<compile_context>
chip_gen: v6e
topology: v6e:2x2x1
jax: 0.10.0
libtpu: 0.0.40
codegen_flags: <defaults>
</compile_context>

<pallas_src>
import functools

import jax
import jax.numpy as jnp
from jax.experimental import pallas as pl
from jax.experimental.pallas import tpu as pltpu

# ---------------- configuration (small shapes) ----------------
L_BIN = 7            # -> l_bin + 1 = 8 histogram "L" channels
AB_BIN = 8           # histogram spatial bins  (ab_bin x ab_bin)
NUM_SEG = 4          # number of (common) segmentation classes
HIST_CHANNELS = 64   # hist_channels
HEN_HIDDEN = 32      # HEN hidden width
ENC_HIDDEN = 32      # CTN encoder hidden
DEC_HIDDEN = 32      # CTN decoder hidden
PAD = 32             # replication padding (self.pad)
USE_SEG = True
CTN_TILE = 16384     # pixel tile (lane axis); sweep 8K-32K; fits <=16MiB VMEM


# ---------------- HEN: histogram encoder (single fused call, projections folded) ----------------
def _hen_kernel(x_ref, pool_ref, sel_ref, w1_ref, b1_ref,
                wpi_ref, bpi_ref, wpr_ref, bpr_ref, o_ref):
    # x_ref:    (N*P, cin)  all histograms stacked, channel-last
    # pool_ref: (N, N*P)    block-diagonal mean-pooling matrix (1/P entries)
    # sel_ref:  (N, 1)      1.0 for "input-hist" rows (project by W1_in), else W1_ref
    # wpi/wpr:  (HEN_HIDDEN, EH) = hen_w2 @ ctn_W1_{in,ref}   (pre-multiplied)
    h = jnp.dot(x_ref[...], w1_ref[...], preferred_element_type=jnp.float32) + b1_ref[...]
    h = jnp.maximum(h, 0.0)
    pooled = jnp.dot(pool_ref[...], h, preferred_element_type=jnp.float32)      # (N, HEN_HIDDEN)
    out_in = jnp.dot(pooled, wpi_ref[...], preferred_element_type=jnp.float32) + bpi_ref[...]
    out_rf = jnp.dot(pooled, wpr_ref[...], preferred_element_type=jnp.float32) + bpr_ref[...]
    o_ref[...] = jnp.where(sel_ref[...] > 0.5, out_in, out_rf)


def hen_projected(hists, num_in_rows, hen_w1, hen_b1, wpi, bpi, wpr, bpr):
    """hists: (N, l_bin+1, ab_bin, ab_bin) -> (N, ENC_HIDDEN) projected encodings."""
    N, cin, a1, a2 = hists.shape
    P = a1 * a2
    eh = wpi.shape[1]
    x = jnp.transpose(hists, (0, 2, 3, 1)).reshape(N * P, cin)            # channel-last
    pool = jnp.repeat(jnp.eye(N, dtype=jnp.float32), P, axis=1) / float(P)
    sel = (jnp.arange(N) < num_in_rows).astype(jnp.float32)[:, None]
    return pl.pallas_call(
        _hen_kernel,
        out_shape=jax.ShapeDtypeStruct((N, eh), jnp.float32),
    )(x, pool, sel, hen_w1, hen_b1, wpi, bpi, wpr, bpr)


# ---------------- CTN: per-pixel color-transfer network (pixel-last layout) ----------------
def _ctn_kernel(x_ref, w1_ref, bvec_ref, w2_ref, b2_ref, w3_ref, b3_ref,
                feat_ref, img_ref):
    # x_ref   : (1, CIN, tile)  bf16   [img(3) | seg one-hot(n_seg) | background(1)]
    # w1_ref  : (1, EH, CIN)    bf16   per-image fused first-layer weight
    # bvec_ref: (1, EH, 1)      f32    per-image bias column (in_enc@W1_in + b1)
    # w2_ref  : (DH, EH)        bf16
    # b2_ref  : (DH, 1)         f32
    # w3_ref  : (3, DH)         bf16
    # b3_ref  : (3, 1)          f32
    x = x_ref[0]                                                          # (CIN, tile) bf16
    h1 = jnp.dot(w1_ref[0], x, preferred_element_type=jnp.float32) + bvec_ref[0]
    h1 = jnp.maximum(h1, 0.0).astype(jnp.bfloat16)                        # (EH, tile)
    h2 = jnp.dot(w2_ref[...], h1, preferred_element_type=jnp.float32) + b2_ref[...]
    h2 = jnp.maximum(h2, 0.0)                                             # (DH, tile) f32
    feat_ref[0] = h2.astype(jnp.bfloat16)                                 # lane-dense store
    pre = jnp.dot(w3_ref[...], h2.astype(jnp.bfloat16),
                  preferred_element_type=jnp.float32) + b3_ref[...]       # (3, tile)
    img_ref[0] = jnp.tanh(pre)                                            # lane-dense store


def ctn_fused_forward(x_flat, w1b, bvec, w2_t, b2_col, w3_t, b3_col, *, tile):
    """x_flat: (B, CIN, npix) bf16 -> (feat (B,DH,npix) bf16, img (B,3,npix) f32)."""
    B, cin, npix = x_flat.shape
    eh = w1b.shape[1]
    dh = w2_t.shape[0]
    cout = w3_t.shape[0]
    tile = tile if npix >= tile else npix
    grid = (B, pl.cdiv(npix, tile))
    return pl.pallas_call(
        _ctn_kernel,
        out_shape=(jax.ShapeDtypeStruct((B, dh, npix), jnp.bfloat16),
                   jax.ShapeDtypeStruct((B, cout, npix), jnp.float32)),
        grid=grid,
        in_specs=[
            pl.BlockSpec((1, cin, tile), lambda b, t: (b, 0, t)),
            pl.BlockSpec((1, eh, cin), lambda b, t: (b, 0, 0)),
            pl.BlockSpec((1, eh, 1), lambda b, t: (b, 0, 0)),
            pl.BlockSpec((dh, eh), lambda b, t: (0, 0)),
            pl.BlockSpec((dh, 1), lambda b, t: (0, 0)),
            pl.BlockSpec((cout, dh), lambda b, t: (0, 0)),
            pl.BlockSpec((cout, 1), lambda b, t: (0, 0)),
        ],
        out_specs=[
            pl.BlockSpec((1, dh, tile), lambda b, t: (b, 0, t)),
            pl.BlockSpec((1, cout, tile), lambda b, t: (b, 0, t)),
        ],
        compiler_params=pltpu.CompilerParams(
            dimension_semantics=("parallel", "parallel"),
            vmem_limit_bytes=32 * 1024 * 1024),
    )(x_flat, w1b, bvec, w2_t, b2_col, w3_t, b3_col)


# ---------------- params ----------------
def init_params(key):
    ks = jax.random.split(key, 5)
    cin = L_BIN + 1
    ctn_in = 3 + 2 * HIST_CHANNELS

    def w(k, shape, scale):
        return jax.random.normal(k, shape, jnp.float32) * scale

    return {
        "hen_w1": w(ks[0], (cin, HEN_HIDDEN), 0.2),
        "hen_b1": jnp.zeros((1, HEN_HIDDEN), jnp.float32),
        "hen_w2": w(ks[1], (HEN_HIDDEN, HIST_CHANNELS), 0.2),
        "hen_b2": jnp.zeros((1, HIST_CHANNELS), jnp.float32),
        "ctn_w1": w(ks[2], (ctn_in, ENC_HIDDEN), 0.1),
        "ctn_b1": jnp.zeros((1, ENC_HIDDEN), jnp.float32),
        "ctn_w2": w(ks[3], (ENC_HIDDEN, DEC_HIDDEN), 0.1),
        "ctn_b2": jnp.zeros((1, DEC_HIDDEN), jnp.float32),
        "ctn_w3": w(ks[4], (DEC_HIDDEN, 3), 0.1),
        "ctn_b3": jnp.zeros((1, 3), jnp.float32),
    }


# ---------------- full forward (mirrors DeepColorTransfer.forward, NCHW) ----------------
def deep_color_transfer_forward(params, in_img, in_hist, in_common_seg,
                                ref_img, ref_hist, ref_segwise_hist,
                                ctn_tile=CTN_TILE):
    B, _, in_w, in_h = in_img.shape
    C = HIST_CHANNELS
    eh = ENC_HIDDEN
    n_seg = ref_segwise_hist.shape[1]

    # --- split CTN first-layer weight; pre-multiply HEN second layer by W1_in / W1_ref ---
    w1 = params["ctn_w1"]                                    # (3 + 2C, EH)
    w1_img = w1[:3]                                          # (3, EH)
    w1_in = w1[3:3 + C]                                      # (C, EH)
    w1_ref = w1[3 + C:]                                      # (C, EH)
    wpi = params["hen_w2"] @ w1_in                           # (HEN_HIDDEN, EH)
    bpi = params["hen_b2"] @ w1_in                           # (1, EH)
    wpr = params["hen_w2"] @ w1_ref
    bpr = params["hen_b2"] @ w1_ref

    # --- HEN on all histograms in one fused pallas_call (projections folded) ---
    all_hist = jnp.concatenate(
        [in_hist, ref_hist,
         ref_segwise_hist.reshape(-1, L_BIN + 1, AB_BIN, AB_BIN)], axis=0)
    proj = hen_projected(all_hist, B, params["hen_w1"], params["hen_b1"],
                         wpi, bpi, wpr, bpr)                 # (2B + B*n_seg, EH)
    bias_in = proj[:B]                                       # in_enc  @ W1_in     (B, EH)
    bias_ref = proj[B:2 * B]                                 # ref_enc @ W1_ref    (B, EH)
    m_seg = proj[2 * B:].reshape(B, n_seg, eh)               # sw_enc  @ W1_ref    (B, n_seg, EH)

    # --- per-image fused first-layer weight over [img | seg one-hot | background] ---
    w1b = jnp.concatenate([
        jnp.broadcast_to(w1_img.T[None], (B, eh, 3)),
        jnp.transpose(m_seg, (0, 2, 1)),
        bias_ref[:, :, None],
    ], axis=2).astype(jnp.bfloat16)                          # (B, EH, 3 + n_seg + 1)
    bvec = (bias_in + params["ctn_b1"])[:, :, None]          # (B, EH, 1) f32

    # --- streamed per-pixel data, NCHW channel-first, pixels flattened on the lane axis ---
    if USE_SEG:
        seg_f = in_common_seg.astype(jnp.float32)            # (B, n_seg, H, W)
    else:
        # TODO(synk): original non-seg branch tiles ref enc over the *ref* image
        # dims; here we assume ref/in spatial dims match (required by CTN concat).
        seg_f = jnp.zeros((B, n_seg, in_w, in_h), jnp.float32)
    bg = 1.0 - jnp.sum(seg_f, axis=1, keepdims=True)         # (B, 1, H, W)
    x = jnp.concatenate([in_img, seg_f, bg], axis=1).astype(jnp.bfloat16)
    # replication ("edge") padding commutes with the per-pixel linear mixing.
    x_p = jnp.pad(x, ((0, 0), (0, 0), (PAD, PAD), (PAD, PAD)), mode="edge")
    Hp, Wp = in_w + 2 * PAD, in_h + 2 * PAD
    npix = Hp * Wp
    x_flat = x_p.reshape(B, x.shape[1], npix)                # (B, CIN, npix) bf16

    feat_flat, img_flat = ctn_fused_forward(
        x_flat, w1b, bvec,
        params["ctn_w2"].T.astype(jnp.bfloat16),             # (DH, EH)
        params["ctn_b2"].T,                                  # (DH, 1)
        params["ctn_w3"].T.astype(jnp.bfloat16),             # (3, DH)
        params["ctn_b3"].T,                                  # (3, 1)
        tile=ctn_tile)

    feat = feat_flat.reshape(B, DEC_HIDDEN, Hp, Wp)          # bf16, padded intermediate (NCHW)
    out_img = img_flat.reshape(B, 3, Hp, Wp)[..., PAD:Hp - PAD, PAD:Wp - PAD]
    return [feat, out_img]                                   # CTN_out with last element unpadded


# ---------------- pure-JAX unfused reference (for a correctness check) ----------------
def _reference_forward(params, in_img, in_hist, in_common_seg, ref_img,
                       ref_hist, ref_segwise_hist):
    B, _, in_w, in_h = in_img.shape
    C = HIST_CHANNELS
    n_seg = ref_segwise_hist.shape[1]

    def rep_pad_nhwc(t):
        return jnp.pad(t, ((0, 0), (PAD, PAD), (PAD, PAD), (0, 0)), mode="edge")

    def hen(h):
        N = h.shape[0]
        x = jnp.transpose(h, (0, 2, 3, 1)).reshape(N, -1, L_BIN + 1)
        y = jnp.maximum(x @ params["hen_w1"] + params["hen_b1"], 0.0)
        y = y @ params["hen_w2"] + params["hen_b2"]
        return jnp.mean(y, axis=1)

    in_enc = hen(in_hist)
    ref_enc = hen(ref_hist)
    sw_enc = hen(ref_segwise_hist.reshape(-1, L_BIN + 1, AB_BIN, AB_BIN)).reshape(B, n_seg, C)

    seg = jnp.transpose(in_common_seg.astype(jnp.float32), (0, 2, 3, 1))   # (B,H,W,S)
    cm = jnp.sum(seg, axis=-1, keepdims=True)
    in_tile = jnp.broadcast_to(in_enc[:, None, None, :], (B, in_w, in_h, C))
    replace = jnp.einsum("bhws,bsc->bhwc", seg, sw_enc)
    ref_tile = ref_enc[:, None, None, :] * (1.0 - cm) + cm * replace

    img_nhwc = jnp.transpose(in_img, (0, 2, 3, 1))
    x = jnp.concatenate([rep_pad_nhwc(img_nhwc),
                         rep_pad_nhwc(in_tile),
                         rep_pad_nhwc(ref_tile)], axis=-1)
    h1 = jnp.maximum(x @ params["ctn_w1"] + params["ctn_b1"], 0.0)
    h2 = jnp.maximum(h1 @ params["ctn_w2"] + params["ctn_b2"], 0.0)
    out = jnp.tanh(h2 @ params["ctn_w3"] + params["ctn_b3"])
    feat = jnp.transpose(h2, (0, 3, 1, 2))
    Hp, Wp = in_w + 2 * PAD, in_h + 2 * PAD
    out_img = jnp.transpose(out, (0, 3, 1, 2))[..., PAD:Hp - PAD, PAD:Wp - PAD]
    return [feat, out_img]


if __name__ == "__main__":
    key = jax.random.PRNGKey(0)
    kp, k1, k2, k3, k4, k5, k6 = jax.random.split(key, 7)
    params = init_params(kp)

    B, in_w, in_h = 2, 16, 16
    in_img = jax.random.uniform(k1, (B, 3, in_w, in_h), jnp.float32)
    ref_img = jax.random.uniform(k2, (B, 3, in_w, in_h), jnp.float32)
    in_hist = jax.random.uniform(k3, (B, L_BIN + 1, AB_BIN, AB_BIN), jnp.float32)
    ref_hist = jax.random.uniform(k4, (B, L_BIN + 1, AB_BIN, AB_BIN), jnp.float32)
    ref_segwise_hist = jax.random.uniform(
        k5, (B, NUM_SEG, L_BIN + 1, AB_BIN, AB_BIN), jnp.float32)
    seg_idx = jax.random.randint(k6, (B, in_w, in_h), 0, NUM_SEG)
    in_common_seg = seg_idx[:, None, :, :] == jnp.arange(NUM_SEG)[None, :, None, None]  # bool

    fwd = jax.jit(deep_color_transfer_forward)
    outs = fwd(params, in_img, in_hist, in_common_seg,
               ref_img, ref_hist, ref_segwise_hist)
    for o in outs:
        jax.block_until_ready(o)

    assert outs[-1].shape == (B, 3, in_w, in_h)
    assert outs[0].shape == (B, DEC_HIDDEN, in_w + 2 * PAD, in_h + 2 * PAD)

    # correctness check against the unfused pure-JAX reference
    # (diff sources: bf16 streaming / bf16 MXU operands / bf16 feat output)
    ref_outs = _reference_forward(params, in_img, in_hist, in_common_seg,
                                  ref_img, ref_hist, ref_segwise_hist)
    err_feat = float(jnp.max(jnp.abs(outs[0].astype(jnp.float32) - ref_outs[0])))
    err_img = float(jnp.max(jnp.abs(outs[1] - ref_outs[1])))
    assert err_feat < 2e-2 and err_img < 2e-2, (err_feat, err_img)

    # multi-tile / tail path (npix = 6400 with 1024-pixel tiles -> 7 blocks, partial tail)
    fwd_tail = jax.jit(functools.partial(deep_color_transfer_forward, ctn_tile=1024))
    outs_tail = fwd_tail(params, in_img, in_hist, in_common_seg,
                         ref_img, ref_hist, ref_segwise_hist)
    for o in outs_tail:
        jax.block_until_ready(o)
    err_feat_t = float(jnp.max(jnp.abs(outs_tail[0].astype(jnp.float32) - ref_outs[0])))
    err_img_t = float(jnp.max(jnp.abs(outs_tail[1] - ref_outs[1])))
    assert err_feat_t < 2e-2 and err_img_t < 2e-2, (err_feat_t, err_img_t)

    print("KERNEL_OK")
</pallas_src>

<mosaic_0001>
module attributes {stable_mosaic.version = 11 : i64} {
  func.func @_hen_kernel(%arg0: memref<768x8xf32, #tpu.memory_space<vmem>>, %arg1: memref<12x768xf32, #tpu.memory_space<vmem>>, %arg2: memref<12x1xf32, #tpu.memory_space<vmem>>, %arg3: memref<8x32xf32, #tpu.memory_space<vmem>>, %arg4: memref<1x32xf32, #tpu.memory_space<vmem>>, %arg5: memref<32x32xf32, #tpu.memory_space<vmem>>, %arg6: memref<1x32xf32, #tpu.memory_space<vmem>>, %arg7: memref<32x32xf32, #tpu.memory_space<vmem>>, %arg8: memref<1x32xf32, #tpu.memory_space<vmem>>, %arg9: memref<12x32xf32, #tpu.memory_space<vmem>>) attributes {dimension_semantics = [], scalar_prefetch = 0 : i64, scratch_operands = 0 : i64, tpu.core_type = #tpu.core_type<tc>} {
    %c0 = arith.constant 0 : index
    %c0_0 = arith.constant 0 : index
    %0 = vector.load %arg0[%c0, %c0_0] : memref<768x8xf32, #tpu.memory_space<vmem>>, vector<768x8xf32>
    %c0_1 = arith.constant 0 : index
    %c0_2 = arith.constant 0 : index
    %1 = vector.load %arg3[%c0_1, %c0_2] : memref<8x32xf32, #tpu.memory_space<vmem>>, vector<8x32xf32>
    %cst = arith.constant dense<0.000000e+00> : vector<768x32xf32>
    %2 = tpu.matmul %0, %1, %cst {dimension_numbers = #tpu.dot_dimension_numbers<[1], [0], [0], [1], [0, 0, 1, 1], [], []>} : vector<768x8xf32>, vector<8x32xf32>, vector<768x32xf32> -> vector<768x32xf32>
    %c0_3 = arith.constant 0 : index
    %c0_4 = arith.constant 0 : index
    %3 = vector.load %arg4[%c0_3, %c0_4] : memref<1x32xf32, #tpu.memory_space<vmem>>, vector<1x32xf32>
    %4 = vector.broadcast %3 : vector<1x32xf32> to vector<768x32xf32>
    %5 = arith.addf %2, %4 : vector<768x32xf32>
    %cst_5 = arith.constant 0.000000e+00 : f32
    %6 = vector.broadcast %cst_5 : f32 to vector<768x32xf32>
    %7 = arith.maximumf %5, %6 : vector<768x32xf32>
    %c0_6 = arith.constant 0 : index
    %c0_7 = arith.constant 0 : index
    %8 = vector.load %arg1[%c0_6, %c0_7] : memref<12x768xf32, #tpu.memory_space<vmem>>, vector<12x768xf32>
    %cst_8 = arith.constant dense<0.000000e+00> : vector<12x32xf32>
    %9 = tpu.matmul %8, %7, %cst_8 {dimension_numbers = #tpu.dot_dimension_numbers<[1], [0], [0], [1], [0, 0, 1, 1], [], []>} : vector<12x768xf32>, vector<768x32xf32>, vector<12x32xf32> -> vector<12x32xf32>
    %c0_9 = arith.constant 0 : index
    %c0_10 = arith.constant 0 : index
    %10 = vector.load %arg5[%c0_9, %c0_10] : memref<32x32xf32, #tpu.memory_space<vmem>>, vector<32x32xf32>
    %cst_11 = arith.constant dense<0.000000e+00> : vector<12x32xf32>
    %11 = tpu.matmul %9, %10, %cst_11 {dimension_numbers = #tpu.dot_dimension_numbers<[1], [0], [0], [1], [0, 0, 1, 1], [], []>} : vector<12x32xf32>, vector<32x32xf32>, vector<12x32xf32> -> vector<12x32xf32>
    %c0_12 = arith.constant 0 : index
    %c0_13 = arith.constant 0 : index
    %12 = vector.load %arg6[%c0_12, %c0_13] : memref<1x32xf32, #tpu.memory_space<vmem>>, vector<1x32xf32>
    %13 = vector.broadcast %12 : vector<1x32xf32> to vector<12x32xf32>
    %14 = arith.addf %11, %13 : vector<12x32xf32>
    %c0_14 = arith.constant 0 : index
    %c0_15 = arith.constant 0 : index
    %15 = vector.load %arg7[%c0_14, %c0_15] : memref<32x32xf32, #tpu.memory_space<vmem>>, vector<32x32xf32>
    %cst_16 = arith.constant dense<0.000000e+00> : vector<12x32xf32>
    %16 = tpu.matmul %9, %15, %cst_16 {dimension_numbers = #tpu.dot_dimension_numbers<[1], [0], [0], [1], [0, 0, 1, 1], [], []>} : vector<12x32xf32>, vector<32x32xf32>, vector<12x32xf32> -> vector<12x32xf32>
    %c0_17 = arith.constant 0 : index
    %c0_18 = arith.constant 0 : index
    %17 = vector.load %arg8[%c0_17, %c0_18] : memref<1x32xf32, #tpu.memory_space<vmem>>, vector<1x32xf32>
    %18 = vector.broadcast %17 : vector<1x32xf32> to vector<12x32xf32>
    %19 = arith.addf %16, %18 : vector<12x32xf32>
    %c0_19 = arith.constant 0 : index
    %c0_20 = arith.constant 0 : index
    %20 = vector.load %arg2[%c0_19, %c0_20] : memref<12x1xf32, #tpu.memory_space<vmem>>, vector<12x1xf32>
    %cst_21 = arith.constant 5.000000e-01 : f32
    %21 = vector.broadcast %cst_21 : f32 to vector<12x1xf32>
    %22 = arith.cmpf ogt, %20, %21 : vector<12x1xf32>
    %23 = vector.shape_cast %22 : vector<12x1xi1> to vector<12x1xi1>
    %24 = vector.broadcast %23 : vector<12x1xi1> to vector<12x32xi1>
    %25 = arith.select %24, %14, %19 : vector<12x32xi1>, vector<12x32xf32>
    %c0_22 = arith.constant 0 : index
    %c0_23 = arith.constant 0 : index
    %26 = vector.load %arg9[%c0_22, %c0_23] : memref<12x32xf32, #tpu.memory_space<vmem>>, vector<12x32xf32>
    tpu.vector_store %arg9[%c0_22, %c0_23], %25 {strides = array<i32>} : memref<12x32xf32, #tpu.memory_space<vmem>>, vector<12x32xf32>,
    return
  }
}

module attributes {stable_mosaic.version = 11 : i64} {
  func.func @_ctn_kernel(%arg0: i32, %arg1: i32, %arg2: memref<1x8x6400xbf16, #tpu.memory_space<vmem>>, %arg3: memref<1x32x8xbf16, #tpu.memory_space<vmem>>, %arg4: memref<1x32x1xf32, #tpu.memory_space<vmem>>, %arg5: memref<32x32xbf16, #tpu.memory_space<vmem>>, %arg6: memref<32x1xf32, #tpu.memory_space<vmem>>, %arg7: memref<3x32xbf16, #tpu.memory_space<vmem>>, %arg8: memref<3x1xf32, #tpu.memory_space<vmem>>, %arg9: memref<1x32x6400xbf16, #tpu.memory_space<vmem>>, %arg10: memref<1x3x6400xf32, #tpu.memory_space<vmem>>) attributes {dimension_semantics = [#tpu.dimension_semantics<parallel>, #tpu.dimension_semantics<parallel>], iteration_bounds = array<i64: 2, 1>, scalar_prefetch = 0 : i64, scratch_operands = 0 : i64, tpu.core_type = #tpu.core_type<tc>, window_params = [{transform_indices = @transform_0, window_bounds = array<i64: 1, 8, 6400>}, {transform_indices = @transform_1, window_bounds = array<i64: 1, 32, 8>}, {transform_indices = @transform_2, window_bounds = array<i64: 1, 32, 1>}, {pipeline_mode = #tpu.pipeline_mode<synchronous>, transform_indices = @transform_3, window_bounds = array<i64: 32, 32>}, {pipeline_mode = #tpu.pipeline_mode<synchronous>, transform_indices = @transform_4, window_bounds = array<i64: 32, 1>}, {pipeline_mode = #tpu.pipeline_mode<synchronous>, transform_indices = @transform_5, window_bounds = array<i64: 3, 32>}, {pipeline_mode = #tpu.pipeline_mode<synchronous>, transform_indices = @transform_6, window_bounds = array<i64: 3, 1>}, {transform_indices = @transform_7, window_bounds = array<i64: 1, 32, 6400>}, {transform_indices = @transform_8, window_bounds = array<i64: 1, 3, 6400>}]} {
    %c0 = arith.constant 0 : index
    %c0_0 = arith.constant 0 : index
    %c0_1 = arith.constant 0 : index
    %0 = vector.load %arg2[%c0, %c0_0, %c0_1] : memref<1x8x6400xbf16, #tpu.memory_space<vmem>>, vector<1x8x6400xbf16>
    %1 = vector.shape_cast %0 : vector<1x8x6400xbf16> to vector<8x6400xbf16>
    %c0_2 = arith.constant 0 : index
    %c0_3 = arith.constant 0 : index
    %c0_4 = arith.constant 0 : index
    %2 = vector.load %arg3[%c0_2, %c0_3, %c0_4] : memref<1x32x8xbf16, #tpu.memory_space<vmem>>, vector<1x32x8xbf16>
    %3 = vector.shape_cast %2 : vector<1x32x8xbf16> to vector<32x8xbf16>
    %cst = arith.constant dense<0.000000e+00> : vector<32x6400xf32>
    %4 = tpu.matmul %3, %1, %cst {dimension_numbers = #tpu.dot_dimension_numbers<[1], [0], [0], [1], [0, 0, 1, 1], [], []>} : vector<32x8xbf16>, vector<8x6400xbf16>, vector<32x6400xf32> -> vector<32x6400xf32>
    %c0_5 = arith.constant 0 : index
    %c0_6 = arith.constant 0 : index
    %c0_7 = arith.constant 0 : index
    %5 = vector.load %arg4[%c0_5, %c0_6, %c0_7] : memref<1x32x1xf32, #tpu.memory_space<vmem>>, vector<1x32x1xf32>
    %6 = vector.shape_cast %5 : vector<1x32x1xf32> to vector<32x1xf32>
    %7 = vector.broadcast %6 : vector<32x1xf32> to vector<32x6400xf32>
    %8 = arith.addf %4, %7 : vector<32x6400xf32>
    %cst_8 = arith.constant 0.000000e+00 : f32
    %9 = vector.broadcast %cst_8 : f32 to vector<32x6400xf32>
    %10 = arith.maximumf %8, %9 : vector<32x6400xf32>
    %11 = arith.truncf %10 : vector<32x6400xf32> to vector<32x6400xbf16>
    %c0_9 = arith.constant 0 : index
    %c0_10 = arith.constant 0 : index
    %12 = vector.load %arg5[%c0_9, %c0_10] : memref<32x32xbf16, #tpu.memory_space<vmem>>, vector<32x32xbf16>
    %cst_11 = arith.constant dense<0.000000e+00> : vector<32x6400xf32>
    %13 = tpu.matmul %12, %11, %cst_11 {dimension_numbers = #tpu.dot_dimension_numbers<[1], [0], [0], [1], [0, 0, 1, 1], [], []>} : vector<32x32xbf16>, vector<32x6400xbf16>, vector<32x6400xf32> -> vector<32x6400xf32>
    %c0_12 = arith.constant 0 : index
    %c0_13 = arith.constant 0 : index
    %14 = vector.load %arg6[%c0_12, %c0_13] : memref<32x1xf32, #tpu.memory_space<vmem>>, vector<32x1xf32>
    %15 = vector.broadcast %14 : vector<32x1xf32> to vector<32x6400xf32>
    %16 = arith.addf %13, %15 : vector<32x6400xf32>
    %cst_14 = arith.constant 0.000000e+00 : f32
    %17 = vector.broadcast %cst_14 : f32 to vector<32x6400xf32>
    %18 = arith.maximumf %16, %17 : vector<32x6400xf32>
    %19 = arith.truncf %18 : vector<32x6400xf32> to vector<32x6400xbf16>
    %c0_15 = arith.constant 0 : index
    %c0_16 = arith.constant 0 : index
    %c0_17 = arith.constant 0 : index
    %20 = vector.load %arg9[%c0_15, %c0_16, %c0_17] : memref<1x32x6400xbf16, #tpu.memory_space<vmem>>, vector<1x32x6400xbf16>
    %21 = vector.shape_cast %20 : vector<1x32x6400xbf16> to vector<32x6400xbf16>
    %22 = vector.shape_cast %19 : vector<32x6400xbf16> to vector<1x32x6400xbf16>
    tpu.vector_store %arg9[%c0_15, %c0_16, %c0_17], %22 {strides = array<i32>} : memref<1x32x6400xbf16, #tpu.memory_space<vmem>>, vector<1x32x6400xbf16>,
    %c0_18 = arith.constant 0 : index
    %c0_19 = arith.constant 0 : index
    %23 = vector.load %arg7[%c0_18, %c0_19] : memref<3x32xbf16, #tpu.memory_space<vmem>>, vector<3x32xbf16>
    %24 = arith.truncf %18 : vector<32x6400xf32> to vector<32x6400xbf16>
    %cst_20 = arith.constant dense<0.000000e+00> : vector<3x6400xf32>
    %25 = tpu.matmul %23, %24, %cst_20 {dimension_numbers = #tpu.dot_dimension_numbers<[1], [0], [0], [1], [0, 0, 1, 1], [], []>} : vector<3x32xbf16>, vector<32x6400xbf16>, vector<3x6400xf32> -> vector<3x6400xf32>
    %c0_21 = arith.constant 0 : index
    %c0_22 = arith.constant 0 : index
    %26 = vector.load %arg8[%c0_21, %c0_22] : memref<3x1xf32, #tpu.memory_space<vmem>>, vector<3x1xf32>
    %27 = vector.broadcast %26 : vector<3x1xf32> to vector<3x6400xf32>
    %28 = arith.addf %25, %27 : vector<3x6400xf32>
    %29 = math.tanh %28 : vector<3x6400xf32>
    %c0_23 = arith.constant 0 : index
    %c0_24 = arith.constant 0 : index
    %c0_25 = arith.constant 0 : index
    %30 = vector.load %arg10[%c0_23, %c0_24, %c0_25] : memref<1x3x6400xf32, #tpu.memory_space<vmem>>, vector<1x3x6400xf32>
    %31 = vector.shape_cast %30 : vector<1x3x6400xf32> to vector<3x6400xf32>
    %32 = vector.shape_cast %29 : vector<3x6400xf32> to vector<1x3x6400xf32>
    tpu.vector_store %arg10[%c0_23, %c0_24, %c0_25], %32 {strides = array<i32>} : memref<1x3x6400xf32, #tpu.memory_space<vmem>>, vector<1x3x6400xf32>,
    return
  }
  func.func @transform_0(%arg0: i32, %arg1: i32) -> (i32, i32, i32) {
    %c0_i32 = arith.constant 0 : i32
    %c0_i32_0 = arith.constant 0 : i32
    return %arg0, %c0_i32, %arg1 : i32, i32, i32
  }
  func.func @transform_1(%arg0: i32, %arg1: i32) -> (i32, i32, i32) {
    %c0_i32 = arith.constant 0 : i32
    %c0_i32_0 = arith.constant 0 : i32
    %c0_i32_1 = arith.constant 0 : i32
    return %arg0, %c0_i32, %c0_i32_0 : i32, i32, i32
  }
  func.func @transform_2(%arg0: i32, %arg1: i32) -> (i32, i32, i32) {
    %c0_i32 = arith.constant 0 : i32
    %c0_i32_0 = arith.constant 0 : i32
    %c0_i32_1 = arith.constant 0 : i32
    return %arg0, %c0_i32, %c0_i32_0 : i32, i32, i32
  }
  func.func @transform_3(%arg0: i32, %arg1: i32) -> (i32, i32) {
    %c0_i32 = arith.constant 0 : i32
    %c0_i32_0 = arith.constant 0 : i32
    %c0_i32_1 = arith.constant 0 : i32
    return %c0_i32, %c0_i32_0 : i32, i32
  }
  func.func @transform_4(%arg0: i32, %arg1: i32) -> (i32, i32) {
    %c0_i32 = arith.constant 0 : i32
    %c0_i32_0 = arith.constant 0 : i32
    %c0_i32_1 = arith.constant 0 : i32
    return %c0_i32, %c0_i32_0 : i32, i32
  }
  func.func @transform_5(%arg0: i32, %arg1: i32) -> (i32, i32) {
    %c0_i32 = arith.constant 0 : i32
    %c0_i32_0 = arith.constant 0 : i32
    %c0_i32_1 = arith.constant 0 : i32
    return %c0_i32, %c0_i32_0 : i32, i32
  }
  func.func @transform_6(%arg0: i32, %arg1: i32) -> (i32, i32) {
    %c0_i32 = arith.constant 0 : i32
    %c0_i32_0 = arith.constant 0 : i32
    %c0_i32_1 = arith.constant 0 : i32
    return %c0_i32, %c0_i32_0 : i32, i32
  }
  func.func @transform_7(%arg0: i32, %arg1: i32) -> (i32, i32, i32) {
    %c0_i32 = arith.constant 0 : i32
    %c0_i32_0 = arith.constant 0 : i32
    return %arg0, %c0_i32, %arg1 : i32, i32, i32
  }
  func.func @transform_8(%arg0: i32, %arg1: i32) -> (i32, i32, i32) {
    %c0_i32 = arith.constant 0 : i32
    %c0_i32_0 = arith.constant 0 : i32
    return %arg0, %c0_i32, %arg1 : i32, i32, i32
  }
}

</mosaic_0001>

<llo_original>
// kernel: deep_color_transfer_forward.2
$region0: #{deep_color_transfer_forward.2}
  #allocation0 [shape = 'u32[]', space=smem, size = 0x4, offset = 0x4, fixed_abs, tag = 'smem constant byte address 0x4 - core index']
  #allocation1 [shape = 'u32[144,128]{1,0:T(1,128)}', space=vmem, size = 0x12000, scoped, tag = 'internal scratch']
  %s0 = inlined_call_operand.vmem [shape: f32[768,8], index: 0, kind: input, shape index: {}]
  %s1 = inlined_call_operand.vmem [shape: f32[12,768], index: 1, kind: input, shape index: {}]
  %s2 = inlined_call_operand.vmem [shape: f32[12,1], index: 2, kind: input, shape index: {}]
  %s3 = inlined_call_operand.vmem [shape: f32[8,32], index: 3, kind: input, shape index: {}]
  %s4 = inlined_call_operand.vmem [shape: f32[1,32], index: 4, kind: input, shape index: {}]
  %s5 = inlined_call_operand.vmem [shape: f32[32,32], index: 5, kind: input, shape index: {}]
  %s6 = inlined_call_operand.vmem [shape: f32[1,32], index: 6, kind: input, shape index: {}]
  %s7 = inlined_call_operand.vmem [shape: f32[32,32], index: 7, kind: input, shape index: {}]
  %s8 = inlined_call_operand.vmem [shape: f32[1,32], index: 8, kind: input, shape index: {}]
  %s9 = inlined_call_operand.vmem [shape: f32[12,32], index: 9, kind: output, shape index: {}]
  %s10 = sld [smem:[#allocation0]]
  $region46: #{deep_color_transfer_forward.2} parent=0
    _
  %s12 = ssub.s32 1, %s10
  %s13 = scalar_select 0, %s12, %s10
  // Predicated region
  $region2: #{deep_color_transfer_forward.2} parent=0 // pred_check
    _
  $region3: #{deep_color_transfer_forward.2} parent=0 // pred_check_branch
    %15 = sbr.rel (0) target = $region5
  $region4: #{deep_color_transfer_forward.2} parent=0 // pred_region
    _
  $region5: #{deep_color_transfer_forward.2} parent=0 // pred_fallthru
    _
  // Predicated region
  $region6: #{deep_color_transfer_forward.2} parent=0 // pred_check
    _
  $region7: #{deep_color_transfer_forward.2} parent=0 // pred_check_branch
    %17 = sbr.rel (0) target = $region9
  $region8: #{deep_color_transfer_forward.2} parent=0 // pred_region
    _
  $region9: #{deep_color_transfer_forward.2} parent=0 // pred_fallthru
    _
  // Predicated region
  $region10: #{deep_color_transfer_forward.2} parent=0 // pred_check
    _
  $region11: #{deep_color_transfer_forward.2} parent=0 // pred_check_branch
    %19 = sbr.rel (0) target = $region13
  $region12: #{deep_color_transfer_forward.2} parent=0 // pred_region
    _
  $region13: #{deep_color_transfer_forward.2} parent=0 // pred_fallthru
    _
  // Predicated region
  $region14: #{deep_color_transfer_forward.2} parent=0 // pred_check
    _
  $region15: #{deep_color_transfer_forward.2} parent=0 // pred_check_branch
    %21 = sbr.rel (0) target = $region17
  $region16: #{deep_color_transfer_forward.2} parent=0 // pred_region
    _
  $region17: #{deep_color_transfer_forward.2} parent=0 // pred_fallthru
    _
  // Predicated region
  $region18: #{deep_color_transfer_forward.2} parent=0 // pred_check
    _
  $region19: #{deep_color_transfer_forward.2} parent=0 // pred_check_branch
    %23 = sbr.rel (0) target = $region21
  $region20: #{deep_color_transfer_forward.2} parent=0 // pred_region
    _
  $region21: #{deep_color_transfer_forward.2} parent=0 // pred_fallthru
    _
  // Predicated region
  $region22: #{deep_color_transfer_forward.2} parent=0 // pred_check
    _
  $region23: #{deep_color_transfer_forward.2} parent=0 // pred_check_branch
    %25 = sbr.rel (0) target = $region25
  $region24: #{deep_color_transfer_forward.2} parent=0 // pred_region
    _
  $region25: #{deep_color_transfer_forward.2} parent=0 // pred_fallthru
    _
  // Predicated region
  $region26: #{deep_color_transfer_forward.2} parent=0 // pred_check
    _
  $region27: #{deep_color_transfer_forward.2} parent=0 // pred_check_branch
    %27 = sbr.rel (0) target = $region29
  $region28: #{deep_color_transfer_forward.2} parent=0 // pred_region
    _
  $region29: #{deep_color_transfer_forward.2} parent=0 // pred_fallthru
    _
  // Predicated region
  $region30: #{deep_color_transfer_forward.2} parent=0 // pred_check
    _
  $region31: #{deep_color_transfer_forward.2} parent=0 // pred_check_branch
    %29 = sbr.rel (0) target = $region33
  $region32: #{deep_color_transfer_forward.2} parent=0 // pred_region
    _
  $region33: #{deep_color_transfer_forward.2} parent=0 // pred_fallthru
    _
  // Predicated region
  $region34: #{deep_color_transfer_forward.2} parent=0 // pred_check
    _
  $region35: #{deep_color_transfer_forward.2} parent=0 // pred_check_branch
    %31 = sbr.rel (0) target = $region37
  $region36: #{deep_color_transfer_forward.2} parent=0 // pred_region
    _
  $region37: #{deep_color_transfer_forward.2} parent=0 // pred_fallthru
    _
  %v32 = vld [vmem:[%s0] sm:$0xff]
  %v33 = vld [vmem:[%s0 + $0x8] sm:$0xff]
  %v34 = vld [vmem:[%s0 + $0x10] sm:$0xff]
  %v35 = vld [vmem:[%s0 + $0x18] sm:$0xff]
  %v36 = vld [vmem:[%s0 + $0x20] sm:$0xff]
  %v37 = vld [vmem:[%s0 + $0x28] sm:$0xff]
  %v38 = vld [vmem:[%s0 + $0x30] sm:$0xff]
  %v39 = vld [vmem:[%s0 + $0x38] sm:$0xff]
  %v40 = vld [vmem:[%s0 + $0x40] sm:$0xff]
  %v41 = vld [vmem:[%s0 + $0x48] sm:$0xff]
  %v42 = vld [vmem:[%s0 + $0x50] sm:$0xff]
  %v43 = vld [vmem:[%s0 + $0x58] sm:$0xff]
  %v44 = vld [vmem:[%s0 + $0x60] sm:$0xff]
  %v45 = vld [vmem:[%s0 + $0x68] sm:$0xff]
  %v46 = vld [vmem:[%s0 + $0x70] sm:$0xff]
  %v47 = vld [vmem:[%s0 + $0x78] sm:$0xff]
  %v48 = vld [vmem:[%s0 + $0x80] sm:$0xff]
  %v49 = vld [vmem:[%s0 + $0x88] sm:$0xff]
  %v50 = vld [vmem:[%s0 + $0x90] sm:$0xff]
  %v51 = vld [vmem:[%s0 + $0x98] sm:$0xff]
  %v52 = vld [vmem:[%s0 + $0xa0] sm:$0xff]
  %v53 = vld [vmem:[%s0 + $0xa8] sm:$0xff]
  %v54 = vld [vmem:[%s0 + $0xb0] sm:$0xff]
  %v55 = vld [vmem:[%s0 + $0xb8] sm:$0xff]
  %v56 = vld [vmem:[%s0 + $0xc0] sm:$0xff]
  %v57 = vld [vmem:[%s0 + $0xc8] sm:$0xff]
  %v58 = vld [vmem:[%s0 + $0xd0] sm:$0xff]
  %v59 = vld [vmem:[%s0 + $0xd8] sm:$0xff]
  %v60 = vld [vmem:[%s0 + $0xe0] sm:$0xff]
  %v61 = vld [vmem:[%s0 + $0xe8] sm:$0xff]
  %v62 = vld [vmem:[%s0 + $0xf0] sm:$0xff]
  %v63 = vld [vmem:[%s0 + $0xf8] sm:$0xff]
  %v64 = vld [vmem:[%s0 + $0x100] sm:$0xff]
  %v65 = vld [vmem:[%s0 + $0x108] sm:$0xff]
  %v66 = vld [vmem:[%s0 + $0x110] sm:$0xff]
  %v67 = vld [vmem:[%s0 + $0x118] sm:$0xff]
  %v68 = vld [vmem:[%s0 + $0x120] sm:$0xff]
  %v69 = vld [vmem:[%s0 + $0x128] sm:$0xff]
  %v70 = vld [vmem:[%s0 + $0x130] sm:$0xff]
  %v71 = vld [vmem:[%s0 + $0x138] sm:$0xff]
  %v72 = vld [vmem:[%s0 + $0x140] sm:$0xff]
  %v73 = vld [vmem:[%s0 + $0x148] sm:$0xff]
  %v74 = vld [vmem:[%s0 + $0x150] sm:$0xff]
  %v75 = vld [vmem:[%s0 + $0x158] sm:$0xff]
  %v76 = vld [vmem:[%s0 + $0x160] sm:$0xff]
  %v77 = vld [vmem:[%s0 + $0x168] sm:$0xff]
  %v78 = vld [vmem:[%s0 + $0x170] sm:$0xff]
  %v79 = vld [vmem:[%s0 + $0x178] sm:$0xff]
  %v80 = vld [vmem:[%s0 + $0x180] sm:$0xff]
  %v81 = vld [vmem:[%s0 + $0x188] sm:$0xff]
  %v82 = vld [vmem:[%s0 + $0x190] sm:$0xff]
  %v83 = vld [vmem:[%s0 + $0x198] sm:$0xff]
  %v84 = vld [vmem:[%s0 + $0x1a0] sm:$0xff]
  %v85 = vld [vmem:[%s0 + $0x1a8] sm:$0xff]
  %v86 = vld [vmem:[%s0 + $0x1b0] sm:$0xff]
  %v87 = vld [vmem:[%s0 + $0x1b8] sm:$0xff]
  %v88 = vld [vmem:[%s0 + $0x1c0] sm:$0xff]
  %v89 = vld [vmem:[%s0 + $0x1c8] sm:$0xff]
  %v90 = vld [vmem:[%s0 + $0x1d0] sm:$0xff]
  %v91 = vld [vmem:[%s0 + $0x1d8] sm:$0xff]
  %v92 = vld [vmem:[%s0 + $0x1e0] sm:$0xff]
  %v93 = vld [vmem:[%s0 + $0x1e8] sm:$0xff]
  %v94 = vld [vmem:[%s0 + $0x1f0] sm:$0xff]
  %v95 = vld [vmem:[%s0 + $0x1f8] sm:$0xff]
  %v96 = vld [vmem:[%s0 + $0x200] sm:$0xff]
  %v97 = vld [vmem:[%s0 + $0x208] sm:$0xff]
  %v98 = vld [vmem:[%s0 + $0x210] sm:$0xff]
  %v99 = vld [vmem:[%s0 + $0x218] sm:$0xff]
  %v100 = vld [vmem:[%s0 + $0x220] sm:$0xff]
  %v101 = vld [vmem:[%s0 + $0x228] sm:$0xff]
  %v102 = vld [vmem:[%s0 + $0x230] sm:$0xff]
  %v103 = vld [vmem:[%s0 + $0x238] sm:$0xff]
  %v104 = vld [vmem:[%s0 + $0x240] sm:$0xff]
  %v105 = vld [vmem:[%s0 + $0x248] sm:$0xff]
  %v106 = vld [vmem:[%s0 + $0x250] sm:$0xff]
  %v107 = vld [vmem:[%s0 + $0x258] sm:$0xff]
  %v108 = vld [vmem:[%s0 + $0x260] sm:$0xff]
  %v109 = vld [vmem:[%s0 + $0x268] sm:$0xff]
  %v110 = vld [vmem:[%s0 + $0x270] sm:$0xff]
  %v111 = vld [vmem:[%s0 + $0x278] sm:$0xff]
  %v112 = vld [vmem:[%s0 + $0x280] sm:$0xff]
  %v113 = vld [vmem:[%s0 + $0x288] sm:$0xff]
  %v114 = vld [vmem:[%s0 + $0x290] sm:$0xff]
  %v115 = vld [vmem:[%s0 + $0x298] sm:$0xff]
  %v116 = vld [vmem:[%s0 + $0x2a0] sm:$0xff]
  %v117 = vld [vmem:[%s0 + $0x2a8] sm:$0xff]
  %v118 = vld [vmem:[%s0 + $0x2b0] sm:$0xff]
  %v119 = vld [vmem:[%s0 + $0x2b8] sm:$0xff]
  %v120 = vld [vmem:[%s0 + $0x2c0] sm:$0xff]
  %v121 = vld [vmem:[%s0 + $0x2c8] sm:$0xff]
  %v122 = vld [vmem:[%s0 + $0x2d0] sm:$0xff]
  %v123 = vld [vmem:[%s0 + $0x2d8] sm:$0xff]
  %v124 = vld [vmem:[%s0 + $0x2e0] sm:$0xff]
  %v125 = vld [vmem:[%s0 + $0x2e8] sm:$0xff]
  %v126 = vld [vmem:[%s0 + $0x2f0] sm:$0xff]
  %v127 = vld [vmem:[%s0 + $0x2f8] sm:$0xff]
  %v128 = vld [vmem:[%s3] sm:$0xff]
  %v129 = vld [vmem:[%s4] sm:$0x1]
  %v131 = vlaneseq
  %v132 = vshrl.u32 %v131, 7
  %v133 = vsub.s32 0, %v132
  %v134 = vrot.slane %v129, %v133
  %vm136 = vcmask 64512
  %v138 = vsel %vm136, %v32, 0
  %v141 = vsel %vm136, %v33, 0
  %v144 = vsel %vm136, %v34, 0
  %v147 = vsel %vm136, %v35, 0
  %v150 = vsel %vm136, %v36, 0
  %v153 = vsel %vm136, %v37, 0
  %v156 = vsel %vm136, %v38, 0
  %v159 = vsel %vm136, %v39, 0
  %v162 = vsel %vm136, %v40, 0
  %v165 = vsel %vm136, %v41, 0
  %v168 = vsel %vm136, %v42, 0
  %v171 = vsel %vm136, %v43, 0
  %v174 = vsel %vm136, %v44, 0
  %v177 = vsel %vm136, %v45, 0
  %v180 = vsel %vm136, %v46, 0
  %v183 = vsel %vm136, %v47, 0
  %v186 = vsel %vm136, %v48, 0
  %v189 = vsel %vm136, %v49, 0
  %v192 = vsel %vm136, %v50, 0
  %v195 = vsel %vm136, %v51, 0
  %v198 = vsel %vm136, %v52, 0
  %v201 = vsel %vm136, %v53, 0
  %v204 = vsel %vm136, %v54, 0
  %v207 = vsel %vm136, %v55, 0
  %v210 = vsel %vm136, %v56, 0
  %v213 = vsel %vm136, %v57, 0
  %v216 = vsel %vm136, %v58, 0
  %v219 = vsel %vm136, %v59, 0
  %v222 = vsel %vm136, %v60, 0
  %v225 = vsel %vm136, %v61, 0
  %v228 = vsel %vm136, %v62, 0
  %v231 = vsel %vm136, %v63, 0
  %v234 = vsel %vm136, %v64, 0
  %v237 = vsel %vm136, %v65, 0
  %v240 = vsel %vm136, %v66, 0
  %v243 = vsel %vm136, %v67, 0
  %v246 = vsel %vm136, %v68, 0
  %v249 = vsel %vm136, %v69, 0
  %v252 = vsel %vm136, %v70, 0
  %v255 = vsel %vm136, %v71, 0
  %v258 = vsel %vm136, %v72, 0
  %v261 = vsel %vm136, %v73, 0
  %v264 = vsel %vm136, %v74, 0
  %v267 = vsel %vm136, %v75, 0
  %v270 = vsel %vm136, %v76, 0
  %v273 = vsel %vm136, %v77, 0
  %v276 = vsel %vm136, %v78, 0
  %v279 = vsel %vm136, %v79, 0
  %v282 = vsel %vm136, %v80, 0
  %v285 = vsel %vm136, %v81, 0
  %v288 = vsel %vm136, %v82, 0
  %v291 = vsel %vm136, %v83, 0
  %v294 = vsel %vm136, %v84, 0
  %v297 = vsel %vm136, %v85, 0
  %v300 = vsel %vm136, %v86, 0
  %v303 = vsel %vm136, %v87, 0
  %v306 = vsel %vm136, %v88, 0
  %v309 = vsel %vm136, %v89, 0
  %v312 = vsel %vm136, %v90, 0
  %v315 = vsel %vm136, %v91, 0
  %v318 = vsel %vm136, %v92, 0
  %v321 = vsel %vm136, %v93, 0
  %v324 = vsel %vm136, %v94, 0
  %v327 = vsel %vm136, %v95, 0
  %v330 = vsel %vm136, %v96, 0
  %v333 = vsel %vm136, %v97, 0
  %v336 = vsel %vm136, %v98, 0
  %v339 = vsel %vm136, %v99, 0
  %v342 = vsel %vm136, %v100, 0
  %v345 = vsel %vm136, %v101, 0
  %v348 = vsel %vm136, %v102, 0
  %v351 = vsel %vm136, %v103, 0
  %v354 = vsel %vm136, %v104, 0
  %v357 = vsel %vm136, %v105, 0
  %v360 = vsel %vm136, %v106, 0
  %v363 = vsel %vm136, %v107, 0
  %v366 = vsel %vm136, %v108, 0
  %v369 = vsel %vm136, %v109, 0
  %v372 = vsel %vm136, %v110, 0
  %v375 = vsel %vm136, %v111, 0
  %v378 = vsel %vm136, %v112, 0
  %v381 = vsel %vm136, %v113, 0
  %v384 = vsel %vm136, %v114, 0
  %v387 = vsel %vm136, %v115, 0
  %v390 = vsel %vm136, %v116, 0
  %v393 = vsel %vm136, %v117, 0
  %v396 = vsel %vm136, %v118, 0
  %v399 = vsel %vm136, %v119, 0
  %v402 = vsel %vm136, %v120, 0
  %v405 = vsel %vm136, %v121, 0
  %v408 = vsel %vm136, %v122, 0
  %v411 = vsel %vm136, %v123, 0
  %v414 = vsel %vm136, %v124, 0
  %v417 = vsel %vm136, %v125, 0
  %v420 = vsel %vm136, %v126, 0
  %v423 = vsel %vm136, %v127, 0
  %425 = vmatprep.subr.mxu0 0.0
  %426 = vmatpush1.msra.mxu0 0.0
  %427 = vmatprep.subr.mxu0 0.0
  %428 = vmatpush1.msra.mxu0 0.0
  %429 = vmatprep.subr.mxu0 0.0
  %430 = vmatpush1.msra.mxu0 0.0
  %431 = vmatprep.subr.mxu0 0.0
  %432 = vmatpush1.msra.mxu0 0.0
  %433 = vmatprep.subr.mxu0 0.0
  %434 = vmatpush1.msra.mxu0 0.0
  %435 = vmatprep.subr.mxu0 0.0
  %436 = vmatpush1.msra.mxu0 0.0
  %437 = vmatprep.subr.mxu0 0.0
  %438 = vmatpush1.msra.mxu0 0.0
  %439 = vmatprep.subr.mxu0 0.0
  %440 = vmatpush1.msra.mxu0 0.0
  %441 = vmatprep.subr.mxu0 0.0
  %442 = vmatpush1.msra.mxu0 0.0
  %443 = vmatprep.subr.mxu0 0.0
  %444 = vmatpush1.msra.mxu0 0.0
  %445 = vmatprep.subr.mxu0 0.0
  %446 = vmatpush1.msra.mxu0 0.0
  %447 = vmatprep.subr.mxu0 0.0
  %448 = vmatpush1.msra.mxu0 0.0
  %449 = vmatprep.subr.mxu0 0.0
  %450 = vmatpush1.msra.mxu0 0.0
  %451 = vmatprep.subr.mxu0 0.0
  %452 = vmatpush1.msra.mxu0 0.0
  %453 = vmatprep.subr.mxu0 0.0
  %454 = vmatpush1.msra.mxu0 0.0
  %455 = vmatprep.subr.mxu0 0.0
  %456 = vmatpush1.msra.mxu0 %v128
  %457 = vmatprep.subr.mxu0 0.0
  %458 = vmatpush2.msra.mxu0 0.0
  %459 = vmatprep.subr.mxu0 0.0
  %460 = vmatpush2.msra.mxu0 0.0
  %461 = vmatprep.subr.mxu0 0.0
  %462 = vmatpush2.msra.mxu0 0.0
  %463 = vmatprep.subr.mxu0 0.0
  %464 = vmatpush2.msra.mxu0 0.0
  %465 = vmatprep.subr.mxu0 0.0
  %466 = vmatpush2.msra.mxu0 0.0
  %467 = vmatprep.subr.mxu0 0.0
  %468 = vmatpush2.msra.mxu0 0.0
  %469 = vmatprep.subr.mxu0 0.0
  %470 = vmatpush2.msra.mxu0 0.0
  %471 = vmatprep.subr.mxu0 0.0
  %472 = vmatpush2.msra.mxu0 0.0
  %473 = vmatprep.subr.mxu0 0.0
  %474 = vmatpush2.msra.mxu0 0.0
  %475 = vmatprep.subr.mxu0 0.0
  %476 = vmatpush2.msra.mxu0 0.0
  %477 = vmatprep.subr.mxu0 0.0
  %478 = vmatpush2.msra.mxu0 0.0
  %479 = vmatprep.subr.mxu0 0.0
  %480 = vmatpush2.msra.mxu0 0.0
  %481 = vmatprep.subr.mxu0 0.0
  %482 = vmatpush2.msra.mxu0 0.0
  %483 = vmatprep.subr.mxu0 0.0
  %484 = vmatpush2.msra.mxu0 0.0
  %485 = vmatprep.subr.mxu0 0.0
  %486 = vmatpush2.msra.mxu0 0.0
  %487 = vmatprep.subr.mxu0 0.0
  %488 = vmatpush2.msra.mxu0 0.0
  %489 = vmatprep.mubr.f32.mxu0 0.0
  %490 = vmatmul.mubr.f32.gmra.mxu0 %v138
  %v491 = vpop.f32.mrf.mxu0
  %v492 = vadd.f32 %v134, %v491
  %v493 = vpop.f32.mrf.mxu0
  %494 = vmatprep.mubr.f32.mxu0 0.0
  %495 = vmatmul.mubr.f32.gmra.mxu0 %v141
  %v496 = vpop.f32.mrf.mxu0
  %v497 = vadd.f32 %v134, %v496
  %v498 = vpop.f32.mrf.mxu0
  %499 = vmatprep.mubr.f32.mxu0 0.0
  %500 = vmatmul.mubr.f32.gmra.mxu0 %v144
  %v501 = vpop.f32.mrf.mxu0
  %v502 = vadd.f32 %v134, %v501
  %v503 = vpop.f32.mrf.mxu0
  %504 = vmatprep.mubr.f32.mxu0 0.0
  %505 = vmatmul.mubr.f32.gmra.mxu0 %v147
  %v506 = vpop.f32.mrf.mxu0
  %v507 = vadd.f32 %v134, %v506
  %v508 = vpop.f32.mrf.mxu0
  %509 = vmatprep.mubr.f32.mxu0 0.0
  %510 = vmatmul.mubr.f32.gmra.mxu0 %v150
  %v511 = vpop.f32.mrf.mxu0
  %v512 = vadd.f32 %v134, %v511
  %v513 = vpop.f32.mrf.mxu0
  %514 = vmatprep.mubr.f32.mxu0 0.0
  %515 = vmatmul.mubr.f32.gmra.mxu0 %v153
  %v516 = vpop.f32.mrf.mxu0
  %v517 = vadd.f32 %v134, %v516
  %v518 = vpop.f32.mrf.mxu0
  %519 = vmatprep.mubr.f32.mxu0 0.0
  %520 = vmatmul.mubr.f32.gmra.mxu0 %v156
  %v521 = vpop.f32.mrf.mxu0
  %v522 = vadd.f32 %v134, %v521
  %v523 = vpop.f32.mrf.mxu0
  %524 = vmatprep.mubr.f32.mxu0 0.0
  %525 = vmatmul.mubr.f32.gmra.mxu0 %v159
  %v526 = vpop.f32.mrf.mxu0
  %v527 = vadd.f32 %v134, %v526
  %v528 = vpop.f32.mrf.mxu0
  %529 = vmatprep.mubr.f32.mxu0 0.0
  %530 = vmatmul.mubr.f32.gmra.mxu0 %v162
  %v531 = vpop.f32.mrf.mxu0
  %v532 = vadd.f32 %v134, %v531
  %v533 = vpop.f32.mrf.mxu0
  %534 = vmatprep.mubr.f32.mxu0 0.0
  %535 = vmatmul.mubr.f32.gmra.mxu0 %v165
  %v536 = vpop.f32.mrf.mxu0
  %v537 = vadd.f32 %v134, %v536
  %v538 = vpop.f32.mrf.mxu0
  %539 = vmatprep.mubr.f32.mxu0 0.0
  %540 = vmatmul.mubr.f32.gmra.mxu0 %v168
  %v541 = vpop.f32.mrf.mxu0
  %v542 = vadd.f32 %v134, %v541
  %v543 = vpop.f32.mrf.mxu0
  %544 = vmatprep.mubr.f32.mxu0 0.0
  %545 = vmatmul.mubr.f32.gmra.mxu0 %v171
  %v546 = vpop.f32.mrf.mxu0
  %v547 = vadd.f32 %v134, %v546
  %v548 = vpop.f32.mrf.mxu0
  %549 = vmatprep.mubr.f32.mxu0 0.0
  %550 = vmatmul.mubr.f32.gmra.mxu0 %v174
  %v551 = vpop.f32.mrf.mxu0
  %v552 = vadd.f32 %v134, %v551
  %v553 = vpop.f32.mrf.mxu0
  %554 = vmatprep.mubr.f32.mxu0 0.0
  %555 = vmatmul.mubr.f32.gmra.mxu0 %v177
  %v556 = vpop.f32.mrf.mxu0
  %v557 = vadd.f32 %v134, %v556
  %v558 = vpop.f32.mrf.mxu0
  %559 = vmatprep.mubr.f32.mxu0 0.0
  %560 = vmatmul.mubr.f32.gmra.mxu0 %v180
  %v561 = vpop.f32.mrf.mxu0
  %v562 = vadd.f32 %v134, %v561
  %v563 = vpop.f32.mrf.mxu0
  %564 = vmatprep.mubr.f32.mxu0 0.0
  %565 = vmatmul.mubr.f32.gmra.mxu0 %v183
  %v566 = vpop.f32.mrf.mxu0
  %v567 = vadd.f32 %v134, %v566
  %v568 = vpop.f32.mrf.mxu0
  %569 = vmatprep.mubr.f32.mxu0 0.0
  %570 = vmatmul.mubr.f32.gmra.mxu0 %v186
  %v571 = vpop.f32.mrf.mxu0
  %v572 = vadd.f32 %v134, %v571
  %v573 = vpop.f32.mrf.mxu0
  %574 = vmatprep.mubr.f32.mxu0 0.0
  %575 = vmatmul.mubr.f32.gmra.mxu0 %v189
  %v576 = vpop.f32.mrf.mxu0
  %v577 = vadd.f32 %v134, %v576
  %v578 = vpop.f32.mrf.mxu0
  %579 = vmatprep.mubr.f32.mxu0 0.0
  %580 = vmatmul.mubr.f32.gmra.mxu0 %v192
  %v581 = vpop.f32.mrf.mxu0
  %v582 = vadd.f32 %v134, %v581
  %v583 = vpop.f32.mrf.mxu0
  %584 = vmatprep.mubr.f32.mxu0 0.0
  %585 = vmatmul.mubr.f32.gmra.mxu0 %v195
  %v586 = vpop.f32.mrf.mxu0
  %v587 = vadd.f32 %v134, %v586
  %v588 = vpop.f32.mrf.mxu0
  %589 = vmatprep.mubr.f32.mxu0 0.0
  %590 = vmatmul.mubr.f32.gmra.mxu0 %v198
  %v591 = vpop.f32.mrf.mxu0
  %v592 = vadd.f32 %v134, %v591
  %v593 = vpop.f32.mrf.mxu0
  %594 = vmatprep.mubr.f32.mxu0 0.0
  %595 = vmatmul.mubr.f32.gmra.mxu0 %v201
  %v596 = vpop.f32.mrf.mxu0
  %v597 = vadd.f32 %v134, %v596
  %v598 = vpop.f32.mrf.mxu0
  %599 = vmatprep.mubr.f32.mxu0 0.0
  %600 = vmatmul.mubr.f32.gmra.mxu0 %v204
  %v601 = vpop.f32.mrf.mxu0
  %v602 = vadd.f32 %v134, %v601
  %v603 = vpop.f32.mrf.mxu0
  %604 = vmatprep.mubr.f32.mxu0 0.0
  %605 = vmatmul.mubr.f32.gmra.mxu0 %v207
  %v606 = vpop.f32.mrf.mxu0
  %v607 = vadd.f32 %v134, %v606
  %v608 = vpop.f32.mrf.mxu0
  %609 = vmatprep.mubr.f32.mxu0 0.0
  %610 = vmatmul.mubr.f32.gmra.mxu0 %v210
  %v611 = vpop.f32.mrf.mxu0
  %v612 = vadd.f32 %v134, %v611
  %v613 = vpop.f32.mrf.mxu0
  %614 = vmatprep.mubr.f32.mxu0 0.0
  %615 = vmatmul.mubr.f32.gmra.mxu0 %v213
  %v616 = vpop.f32.mrf.mxu0
  %v617 = vadd.f32 %v134, %v616
  %v618 = vpop.f32.mrf.mxu0
  %619 = vmatprep.mubr.f32.mxu0 0.0
  %620 = vmatmul.mubr.f32.gmra.mxu0 %v216
  %v621 = vpop.f32.mrf.mxu0
  %v622 = vadd.f32 %v134, %v621
  %v623 = vpop.f32.mrf.mxu0
  %624 = vmatprep.mubr.f32.mxu0 0.0
  %625 = vmatmul.mubr.f32.gmra.mxu0 %v219
  %v626 = vpop.f32.mrf.mxu0
  %v627 = vadd.f32 %v134, %v626
  %v628 = vpop.f32.mrf.mxu0
  %629 = vmatprep.mubr.f32.mxu0 0.0
  %630 = vmatmul.mubr.f32.gmra.mxu0 %v222
  %v631 = vpop.f32.mrf.mxu0
  %v632 = vadd.f32 %v134, %v631
  %v633 = vpop.f32.mrf.mxu0
  %634 = vmatprep.mubr.f32.mxu0 0.0
  %635 = vmatmul.mubr.f32.gmra.mxu0 %v225
  %v636 = vpop.f32.mrf.mxu0
  %v637 = vadd.f32 %v134, %v636
  %v638 = vpop.f32.mrf.mxu0
  %639 = vmatprep.mubr.f32.mxu0 0.0
  %640 = vmatmul.mubr.f32.gmra.mxu0 %v228
  %v641 = vpop.f32.mrf.mxu0
  %v642 = vadd.f32 %v134, %v641
  %v643 = vpop.f32.mrf.mxu0
  %644 = vmatprep.mubr.f32.mxu0 0.0
  %645 = vmatmul.mubr.f32.gmra.mxu0 %v231
  %v646 = vpop.f32.mrf.mxu0
  %v647 = vadd.f32 %v134, %v646
  %v648 = vpop.f32.mrf.mxu0
  %649 = vmatprep.mubr.f32.mxu0 0.0
  %650 = vmatmul.mubr.f32.gmra.mxu0 %v234
  %v651 = vpop.f32.mrf.mxu0
  %v652 = vadd.f32 %v134, %v651
  %v653 = vpop.f32.mrf.mxu0
  %654 = vmatprep.mubr.f32.mxu0 0.0
  %655 = vmatmul.mubr.f32.gmra.mxu0 %v237
  %v656 = vpop.f32.mrf.mxu0
  %v657 = vadd.f32 %v134, %v656
  %v658 = vpop.f32.mrf.mxu0
  %659 = vmatprep.mubr.f32.mxu0 0.0
  %660 = vmatmul.mubr.f32.gmra.mxu0 %v240
  %v661 = vpop.f32.mrf.mxu0
  %v662 = vadd.f32 %v134, %v661
  %v663 = vpop.f32.mrf.mxu0
  %664 = vmatprep.mubr.f32.mxu0 0.0
  %665 = vmatmul.mubr.f32.gmra.mxu0 %v243
  %v666 = vpop.f32.mrf.mxu0
  %v667 = vadd.f32 %v134, %v666
  %v668 = vpop.f32.mrf.mxu0
  %669 = vmatprep.mubr.f32.mxu0 0.0
  %670 = vmatmul.mubr.f32.gmra.mxu0 %v246
  %v671 = vpop.f32.mrf.mxu0
  %v672 = vadd.f32 %v134, %v671
  %v673 = vpop.f32.mrf.mxu0
  %674 = vmatprep.mubr.f32.mxu0 0.0
  %675 = vmatmul.mubr.f32.gmra.mxu0 %v249
  %v676 = vpop.f32.mrf.mxu0
  %v677 = vadd.f32 %v134, %v676
  %v678 = vpop.f32.mrf.mxu0
  %679 = vmatprep.mubr.f32.mxu0 0.0
  %680 = vmatmul.mubr.f32.gmra.mxu0 %v252
  %v681 = vpop.f32.mrf.mxu0
  %v682 = vadd.f32 %v134, %v681
  %v683 = vpop.f32.mrf.mxu0
  %684 = vmatprep.mubr.f32.mxu0 0.0
  %685 = vmatmul.mubr.f32.gmra.mxu0 %v255
  %v686 = vpop.f32.mrf.mxu0
  %v687 = vadd.f32 %v134, %v686
  %v688 = vpop.f32.mrf.mxu0
  %689 = vmatprep.mubr.f32.mxu0 0.0
  %690 = vmatmul.mubr.f32.gmra.mxu0 %v258
  %v691 = vpop.f32.mrf.mxu0
  %v692 = vadd.f32 %v134, %v691
  %v693 = vpop.f32.mrf.mxu0
  %694 = vmatprep.mubr.f32.mxu0 0.0
  %695 = vmatmul.mubr.f32.gmra.mxu0 %v261
  %v696 = vpop.f32.mrf.mxu0
  %v697 = vadd.f32 %v134, %v696
  %v698 = vpop.f32.mrf.mxu0
  %699 = vmatprep.mubr.f32.mxu0 0.0
  %700 = vmatmul.mubr.f32.gmra.mxu0 %v264
  %v701 = vpop.f32.mrf.mxu0
  %v702 = vadd.f32 %v134, %v701
  %v703 = vpop.f32.mrf.mxu0
  %704 = vmatprep.mubr.f32.mxu0 0.0
  %705 = vmatmul.mubr.f32.gmra.mxu0 %v267
  %v706 = vpop.f32.mrf.mxu0
  %v707 = vadd.f32 %v134, %v706
  %v708 = vpop.f32.mrf.mxu0
  %709 = vmatprep.mubr.f32.mxu0 0.0
  %710 = vmatmul.mubr.f32.gmra.mxu0 %v270
  %v711 = vpop.f32.mrf.mxu0
  %v712 = vadd.f32 %v134, %v711
  %v713 = vpop.f32.mrf.mxu0
  %714 = vmatprep.mubr.f32.mxu0 0.0
  %715 = vmatmul.mubr.f32.gmra.mxu0 %v273
  %v716 = vpop.f32.mrf.mxu0
  %v717 = vadd.f32 %v134, %v716
  %v718 = vpop.f32.mrf.mxu0
  %719 = vmatprep.mubr.f32.mxu0 0.0
  %720 = vmatmul.mubr.f32.gmra.mxu0 %v276
  %v721 = vpop.f32.mrf.mxu0
  %v722 = vadd.f32 %v134, %v721
  %v723 = vpop.f32.mrf.mxu0
  %724 = vmatprep.mubr.f32.mxu0 0.0
  %725 = vmatmul.mubr.f32.gmra.mxu0 %v279
  %v726 = vpop.f32.mrf.mxu0
  %v727 = vadd.f32 %v134, %v726
  %v728 = vpop.f32.mrf.mxu0
  %729 = vmatprep.mubr.f32.mxu0 0.0
  %730 = vmatmul.mubr.f32.gmra.mxu0 %v282
  %v731 = vpop.f32.mrf.mxu0
  %v732 = vadd.f32 %v134, %v731
  %v733 = vpop.f32.mrf.mxu0
  %734 = vmatprep.mubr.f32.mxu0 0.0
  %735 = vmatmul.mubr.f32.gmra.mxu0 %v285
  %v736 = vpop.f32.mrf.mxu0
  %v737 = vadd.f32 %v134, %v736
  %v738 = vpop.f32.mrf.mxu0
  %739 = vmatprep.mubr.f32.mxu0 0.0
  %740 = vmatmul.mubr.f32.gmra.mxu0 %v288
  %v741 = vpop.f32.mrf.mxu0
  %v742 = vadd.f32 %v134, %v741
  %v743 = vpop.f32.mrf.mxu0
  %744 = vmatprep.mubr.f32.mxu0 0.0
  %745 = vmatmul.mubr.f32.gmra.mxu0 %v291
  %v746 = vpop.f32.mrf.mxu0
  %v747 = vadd.f32 %v134, %v746
  %v748 = vpop.f32.mrf.mxu0
  %749 = vmatprep.mubr.f32.mxu0 0.0
  %750 = vmatmul.mubr.f32.gmra.mxu0 %v294
  %v751 = vpop.f32.mrf.mxu0
  %v752 = vadd.f32 %v134, %v751
  %v753 = vpop.f32.mrf.mxu0
  %754 = vmatprep.mubr.f32.mxu0 0.0
  %755 = vmatmul.mubr.f32.gmra.mxu0 %v297
  %v756 = vpop.f32.mrf.mxu0
  %v757 = vadd.f32 %v134, %v756
  %v758 = vpop.f32.mrf.mxu0
  %759 = vmatprep.mubr.f32.mxu0 0.0
  %760 = vmatmul.mubr.f32.gmra.mxu0 %v300
  %v761 = vpop.f32.mrf.mxu0
  %v762 = vadd.f32 %v134, %v761
  %v763 = vpop.f32.mrf.mxu0
  %764 = vmatprep.mubr.f32.mxu0 0.0
  %765 = vmatmul.mubr.f32.gmra.mxu0 %v303
  %v766 = vpop.f32.mrf.mxu0
  %v767 = vadd.f32 %v134, %v766
  %v768 = vpop.f32.mrf.mxu0
  %769 = vmatprep.mubr.f32.mxu0 0.0
  %770 = vmatmul.mubr.f32.gmra.mxu0 %v306
  %v771 = vpop.f32.mrf.mxu0
  %v772 = vadd.f32 %v134, %v771
  %v773 = vpop.f32.mrf.mxu0
  %774 = vmatprep.mubr.f32.mxu0 0.0
  %775 = vmatmul.mubr.f32.gmra.mxu0 %v309
  %v776 = vpop.f32.mrf.mxu0
  %v777 = vadd.f32 %v134, %v776
  %v778 = vpop.f32.mrf.mxu0
  %779 = vmatprep.mubr.f32.mxu0 0.0
  %780 = vmatmul.mubr.f32.gmra.mxu0 %v312
  %v781 = vpop.f32.mrf.mxu0
  %v782 = vadd.f32 %v134, %v781
  %v783 = vpop.f32.mrf.mxu0
  %784 = vmatprep.mubr.f32.mxu0 0.0
  %785 = vmatmul.mubr.f32.gmra.mxu0 %v315
  %v786 = vpop.f32.mrf.mxu0
  %v787 = vadd.f32 %v134, %v786
  %v788 = vpop.f32.mrf.mxu0
  %789 = vmatprep.mubr.f32.mxu0 0.0
  %790 = vmatmul.mubr.f32.gmra.mxu0 %v318
  %v791 = vpop.f32.mrf.mxu0
  %v792 = vadd.f32 %v134, %v791
  %v793 = vpop.f32.mrf.mxu0
  %794 = vmatprep.mubr.f32.mxu0 0.0
  %795 = vmatmul.mubr.f32.gmra.mxu0 %v321
  %v796 = vpop.f32.mrf.mxu0
  %v797 = vadd.f32 %v134, %v796
  %v798 = vpop.f32.mrf.mxu0
  %799 = vmatprep.mubr.f32.mxu0 0.0
  %800 = vmatmul.mubr.f32.gmra.mxu0 %v324
  %v801 = vpop.f32.mrf.mxu0
  %v802 = vadd.f32 %v134, %v801
  %v803 = vpop.f32.mrf.mxu0
  %804 = vmatprep.mubr.f32.mxu0 0.0
  %805 = vmatmul.mubr.f32.gmra.mxu0 %v327
  %v806 = vpop.f32.mrf.mxu0
  %v807 = vadd.f32 %v134, %v806
  %v808 = vpop.f32.mrf.mxu0
  %809 = vmatprep.mubr.f32.mxu0 0.0
  %810 = vmatmul.mubr.f32.gmra.mxu0 %v330
  %v811 = vpop.f32.mrf.mxu0
  %v812 = vadd.f32 %v134, %v811
  %v813 = vpop.f32.mrf.mxu0
  %814 = vmatprep.mubr.f32.mxu0 0.0
  %815 = vmatmul.mubr.f32.gmra.mxu0 %v333
  %v816 = vpop.f32.mrf.mxu0
  %v817 = vadd.f32 %v134, %v816
  %v818 = vpop.f32.mrf.mxu0
  %819 = vmatprep.mubr.f32.mxu0 0.0
  %820 = vmatmul.mubr.f32.gmra.mxu0 %v336
  %v821 = vpop.f32.mrf.mxu0
  %v822 = vadd.f32 %v134, %v821
  %v823 = vpop.f32.mrf.mxu0
  %824 = vmatprep.mubr.f32.mxu0 0.0
  %825 = vmatmul.mubr.f32.gmra.mxu0 %v339
  %v826 = vpop.f32.mrf.mxu0
  %v827 = vadd.f32 %v134, %v826
  %v828 = vpop.f32.mrf.mxu0
  %829 = vmatprep.mubr.f32.mxu0 0.0
  %830 = vmatmul.mubr.f32.gmra.mxu0 %v342
  %v831 = vpop.f32.mrf.mxu0
  %v832 = vadd.f32 %v134, %v831
  %v833 = vpop.f32.mrf.mxu0
  %834 = vmatprep.mubr.f32.mxu0 0.0
  %835 = vmatmul.mubr.f32.gmra.mxu0 %v345
  %v836 = vpop.f32.mrf.mxu0
  %v837 = vadd.f32 %v134, %v836
  %v838 = vpop.f32.mrf.mxu0
  %839 = vmatprep.mubr.f32.mxu0 0.0
  %840 = vmatmul.mubr.f32.gmra.mxu0 %v348
  %v841 = vpop.f32.mrf.mxu0
  %v842 = vadd.f32 %v134, %v841
  %v843 = vpop.f32.mrf.mxu0
  %844 = vmatprep.mubr.f32.mxu0 0.0
  %845 = vmatmul.mubr.f32.gmra.mxu0 %v351
  %v846 = vpop.f32.mrf.mxu0
  %v847 = vadd.f32 %v134, %v846
  %v848 = vpop.f32.mrf.mxu0
  %849 = vmatprep.mubr.f32.mxu0 0.0
  %850 = vmatmul.mubr.f32.gmra.mxu0 %v354
  %v851 = vpop.f32.mrf.mxu0
  %v852 = vadd.f32 %v134, %v851
  %v853 = vpop.f32.mrf.mxu0
  %854 = vmatprep.mubr.f32.mxu0 0.0
  %855 = vmatmul.mubr.f32.gmra.mxu0 %v357
  %v856 = vpop.f32.mrf.mxu0
  %v857 = vadd.f32 %v134, %v856
  %v858 = vpop.f32.mrf.mxu0
  %859 = vmatprep.mubr.f32.mxu0 0.0
  %860 = vmatmul.mubr.f32.gmra.mxu0 %v360
  %v861 = vpop.f32.mrf.mxu0
  %v862 = vadd.f32 %v134, %v861
  %v863 = vpop.f32.mrf.mxu0
  %864 = vmatprep.mubr.f32.mxu0 0.0
  %865 = vmatmul.mubr.f32.gmra.mxu0 %v363
  %v866 = vpop.f32.mrf.mxu0
  %v867 = vadd.f32 %v134, %v866
  %v868 = vpop.f32.mrf.mxu0
  %869 = vmatprep.mubr.f32.mxu0 0.0
  %870 = vmatmul.mubr.f32.gmra.mxu0 %v366
  %v871 = vpop.f32.mrf.mxu0
  %v872 = vadd.f32 %v134, %v871
  %v873 = vpop.f32.mrf.mxu0
  %874 = vmatprep.mubr.f32.mxu0 0.0
  %875 = vmatmul.mubr.f32.gmra.mxu0 %v369
  %v876 = vpop.f32.mrf.mxu0
  %v877 = vadd.f32 %v134, %v876
  %v878 = vpop.f32.mrf.mxu0
  %879 = vmatprep.mubr.f32.mxu0 0.0
  %880 = vmatmul.mubr.f32.gmra.mxu0 %v372
  %v881 = vpop.f32.mrf.mxu0
  %v882 = vadd.f32 %v134, %v881
  %v883 = vpop.f32.mrf.mxu0
  %884 = vmatprep.mubr.f32.mxu0 0.0
  %885 = vmatmul.mubr.f32.gmra.mxu0 %v375
  %v886 = vpop.f32.mrf.mxu0
  %v887 = vadd.f32 %v134, %v886
  %v888 = vpop.f32.mrf.mxu0
  %889 = vmatprep.mubr.f32.mxu0 0.0
  %890 = vmatmul.mubr.f32.gmra.mxu0 %v378
  %v891 = vpop.f32.mrf.mxu0
  %v892 = vadd.f32 %v134, %v891
  %v893 = vpop.f32.mrf.mxu0
  %894 = vmatprep.mubr.f32.mxu0 0.0
  %895 = vmatmul.mubr.f32.gmra.mxu0 %v381
  %v896 = vpop.f32.mrf.mxu0
  %v897 = vadd.f32 %v134, %v896
  %v898 = vpop.f32.mrf.mxu0
  %899 = vmatprep.mubr.f32.mxu0 0.0
  %900 = vmatmul.mubr.f32.gmra.mxu0 %v384
  %v901 = vpop.f32.mrf.mxu0
  %v902 = vadd.f32 %v134, %v901
  %v903 = vpop.f32.mrf.mxu0
  %904 = vmatprep.mubr.f32.mxu0 0.0
  %905 = vmatmul.mubr.f32.gmra.mxu0 %v387
  %v906 = vpop.f32.mrf.mxu0
  %v907 = vadd.f32 %v134, %v906
  %v908 = vpop.f32.mrf.mxu0
  %909 = vmatprep.mubr.f32.mxu0 0.0
  %910 = vmatmul.mubr.f32.gmra.mxu0 %v390
  %v911 = vpop.f32.mrf.mxu0
  %v912 = vadd.f32 %v134, %v911
  %v913 = vpop.f32.mrf.mxu0
  %914 = vmatprep.mubr.f32.mxu0 0.0
  %915 = vmatmul.mubr.f32.gmra.mxu0 %v393
  %v916 = vpop.f32.mrf.mxu0
  %v917 = vadd.f32 %v134, %v916
  %v918 = vpop.f32.mrf.mxu0
  %919 = vmatprep.mubr.f32.mxu0 0.0
  %920 = vmatmul.mubr.f32.gmra.mxu0 %v396
  %v921 = vpop.f32.mrf.mxu0
  %v922 = vadd.f32 %v134, %v921
  %v923 = vpop.f32.mrf.mxu0
  %924 = vmatprep.mubr.f32.mxu0 0.0
  %925 = vmatmul.mubr.f32.gmra.mxu0 %v399
  %v926 = vpop.f32.mrf.mxu0
  %v927 = vadd.f32 %v134, %v926
  %v928 = vpop.f32.mrf.mxu0
  %929 = vmatprep.mubr.f32.mxu0 0.0
  %930 = vmatmul.mubr.f32.gmra.mxu0 %v402
  %v931 = vpop.f32.mrf.mxu0
  %v932 = vadd.f32 %v134, %v931
  %v933 = vpop.f32.mrf.mxu0
  %934 = vmatprep.mubr.f32.mxu0 0.0
  %935 = vmatmul.mubr.f32.gmra.mxu0 %v405
  %v936 = vpop.f32.mrf.mxu0
  %v937 = vadd.f32 %v134, %v936
  %v938 = vpop.f32.mrf.mxu0
  %939 = vmatprep.mubr.f32.mxu0 0.0
  %940 = vmatmul.mubr.f32.gmra.mxu0 %v408
  %v941 = vpop.f32.mrf.mxu0
  %v942 = vadd.f32 %v134, %v941
  %v943 = vpop.f32.mrf.mxu0
  %944 = vmatprep.mubr.f32.mxu0 0.0
  %945 = vmatmul.mubr.f32.gmra.mxu0 %v411
  %v946 = vpop.f32.mrf.mxu0
  %v947 = vadd.f32 %v134, %v946
  %v948 = vpop.f32.mrf.mxu0
  %949 = vmatprep.mubr.f32.mxu0 0.0
  %950 = vmatmul.mubr.f32.gmra.mxu0 %v414
  %v951 = vpop.f32.mrf.mxu0
  %v952 = vadd.f32 %v134, %v951
  %v953 = vpop.f32.mrf.mxu0
  %954 = vmatprep.mubr.f32.mxu0 0.0
  %955 = vmatmul.mubr.f32.gmra.mxu0 %v417
  %v956 = vpop.f32.mrf.mxu0
  %v957 = vadd.f32 %v134, %v956
  %v958 = vpop.f32.mrf.mxu0
  %959 = vmatprep.mubr.f32.mxu0 0.0
  %960 = vmatmul.mubr.f32.gmra.mxu0 %v420
  %v961 = vpop.f32.mrf.mxu0
  %v962 = vadd.f32 %v134, %v961
  %v963 = vpop.f32.mrf.mxu0
  %964 = vmatprep.mubr.f32.mxu0 0.0
  %965 = vmatmul.mubr.f32.gmra.mxu0 %v423
  %v966 = vpop.f32.mrf.mxu0
  %v967 = vadd.f32 %v134, %v966
  %v968 = vpop.f32.mrf.mxu0
  %969 = vdwg.mxu0
  %v970 = vmax.f32 %v492, 0.0
  %v971 = vmax.f32 %v497, 0.0
  %v972 = vmax.f32 %v502, 0.0
  %v973 = vmax.f32 %v507, 0.0
  %v974 = vmax.f32 %v512, 0.0
  %v975 = vmax.f32 %v517, 0.0
  %v976 = vmax.f32 %v522, 0.0
  %v977 = vmax.f32 %v527, 0.0
  %v978 = vmax.f32 %v532, 0.0
  %v979 = vmax.f32 %v537, 0.0
  %v980 = vmax.f32 %v542, 0.0
  %v981 = vmax.f32 %v547, 0.0
  %v982 = vmax.f32 %v552, 0.0
  %v983 = vmax.f32 %v557, 0.0
  %v984 = vmax.f32 %v562, 0.0
  %v985 = vmax.f32 %v567, 0.0
  %v986 = vmax.f32 %v572, 0.0
  %v987 = vmax.f32 %v577, 0.0
  %v988 = vmax.f32 %v582, 0.0
  %v989 = vmax.f32 %v587, 0.0
  %v990 = vmax.f32 %v592, 0.0
  %v991 = vmax.f32 %v597, 0.0
  %v992 = vmax.f32 %v602, 0.0
  %v993 = vmax.f32 %v607, 0.0
  %v994 = vmax.f32 %v612, 0.0
  %v995 = vmax.f32 %v617, 0.0
  %v996 = vmax.f32 %v622, 0.0
  %v997 = vmax.f32 %v627, 0.0
  %v998 = vmax.f32 %v632, 0.0
  %v999 = vmax.f32 %v637, 0.0
  %v1000 = vmax.f32 %v642, 0.0
  %v1001 = vmax.f32 %v647, 0.0
  %v1002 = vmax.f32 %v652, 0.0
  %v1003 = vmax.f32 %v657, 0.0
  %v1004 = vmax.f32 %v662, 0.0
  %v1005 = vmax.f32 %v667, 0.0
  %v1006 = vmax.f32 %v672, 0.0
  %v1007 = vmax.f32 %v677, 0.0
  %v1008 = vmax.f32 %v682, 0.0
  %v1009 = vmax.f32 %v687, 0.0
  %v1010 = vmax.f32 %v692, 0.0
  %v1011 = vmax.f32 %v697, 0.0
  %v1012 = vmax.f32 %v702, 0.0
  %v1013 = vmax.f32 %v707, 0.0
  %v1014 = vmax.f32 %v712, 0.0
  %v1015 = vmax.f32 %v717, 0.0
  %v1016 = vmax.f32 %v722, 0.0
  %v1017 = vmax.f32 %v727, 0.0
  %v1018 = vmax.f32 %v732, 0.0
  %v1019 = vmax.f32 %v737, 0.0
  %v1020 = vmax.f32 %v742, 0.0
  %v1021 = vmax.f32 %v747, 0.0
  %v1022 = vmax.f32 %v752, 0.0
  %v1023 = vmax.f32 %v757, 0.0
  %v1024 = vmax.f32 %v762, 0.0
  %v1025 = vmax.f32 %v767, 0.0
  %v1026 = vmax.f32 %v772, 0.0
  %v1027 = vmax.f32 %v777, 0.0
  %v1028 = vmax.f32 %v782, 0.0
  %v1029 = vmax.f32 %v787, 0.0
  %v1030 = vmax.f32 %v792, 0.0
  %v1031 = vmax.f32 %v797, 0.0
  %v1032 = vmax.f32 %v802, 0.0
  %v1033 = vmax.f32 %v807, 0.0
  %v1034 = vmax.f32 %v812, 0.0
  %v1035 = vmax.f32 %v817, 0.0
  %v1036 = vmax.f32 %v822, 0.0
  %v1037 = vmax.f32 %v827, 0.0
  %v1038 = vmax.f32 %v832, 0.0
  %v1039 = vmax.f32 %v837, 0.0
  %v1040 = vmax.f32 %v842, 0.0
  %v1041 = vmax.f32 %v847, 0.0
  %v1042 = vmax.f32 %v852, 0.0
  %v1043 = vmax.f32 %v857, 0.0
  %v1044 = vmax.f32 %v862, 0.0
  %v1045 = vmax.f32 %v867, 0.0
  %v1046 = vmax.f32 %v872, 0.0
  %v1047 = vmax.f32 %v877, 0.0
  %v1048 = vmax.f32 %v882, 0.0
  %v1049 = vmax.f32 %v887, 0.0
  %v1050 = vmax.f32 %v892, 0.0
  %v1051 = vmax.f32 %v897, 0.0
  %v1052 = vmax.f32 %v902, 0.0
  %v1053 = vmax.f32 %v907, 0.0
  %v1054 = vmax.f32 %v912, 0.0
  %v1055 = vmax.f32 %v917, 0.0
  %v1056 = vmax.f32 %v922, 0.0
  %v1057 = vmax.f32 %v927, 0.0
  %v1058 = vmax.f32 %v932, 0.0
  %v1059 = vmax.f32 %v937, 0.0
  %v1060 = vmax.f32 %v942, 0.0
  %v1061 = vmax.f32 %v947, 0.0
  %v1062 = vmax.f32 %v952, 0.0
  %v1063 = vmax.f32 %v957, 0.0
  %v1064 = vmax.f32 %v962, 0.0
  %v1065 = vmax.f32 %v967, 0.0
  %v1066 = vld [vmem:[%s1] sm:$0xff]
  %v1067 = vld [vmem:[%s1 + $0x8] sm:$0xff]
  %v1068 = vld [vmem:[%s1 + $0x10] sm:$0xff]
  %v1069 = vld [vmem:[%s1 + $0x18] sm:$0xff]
  %v1070 = vld [vmem:[%s1 + $0x20] sm:$0xff]
  %v1071 = vld [vmem:[%s1 + $0x28] sm:$0xff]
  %v1072 = vld [vmem:[%s1 + $0x30] sm:$0xf]
  %v1073 = vld [vmem:[%s1 + $0x38] sm:$0xf]
  %v1074 = vld [vmem:[%s1 + $0x40] sm:$0xf]
  %v1075 = vld [vmem:[%s1 + $0x48] sm:$0xf]
  %v1076 = vld [vmem:[%s1 + $0x50] sm:$0xf]
  %v1077 = vld [vmem:[%s1 + $0x58] sm:$0xf]
  %1078 = vmatprep.subr.mxu0 0.0
  %1079 = vmatpush1.msra.mxu0 %v985
  %1080 = vmatprep.subr.mxu0 0.0
  %1081 = vmatpush1.msra.mxu0 %v984
  %1082 = vmatprep.subr.mxu0 0.0
  %1083 = vmatpush1.msra.mxu0 %v983
  %1084 = vmatprep.subr.mxu0 0.0
  %1085 = vmatpush1.msra.mxu0 %v982
  %1086 = vmatprep.subr.mxu0 0.0
  %1087 = vmatpush1.msra.mxu0 %v981
  %1088 = vmatprep.subr.mxu0 0.0
  %1089 = vmatpush1.msra.mxu0 %v980
  %1090 = vmatprep.subr.mxu0 0.0
  %1091 = vmatpush1.msra.mxu0 %v979
  %1092 = vmatprep.subr.mxu0 0.0
  %1093 = vmatpush1.msra.mxu0 %v978
  %1094 = vmatprep.subr.mxu0 0.0
  %1095 = vmatpush1.msra.mxu0 %v977
  %1096 = vmatprep.subr.mxu0 0.0
  %1097 = vmatpush1.msra.mxu0 %v976
  %1098 = vmatprep.subr.mxu0 0.0
  %1099 = vmatpush1.msra.mxu0 %v975
  %1100 = vmatprep.subr.mxu0 0.0
  %1101 = vmatpush1.msra.mxu0 %v974
  %1102 = vmatprep.subr.mxu0 0.0
  %1103 = vmatpush1.msra.mxu0 %v973
  %1104 = vmatprep.subr.mxu0 0.0
  %1105 = vmatpush1.msra.mxu0 %v972
  %1106 = vmatprep.subr.mxu0 0.0
  %1107 = vmatpush1.msra.mxu0 %v971
  %1108 = vmatprep.subr.mxu0 0.0
  %1109 = vmatpush1.msra.mxu0 %v970
  %1110 = vmatprep.subr.mxu0 0.0
  %1111 = vmatpush2.msra.mxu0 %v1001
  %1112 = vmatprep.subr.mxu0 0.0
  %1113 = vmatpush2.msra.mxu0 %v1000
  %1114 = vmatprep.subr.mxu0 0.0
  %1115 = vmatpush2.msra.mxu0 %v999
  %1116 = vmatprep.subr.mxu0 0.0
  %1117 = vmatpush2.msra.mxu0 %v998
  %1118 = vmatprep.subr.mxu0 0.0
  %1119 = vmatpush2.msra.mxu0 %v997
  %1120 = vmatprep.subr.mxu0 0.0
  %1121 = vmatpush2.msra.mxu0 %v996
  %1122 = vmatprep.subr.mxu0 0.0
  %1123 = vmatpush2.msra.mxu0 %v995
  %1124 = vmatprep.subr.mxu0 0.0
  %1125 = vmatpush2.msra.mxu0 %v994
  %1126 = vmatprep.subr.mxu0 0.0
  %1127 = vmatpush2.msra.mxu0 %v993
  %1128 = vmatprep.subr.mxu0 0.0
  %1129 = vmatpush2.msra.mxu0 %v992
  %1130 = vmatprep.subr.mxu0 0.0
  %1131 = vmatpush2.msra.mxu0 %v991
  %1132 = vmatprep.subr.mxu0 0.0
  %1133 = vmatpush2.msra.mxu0 %v990
  %1134 = vmatprep.subr.mxu0 0.0
  %1135 = vmatpush2.msra.mxu0 %v989
  %1136 = vmatprep.subr.mxu0 0.0
  %1137 = vmatpush2.msra.mxu0 %v988
  %1138 = vmatprep.subr.mxu0 0.0
  %1139 = vmatpush2.msra.mxu0 %v987
  %1140 = vmatprep.subr.mxu0 0.0
  %1141 = vmatpush2.msra.mxu0 %v986
  %1142 = vmatprep.mubr.f32.mxu0 %v1067
  %1143 = vmatmul.mubr.f32.gmra.mxu0 %v1066
  %v1144 = vpop.f32.mrf.mxu0
  %v1145 = vadd.f32 0.0, %v1144
  %v1146 = vpop.f32.mrf.mxu0
  %1147 = vmatprep.mubr.f32.mxu0 %v1073
  %1148 = vmatmul.mubr.f32.gmra.mxu0 %v1072
  %v1149 = vpop.f32.mrf.mxu0
  %v1150 = vadd.f32 0.0, %v1149
  %v1151 = vpop.f32.mrf.mxu0
  %1152 = vdwg.mxu0
  %1153 = vmatprep.subr.mxu0 0.0
  %1154 = vmatpush1.msra.mxu0 %v1017
  %1155 = vmatprep.subr.mxu0 0.0
  %1156 = vmatpush1.msra.mxu0 %v1016
  %1157 = vmatprep.subr.mxu0 0.0
  %1158 = vmatpush1.msra.mxu0 %v1015
  %1159 = vmatprep.subr.mxu0 0.0
  %1160 = vmatpush1.msra.mxu0 %v1014
  %1161 = vmatprep.subr.mxu0 0.0
  %1162 = vmatpush1.msra.mxu0 %v1013
  %1163 = vmatprep.subr.mxu0 0.0
  %1164 = vmatpush1.msra.mxu0 %v1012
  %1165 = vmatprep.subr.mxu0 0.0
  %1166 = vmatpush1.msra.mxu0 %v1011
  %1167 = vmatprep.subr.mxu0 0.0
  %1168 = vmatpush1.msra.mxu0 %v1010
  %1169 = vmatprep.subr.mxu0 0.0
  %1170 = vmatpush1.msra.mxu0 %v1009
  %1171 = vmatprep.subr.mxu0 0.0
  %1172 = vmatpush1.msra.mxu0 %v1008
  %1173 = vmatprep.subr.mxu0 0.0
  %1174 = vmatpush1.msra.mxu0 %v1007
  %1175 = vmatprep.subr.mxu0 0.0
  %1176 = vmatpush1.msra.mxu0 %v1006
  %1177 = vmatprep.subr.mxu0 0.0
  %1178 = vmatpush1.msra.mxu0 %v1005
  %1179 = vmatprep.subr.mxu0 0.0
  %1180 = vmatpush1.msra.mxu0 %v1004
  %1181 = vmatprep.subr.mxu0 0.0
  %1182 = vmatpush1.msra.mxu0 %v1003
  %1183 = vmatprep.subr.mxu0 0.0
  %1184 = vmatpush1.msra.mxu0 %v1002
  %1185 = vmatprep.subr.mxu0 0.0
  %1186 = vmatpush2.msra.mxu0 %v1033
  %1187 = vmatprep.subr.mxu0 0.0
  %1188 = vmatpush2.msra.mxu0 %v1032
  %1189 = vmatprep.subr.mxu0 0.0
  %1190 = vmatpush2.msra.mxu0 %v1031
  %1191 = vmatprep.subr.mxu0 0.0
  %1192 = vmatpush2.msra.mxu0 %v1030
  %1193 = vmatprep.subr.mxu0 0.0
  %1194 = vmatpush2.msra.mxu0 %v1029
  %1195 = vmatprep.subr.mxu0 0.0
  %1196 = vmatpush2.msra.mxu0 %v1028
  %1197 = vmatprep.subr.mxu0 0.0
  %1198 = vmatpush2.msra.mxu0 %v1027
  %1199 = vmatprep.subr.mxu0 0.0
  %1200 = vmatpush2.msra.mxu0 %v1026
  %1201 = vmatprep.subr.mxu0 0.0
  %1202 = vmatpush2.msra.mxu0 %v1025
  %1203 = vmatprep.subr.mxu0 0.0
  %1204 = vmatpush2.msra.mxu0 %v1024
  %1205 = vmatprep.subr.mxu0 0.0
  %1206 = vmatpush2.msra.mxu0 %v1023
  %1207 = vmatprep.subr.mxu0 0.0
  %1208 = vmatpush2.msra.mxu0 %v1022
  %1209 = vmatprep.subr.mxu0 0.0
  %1210 = vmatpush2.msra.mxu0 %v1021
  %1211 = vmatprep.subr.mxu0 0.0
  %1212 = vmatpush2.msra.mxu0 %v1020
  %1213 = vmatprep.subr.mxu0 0.0
  %1214 = vmatpush2.msra.mxu0 %v1019
  %1215 = vmatprep.subr.mxu0 0.0
  %1216 = vmatpush2.msra.mxu0 %v1018
  %1217 = vmatprep.mubr.f32.mxu0 %v1069
  %1218 = vmatmul.mubr.f32.gmra.mxu0 %v1068
  %v1219 = vpop.f32.mrf.mxu0
  %v1220 = vadd.f32 %v1145, %v1219
  %v1221 = vpop.f32.mrf.mxu0
  %1222 = vmatprep.mubr.f32.mxu0 %v1075
  %1223 = vmatmul.mubr.f32.gmra.mxu0 %v1074
  %v1224 = vpop.f32.mrf.mxu0
  %v1225 = vadd.f32 %v1150, %v1224
  %v1226 = vpop.f32.mrf.mxu0
  %1227 = vdwg.mxu0
  %1228 = vmatprep.subr.mxu0 0.0
  %1229 = vmatpush1.msra.mxu0 %v1049
  %1230 = vmatprep.subr.mxu0 0.0
  %1231 = vmatpush1.msra.mxu0 %v1048
  %1232 = vmatprep.subr.mxu0 0.0
  %1233 = vmatpush1.msra.mxu0 %v1047
  %1234 = vmatprep.subr.mxu0 0.0
  %1235 = vmatpush1.msra.mxu0 %v1046
  %1236 = vmatprep.subr.mxu0 0.0
  %1237 = vmatpush1.msra.mxu0 %v1045
  %1238 = vmatprep.subr.mxu0 0.0
  %1239 = vmatpush1.msra.mxu0 %v1044
  %1240 = vmatprep.subr.mxu0 0.0
  %1241 = vmatpush1.msra.mxu0 %v1043
  %1242 = vmatprep.subr.mxu0 0.0
  %1243 = vmatpush1.msra.mxu0 %v1042
  %1244 = vmatprep.subr.mxu0 0.0
  %1245 = vmatpush1.msra.mxu0 %v1041
  %1246 = vmatprep.subr.mxu0 0.0
  %1247 = vmatpush1.msra.mxu0 %v1040
  %1248 = vmatprep.subr.mxu0 0.0
  %1249 = vmatpush1.msra.mxu0 %v1039
  %1250 = vmatprep.subr.mxu0 0.0
  %1251 = vmatpush1.msra.mxu0 %v1038
  %1252 = vmatprep.subr.mxu0 0.0
  %1253 = vmatpush1.msra.mxu0 %v1037
  %1254 = vmatprep.subr.mxu0 0.0
  %1255 = vmatpush1.msra.mxu0 %v1036
  %1256 = vmatprep.subr.mxu0 0.0
  %1257 = vmatpush1.msra.mxu0 %v1035
  %1258 = vmatprep.subr.mxu0 0.0
  %1259 = vmatpush1.msra.mxu0 %v1034
  %1260 = vmatprep.subr.mxu0 0.0
  %1261 = vmatpush2.msra.mxu0 %v1065
  %1262 = vmatprep.subr.mxu0 0.0
  %1263 = vmatpush2.msra.mxu0 %v1064
  %1264 = vmatprep.subr.mxu0 0.0
  %1265 = vmatpush2.msra.mxu0 %v1063
  %1266 = vmatprep.subr.mxu0 0.0
  %1267 = vmatpush2.msra.mxu0 %v1062
  %1268 = vmatprep.subr.mxu0 0.0
  %1269 = vmatpush2.msra.mxu0 %v1061
  %1270 = vmatprep.subr.mxu0 0.0
  %1271 = vmatpush2.msra.mxu0 %v1060
  %1272 = vmatprep.subr.mxu0 0.0
  %1273 = vmatpush2.msra.mxu0 %v1059
  %1274 = vmatprep.subr.mxu0 0.0
  %1275 = vmatpush2.msra.mxu0 %v1058
  %1276 = vmatprep.subr.mxu0 0.0
  %1277 = vmatpush2.msra.mxu0 %v1057
  %1278 = vmatprep.subr.mxu0 0.0
  %1279 = vmatpush2.msra.mxu0 %v1056
  %1280 = vmatprep.subr.mxu0 0.0
  %1281 = vmatpush2.msra.mxu0 %v1055
  %1282 = vmatprep.subr.mxu0 0.0
  %1283 = vmatpush2.msra.mxu0 %v1054
  %1284 = vmatprep.subr.mxu0 0.0
  %1285 = vmatpush2.msra.mxu0 %v1053
  %1286 = vmatprep.subr.mxu0 0.0
  %1287 = vmatpush2.msra.mxu0 %v1052
  %1288 = vmatprep.subr.mxu0 0.0
  %1289 = vmatpush2.msra.mxu0 %v1051
  %1290 = vmatprep.subr.mxu0 0.0
  %1291 = vmatpush2.msra.mxu0 %v1050
  %1292 = vmatprep.mubr.f32.mxu0 %v1071
  %1293 = vmatmul.mubr.f32.gmra.mxu0 %v1070
  %v1294 = vpop.f32.mrf.mxu0
  %v1295 = vadd.f32 %v1220, %v1294
  %v1296 = vpop.f32.mrf.mxu0
  %1297 = vmatprep.mubr.f32.mxu0 %v1077
  %1298 = vmatmul.mubr.f32.gmra.mxu0 %v1076
  %v1299 = vpop.f32.mrf.mxu0
  %v1300 = vadd.f32 %v1225, %v1299
  %v1301 = vpop.f32.mrf.mxu0
  %1302 = vdwg.mxu0
  %v1303 = vld [vmem:[%s5] sm:$0xff]
  %v1304 = vld [vmem:[%s5 + $0x8] sm:$0xff]
  %v1305 = vld [vmem:[%s5 + $0x10] sm:$0xff]
  %v1306 = vld [vmem:[%s5 + $0x18] sm:$0xff]
  %v1307 = vld [vmem:[%s6] sm:$0x1]
  %v1309 = vlaneseq
  %v1310 = vshrl.u32 %v1309, 7
  %v1311 = vsub.s32 0, %v1310
  %v1312 = vrot.slane %v1307, %v1311
  %vm1314 = vcmask 261120
  %v1316 = vsel %vm1314, %v1295, 0
  %v1319 = vsel %vm1314, %v1300, 0
  %1321 = vmatprep.subr.mxu0 0.0
  %1322 = vmatpush1.msra.mxu0 0.0
  %1323 = vmatprep.subr.mxu0 0.0
  %1324 = vmatpush1.msra.mxu0 0.0
  %1325 = vmatprep.subr.mxu0 0.0
  %1326 = vmatpush1.msra.mxu0 0.0
  %1327 = vmatprep.subr.mxu0 0.0
  %1328 = vmatpush1.msra.mxu0 0.0
  %1329 = vmatprep.subr.mxu0 0.0
  %1330 = vmatpush1.msra.mxu0 0.0
  %1331 = vmatprep.subr.mxu0 0.0
  %1332 = vmatpush1.msra.mxu0 0.0
  %1333 = vmatprep.subr.mxu0 0.0
  %1334 = vmatpush1.msra.mxu0 0.0
  %1335 = vmatprep.subr.mxu0 0.0
  %1336 = vmatpush1.msra.mxu0 0.0
  %1337 = vmatprep.subr.mxu0 0.0
  %1338 = vmatpush1.msra.mxu0 0.0
  %1339 = vmatprep.subr.mxu0 0.0
  %1340 = vmatpush1.msra.mxu0 0.0
  %1341 = vmatprep.subr.mxu0 0.0
  %1342 = vmatpush1.msra.mxu0 0.0
  %1343 = vmatprep.subr.mxu0 0.0
  %1344 = vmatpush1.msra.mxu0 0.0
  %1345 = vmatprep.subr.mxu0 0.0
  %1346 = vmatpush1.msra.mxu0 %v1306
  %1347 = vmatprep.subr.mxu0 0.0
  %1348 = vmatpush1.msra.mxu0 %v1305
  %1349 = vmatprep.subr.mxu0 0.0
  %1350 = vmatpush1.msra.mxu0 %v1304
  %1351 = vmatprep.subr.mxu0 0.0
  %1352 = vmatpush1.msra.mxu0 %v1303
  %1353 = vmatprep.subr.mxu0 0.0
  %1354 = vmatpush2.msra.mxu0 0.0
  %1355 = vmatprep.subr.mxu0 0.0
  %1356 = vmatpush2.msra.mxu0 0.0
  %1357 = vmatprep.subr.mxu0 0.0
  %1358 = vmatpush2.msra.mxu0 0.0
  %1359 = vmatprep.subr.mxu0 0.0
  %1360 = vmatpush2.msra.mxu0 0.0
  %1361 = vmatprep.subr.mxu0 0.0
  %1362 = vmatpush2.msra.mxu0 0.0
  %1363 = vmatprep.subr.mxu0 0.0
  %1364 = vmatpush2.msra.mxu0 0.0
  %1365 = vmatprep.subr.mxu0 0.0
  %1366 = vmatpush2.msra.mxu0 0.0
  %1367 = vmatprep.subr.mxu0 0.0
  %1368 = vmatpush2.msra.mxu0 0.0
  %1369 = vmatprep.subr.mxu0 0.0
  %1370 = vmatpush2.msra.mxu0 0.0
  %1371 = vmatprep.subr.mxu0 0.0
  %1372 = vmatpush2.msra.mxu0 0.0
  %1373 = vmatprep.subr.mxu0 0.0
  %1374 = vmatpush2.msra.mxu0 0.0
  %1375 = vmatprep.subr.mxu0 0.0
  %1376 = vmatpush2.msra.mxu0 0.0
  %1377 = vmatprep.subr.mxu0 0.0
  %1378 = vmatpush2.msra.mxu0 0.0
  %1379 = vmatprep.subr.mxu0 0.0
  %1380 = vmatpush2.msra.mxu0 0.0
  %1381 = vmatprep.subr.mxu0 0.0
  %1382 = vmatpush2.msra.mxu0 0.0
  %1383 = vmatprep.subr.mxu0 0.0
  %1384 = vmatpush2.msra.mxu0 0.0
  %1385 = vmatprep.mubr.f32.mxu0 0.0
  %1386 = vmatmul.mubr.f32.gmra.mxu0 %v1316
  %v1387 = vpop.f32.mrf.mxu0
  %v1388 = vadd.f32 %v1312, %v1387
  %v1389 = vpop.f32.mrf.mxu0
  %1390 = vmatprep.mubr.f32.mxu0 0.0
  %1391 = vmatmul.mubr.f32.gmra.mxu0 %v1319
  %v1392 = vpop.f32.mrf.mxu0
  %v1393 = vadd.f32 %v1312, %v1392
  %v1394 = vpop.f32.mrf.mxu0
  %1395 = vdwg.mxu0
  %v1396 = vld [vmem:[%s7] sm:$0xff]
  %v1397 = vld [vmem:[%s7 + $0x8] sm:$0xff]
  %v1398 = vld [vmem:[%s7 + $0x10] sm:$0xff]
  %v1399 = vld [vmem:[%s7 + $0x18] sm:$0xff]
  %v1400 = vld [vmem:[%s8] sm:$0x1]
  %v1402 = vlaneseq
  %v1403 = vshrl.u32 %v1402, 7
  %v1404 = vsub.s32 0, %v1403
  %v1405 = vrot.slane %v1400, %v1404
  %1407 = vmatprep.subr.mxu0 0.0
  %1408 = vmatpush1.msra.mxu0 0.0
  %1409 = vmatprep.subr.mxu0 0.0
  %1410 = vmatpush1.msra.mxu0 0.0
  %1411 = vmatprep.subr.mxu0 0.0
  %1412 = vmatpush1.msra.mxu0 0.0
  %1413 = vmatprep.subr.mxu0 0.0
  %1414 = vmatpush1.msra.mxu0 0.0
  %1415 = vmatprep.subr.mxu0 0.0
  %1416 = vmatpush1.msra.mxu0 0.0
  %1417 = vmatprep.subr.mxu0 0.0
  %1418 = vmatpush1.msra.mxu0 0.0
  %1419 = vmatprep.subr.mxu0 0.0
  %1420 = vmatpush1.msra.mxu0 0.0
  %1421 = vmatprep.subr.mxu0 0.0
  %1422 = vmatpush1.msra.mxu0 0.0
  %1423 = vmatprep.subr.mxu0 0.0
  %1424 = vmatpush1.msra.mxu0 0.0
  %1425 = vmatprep.subr.mxu0 0.0
  %1426 = vmatpush1.msra.mxu0 0.0
  %1427 = vmatprep.subr.mxu0 0.0
  %1428 = vmatpush1.msra.mxu0 0.0
  %1429 = vmatprep.subr.mxu0 0.0
  %1430 = vmatpush1.msra.mxu0 0.0
  %1431 = vmatprep.subr.mxu0 0.0
  %1432 = vmatpush1.msra.mxu0 %v1399
  %1433 = vmatprep.subr.mxu0 0.0
  %1434 = vmatpush1.msra.mxu0 %v1398
  %1435 = vmatprep.subr.mxu0 0.0
  %1436 = vmatpush1.msra.mxu0 %v1397
  %1437 = vmatprep.subr.mxu0 0.0
  %1438 = vmatpush1.msra.mxu0 %v1396
  %1439 = vmatprep.subr.mxu0 0.0
  %1440 = vmatpush2.msra.mxu0 0.0
  %1441 = vmatprep.subr.mxu0 0.0
  %1442 = vmatpush2.msra.mxu0 0.0
  %1443 = vmatprep.subr.mxu0 0.0
  %1444 = vmatpush2.msra.mxu0 0.0
  %1445 = vmatprep.subr.mxu0 0.0
  %1446 = vmatpush2.msra.mxu0 0.0
  %1447 = vmatprep.subr.mxu0 0.0
  %1448 = vmatpush2.msra.mxu0 0.0
  %1449 = vmatprep.subr.mxu0 0.0
  %1450 = vmatpush2.msra.mxu0 0.0
  %1451 = vmatprep.subr.mxu0 0.0
  %1452 = vmatpush2.msra.mxu0 0.0
  %1453 = vmatprep.subr.mxu0 0.0
  %1454 = vmatpush2.msra.mxu0 0.0
  %1455 = vmatprep.subr.mxu0 0.0
  %1456 = vmatpush2.msra.mxu0 0.0
  %1457 = vmatprep.subr.mxu0 0.0
  %1458 = vmatpush2.msra.mxu0 0.0
  %1459 = vmatprep.subr.mxu0 0.0
  %1460 = vmatpush2.msra.mxu0 0.0
  %1461 = vmatprep.subr.mxu0 0.0
  %1462 = vmatpush2.msra.mxu0 0.0
  %1463 = vmatprep.subr.mxu0 0.0
  %1464 = vmatpush2.msra.mxu0 0.0
  %1465 = vmatprep.subr.mxu0 0.0
  %1466 = vmatpush2.msra.mxu0 0.0
  %1467 = vmatprep.subr.mxu0 0.0
  %1468 = vmatpush2.msra.mxu0 0.0
  %1469 = vmatprep.subr.mxu0 0.0
  %1470 = vmatpush2.msra.mxu0 0.0
  %1471 = vmatprep.mubr.f32.mxu0 0.0
  %1472 = vmatmul.mubr.f32.gmra.mxu0 %v1316
  %v1473 = vpop.f32.mrf.mxu0
  %v1474 = vadd.f32 %v1405, %v1473
  %v1475 = vpop.f32.mrf.mxu0
  %1476 = vmatprep.mubr.f32.mxu0 0.0
  %1477 = vmatmul.mubr.f32.gmra.mxu0 %v1319
  %v1478 = vpop.f32.mrf.mxu0
  %v1479 = vadd.f32 %v1405, %v1478
  %v1480 = vpop.f32.mrf.mxu0
  %1481 = vdwg.mxu0
  %v1482 = vld [vmem:[%s2] sm:$0xff]
  %v1483 = vld [vmem:[%s2 + $0x8] sm:$0xf]
  %vm1484 = vcmp.gt.f32.partialorder %v1482, 0.5
  %vm1485 = vcmp.gt.f32.partialorder %v1483, 0.5
  %v1486 = vsel %vm1484, 1, 0
  %v1487 = vsel %vm1485, 1, 0
  %1488 = vset.pattern.permute.xlu0 0
  %1489 = vperm.xlu0 %1488, %v1486
  %v1490 = vpop.permute.xlu0 %1489
  %1491 = vset.pattern.permute.xlu0 0
  %1492 = vperm.xlu0 %1491, %v1487
  %v1493 = vpop.permute.xlu0 %1492
  %vm1494 = vcmp.eq.s32.totalorder %v1490, 1
  %vm1495 = vcmp.eq.s32.totalorder %v1493, 1
  %v1496 = vsel %vm1494, %v1388, %v1474
  %v1497 = vsel %vm1495, %v1393, %v1479
  %1498 = vst.msk [vmem:[%s9] sm:$0xff] %vm1314, %v1496
  %vm1499 = vcmask 257024
  %1500 = vst.msk [vmem:[%s9 + $0x8] sm:$0xf] %vm1499, %v1497
  // Predicated region
  $region38: #{deep_color_transfer_forward.2} parent=0 // pred_check
    _
  $region39: #{deep_color_transfer_forward.2} parent=0 // pred_check_branch
    %1502 = sbr.rel (0) target = $region41
  $region40: #{deep_color_transfer_forward.2} parent=0 // pred_region
    _
  $region41: #{deep_color_transfer_forward.2} parent=0 // pred_fallthru
    _
  // Predicated region
  $region42: #{deep_color_transfer_forward.2} parent=0 // pred_check
    _
  $region43: #{deep_color_transfer_forward.2} parent=0 // pred_check_branch
    %1504 = sbr.rel (0) target = $region45
  $region44: #{deep_color_transfer_forward.2} parent=0 // pred_region
    _
  $region45: #{deep_color_transfer_forward.2} parent=0 // pred_fallthru
    _

// kernel: deep_color_transfer_forward.3
$region0: #{deep_color_transfer_forward.3}
  #allocation0 [shape = 'u32[]', space=smem, size = 0x4, offset = 0x4, fixed_abs, tag = 'smem constant byte address 0x4 - core index']
  #allocation1 [shape = 'u32[144,128]{1,0:T(1,128)}', space=vmem, size = 0x12000, scoped, tag = 'internal scratch']
  %s0 = inlined_call_operand.vmem [shape: bf16[2,8,6400], index: 0, kind: input, shape index: {}]
  %s1 = inlined_call_operand.vmem [shape: bf16[2,32,8], index: 1, kind: input, shape index: {}]
  %s2 = inlined_call_operand.vmem [shape: f32[2,32,1], index: 2, kind: input, shape index: {}]
  %s3 = inlined_call_operand.vmem [shape: bf16[32,32], index: 3, kind: input, shape index: {}]
  %s4 = inlined_call_operand.vmem [shape: f32[32,1], index: 4, kind: input, shape index: {}]
  %s5 = inlined_call_operand.vmem [shape: bf16[3,32], index: 5, kind: input, shape index: {}]
  %s6 = inlined_call_operand.vmem [shape: f32[3,1], index: 6, kind: input, shape index: {}]
  %s7 = inlined_call_operand.vmem [shape: bf16[2,32,6400], index: 7, kind: output, shape index: {0}]
  %s8 = inlined_call_operand.vmem [shape: f32[2,3,6400], index: 8, kind: output, shape index: {1}]
  %9 = xla_tuple %s7, %s8
  %s10 = sld [smem:[#allocation0]]
  $region69: #{deep_color_transfer_forward.3} parent=0
    _
  %s12 = ssub.s32 1, %s10
  %s13 = scalar_select 0, %s12, %s10
  loop: start=0, step=1, limit=4
  $region2: #{deep_color_transfer_forward.3} parent=0 // loop_pre_header
    _
  $region3: #{deep_color_transfer_forward.3} parent=0 // loop_header
    %s15 = sphi 0, %s19
    %p16 = scmp.ge.s32.totalorder %s15, 4
    %s22 = sphi 0, %s34
    %s23 = sphi 0, %s30
    %s24 = sphi 0, %s22
    %s25 = sphi 0, %s23
    %s26 = sphi 0, %s24
    %s27 = sphi 0, %s25
    %s39 = sphi 0, %s41
    %s42 = sphi 0, %s39
    %s43 = sphi 0, %s42
    %s59 = sphi 0, %s43
    %s65 = sphi 0, %s67
    %s68 = sphi 0, %s65
    %s69 = sphi 0, %s68
    %s85 = sphi 0, %s69
    %s91 = sphi 0, %s93
    %s94 = sphi 0, %s91
    %s95 = sphi 0, %s94
    %s111 = sphi 0, %s95
    %s115 = sphi 0, %s115
    %s117 = sphi 0, %s115
    %s118 = sphi 0, %s117
    %s132 = sphi 0, %s118
    %s136 = sphi 0, %s136
    %s138 = sphi 0, %s136
    %s139 = sphi 0, %s138
    %s153 = sphi 0, %s139
    %s157 = sphi 0, %s157
    %s159 = sphi 0, %s157
    %s160 = sphi 0, %s159
    %s174 = sphi 0, %s160
    %s178 = sphi 0, %s178
    %s180 = sphi 0, %s178
    %s181 = sphi 0, %s180
    %s195 = sphi 0, %s181
    %s203 = sphi 0, %s205
    %s206 = sphi 0, %s203
    %s207 = sphi 0, %s206
    %s223 = sphi 0, %s207
    %s231 = sphi 0, %s233
    %s234 = sphi 0, %s231
    %s235 = sphi 0, %s234
    %s251 = sphi 0, %s235
  $region4: #{deep_color_transfer_forward.3} parent=0 // loop_header_branch
    %18 = sbr.rel (%p16) target = $region8
  $region5: #{deep_color_transfer_forward.3} parent=0 // loop_body
    %s20 = ssub.s32 %s15, 1
    %s21 = ssub.s32 %s15, 2
    %s28 = sadd.s32 1, %s23
    %p29 = scmp.ge.s32.totalorder %s28, 1
    %s30 = scalar_select %p29, 0, %s28
    %s31 = sadd.s32 1, %s22
    %s32 = scalar_select %p29, %s31, %s22
    %p33 = scmp.ge.s32.totalorder %s32, 2
    %s34 = scalar_select %p33, 0, %s32
    %s35 = ssub.s32 %s22, %s34
    %s36 = ssub.s32 %s23, %s30
    %s37 = sor.u32 %s35, %s36
    %p38 = scmp.eq.s32.totalorder %s37, 0
    %s40 = sadd.s32 %s39, 1
    %s41 = scalar_select %p38, %s39, %s40
    %p44 = pneg %p38
    %p45 = scmp.eq.s32.totalorder %s15, 1
    %p46 = por %p44, %p45
    %p47 = scmp.ne.s32.totalorder %s39, %s42
    %p48 = scmp.eq.s32.totalorder %s15, 0
    %p49 = por %p47, %p48
    %p50 = scmp.ne.s32.totalorder %s39, %s42
    %p51 = scmp.eq.s32.totalorder %s20, 1
    %p52 = por %p50, %p51
    %p53 = scmp.ne.s32.totalorder %s42, %s43
    %p54 = scmp.eq.s32.totalorder %s20, 0
    %p55 = por %p53, %p54
    %p56 = scmp.ne.s32.totalorder %s42, %s43
    %p57 = scmp.eq.s32.totalorder %s21, 1
    %p58 = por %p56, %p57
    %p60 = scmp.ne.s32.totalorder %s43, %s59
    %p61 = scmp.eq.s32.totalorder %s21, 0
    %p62 = por %p60, %p61
    %s63 = ssub.s32 %s22, %s34
    %p64 = scmp.eq.s32.totalorder %s63, 0
    %s66 = sadd.s32 %s65, 1
    %s67 = scalar_select %p64, %s65, %s66
    %p70 = pneg %p64
    %p71 = scmp.eq.s32.totalorder %s15, 1
    %p72 = por %p70, %p71
    %p73 = scmp.ne.s32.totalorder %s65, %s68
    %p74 = scmp.eq.s32.totalorder %s15, 0
    %p75 = por %p73, %p74
    %p76 = scmp.ne.s32.totalorder %s65, %s68
    %p77 = scmp.eq.s32.totalorder %s20, 1
    %p78 = por %p76, %p77
    %p79 = scmp.ne.s32.totalorder %s68, %s69
    %p80 = scmp.eq.s32.totalorder %s20, 0
    %p81 = por %p79, %p80
    %p82 = scmp.ne.s32.totalorder %s68, %s69
    %p83 = scmp.eq.s32.totalorder %s21, 1
    %p84 = por %p82, %p83
    %p86 = scmp.ne.s32.totalorder %s69, %s85
    %p87 = scmp.eq.s32.totalorder %s21, 0
    %p88 = por %p86, %p87
    %s89 = ssub.s32 %s22, %s34
    %p90 = scmp.eq.s32.totalorder %s89, 0
    %s92 = sadd.s32 %s91, 1
    %s93 = scalar_select %p90, %s91, %s92
    %p96 = pneg %p90
    %p97 = scmp.eq.s32.totalorder %s15, 1
    %p98 = por %p96, %p97
    %p99 = scmp.ne.s32.totalorder %s91, %s94
    %p100 = scmp.eq.s32.totalorder %s15, 0
    %p101 = por %p99, %p100
    %p102 = scmp.ne.s32.totalorder %s91, %s94
    %p103 = scmp.eq.s32.totalorder %s20, 1
    %p104 = por %p102, %p103
    %p105 = scmp.ne.s32.totalorder %s94, %s95
    %p106 = scmp.eq.s32.totalorder %s20, 0
    %p107 = por %p105, %p106
    %p108 = scmp.ne.s32.totalorder %s94, %s95
    %p109 = scmp.eq.s32.totalorder %s21, 1
    %p110 = por %p108, %p109
    %p112 = scmp.ne.s32.totalorder %s95, %s111
    %p113 = scmp.eq.s32.totalorder %s21, 0
    %p114 = por %p112, %p113
    %s116 = sadd.s32 %s115, 1
    %p119 = scmp.eq.s32.totalorder %s15, 1
    %p120 = scmp.ne.s32.totalorder %s115, %s117
    %p121 = scmp.eq.s32.totalorder %s15, 0
    %p122 = por %p120, %p121
    %p123 = scmp.ne.s32.totalorder %s115, %s117
    %p124 = scmp.eq.s32.totalorder %s20, 1
    %p125 = por %p123, %p124
    %p126 = scmp.ne.s32.totalorder %s117, %s118
    %p127 = scmp.eq.s32.totalorder %s20, 0
    %p128 = por %p126, %p127
    %p129 = scmp.ne.s32.totalorder %s117, %s118
    %p130 = scmp.eq.s32.totalorder %s21, 1
    %p131 = por %p129, %p130
    %p133 = scmp.ne.s32.totalorder %s118, %s132
    %p134 = scmp.eq.s32.totalorder %s21, 0
    %p135 = por %p133, %p134
    %s137 = sadd.s32 %s136, 1
    %p140 = scmp.eq.s32.totalorder %s15, 1
    %p141 = scmp.ne.s32.totalorder %s136, %s138
    %p142 = scmp.eq.s32.totalorder %s15, 0
    %p143 = por %p141, %p142
    %p144 = scmp.ne.s32.totalorder %s136, %s138
    %p145 = scmp.eq.s32.totalorder %s20, 1
    %p146 = por %p144, %p145
    %p147 = scmp.ne.s32.totalorder %s138, %s139
    %p148 = scmp.eq.s32.totalorder %s20, 0
    %p149 = por %p147, %p148
    %p150 = scmp.ne.s32.totalorder %s138, %s139
    %p151 = scmp.eq.s32.totalorder %s21, 1
    %p152 = por %p150, %p151
    %p154 = scmp.ne.s32.totalorder %s139, %s153
    %p155 = scmp.eq.s32.totalorder %s21, 0
    %p156 = por %p154, %p155
    %s158 = sadd.s32 %s157, 1
    %p161 = scmp.eq.s32.totalorder %s15, 1
    %p162 = scmp.ne.s32.totalorder %s157, %s159
    %p163 = scmp.eq.s32.totalorder %s15, 0
    %p164 = por %p162, %p163
    %p165 = scmp.ne.s32.totalorder %s157, %s159
    %p166 = scmp.eq.s32.totalorder %s20, 1
    %p167 = por %p165, %p166
    %p168 = scmp.ne.s32.totalorder %s159, %s160
    %p169 = scmp.eq.s32.totalorder %s20, 0
    %p170 = por %p168, %p169
    %p171 = scmp.ne.s32.totalorder %s159, %s160
    %p172 = scmp.eq.s32.totalorder %s21, 1
    %p173 = por %p171, %p172
    %p175 = scmp.ne.s32.totalorder %s160, %s174
    %p176 = scmp.eq.s32.totalorder %s21, 0
    %p177 = por %p175, %p176
    %s179 = sadd.s32 %s178, 1
    %p182 = scmp.eq.s32.totalorder %s15, 1
    %p183 = scmp.ne.s32.totalorder %s178, %s180
    %p184 = scmp.eq.s32.totalorder %s15, 0
    %p185 = por %p183, %p184
    %p186 = scmp.ne.s32.totalorder %s178, %s180
    %p187 = scmp.eq.s32.totalorder %s20, 1
    %p188 = por %p186, %p187
    %p189 = scmp.ne.s32.totalorder %s180, %s181
    %p190 = scmp.eq.s32.totalorder %s20, 0
    %p191 = por %p189, %p190
    %p192 = scmp.ne.s32.totalorder %s180, %s181
    %p193 = scmp.eq.s32.totalorder %s21, 1
    %p194 = por %p192, %p193
    %p196 = scmp.ne.s32.totalorder %s181, %s195
    %p197 = scmp.eq.s32.totalorder %s21, 0
    %p198 = por %p196, %p197
    %s199 = ssub.s32 %s22, %s34
    %s200 = ssub.s32 %s23, %s30
    %s201 = sor.u32 %s199, %s200
    %p202 = scmp.eq.s32.totalorder %s201, 0
    %s204 = sadd.s32 %s203, 1
    %s205 = scalar_select %p202, %s203, %s204
    %p208 = pneg %p202
    %p209 = scmp.eq.s32.totalorder %s15, 1
    %p210 = por %p208, %p209
    %p211 = scmp.ne.s32.totalorder %s203, %s206
    %p212 = scmp.eq.s32.totalorder %s15, 0
    %p213 = por %p211, %p212
    %p214 = scmp.ne.s32.totalorder %s203, %s206
    %p215 = scmp.eq.s32.totalorder %s20, 1
    %p216 = por %p214, %p215
    %p217 = scmp.ne.s32.totalorder %s206, %s207
    %p218 = scmp.eq.s32.totalorder %s20, 0
    %p219 = por %p217, %p218
    %p220 = scmp.ne.s32.totalorder %s206, %s207
    %p221 = scmp.eq.s32.totalorder %s21, 1
    %p222 = por %p220, %p221
    %p224 = scmp.ne.s32.totalorder %s207, %s223
    %p225 = scmp.eq.s32.totalorder %s21, 0
    %p226 = por %p224, %p225
    %s227 = ssub.s32 %s22, %s34
    %s228 = ssub.s32 %s23, %s30
    %s229 = sor.u32 %s227, %s228
    %p230 = scmp.eq.s32.totalorder %s229, 0
    %s232 = sadd.s32 %s231, 1
    %s233 = scalar_select %p230, %s231, %s232
    %p236 = pneg %p230
    %p237 = scmp.eq.s32.totalorder %s15, 1
    %p238 = por %p236, %p237
    %p239 = scmp.ne.s32.totalorder %s231, %s234
    %p240 = scmp.eq.s32.totalorder %s15, 0
    %p241 = por %p239, %p240
    %p242 = scmp.ne.s32.totalorder %s231, %s234
    %p243 = scmp.eq.s32.totalorder %s20, 1
    %p244 = por %p242, %p243
    %p245 = scmp.ne.s32.totalorder %s234, %s235
    %p246 = scmp.eq.s32.totalorder %s20, 0
    %p247 = por %p245, %p246
    %p248 = scmp.ne.s32.totalorder %s234, %s235
    %p249 = scmp.eq.s32.totalorder %s21, 1
    %p250 = por %p248, %p249
    %p252 = scmp.ne.s32.totalorder %s235, %s251
    %p253 = scmp.eq.s32.totalorder %s21, 0
    %p254 = por %p252, %p253
    %p255 = scmp.le.s32.totalorder 1, %s15
    %p256 = scmp.lt.s32.totalorder %s15, 3
    %p257 = pnand %p255, %p256
    %p258 = pneg %p257
    // Predicated region
    $region9: #{deep_color_transfer_forward.3} parent=5 // pred_check
      _
    $region10: #{deep_color_transfer_forward.3} parent=5 // pred_check_branch
      %260 = sbr.rel (%p257) target = $region12
    $region11: #{deep_color_transfer_forward.3} parent=5 // pred_region
      %s261 = ssub.s32 %s15, 1
      // Predicated region
      $region13: #{deep_color_transfer_forward.3} parent=11 // pred_check
        %p262 = pneg %p128
      $region14: #{deep_color_transfer_forward.3} parent=11 // pred_check_branch
        %264 = sbr.rel (%p262) target = $region16
      $region15: #{deep_color_transfer_forward.3} parent=11 // pred_region
        _
      $region16: #{deep_color_transfer_forward.3} parent=11 // pred_fallthru
        _
      // Predicated region
      $region17: #{deep_color_transfer_forward.3} parent=11 // pred_check
        %p265 = pneg %p149
      $region18: #{deep_color_transfer_forward.3} parent=11 // pred_check_branch
        %267 = sbr.rel (%p265) target = $region20
      $region19: #{deep_color_transfer_forward.3} parent=11 // pred_region
        _
      $region20: #{deep_color_transfer_forward.3} parent=11 // pred_fallthru
        _
      // Predicated region
      $region21: #{deep_color_transfer_forward.3} parent=11 // pred_check
        %p268 = pneg %p170
      $region22: #{deep_color_transfer_forward.3} parent=11 // pred_check_branch
        %270 = sbr.rel (%p268) target = $region24
      $region23: #{deep_color_transfer_forward.3} parent=11 // pred_region
        _
      $region24: #{deep_color_transfer_forward.3} parent=11 // pred_fallthru
        _
      // Predicated region
      $region25: #{deep_color_transfer_forward.3} parent=11 // pred_check
        %p271 = pneg %p191
      $region26: #{deep_color_transfer_forward.3} parent=11 // pred_check_branch
        %273 = sbr.rel (%p271) target = $region28
      $region27: #{deep_color_transfer_forward.3} parent=11 // pred_region
        _
      $region28: #{deep_color_transfer_forward.3} parent=11 // pred_fallthru
        _
    $region12: #{deep_color_transfer_forward.3} parent=5 // pred_fallthru
      _
    %p274 = scmp.lt.s32.totalorder %s15, 2
    // Predicated region
    $region29: #{deep_color_transfer_forward.3} parent=5 // pred_check
      %p275 = pneg %p274
    $region30: #{deep_color_transfer_forward.3} parent=5 // pred_check_branch
      %277 = sbr.rel (%p275) target = $region32
    $region31: #{deep_color_transfer_forward.3} parent=5 // pred_region
      // Predicated region
      $region33: #{deep_color_transfer_forward.3} parent=31 // pred_check
        %p278 = pneg %p49
      $region34: #{deep_color_transfer_forward.3} parent=31 // pred_check_branch
        %280 = sbr.rel (%p278) target = $region36
      $region35: #{deep_color_transfer_forward.3} parent=31 // pred_region
        %s281 = smul.u32 50, %s23
        %p282 = scmp.lt.s32.totalorder %s22, 1
        %s283 = scalar_select %p282, %s22, 1
        %p284 = scmp.lt.s32.totalorder %s281, 49
        %s285 = scalar_select %p284, %s281, 49
        %s286 = smul.addr %s283, 50
        %s287 = sadd.s32 %s285, %s286
        %s288 = smul.addr %s287, 4
        %s289 = scalar_lea.vmem %s0, %s288
        %s290 = smul.u32 50, %s23
      $region36: #{deep_color_transfer_forward.3} parent=31 // pred_fallthru
        _
      // Predicated region
      $region37: #{deep_color_transfer_forward.3} parent=31 // pred_check
        %p291 = pneg %p75
      $region38: #{deep_color_transfer_forward.3} parent=31 // pred_check_branch
        %293 = sbr.rel (%p291) target = $region40
      $region39: #{deep_color_transfer_forward.3} parent=31 // pred_region
        %p294 = scmp.lt.s32.totalorder %s22, 1
        %s295 = scalar_select %p294, %s22, 1
        %s296 = smul.addr %s295, 4
        %s297 = smul.addr %s296, 4
        %s298 = scalar_lea.vmem %s1, %s297
      $region40: #{deep_color_transfer_forward.3} parent=31 // pred_fallthru
        _
      // Predicated region
      $region41: #{deep_color_transfer_forward.3} parent=31 // pred_check
        %p299 = pneg %p101
      $region42: #{deep_color_transfer_forward.3} parent=31 // pred_check_branch
        %301 = sbr.rel (%p299) target = $region44
      $region43: #{deep_color_transfer_forward.3} parent=31 // pred_region
        %p302 = scmp.lt.s32.totalorder %s22, 1
        %s303 = scalar_select %p302, %s22, 1
        %s304 = smul.addr %s303, 4
        %s305 = smul.addr %s304, 8
        %s306 = scalar_lea.vmem %s2, %s305
      $region44: #{deep_color_transfer_forward.3} parent=31 // pred_fallthru
        _
    $region32: #{deep_color_transfer_forward.3} parent=5 // pred_fallthru
      _
    %p307 = scmp.le.s32.totalorder 1, %s15
    %p308 = scmp.lt.s32.totalorder %s15, 3
    %p309 = pnand %p307, %p308
    %p310 = pneg %p309
    // Predicated region
    $region45: #{deep_color_transfer_forward.3} parent=5 // pred_check
      _
    $region46: #{deep_color_transfer_forward.3} parent=5 // pred_check_branch
      %312 = sbr.rel (%p309) target = $region48
    $region47: #{deep_color_transfer_forward.3} parent=5 // pred_region
      %s313 = ssub.s32 %s15, 1
      %s314 = smul.u32 50, %s25
      %p315 = scmp.lt.s32.totalorder %s24, 1
      %s316 = scalar_select %p315, %s24, 1
      %p317 = scmp.lt.s32.totalorder %s314, 49
      %s318 = scalar_select %p317, %s314, 49
      %s319 = smul.addr %s316, 50
      %s320 = sadd.s32 %s318, %s319
      %s321 = smul.addr %s320, 4
      %s322 = scalar_lea.vmem %s0, %s321
      %p323 = pneg %p55
      %p324 = pneg %p52
      %p325 = scmp.lt.s32.totalorder %s24, 1
      %s326 = scalar_select %p325, %s24, 1
      %s327 = smul.addr %s326, 4
      %s328 = smul.addr %s327, 4
      %s329 = scalar_lea.vmem %s1, %s328
      %p330 = pneg %p81
      %p331 = pneg %p78
      %p332 = scmp.lt.s32.totalorder %s24, 1
      %s333 = scalar_select %p332, %s24, 1
      %s334 = smul.addr %s333, 4
      %s335 = smul.addr %s334, 8
      %s336 = scalar_lea.vmem %s2, %s335
      %p337 = pneg %p107
      %p338 = pneg %p104
      %p339 = pneg %p128
      %p340 = pneg %p125
      %p341 = pneg %p149
      %p342 = pneg %p146
      %p343 = pneg %p170
      %p344 = pneg %p167
      %p345 = pneg %p191
      %p346 = pneg %p188
      %p347 = pneg %p219
      %p348 = pneg %p216
      %s349 = smul.u32 50, %s25
      %p350 = scmp.lt.s32.totalorder %s24, 1
      %s351 = scalar_select %p350, %s24, 1
      %p352 = scmp.lt.s32.totalorder %s349, 49
      %s353 = scalar_select %p352, %s349, 49
      %s354 = smul.addr %s351, 200
      %s355 = sadd.s32 %s353, %s354
      %s356 = smul.addr %s355, 4
      %s357 = scalar_lea.vmem %s7, %s356
      %p358 = pneg %p247
      %p359 = pneg %p244
      %s360 = smul.u32 50, %s25
      %p361 = scmp.lt.s32.totalorder %s24, 1
      %s362 = scalar_select %p361, %s24, 1
      %p363 = scmp.lt.s32.totalorder %s360, 49
      %s364 = scalar_select %p363, %s360, 49
      %s365 = smul.addr %s362, 50
      %s366 = sadd.s32 %s364, %s365
      %s367 = smul.addr %s366, 4
      %s368 = scalar_lea.vmem %s8, %s367
      %s369 = smul.u32 50, %s25
      %p370 = scmp.lt.s32.totalorder %s24, 1
      %s371 = scalar_select %p370, %s24, 1
      %p372 = scmp.lt.s32.totalorder %s369, 49
      %s373 = scalar_select %p372, %s369, 49
      %s374 = smul.addr %s371, 50
      %s375 = sadd.s32 %s373, %s374
      %s376 = smul.addr %s375, 4
      %s377 = scalar_lea.vmem %s0, %s376
      %s378 = smul.u32 50, %s25
      %p379 = scmp.lt.s32.totalorder %s24, 1
      %s380 = scalar_select %p379, %s24, 1
      %s381 = smul.addr %s380, 4
      %s382 = smul.addr %s381, 4
      %s383 = scalar_lea.vmem %s1, %s382
      %p384 = scmp.lt.s32.totalorder %s24, 1
      %s385 = scalar_select %p384, %s24, 1
      %s386 = smul.addr %s385, 4
      %s387 = smul.addr %s386, 8
      %s388 = scalar_lea.vmem %s2, %s387
      %s389 = smul.u32 50, %s25
      %p390 = scmp.lt.s32.totalorder %s24, 1
      %s391 = scalar_select %p390, %s24, 1
      %p392 = scmp.lt.s32.totalorder %s389, 49
      %s393 = scalar_select %p392, %s389, 49
      %s394 = smul.addr %s391, 200
      %s395 = sadd.s32 %s393, %s394
      %s396 = smul.addr %s395, 4
      %s397 = scalar_lea.vmem %s7, %s396
      %s398 = smul.u32 50, %s25
      %s399 = smul.u32 50, %s25
      %p400 = scmp.lt.s32.totalorder %s24, 1
      %s401 = scalar_select %p400, %s24, 1
      %p402 = scmp.lt.s32.totalorder %s399, 49
      %s403 = scalar_select %p402, %s399, 49
      %s404 = smul.addr %s401, 50
      %s405 = sadd.s32 %s403, %s404
      %s406 = smul.addr %s405, 4
      %s407 = scalar_lea.vmem %s8, %s406
      %s408 = smul.u32 50, %s25
      %v410 = vld [vmem:[%s377] sm:$0xff]
      %v411 = vld [vmem:[%s377 + $0x8] sm:$0xff]
      %v412 = vld [vmem:[%s377 + $0x10] sm:$0xff]
      %v413 = vld [vmem:[%s377 + $0x18] sm:$0xff]
      %v414 = vld [vmem:[%s377 + $0x20] sm:$0xff]
      %v415 = vld [vmem:[%s377 + $0x28] sm:$0xff]
      %v416 = vld [vmem:[%s377 + $0x30] sm:$0xff]
      %v417 = vld [vmem:[%s377 + $0x38] sm:$0xff]
      %v418 = vld [vmem:[%s377 + $0x40] sm:$0xff]
      %v419 = vld [vmem:[%s377 + $0x48] sm:$0xff]
      %v420 = vld [vmem:[%s377 + $0x50] sm:$0xff]
      %v421 = vld [vmem:[%s377 + $0x58] sm:$0xff]
      %v422 = vld [vmem:[%s377 + $0x60] sm:$0xff]
      %v423 = vld [vmem:[%s377 + $0x68] sm:$0xff]
      %v424 = vld [vmem:[%s377 + $0x70] sm:$0xff]
      %v425 = vld [vmem:[%s377 + $0x78] sm:$0xff]
      %v426 = vld [vmem:[%s377 + $0x80] sm:$0xff]
      %v427 = vld [vmem:[%s377 + $0x88] sm:$0xff]
      %v428 = vld [vmem:[%s377 + $0x90] sm:$0xff]
      %v429 = vld [vmem:[%s377 + $0x98] sm:$0xff]
      %v430 = vld [vmem:[%s377 + $0xa0] sm:$0xff]
      %v431 = vld [vmem:[%s377 + $0xa8] sm:$0xff]
      %v432 = vld [vmem:[%s377 + $0xb0] sm:$0xff]
      %v433 = vld [vmem:[%s377 + $0xb8] sm:$0xff]
      %v434 = vld [vmem:[%s377 + $0xc0] sm:$0xff]
      %v435 = vld [vmem:[%s383] sm:$0xf]
      %v436 = vld [vmem:[%s383 + $0x4] sm:$0xf]
      %v437 = vld [vmem:[%s383 + $0x8] sm:$0xf]
      %v438 = vld [vmem:[%s383 + $0xc] sm:$0xf]
      %v439 = vld [vmem:[%s388] sm:$0xff]
      %v440 = vld [vmem:[%s388 + $0x8] sm:$0xff]
      %v441 = vld [vmem:[%s388 + $0x10] sm:$0xff]
      %v442 = vld [vmem:[%s388 + $0x18] sm:$0xff]
      %444 = vset.pattern.permute.xlu0 0
      %445 = vperm.xlu0 %444, %v439
      %v446 = vpop.permute.xlu0 %445
      %449 = vset.pattern.permute.xlu0 0
      %450 = vperm.xlu0 %449, %v440
      %v451 = vpop.permute.xlu0 %450
      %454 = vset.pattern.permute.xlu0 0
      %455 = vperm.xlu0 %454, %v441
      %v456 = vpop.permute.xlu0 %455
      %459 = vset.pattern.permute.xlu0 0
      %460 = vperm.xlu0 %459, %v442
      %v461 = vpop.permute.xlu0 %460
      %v467 = vunpack.c.l.b16 %v435
      %v468 = vunpack.c.l.b16 %v436
      %v469 = vunpack.c.l.b16 %v437
      %v470 = vunpack.c.l.b16 %v438
      %v471 = vpack.c.b16 %v468, %v467
      %v472 = vpack.c.b16 %v470, %v469
      %v498 = vunpack.c.l.b16 %v410
      %v499 = vunpack.c.h.b16 %v410
      %v500 = vunpack.c.l.b16 %v411
      %v501 = vunpack.c.h.b16 %v411
      %v502 = vunpack.c.l.b16 %v412
      %v503 = vunpack.c.h.b16 %v412
      %v504 = vunpack.c.l.b16 %v413
      %v505 = vunpack.c.h.b16 %v413
      %v506 = vunpack.c.l.b16 %v414
      %v507 = vunpack.c.h.b16 %v414
      %v508 = vunpack.c.l.b16 %v415
      %v509 = vunpack.c.h.b16 %v415
      %v510 = vunpack.c.l.b16 %v416
      %v511 = vunpack.c.h.b16 %v416
      %v512 = vunpack.c.l.b16 %v417
      %v513 = vunpack.c.h.b16 %v417
      %v514 = vunpack.c.l.b16 %v418
      %v515 = vunpack.c.h.b16 %v418
      %v516 = vunpack.c.l.b16 %v419
      %v517 = vunpack.c.h.b16 %v419
      %v518 = vunpack.c.l.b16 %v420
      %v519 = vunpack.c.h.b16 %v420
      %v520 = vunpack.c.l.b16 %v421
      %v521 = vunpack.c.h.b16 %v421
      %v522 = vunpack.c.l.b16 %v422
      %v523 = vunpack.c.h.b16 %v422
      %v524 = vunpack.c.l.b16 %v423
      %v525 = vunpack.c.h.b16 %v423
      %v526 = vunpack.c.l.b16 %v424
      %v527 = vunpack.c.h.b16 %v424
      %v528 = vunpack.c.l.b16 %v425
      %v529 = vunpack.c.h.b16 %v425
      %v530 = vunpack.c.l.b16 %v426
      %v531 = vunpack.c.h.b16 %v426
      %v532 = vunpack.c.l.b16 %v427
      %v533 = vunpack.c.h.b16 %v427
      %v534 = vunpack.c.l.b16 %v428
      %v535 = vunpack.c.h.b16 %v428
      %v536 = vunpack.c.l.b16 %v429
      %v537 = vunpack.c.h.b16 %v429
      %v538 = vunpack.c.l.b16 %v430
      %v539 = vunpack.c.h.b16 %v430
      %v540 = vunpack.c.l.b16 %v431
      %v541 = vunpack.c.h.b16 %v431
      %v542 = vunpack.c.l.b16 %v432
      %v543 = vunpack.c.h.b16 %v432
      %v544 = vunpack.c.l.b16 %v433
      %v545 = vunpack.c.h.b16 %v433
      %v546 = vunpack.c.l.b16 %v434
      %v547 = vunpack.c.h.b16 %v434
      %v548 = vpack.c.b16 %v498, %v498
      %v549 = vpack.c.b16 %v499, %v499
      %v550 = vpack.c.b16 %v500, %v500
      %v551 = vpack.c.b16 %v501, %v501
      %v552 = vpack.c.b16 %v502, %v502
      %v553 = vpack.c.b16 %v503, %v503
      %v554 = vpack.c.b16 %v504, %v504
      %v555 = vpack.c.b16 %v505, %v505
      %v556 = vpack.c.b16 %v506, %v506
      %v557 = vpack.c.b16 %v507, %v507
      %v558 = vpack.c.b16 %v508, %v508
      %v559 = vpack.c.b16 %v509, %v509
      %v560 = vpack.c.b16 %v510, %v510
      %v561 = vpack.c.b16 %v511, %v511
      %v562 = vpack.c.b16 %v512, %v512
      %v563 = vpack.c.b16 %v513, %v513
      %v564 = vpack.c.b16 %v514, %v514
      %v565 = vpack.c.b16 %v515, %v515
      %v566 = vpack.c.b16 %v516, %v516
      %v567 = vpack.c.b16 %v517, %v517
      %v568 = vpack.c.b16 %v518, %v518
      %v569 = vpack.c.b16 %v519, %v519
      %v570 = vpack.c.b16 %v520, %v520
      %v571 = vpack.c.b16 %v521, %v521
      %v572 = vpack.c.b16 %v522, %v522
      %v573 = vpack.c.b16 %v523, %v523
      %v574 = vpack.c.b16 %v524, %v524
      %v575 = vpack.c.b16 %v525, %v525
      %v576 = vpack.c.b16 %v526, %v526
      %v577 = vpack.c.b16 %v527, %v527
      %v578 = vpack.c.b16 %v528, %v528
      %v579 = vpack.c.b16 %v529, %v529
      %v580 = vpack.c.b16 %v530, %v530
      %v581 = vpack.c.b16 %v531, %v531
      %v582 = vpack.c.b16 %v532, %v532
      %v583 = vpack.c.b16 %v533, %v533
      %v584 = vpack.c.b16 %v534, %v534
      %v585 = vpack.c.b16 %v535, %v535
      %v586 = vpack.c.b16 %v536, %v536
      %v587 = vpack.c.b16 %v537, %v537
      %v588 = vpack.c.b16 %v538, %v538
      %v589 = vpack.c.b16 %v539, %v539
      %v590 = vpack.c.b16 %v540, %v540
      %v591 = vpack.c.b16 %v541, %v541
      %v592 = vpack.c.b16 %v542, %v542
      %v593 = vpack.c.b16 %v543, %v543
      %v594 = vpack.c.b16 %v544, %v544
      %v595 = vpack.c.b16 %v545, %v545
      %v596 = vpack.c.b16 %v546, %v546
      %v597 = vpack.c.b16 %v547, %v547
      %vm598 = vcmask 64512
      %v600 = vsel %vm598, %v471, 0
      %v603 = vsel %vm598, %v472, 0
      %vm605 = vcmask 1043456
      %v607 = vsel %vm605, %v548, 0
      %v610 = vsel %vm605, %v549, 0
      %v613 = vsel %vm605, %v550, 0
      %v616 = vsel %vm605, %v551, 0
      %v619 = vsel %vm605, %v552, 0
      %v622 = vsel %vm605, %v553, 0
      %v625 = vsel %vm605, %v554, 0
      %v628 = vsel %vm605, %v555, 0
      %v631 = vsel %vm605, %v556, 0
      %v634 = vsel %vm605, %v557, 0
      %v637 = vsel %vm605, %v558, 0
      %v640 = vsel %vm605, %v559, 0
      %v643 = vsel %vm605, %v560, 0
      %v646 = vsel %vm605, %v561, 0
      %v649 = vsel %vm605, %v562, 0
      %v652 = vsel %vm605, %v563, 0
      %v655 = vsel %vm605, %v564, 0
      %v658 = vsel %vm605, %v565, 0
      %v661 = vsel %vm605, %v566, 0
      %v664 = vsel %vm605, %v567, 0
      %v667 = vsel %vm605, %v568, 0
      %v670 = vsel %vm605, %v569, 0
      %v673 = vsel %vm605, %v570, 0
      %v676 = vsel %vm605, %v571, 0
      %v679 = vsel %vm605, %v572, 0
      %v682 = vsel %vm605, %v573, 0
      %v685 = vsel %vm605, %v574, 0
      %v688 = vsel %vm605, %v575, 0
      %v691 = vsel %vm605, %v576, 0
      %v694 = vsel %vm605, %v577, 0
      %v697 = vsel %vm605, %v578, 0
      %v700 = vsel %vm605, %v579, 0
      %v703 = vsel %vm605, %v580, 0
      %v706 = vsel %vm605, %v581, 0
      %v709 = vsel %vm605, %v582, 0
      %v712 = vsel %vm605, %v583, 0
      %v715 = vsel %vm605, %v584, 0
      %v718 = vsel %vm605, %v585, 0
      %v721 = vsel %vm605, %v586, 0
      %v724 = vsel %vm605, %v587, 0
      %v727 = vsel %vm605, %v588, 0
      %v730 = vsel %vm605, %v589, 0
      %v733 = vsel %vm605, %v590, 0
      %v736 = vsel %vm605, %v591, 0
      %v739 = vsel %vm605, %v592, 0
      %v742 = vsel %vm605, %v593, 0
      %v745 = vsel %vm605, %v594, 0
      %v748 = vsel %vm605, %v595, 0
      %v751 = vsel %vm605, %v596, 0
      %v754 = vsel %vm605, %v597, 0
      %756 = vmatprep.subr.bf16.mxu0 0
      %757 = vmatpush1.bf16.msra.mxu0 0
      %758 = vmatprep.subr.bf16.mxu0 0
      %759 = vmatpush1.bf16.msra.mxu0 0
      %760 = vmatprep.subr.bf16.mxu0 0
      %761 = vmatpush1.bf16.msra.mxu0 0
      %762 = vmatprep.subr.bf16.mxu0 0
      %763 = vmatpush1.bf16.msra.mxu0 0
      %764 = vmatprep.subr.bf16.mxu0 0
      %765 = vmatpush1.bf16.msra.mxu0 0
      %766 = vmatprep.subr.bf16.mxu0 0
      %767 = vmatpush1.bf16.msra.mxu0 0
      %768 = vmatprep.subr.bf16.mxu0 0
      %769 = vmatpush1.bf16.msra.mxu0 0
      %770 = vmatprep.subr.bf16.mxu0 %v610
      %771 = vmatpush1.bf16.msra.mxu0 %v607
      %772 = vmatprep.subr.bf16.mxu0 0
      %773 = vmatpush2.bf16.msra.mxu0 0
      %774 = vmatprep.subr.bf16.mxu0 0
      %775 = vmatpush2.bf16.msra.mxu0 0
      %776 = vmatprep.subr.bf16.mxu0 0
      %777 = vmatpush2.bf16.msra.mxu0 0
      %778 = vmatprep.subr.bf16.mxu0 0
      %779 = vmatpush2.bf16.msra.mxu0 0
      %780 = vmatprep.subr.bf16.mxu0 0
      %781 = vmatpush2.bf16.msra.mxu0 0
      %782 = vmatprep.subr.bf16.mxu0 0
      %783 = vmatpush2.bf16.msra.mxu0 0
      %784 = vmatprep.subr.bf16.mxu0 0
      %785 = vmatpush2.bf16.msra.mxu0 0
      %786 = vmatprep.subr.bf16.mxu0 0
      %787 = vmatpush2.bf16.msra.mxu0 0
      %788 = vmatprep.mubr.bf16.mxu0 0
      %789 = vmatmul.mubr.bf16.gmra.mxu0 %v600
      %v790 = vpop.f32.mrf.mxu0
      %v791 = vadd.f32 %v446, %v790
      %v792 = vpop.f32.mrf.mxu0
      %v793 = vadd.f32 %v446, %v792
      %v794 = vpop.f32.mrf.mxu0
      %v795 = vadd.f32 %v451, %v794
      %v796 = vpop.f32.mrf.mxu0
      %v797 = vadd.f32 %v451, %v796
      %798 = vmatprep.mubr.bf16.mxu0 0
      %799 = vmatmul.mubr.bf16.gmra.mxu0 %v603
      %v800 = vpop.f32.mrf.mxu0
      %v801 = vadd.f32 %v456, %v800
      %v802 = vpop.f32.mrf.mxu0
      %v803 = vadd.f32 %v456, %v802
      %v804 = vpop.f32.mrf.mxu0
      %v805 = vadd.f32 %v461, %v804
      %v806 = vpop.f32.mrf.mxu0
      %v807 = vadd.f32 %v461, %v806
      %808 = vdwg.mxu0
      %809 = vmatprep.subr.bf16.mxu0 0
      %810 = vmatpush1.bf16.msra.mxu0 0
      %811 = vmatprep.subr.bf16.mxu0 0
      %812 = vmatpush1.bf16.msra.mxu0 0
      %813 = vmatprep.subr.bf16.mxu0 0
      %814 = vmatpush1.bf16.msra.mxu0 0
      %815 = vmatprep.subr.bf16.mxu0 0
      %816 = vmatpush1.bf16.msra.mxu0 0
      %817 = vmatprep.subr.bf16.mxu0 0
      %818 = vmatpush1.bf16.msra.mxu0 0
      %819 = vmatprep.subr.bf16.mxu0 0
      %820 = vmatpush1.bf16.msra.mxu0 0
      %821 = vmatprep.subr.bf16.mxu0 0
      %822 = vmatpush1.bf16.msra.mxu0 0
      %823 = vmatprep.subr.bf16.mxu0 %v616
      %824 = vmatpush1.bf16.msra.mxu0 %v613
      %825 = vmatprep.subr.bf16.mxu0 0
      %826 = vmatpush2.bf16.msra.mxu0 0
      %827 = vmatprep.subr.bf16.mxu0 0
      %828 = vmatpush2.bf16.msra.mxu0 0
      %829 = vmatprep.subr.bf16.mxu0 0
      %830 = vmatpush2.bf16.msra.mxu0 0
      %831 = vmatprep.subr.bf16.mxu0 0
      %832 = vmatpush2.bf16.msra.mxu0 0
      %833 = vmatprep.subr.bf16.mxu0 0
      %834 = vmatpush2.bf16.msra.mxu0 0
      %835 = vmatprep.subr.bf16.mxu0 0
      %836 = vmatpush2.bf16.msra.mxu0 0
      %837 = vmatprep.subr.bf16.mxu0 0
      %838 = vmatpush2.bf16.msra.mxu0 0
      %839 = vmatprep.subr.bf16.mxu0 0
      %840 = vmatpush2.bf16.msra.mxu0 0
      %841 = vmatprep.mubr.bf16.mxu0 0
      %842 = vmatmul.mubr.bf16.gmra.mxu0 %v600
      %v843 = vpop.f32.mrf.mxu0
      %v844 = vadd.f32 %v446, %v843
      %v845 = vpop.f32.mrf.mxu0
      %v846 = vadd.f32 %v446, %v845
      %v847 = vpop.f32.mrf.mxu0
      %v848 = vadd.f32 %v451, %v847
      %v849 = vpop.f32.mrf.mxu0
      %v850 = vadd.f32 %v451, %v849
      %851 = vmatprep.mubr.bf16.mxu0 0
      %852 = vmatmul.mubr.bf16.gmra.mxu0 %v603
      %v853 = vpop.f32.mrf.mxu0
      %v854 = vadd.f32 %v456, %v853
      %v855 = vpop.f32.mrf.mxu0
      %v856 = vadd.f32 %v456, %v855
      %v857 = vpop.f32.mrf.mxu0
      %v858 = vadd.f32 %v461, %v857
      %v859 = vpop.f32.mrf.mxu0
      %v860 = vadd.f32 %v461, %v859
      %861 = vdwg.mxu0
      %862 = vmatprep.subr.bf16.mxu0 0
      %863 = vmatpush1.bf16.msra.mxu0 0
      %864 = vmatprep.subr.bf16.mxu0 0
      %865 = vmatpush1.bf16.msra.mxu0 0
      %866 = vmatprep.subr.bf16.mxu0 0
      %867 = vmatpush1.bf16.msra.mxu0 0
      %868 = vmatprep.subr.bf16.mxu0 0
      %869 = vmatpush1.bf16.msra.mxu0 0
      %870 = vmatprep.subr.bf16.mxu0 0
      %871 = vmatpush1.bf16.msra.mxu0 0
      %872 = vmatprep.subr.bf16.mxu0 0
      %873 = vmatpush1.bf16.msra.mxu0 0
      %874 = vmatprep.subr.bf16.mxu0 0
      %875 = vmatpush1.bf16.msra.mxu0 0
      %876 = vmatprep.subr.bf16.mxu0 %v622
      %877 = vmatpush1.bf16.msra.mxu0 %v619
      %878 = vmatprep.subr.bf16.mxu0 0
      %879 = vmatpush2.bf16.msra.mxu0 0
      %880 = vmatprep.subr.bf16.mxu0 0
      %881 = vmatpush2.bf16.msra.mxu0 0
      %882 = vmatprep.subr.bf16.mxu0 0
      %883 = vmatpush2.bf16.msra.mxu0 0
      %884 = vmatprep.subr.bf16.mxu0 0
      %885 = vmatpush2.bf16.msra.mxu0 0
      %886 = vmatprep.subr.bf16.mxu0 0
      %887 = vmatpush2.bf16.msra.mxu0 0
      %888 = vmatprep.subr.bf16.mxu0 0
      %889 = vmatpush2.bf16.msra.mxu0 0
      %890 = vmatprep.subr.bf16.mxu0 0
      %891 = vmatpush2.bf16.msra.mxu0 0
      %892 = vmatprep.subr.bf16.mxu0 0
      %893 = vmatpush2.bf16.msra.mxu0 0
      %894 = vmatprep.mubr.bf16.mxu0 0
      %895 = vmatmul.mubr.bf16.gmra.mxu0 %v600
      %v896 = vpop.f32.mrf.mxu0
      %v897 = vadd.f32 %v446, %v896
      %v898 = vpop.f32.mrf.mxu0
      %v899 = vadd.f32 %v446, %v898
      %v900 = vpop.f32.mrf.mxu0
      %v901 = vadd.f32 %v451, %v900
      %v902 = vpop.f32.mrf.mxu0
      %v903 = vadd.f32 %v451, %v902
      %904 = vmatprep.mubr.bf16.mxu0 0
      %905 = vmatmul.mubr.bf16.gmra.mxu0 %v603
      %v906 = vpop.f32.mrf.mxu0
      %v907 = vadd.f32 %v456, %v906
      %v908 = vpop.f32.mrf.mxu0
      %v909 = vadd.f32 %v456, %v908
      %v910 = vpop.f32.mrf.mxu0
      %v911 = vadd.f32 %v461, %v910
      %v912 = vpop.f32.mrf.mxu0
      %v913 = vadd.f32 %v461, %v912
      %914 = vdwg.mxu0
      %915 = vmatprep.subr.bf16.mxu0 0
      %916 = vmatpush1.bf16.msra.mxu0 0
      %917 = vmatprep.subr.bf16.mxu0 0
      %918 = vmatpush1.bf16.msra.mxu0 0
      %919 = vmatprep.subr.bf16.mxu0 0
      %920 = vmatpush1.bf16.msra.mxu0 0
      %921 = vmatprep.subr.bf16.mxu0 0
      %922 = vmatpush1.bf16.msra.mxu0 0
      %923 = vmatprep.subr.bf16.mxu0 0
      %924 = vmatpush1.bf16.msra.mxu0 0
      %925 = vmatprep.subr.bf16.mxu0 0
      %926 = vmatpush1.bf16.msra.mxu0 0
      %927 = vmatprep.subr.bf16.mxu0 0
      %928 = vmatpush1.bf16.msra.mxu0 0
      %929 = vmatprep.subr.bf16.mxu0 %v628
      %930 = vmatpush1.bf16.msra.mxu0 %v625
      %931 = vmatprep.subr.bf16.mxu0 0
      %932 = vmatpush2.bf16.msra.mxu0 0
      %933 = vmatprep.subr.bf16.mxu0 0
      %934 = vmatpush2.bf16.msra.mxu0 0
      %935 = vmatprep.subr.bf16.mxu0 0
      %936 = vmatpush2.bf16.msra.mxu0 0
      %937 = vmatprep.subr.bf16.mxu0 0
      %938 = vmatpush2.bf16.msra.mxu0 0
      %939 = vmatprep.subr.bf16.mxu0 0
      %940 = vmatpush2.bf16.msra.mxu0 0
      %941 = vmatprep.subr.bf16.mxu0 0
      %942 = vmatpush2.bf16.msra.mxu0 0
      %943 = vmatprep.subr.bf16.mxu0 0
      %944 = vmatpush2.bf16.msra.mxu0 0
      %945 = vmatprep.subr.bf16.mxu0 0
      %946 = vmatpush2.bf16.msra.mxu0 0
      %947 = vmatprep.mubr.bf16.mxu0 0
      %948 = vmatmul.mubr.bf16.gmra.mxu0 %v600
      %v949 = vpop.f32.mrf.mxu0
      %v950 = vadd.f32 %v446, %v949
      %v951 = vpop.f32.mrf.mxu0
      %v952 = vadd.f32 %v446, %v951
      %v953 = vpop.f32.mrf.mxu0
      %v954 = vadd.f32 %v451, %v953
      %v955 = vpop.f32.mrf.mxu0
      %v956 = vadd.f32 %v451, %v955
      %957 = vmatprep.mubr.bf16.mxu0 0
      %958 = vmatmul.mubr.bf16.gmra.mxu0 %v603
      %v959 = vpop.f32.mrf.mxu0
      %v960 = vadd.f32 %v456, %v959
      %v961 = vpop.f32.mrf.mxu0
      %v962 = vadd.f32 %v456, %v961
      %v963 = vpop.f32.mrf.mxu0
      %v964 = vadd.f32 %v461, %v963
      %v965 = vpop.f32.mrf.mxu0
      %v966 = vadd.f32 %v461, %v965
      %967 = vdwg.mxu0
      %968 = vmatprep.subr.bf16.mxu0 0
      %969 = vmatpush1.bf16.msra.mxu0 0
      %970 = vmatprep.subr.bf16.mxu0 0
      %971 = vmatpush1.bf16.msra.mxu0 0
      %972 = vmatprep.subr.bf16.mxu0 0
      %973 = vmatpush1.bf16.msra.mxu0 0
      %974 = vmatprep.subr.bf16.mxu0 0
      %975 = vmatpush1.bf16.msra.mxu0 0
      %976 = vmatprep.subr.bf16.mxu0 0
      %977 = vmatpush1.bf16.msra.mxu0 0
      %978 = vmatprep.subr.bf16.mxu0 0
      %979 = vmatpush1.bf16.msra.mxu0 0
      %980 = vmatprep.subr.bf16.mxu0 0
      %981 = vmatpush1.bf16.msra.mxu0 0
      %982 = vmatprep.subr.bf16.mxu0 %v634
      %983 = vmatpush1.bf16.msra.mxu0 %v631
      %984 = vmatprep.subr.bf16.mxu0 0
      %985 = vmatpush2.bf16.msra.mxu0 0
      %986 = vmatprep.subr.bf16.mxu0 0
      %987 = vmatpush2.bf16.msra.mxu0 0
      %988 = vmatprep.subr.bf16.mxu0 0
      %989 = vmatpush2.bf16.msra.mxu0 0
      %990 = vmatprep.subr.bf16.mxu0 0
      %991 = vmatpush2.bf16.msra.mxu0 0
      %992 = vmatprep.subr.bf16.mxu0 0
      %993 = vmatpush2.bf16.msra.mxu0 0
      %994 = vmatprep.subr.bf16.mxu0 0
      %995 = vmatpush2.bf16.msra.mxu0 0
      %996 = vmatprep.subr.bf16.mxu0 0
      %997 = vmatpush2.bf16.msra.mxu0 0
      %998 = vmatprep.subr.bf16.mxu0 0
      %999 = vmatpush2.bf16.msra.mxu0 0
      %1000 = vmatprep.mubr.bf16.mxu0 0
      %1001 = vmatmul.mubr.bf16.gmra.mxu0 %v600
      %v1002 = vpop.f32.mrf.mxu0
      %v1003 = vadd.f32 %v446, %v1002
      %v1004 = vpop.f32.mrf.mxu0
      %v1005 = vadd.f32 %v446, %v1004
      %v1006 = vpop.f32.mrf.mxu0
      %v1007 = vadd.f32 %v451, %v1006
      %v1008 = vpop.f32.mrf.mxu0
      %v1009 = vadd.f32 %v451, %v1008
      %1010 = vmatprep.mubr.bf16.mxu0 0
      %1011 = vmatmul.mubr.bf16.gmra.mxu0 %v603
      %v1012 = vpop.f32.mrf.mxu0
      %v1013 = vadd.f32 %v456, %v1012
      %v1014 = vpop.f32.mrf.mxu0
      %v1015 = vadd.f32 %v456, %v1014
      %v1016 = vpop.f32.mrf.mxu0
      %v1017 = vadd.f32 %v461, %v1016
      %v1018 = vpop.f32.mrf.mxu0
      %v1019 = vadd.f32 %v461, %v1018
      %1020 = vdwg.mxu0
      %1021 = vmatprep.subr.bf16.mxu0 0
      %1022 = vmatpush1.bf16.msra.mxu0 0
      %1023 = vmatprep.subr.bf16.mxu0 0
      %1024 = vmatpush1.bf16.msra.mxu0 0
      %1025 = vmatprep.subr.bf16.mxu0 0
      %1026 = vmatpush1.bf16.msra.mxu0 0
      %1027 = vmatprep.subr.bf16.mxu0 0
      %1028 = vmatpush1.bf16.msra.mxu0 0
      %1029 = vmatprep.subr.bf16.mxu0 0
      %1030 = vmatpush1.bf16.msra.mxu0 0
      %1031 = vmatprep.subr.bf16.mxu0 0
      %1032 = vmatpush1.bf16.msra.mxu0 0
      %1033 = vmatprep.subr.bf16.mxu0 0
      %1034 = vmatpush1.bf16.msra.mxu0 0
      %1035 = vmatprep.subr.bf16.mxu0 %v640
      %1036 = vmatpush1.bf16.msra.mxu0 %v637
      %1037 = vmatprep.subr.bf16.mxu0 0
      %1038 = vmatpush2.bf16.msra.mxu0 0
      %1039 = vmatprep.subr.bf16.mxu0 0
      %1040 = vmatpush2.bf16.msra.mxu0 0
      %1041 = vmatprep.subr.bf16.mxu0 0
      %1042 = vmatpush2.bf16.msra.mxu0 0
      %1043 = vmatprep.subr.bf16.mxu0 0
      %1044 = vmatpush2.bf16.msra.mxu0 0
      %1045 = vmatprep.subr.bf16.mxu0 0
      %1046 = vmatpush2.bf16.msra.mxu0 0
      %1047 = vmatprep.subr.bf16.mxu0 0
      %1048 = vmatpush2.bf16.msra.mxu0 0
      %1049 = vmatprep.subr.bf16.mxu0 0
      %1050 = vmatpush2.bf16.msra.mxu0 0
      %1051 = vmatprep.subr.bf16.mxu0 0
      %1052 = vmatpush2.bf16.msra.mxu0 0
      %1053 = vmatprep.mubr.bf16.mxu0 0
      %1054 = vmatmul.mubr.bf16.gmra.mxu0 %v600
      %v1055 = vpop.f32.mrf.mxu0
      %v1056 = vadd.f32 %v446, %v1055
      %v1057 = vpop.f32.mrf.mxu0
      %v1058 = vadd.f32 %v446, %v1057
      %v1059 = vpop.f32.mrf.mxu0
      %v1060 = vadd.f32 %v451, %v1059
      %v1061 = vpop.f32.mrf.mxu0
      %v1062 = vadd.f32 %v451, %v1061
      %1063 = vmatprep.mubr.bf16.mxu0 0
      %1064 = vmatmul.mubr.bf16.gmra.mxu0 %v603
      %v1065 = vpop.f32.mrf.mxu0
      %v1066 = vadd.f32 %v456, %v1065
      %v1067 = vpop.f32.mrf.mxu0
      %v1068 = vadd.f32 %v456, %v1067
      %v1069 = vpop.f32.mrf.mxu0
      %v1070 = vadd.f32 %v461, %v1069
      %v1071 = vpop.f32.mrf.mxu0
      %v1072 = vadd.f32 %v461, %v1071
      %1073 = vdwg.mxu0
      %1074 = vmatprep.subr.bf16.mxu0 0
      %1075 = vmatpush1.bf16.msra.mxu0 0
      %1076 = vmatprep.subr.bf16.mxu0 0
      %1077 = vmatpush1.bf16.msra.mxu0 0
      %1078 = vmatprep.subr.bf16.mxu0 0
      %1079 = vmatpush1.bf16.msra.mxu0 0
      %1080 = vmatprep.subr.bf16.mxu0 0
      %1081 = vmatpush1.bf16.msra.mxu0 0
      %1082 = vmatprep.subr.bf16.mxu0 0
      %1083 = vmatpush1.bf16.msra.mxu0 0
      %1084 = vmatprep.subr.bf16.mxu0 0
      %1085 = vmatpush1.bf16.msra.mxu0 0
      %1086 = vmatprep.subr.bf16.mxu0 0
      %1087 = vmatpush1.bf16.msra.mxu0 0
      %1088 = vmatprep.subr.bf16.mxu0 %v646
      %1089 = vmatpush1.bf16.msra.mxu0 %v643
      %1090 = vmatprep.subr.bf16.mxu0 0
      %1091 = vmatpush2.bf16.msra.mxu0 0
      %1092 = vmatprep.subr.bf16.mxu0 0
      %1093 = vmatpush2.bf16.msra.mxu0 0
      %1094 = vmatprep.subr.bf16.mxu0 0
      %1095 = vmatpush2.bf16.msra.mxu0 0
      %1096 = vmatprep.subr.bf16.mxu0 0
      %1097 = vmatpush2.bf16.msra.mxu0 0
      %1098 = vmatprep.subr.bf16.mxu0 0
      %1099 = vmatpush2.bf16.msra.mxu0 0
      %1100 = vmatprep.subr.bf16.mxu0 0
      %1101 = vmatpush2.bf16.msra.mxu0 0
      %1102 = vmatprep.subr.bf16.mxu0 0
      %1103 = vmatpush2.bf16.msra.mxu0 0
      %1104 = vmatprep.subr.bf16.mxu0 0
      %1105 = vmatpush2.bf16.msra.mxu0 0
      %1106 = vmatprep.mubr.bf16.mxu0 0
      %1107 = vmatmul.mubr.bf16.gmra.mxu0 %v600
      %v1108 = vpop.f32.mrf.mxu0
      %v1109 = vadd.f32 %v446, %v1108
      %v1110 = vpop.f32.mrf.mxu0
      %v1111 = vadd.f32 %v446, %v1110
      %v1112 = vpop.f32.mrf.mxu0
      %v1113 = vadd.f32 %v451, %v1112
      %v1114 = vpop.f32.mrf.mxu0
      %v1115 = vadd.f32 %v451, %v1114
      %1116 = vmatprep.mubr.bf16.mxu0 0
      %1117 = vmatmul.mubr.bf16.gmra.mxu0 %v603
      %v1118 = vpop.f32.mrf.mxu0
      %v1119 = vadd.f32 %v456, %v1118
      %v1120 = vpop.f32.mrf.mxu0
      %v1121 = vadd.f32 %v456, %v1120
      %v1122 = vpop.f32.mrf.mxu0
      %v1123 = vadd.f32 %v461, %v1122
      %v1124 = vpop.f32.mrf.mxu0
      %v1125 = vadd.f32 %v461, %v1124
      %1126 = vdwg.mxu0
      %1127 = vmatprep.subr.bf16.mxu0 0
      %1128 = vmatpush1.bf16.msra.mxu0 0
      %1129 = vmatprep.subr.bf16.mxu0 0
      %1130 = vmatpush1.bf16.msra.mxu0 0
      %1131 = vmatprep.subr.bf16.mxu0 0
      %1132 = vmatpush1.bf16.msra.mxu0 0
      %1133 = vmatprep.subr.bf16.mxu0 0
      %1134 = vmatpush1.bf16.msra.mxu0 0
      %1135 = vmatprep.subr.bf16.mxu0 0
      %1136 = vmatpush1.bf16.msra.mxu0 0
      %1137 = vmatprep.subr.bf16.mxu0 0
      %1138 = vmatpush1.bf16.msra.mxu0 0
      %1139 = vmatprep.subr.bf16.mxu0 0
      %1140 = vmatpush1.bf16.msra.mxu0 0
      %1141 = vmatprep.subr.bf16.mxu0 %v652
      %1142 = vmatpush1.bf16.msra.mxu0 %v649
      %1143 = vmatprep.subr.bf16.mxu0 0
      %1144 = vmatpush2.bf16.msra.mxu0 0
      %1145 = vmatprep.subr.bf16.mxu0 0
      %1146 = vmatpush2.bf16.msra.mxu0 0
      %1147 = vmatprep.subr.bf16.mxu0 0
      %1148 = vmatpush2.bf16.msra.mxu0 0
      %1149 = vmatprep.subr.bf16.mxu0 0
      %1150 = vmatpush2.bf16.msra.mxu0 0
      %1151 = vmatprep.subr.bf16.mxu0 0
      %1152 = vmatpush2.bf16.msra.mxu0 0
      %1153 = vmatprep.subr.bf16.mxu0 0
      %1154 = vmatpush2.bf16.msra.mxu0 0
      %1155 = vmatprep.subr.bf16.mxu0 0
      %1156 = vmatpush2.bf16.msra.mxu0 0
      %1157 = vmatprep.subr.bf16.mxu0 0
      %1158 = vmatpush2.bf16.msra.mxu0 0
      %1159 = vmatprep.mubr.bf16.mxu0 0
      %1160 = vmatmul.mubr.bf16.gmra.mxu0 %v600
      %v1161 = vpop.f32.mrf.mxu0
      %v1162 = vadd.f32 %v446, %v1161
      %v1163 = vpop.f32.mrf.mxu0
      %v1164 = vadd.f32 %v446, %v1163
      %v1165 = vpop.f32.mrf.mxu0
      %v1166 = vadd.f32 %v451, %v1165
      %v1167 = vpop.f32.mrf.mxu0
      %v1168 = vadd.f32 %v451, %v1167
      %1169 = vmatprep.mubr.bf16.mxu0 0
      %1170 = vmatmul.mubr.bf16.gmra.mxu0 %v603
      %v1171 = vpop.f32.mrf.mxu0
      %v1172 = vadd.f32 %v456, %v1171
      %v1173 = vpop.f32.mrf.mxu0
      %v1174 = vadd.f32 %v456, %v1173
      %v1175 = vpop.f32.mrf.mxu0
      %v1176 = vadd.f32 %v461, %v1175
      %v1177 = vpop.f32.mrf.mxu0
      %v1178 = vadd.f32 %v461, %v1177
      %1179 = vdwg.mxu0
      %1180 = vmatprep.subr.bf16.mxu0 0
      %1181 = vmatpush1.bf16.msra.mxu0 0
      %1182 = vmatprep.subr.bf16.mxu0 0
      %1183 = vmatpush1.bf16.msra.mxu0 0
      %1184 = vmatprep.subr.bf16.mxu0 0
      %1185 = vmatpush1.bf16.msra.mxu0 0
      %1186 = vmatprep.subr.bf16.mxu0 0
      %1187 = vmatpush1.bf16.msra.mxu0 0
      %1188 = vmatprep.subr.bf16.mxu0 0
      %1189 = vmatpush1.bf16.msra.mxu0 0
      %1190 = vmatprep.subr.bf16.mxu0 0
      %1191 = vmatpush1.bf16.msra.mxu0 0
      %1192 = vmatprep.subr.bf16.mxu0 0
      %1193 = vmatpush1.bf16.msra.mxu0 0
      %1194 = vmatprep.subr.bf16.mxu0 %v658
      %1195 = vmatpush1.bf16.msra.mxu0 %v655
      %1196 = vmatprep.subr.bf16.mxu0 0
      %1197 = vmatpush2.bf16.msra.mxu0 0
      %1198 = vmatprep.subr.bf16.mxu0 0
      %1199 = vmatpush2.bf16.msra.mxu0 0
      %1200 = vmatprep.subr.bf16.mxu0 0
      %1201 = vmatpush2.bf16.msra.mxu0 0
      %1202 = vmatprep.subr.bf16.mxu0 0
      %1203 = vmatpush2.bf16.msra.mxu0 0
      %1204 = vmatprep.subr.bf16.mxu0 0
      %1205 = vmatpush2.bf16.msra.mxu0 0
      %1206 = vmatprep.subr.bf16.mxu0 0
      %1207 = vmatpush2.bf16.msra.mxu0 0
      %1208 = vmatprep.subr.bf16.mxu0 0
      %1209 = vmatpush2.bf16.msra.mxu0 0
      %1210 = vmatprep.subr.bf16.mxu0 0
      %1211 = vmatpush2.bf16.msra.mxu0 0
      %1212 = vmatprep.mubr.bf16.mxu0 0
      %1213 = vmatmul.mubr.bf16.gmra.mxu0 %v600
      %v1214 = vpop.f32.mrf.mxu0
      %v1215 = vadd.f32 %v446, %v1214
      %v1216 = vpop.f32.mrf.mxu0
      %v1217 = vadd.f32 %v446, %v1216
      %v1218 = vpop.f32.mrf.mxu0
      %v1219 = vadd.f32 %v451, %v1218
      %v1220 = vpop.f32.mrf.mxu0
      %v1221 = vadd.f32 %v451, %v1220
      %1222 = vmatprep.mubr.bf16.mxu0 0
      %1223 = vmatmul.mubr.bf16.gmra.mxu0 %v603
      %v1224 = vpop.f32.mrf.mxu0
      %v1225 = vadd.f32 %v456, %v1224
      %v1226 = vpop.f32.mrf.mxu0
      %v1227 = vadd.f32 %v456, %v1226
      %v1228 = vpop.f32.mrf.mxu0
      %v1229 = vadd.f32 %v461, %v1228
      %v1230 = vpop.f32.mrf.mxu0
      %v1231 = vadd.f32 %v461, %v1230
      %1232 = vdwg.mxu0
      %1233 = vmatprep.subr.bf16.mxu0 0
      %1234 = vmatpush1.bf16.msra.mxu0 0
      %1235 = vmatprep.subr.bf16.mxu0 0
      %1236 = vmatpush1.bf16.msra.mxu0 0
      %1237 = vmatprep.subr.bf16.mxu0 0
      %1238 = vmatpush1.bf16.msra.mxu0 0
      %1239 = vmatprep.subr.bf16.mxu0 0
      %1240 = vmatpush1.bf16.msra.mxu0 0
      %1241 = vmatprep.subr.bf16.mxu0 0
      %1242 = vmatpush1.bf16.msra.mxu0 0
      %1243 = vmatprep.subr.bf16.mxu0 0
      %1244 = vmatpush1.bf16.msra.mxu0 0
      %1245 = vmatprep.subr.bf16.mxu0 0
      %1246 = vmatpush1.bf16.msra.mxu0 0
      %1247 = vmatprep.subr.bf16.mxu0 %v664
      %1248 = vmatpush1.bf16.msra.mxu0 %v661
      %1249 = vmatprep.subr.bf16.mxu0 0
      %1250 = vmatpush2.bf16.msra.mxu0 0
      %1251 = vmatprep.subr.bf16.mxu0 0
      %1252 = vmatpush2.bf16.msra.mxu0 0
      %1253 = vmatprep.subr.bf16.mxu0 0
      %1254 = vmatpush2.bf16.msra.mxu0 0
      %1255 = vmatprep.subr.bf16.mxu0 0
      %1256 = vmatpush2.bf16.msra.mxu0 0
      %1257 = vmatprep.subr.bf16.mxu0 0
      %1258 = vmatpush2.bf16.msra.mxu0 0
      %1259 = vmatprep.subr.bf16.mxu0 0
      %1260 = vmatpush2.bf16.msra.mxu0 0
      %1261 = vmatprep.subr.bf16.mxu0 0
      %1262 = vmatpush2.bf16.msra.mxu0 0
      %1263 = vmatprep.subr.bf16.mxu0 0
      %1264 = vmatpush2.bf16.msra.mxu0 0
      %1265 = vmatprep.mubr.bf16.mxu0 0
      %1266 = vmatmul.mubr.bf16.gmra.mxu0 %v600
      %v1267 = vpop.f32.mrf.mxu0
      %v1268 = vadd.f32 %v446, %v1267
      %v1269 = vpop.f32.mrf.mxu0
      %v1270 = vadd.f32 %v446, %v1269
      %v1271 = vpop.f32.mrf.mxu0
      %v1272 = vadd.f32 %v451, %v1271
      %v1273 = vpop.f32.mrf.mxu0
      %v1274 = vadd.f32 %v451, %v1273
      %1275 = vmatprep.mubr.bf16.mxu0 0
      %1276 = vmatmul.mubr.bf16.gmra.mxu0 %v603
      %v1277 = vpop.f32.mrf.mxu0
      %v1278 = vadd.f32 %v456, %v1277
      %v1279 = vpop.f32.mrf.mxu0
      %v1280 = vadd.f32 %v456, %v1279
      %v1281 = vpop.f32.mrf.mxu0
      %v1282 = vadd.f32 %v461, %v1281
      %v1283 = vpop.f32.mrf.mxu0
      %v1284 = vadd.f32 %v461, %v1283
      %1285 = vdwg.mxu0
      %1286 = vmatprep.subr.bf16.mxu0 0
      %1287 = vmatpush1.bf16.msra.mxu0 0
      %1288 = vmatprep.subr.bf16.mxu0 0
      %1289 = vmatpush1.bf16.msra.mxu0 0
      %1290 = vmatprep.subr.bf16.mxu0 0
      %1291 = vmatpush1.bf16.msra.mxu0 0
      %1292 = vmatprep.subr.bf16.mxu0 0
      %1293 = vmatpush1.bf16.msra.mxu0 0
      %1294 = vmatprep.subr.bf16.mxu0 0
      %1295 = vmatpush1.bf16.msra.mxu0 0
      %1296 = vmatprep.subr.bf16.mxu0 0
      %1297 = vmatpush1.bf16.msra.mxu0 0
      %1298 = vmatprep.subr.bf16.mxu0 0
      %1299 = vmatpush1.bf16.msra.mxu0 0
      %1300 = vmatprep.subr.bf16.mxu0 %v670
      %1301 = vmatpush1.bf16.msra.mxu0 %v667
      %1302 = vmatprep.subr.bf16.mxu0 0
      %1303 = vmatpush2.bf16.msra.mxu0 0
      %1304 = vmatprep.subr.bf16.mxu0 0
      %1305 = vmatpush2.bf16.msra.mxu0 0
      %1306 = vmatprep.subr.bf16.mxu0 0
      %1307 = vmatpush2.bf16.msra.mxu0 0
      %1308 = vmatprep.subr.bf16.mxu0 0
      %1309 = vmatpush2.bf16.msra.mxu0 0
      %1310 = vmatprep.subr.bf16.mxu0 0
      %1311 = vmatpush2.bf16.msra.mxu0 0
      %1312 = vmatprep.subr.bf16.mxu0 0
      %1313 = vmatpush2.bf16.msra.mxu0 0
      %1314 = vmatprep.subr.bf16.mxu0 0
      %1315 = vmatpush2.bf16.msra.mxu0 0
      %1316 = vmatprep.subr.bf16.mxu0 0
      %1317 = vmatpush2.bf16.msra.mxu0 0
      %1318 = vmatprep.mubr.bf16.mxu0 0
      %1319 = vmatmul.mubr.bf16.gmra.mxu0 %v600
      %v1320 = vpop.f32.mrf.mxu0
      %v1321 = vadd.f32 %v446, %v1320
      %v1322 = vpop.f32.mrf.mxu0
      %v1323 = vadd.f32 %v446, %v1322
      %v1324 = vpop.f32.mrf.mxu0
      %v1325 = vadd.f32 %v451, %v1324
      %v1326 = vpop.f32.mrf.mxu0
      %v1327 = vadd.f32 %v451, %v1326
      %1328 = vmatprep.mubr.bf16.mxu0 0
      %1329 = vmatmul.mubr.bf16.gmra.mxu0 %v603
      %v1330 = vpop.f32.mrf.mxu0
      %v1331 = vadd.f32 %v456, %v1330
      %v1332 = vpop.f32.mrf.mxu0
      %v1333 = vadd.f32 %v456, %v1332
      %v1334 = vpop.f32.mrf.mxu0
      %v1335 = vadd.f32 %v461, %v1334
      %v1336 = vpop.f32.mrf.mxu0
      %v1337 = vadd.f32 %v461, %v1336
      %1338 = vdwg.mxu0
      %1339 = vmatprep.subr.bf16.mxu0 0
      %1340 = vmatpush1.bf16.msra.mxu0 0
      %1341 = vmatprep.subr.bf16.mxu0 0
      %1342 = vmatpush1.bf16.msra.mxu0 0
      %1343 = vmatprep.subr.bf16.mxu0 0
      %1344 = vmatpush1.bf16.msra.mxu0 0
      %1345 = vmatprep.subr.bf16.mxu0 0
      %1346 = vmatpush1.bf16.msra.mxu0 0
      %1347 = vmatprep.subr.bf16.mxu0 0
      %1348 = vmatpush1.bf16.msra.mxu0 0
      %1349 = vmatprep.subr.bf16.mxu0 0
      %1350 = vmatpush1.bf16.msra.mxu0 0
      %1351 = vmatprep.subr.bf16.mxu0 0
      %1352 = vmatpush1.bf16.msra.mxu0 0
      %1353 = vmatprep.subr.bf16.mxu0 %v676
      %1354 = vmatpush1.bf16.msra.mxu0 %v673
      %1355 = vmatprep.subr.bf16.mxu0 0
      %1356 = vmatpush2.bf16.msra.mxu0 0
      %1357 = vmatprep.subr.bf16.mxu0 0
      %1358 = vmatpush2.bf16.msra.mxu0 0
      %1359 = vmatprep.subr.bf16.mxu0 0
      %1360 = vmatpush2.bf16.msra.mxu0 0
      %1361 = vmatprep.subr.bf16.mxu0 0
      %1362 = vmatpush2.bf16.msra.mxu0 0
      %1363 = vmatprep.subr.bf16.mxu0 0
      %1364 = vmatpush2.bf16.msra.mxu0 0
      %1365 = vmatprep.subr.bf16.mxu0 0
      %1366 = vmatpush2.bf16.msra.mxu0 0
      %1367 = vmatprep.subr.bf16.mxu0 0
      %1368 = vmatpush2.bf16.msra.mxu0 0
      %1369 = vmatprep.subr.bf16.mxu0 0
      %1370 = vmatpush2.bf16.msra.mxu0 0
      %1371 = vmatprep.mubr.bf16.mxu0 0
      %1372 = vmatmul.mubr.bf16.gmra.mxu0 %v600
      %v1373 = vpop.f32.mrf.mxu0
      %v1374 = vadd.f32 %v446, %v1373
      %v1375 = vpop.f32.mrf.mxu0
      %v1376 = vadd.f32 %v446, %v1375
      %v1377 = vpop.f32.mrf.mxu0
      %v1378 = vadd.f32 %v451, %v1377
      %v1379 = vpop.f32.mrf.mxu0
      %v1380 = vadd.f32 %v451, %v1379
      %1381 = vmatprep.mubr.bf16.mxu0 0
      %1382 = vmatmul.mubr.bf16.gmra.mxu0 %v603
      %v1383 = vpop.f32.mrf.mxu0
      %v1384 = vadd.f32 %v456, %v1383
      %v1385 = vpop.f32.mrf.mxu0
      %v1386 = vadd.f32 %v456, %v1385
      %v1387 = vpop.f32.mrf.mxu0
      %v1388 = vadd.f32 %v461, %v1387
      %v1389 = vpop.f32.mrf.mxu0
      %v1390 = vadd.f32 %v461, %v1389
      %1391 = vdwg.mxu0
      %1392 = vmatprep.subr.bf16.mxu0 0
      %1393 = vmatpush1.bf16.msra.mxu0 0
      %1394 = vmatprep.subr.bf16.mxu0 0
      %1395 = vmatpush1.bf16.msra.mxu0 0
      %1396 = vmatprep.subr.bf16.mxu0 0
      %1397 = vmatpush1.bf16.msra.mxu0 0
      %1398 = vmatprep.subr.bf16.mxu0 0
      %1399 = vmatpush1.bf16.msra.mxu0 0
      %1400 = vmatprep.subr.bf16.mxu0 0
      %1401 = vmatpush1.bf16.msra.mxu0 0
      %1402 = vmatprep.subr.bf16.mxu0 0
      %1403 = vmatpush1.bf16.msra.mxu0 0
      %1404 = vmatprep.subr.bf16.mxu0 0
      %1405 = vmatpush1.bf16.msra.mxu0 0
      %1406 = vmatprep.subr.bf16.mxu0 %v682
      %1407 = vmatpush1.bf16.msra.mxu0 %v679
      %1408 = vmatprep.subr.bf16.mxu0 0
      %1409 = vmatpush2.bf16.msra.mxu0 0
      %1410 = vmatprep.subr.bf16.mxu0 0
      %1411 = vmatpush2.bf16.msra.mxu0 0
      %1412 = vmatprep.subr.bf16.mxu0 0
      %1413 = vmatpush2.bf16.msra.mxu0 0
      %1414 = vmatprep.subr.bf16.mxu0 0
      %1415 = vmatpush2.bf16.msra.mxu0 0
      %1416 = vmatprep.subr.bf16.mxu0 0
      %1417 = vmatpush2.bf16.msra.mxu0 0
      %1418 = vmatprep.subr.bf16.mxu0 0
      %1419 = vmatpush2.bf16.msra.mxu0 0
      %1420 = vmatprep.subr.bf16.mxu0 0
      %1421 = vmatpush2.bf16.msra.mxu0 0
      %1422 = vmatprep.subr.bf16.mxu0 0
      %1423 = vmatpush2.bf16.msra.mxu0 0
      %1424 = vmatprep.mubr.bf16.mxu0 0
      %1425 = vmatmul.mubr.bf16.gmra.mxu0 %v600
      %v1426 = vpop.f32.mrf.mxu0
      %v1427 = vadd.f32 %v446, %v1426
      %v1428 = vpop.f32.mrf.mxu0
      %v1429 = vadd.f32 %v446, %v1428
      %v1430 = vpop.f32.mrf.mxu0
      %v1431 = vadd.f32 %v451, %v1430
      %v1432 = vpop.f32.mrf.mxu0
      %v1433 = vadd.f32 %v451, %v1432
      %1434 = vmatprep.mubr.bf16.mxu0 0
      %1435 = vmatmul.mubr.bf16.gmra.mxu0 %v603
      %v1436 = vpop.f32.mrf.mxu0
      %v1437 = vadd.f32 %v456, %v1436
      %v1438 = vpop.f32.mrf.mxu0
      %v1439 = vadd.f32 %v456, %v1438
      %v1440 = vpop.f32.mrf.mxu0
      %v1441 = vadd.f32 %v461, %v1440
      %v1442 = vpop.f32.mrf.mxu0
      %v1443 = vadd.f32 %v461, %v1442
      %1444 = vdwg.mxu0
      %1445 = vmatprep.subr.bf16.mxu0 0
      %1446 = vmatpush1.bf16.msra.mxu0 0
      %1447 = vmatprep.subr.bf16.mxu0 0
      %1448 = vmatpush1.bf16.msra.mxu0 0
      %1449 = vmatprep.subr.bf16.mxu0 0
      %1450 = vmatpush1.bf16.msra.mxu0 0
      %1451 = vmatprep.subr.bf16.mxu0 0
      %1452 = vmatpush1.bf16.msra.mxu0 0
      %1453 = vmatprep.subr.bf16.mxu0 0
      %1454 = vmatpush1.bf16.msra.mxu0 0
      %1455 = vmatprep.subr.bf16.mxu0 0
      %1456 = vmatpush1.bf16.msra.mxu0 0
      %1457 = vmatprep.subr.bf16.mxu0 0
      %1458 = vmatpush1.bf16.msra.mxu0 0
      %1459 = vmatprep.subr.bf16.mxu0 %v688
      %1460 = vmatpush1.bf16.msra.mxu0 %v685
      %1461 = vmatprep.subr.bf16.mxu0 0
      %1462 = vmatpush2.bf16.msra.mxu0 0
      %1463 = vmatprep.subr.bf16.mxu0 0
      %1464 = vmatpush2.bf16.msra.mxu0 0
      %1465 = vmatprep.subr.bf16.mxu0 0
      %1466 = vmatpush2.bf16.msra.mxu0 0
      %1467 = vmatprep.subr.bf16.mxu0 0
      %1468 = vmatpush2.bf16.msra.mxu0 0
      %1469 = vmatprep.subr.bf16.mxu0 0
      %1470 = vmatpush2.bf16.msra.mxu0 0
      %1471 = vmatprep.subr.bf16.mxu0 0
      %1472 = vmatpush2.bf16.msra.mxu0 0
      %1473 = vmatprep.subr.bf16.mxu0 0
      %1474 = vmatpush2.bf16.msra.mxu0 0
      %1475 = vmatprep.subr.bf16.mxu0 0
      %1476 = vmatpush2.bf16.msra.mxu0 0
      %1477 = vmatprep.mubr.bf16.mxu0 0
      %1478 = vmatmul.mubr.bf16.gmra.mxu0 %v600
      %v1479 = vpop.f32.mrf.mxu0
      %v1480 = vadd.f32 %v446, %v1479
      %v1481 = vpop.f32.mrf.mxu0
      %v1482 = vadd.f32 %v446, %v1481
      %v1483 = vpop.f32.mrf.mxu0
      %v1484 = vadd.f32 %v451, %v1483
      %v1485 = vpop.f32.mrf.mxu0
      %v1486 = vadd.f32 %v451, %v1485
      %1487 = vmatprep.mubr.bf16.mxu0 0
      %1488 = vmatmul.mubr.bf16.gmra.mxu0 %v603
      %v1489 = vpop.f32.mrf.mxu0
      %v1490 = vadd.f32 %v456, %v1489
      %v1491 = vpop.f32.mrf.mxu0
      %v1492 = vadd.f32 %v456, %v1491
      %v1493 = vpop.f32.mrf.mxu0
      %v1494 = vadd.f32 %v461, %v1493
      %v1495 = vpop.f32.mrf.mxu0
      %v1496 = vadd.f32 %v461, %v1495
      %1497 = vdwg.mxu0
      %1498 = vmatprep.subr.bf16.mxu0 0
      %1499 = vmatpush1.bf16.msra.mxu0 0
      %1500 = vmatprep.subr.bf16.mxu0 0
      %1501 = vmatpush1.bf16.msra.mxu0 0
      %1502 = vmatprep.subr.bf16.mxu0 0
      %1503 = vmatpush1.bf16.msra.mxu0 0
      %1504 = vmatprep.subr.bf16.mxu0 0
      %1505 = vmatpush1.bf16.msra.mxu0 0
      %1506 = vmatprep.subr.bf16.mxu0 0
      %1507 = vmatpush1.bf16.msra.mxu0 0
      %1508 = vmatprep.subr.bf16.mxu0 0
      %1509 = vmatpush1.bf16.msra.mxu0 0
      %1510 = vmatprep.subr.bf16.mxu0 0
      %1511 = vmatpush1.bf16.msra.mxu0 0
      %1512 = vmatprep.subr.bf16.mxu0 %v694
      %1513 = vmatpush1.bf16.msra.mxu0 %v691
      %1514 = vmatprep.subr.bf16.mxu0 0
      %1515 = vmatpush2.bf16.msra.mxu0 0
      %1516 = vmatprep.subr.bf16.mxu0 0
      %1517 = vmatpush2.bf16.msra.mxu0 0
      %1518 = vmatprep.subr.bf16.mxu0 0
      %1519 = vmatpush2.bf16.msra.mxu0 0
      %1520 = vmatprep.subr.bf16.mxu0 0
      %1521 = vmatpush2.bf16.msra.mxu0 0
      %1522 = vmatprep.subr.bf16.mxu0 0
      %1523 = vmatpush2.bf16.msra.mxu0 0
      %1524 = vmatprep.subr.bf16.mxu0 0
      %1525 = vmatpush2.bf16.msra.mxu0 0
      %1526 = vmatprep.subr.bf16.mxu0 0
      %1527 = vmatpush2.bf16.msra.mxu0 0
      %1528 = vmatprep.subr.bf16.mxu0 0
      %1529 = vmatpush2.bf16.msra.mxu0 0
      %1530 = vmatprep.mubr.bf16.mxu0 0
      %1531 = vmatmul.mubr.bf16.gmra.mxu0 %v600
      %v1532 = vpop.f32.mrf.mxu0
      %v1533 = vadd.f32 %v446, %v1532
      %v1534 = vpop.f32.mrf.mxu0
      %v1535 = vadd.f32 %v446, %v1534
      %v1536 = vpop.f32.mrf.mxu0
      %v1537 = vadd.f32 %v451, %v1536
      %v1538 = vpop.f32.mrf.mxu0
      %v1539 = vadd.f32 %v451, %v1538
      %1540 = vmatprep.mubr.bf16.mxu0 0
      %1541 = vmatmul.mubr.bf16.gmra.mxu0 %v603
      %v1542 = vpop.f32.mrf.mxu0
      %v1543 = vadd.f32 %v456, %v1542
      %v1544 = vpop.f32.mrf.mxu0
      %v1545 = vadd.f32 %v456, %v1544
      %v1546 = vpop.f32.mrf.mxu0
      %v1547 = vadd.f32 %v461, %v1546
      %v1548 = vpop.f32.mrf.mxu0
      %v1549 = vadd.f32 %v461, %v1548
      %1550 = vdwg.mxu0
      %1551 = vmatprep.subr.bf16.mxu0 0
      %1552 = vmatpush1.bf16.msra.mxu0 0
      %1553 = vmatprep.subr.bf16.mxu0 0
      %1554 = vmatpush1.bf16.msra.mxu0 0
      %1555 = vmatprep.subr.bf16.mxu0 0
      %1556 = vmatpush1.bf16.msra.mxu0 0
      %1557 = vmatprep.subr.bf16.mxu0 0
      %1558 = vmatpush1.bf16.msra.mxu0 0
      %1559 = vmatprep.subr.bf16.mxu0 0
      %1560 = vmatpush1.bf16.msra.mxu0 0
      %1561 = vmatprep.subr.bf16.mxu0 0
      %1562 = vmatpush1.bf16.msra.mxu0 0
      %1563 = vmatprep.subr.bf16.mxu0 0
      %1564 = vmatpush1.bf16.msra.mxu0 0
      %1565 = vmatprep.subr.bf16.mxu0 %v700
      %1566 = vmatpush1.bf16.msra.mxu0 %v697
      %1567 = vmatprep.subr.bf16.mxu0 0
      %1568 = vmatpush2.bf16.msra.mxu0 0
      %1569 = vmatprep.subr.bf16.mxu0 0
      %1570 = vmatpush2.bf16.msra.mxu0 0
      %1571 = vmatprep.subr.bf16.mxu0 0
      %1572 = vmatpush2.bf16.msra.mxu0 0
      %1573 = vmatprep.subr.bf16.mxu0 0
      %1574 = vmatpush2.bf16.msra.mxu0 0
      %1575 = vmatprep.subr.bf16.mxu0 0
      %1576 = vmatpush2.bf16.msra.mxu0 0
      %1577 = vmatprep.subr.bf16.mxu0 0
      %1578 = vmatpush2.bf16.msra.mxu0 0
      %1579 = vmatprep.subr.bf16.mxu0 0
      %1580 = vmatpush2.bf16.msra.mxu0 0
      %1581 = vmatprep.subr.bf16.mxu0 0
      %1582 = vmatpush2.bf16.msra.mxu0 0
      %1583 = vmatprep.mubr.bf16.mxu0 0
      %1584 = vmatmul.mubr.bf16.gmra.mxu0 %v600
      %v1585 = vpop.f32.mrf.mxu0
      %v1586 = vadd.f32 %v446, %v1585
      %v1587 = vpop.f32.mrf.mxu0
      %v1588 = vadd.f32 %v446, %v1587
      %v1589 = vpop.f32.mrf.mxu0
      %v1590 = vadd.f32 %v451, %v1589
      %v1591 = vpop.f32.mrf.mxu0
      %v1592 = vadd.f32 %v451, %v1591
      %1593 = vmatprep.mubr.bf16.mxu0 0
      %1594 = vmatmul.mubr.bf16.gmra.mxu0 %v603
      %v1595 = vpop.f32.mrf.mxu0
      %v1596 = vadd.f32 %v456, %v1595
      %v1597 = vpop.f32.mrf.mxu0
      %v1598 = vadd.f32 %v456, %v1597
      %v1599 = vpop.f32.mrf.mxu0
      %v1600 = vadd.f32 %v461, %v1599
      %v1601 = vpop.f32.mrf.mxu0
      %v1602 = vadd.f32 %v461, %v1601
      %1603 = vdwg.mxu0
      %1604 = vmatprep.subr.bf16.mxu0 0
      %1605 = vmatpush1.bf16.msra.mxu0 0
      %1606 = vmatprep.subr.bf16.mxu0 0
      %1607 = vmatpush1.bf16.msra.mxu0 0
      %1608 = vmatprep.subr.bf16.mxu0 0
      %1609 = vmatpush1.bf16.msra.mxu0 0
      %1610 = vmatprep.subr.bf16.mxu0 0
      %1611 = vmatpush1.bf16.msra.mxu0 0
      %1612 = vmatprep.subr.bf16.mxu0 0
      %1613 = vmatpush1.bf16.msra.mxu0 0
      %1614 = vmatprep.subr.bf16.mxu0 0
      %1615 = vmatpush1.bf16.msra.mxu0 0
      %1616 = vmatprep.subr.bf16.mxu0 0
      %1617 = vmatpush1.bf16.msra.mxu0 0
      %1618 = vmatprep.subr.bf16.mxu0 %v706
      %1619 = vmatpush1.bf16.msra.mxu0 %v703
      %1620 = vmatprep.subr.bf16.mxu0 0
      %1621 = vmatpush2.bf16.msra.mxu0 0
      %1622 = vmatprep.subr.bf16.mxu0 0
      %1623 = vmatpush2.bf16.msra.mxu0 0
      %1624 = vmatprep.subr.bf16.mxu0 0
      %1625 = vmatpush2.bf16.msra.mxu0 0
      %1626 = vmatprep.subr.bf16.mxu0 0
      %1627 = vmatpush2.bf16.msra.mxu0 0
      %1628 = vmatprep.subr.bf16.mxu0 0
      %1629 = vmatpush2.bf16.msra.mxu0 0
      %1630 = vmatprep.subr.bf16.mxu0 0
      %1631 = vmatpush2.bf16.msra.mxu0 0
      %1632 = vmatprep.subr.bf16.mxu0 0
      %1633 = vmatpush2.bf16.msra.mxu0 0
      %1634 = vmatprep.subr.bf16.mxu0 0
      %1635 = vmatpush2.bf16.msra.mxu0 0
      %1636 = vmatprep.mubr.bf16.mxu0 0
      %1637 = vmatmul.mubr.bf16.gmra.mxu0 %v600
      %v1638 = vpop.f32.mrf.mxu0
      %v1639 = vadd.f32 %v446, %v1638
      %v1640 = vpop.f32.mrf.mxu0
      %v1641 = vadd.f32 %v446, %v1640
      %v1642 = vpop.f32.mrf.mxu0
      %v1643 = vadd.f32 %v451, %v1642
      %v1644 = vpop.f32.mrf.mxu0
      %v1645 = vadd.f32 %v451, %v1644
      %1646 = vmatprep.mubr.bf16.mxu0 0
      %1647 = vmatmul.mubr.bf16.gmra.mxu0 %v603
      %v1648 = vpop.f32.mrf.mxu0
      %v1649 = vadd.f32 %v456, %v1648
      %v1650 = vpop.f32.mrf.mxu0
      %v1651 = vadd.f32 %v456, %v1650
      %v1652 = vpop.f32.mrf.mxu0
      %v1653 = vadd.f32 %v461, %v1652
      %v1654 = vpop.f32.mrf.mxu0
      %v1655 = vadd.f32 %v461, %v1654
      %1656 = vdwg.mxu0
      %1657 = vmatprep.subr.bf16.mxu0 0
      %1658 = vmatpush1.bf16.msra.mxu0 0
      %1659 = vmatprep.subr.bf16.mxu0 0
      %1660 = vmatpush1.bf16.msra.mxu0 0
      %1661 = vmatprep.subr.bf16.mxu0 0
      %1662 = vmatpush1.bf16.msra.mxu0 0
      %1663 = vmatprep.subr.bf16.mxu0 0
      %1664 = vmatpush1.bf16.msra.mxu0 0
      %1665 = vmatprep.subr.bf16.mxu0 0
      %1666 = vmatpush1.bf16.msra.mxu0 0
      %1667 = vmatprep.subr.bf16.mxu0 0
      %1668 = vmatpush1.bf16.msra.mxu0 0
      %1669 = vmatprep.subr.bf16.mxu0 0
      %1670 = vmatpush1.bf16.msra.mxu0 0
      %1671 = vmatprep.subr.bf16.mxu0 %v712
      %1672 = vmatpush1.bf16.msra.mxu0 %v709
      %1673 = vmatprep.subr.bf16.mxu0 0
      %1674 = vmatpush2.bf16.msra.mxu0 0
      %1675 = vmatprep.subr.bf16.mxu0 0
      %1676 = vmatpush2.bf16.msra.mxu0 0
      %1677 = vmatprep.subr.bf16.mxu0 0
      %1678 = vmatpush2.bf16.msra.mxu0 0
      %1679 = vmatprep.subr.bf16.mxu0 0
      %1680 = vmatpush2.bf16.msra.mxu0 0
      %1681 = vmatprep.subr.bf16.mxu0 0
      %1682 = vmatpush2.bf16.msra.mxu0 0
      %1683 = vmatprep.subr.bf16.mxu0 0
      %1684 = vmatpush2.bf16.msra.mxu0 0
      %1685 = vmatprep.subr.bf16.mxu0 0
      %1686 = vmatpush2.bf16.msra.mxu0 0
      %1687 = vmatprep.subr.bf16.mxu0 0
      %1688 = vmatpush2.bf16.msra.mxu0 0
      %1689 = vmatprep.mubr.bf16.mxu0 0
      %1690 = vmatmul.mubr.bf16.gmra.mxu0 %v600
      %v1691 = vpop.f32.mrf.mxu0
      %v1692 = vadd.f32 %v446, %v1691
      %v1693 = vpop.f32.mrf.mxu0
      %v1694 = vadd.f32 %v446, %v1693
      %v1695 = vpop.f32.mrf.mxu0
      %v1696 = vadd.f32 %v451, %v1695
      %v1697 = vpop.f32.mrf.mxu0
      %v1698 = vadd.f32 %v451, %v1697
      %1699 = vmatprep.mubr.bf16.mxu0 0
      %1700 = vmatmul.mubr.bf16.gmra.mxu0 %v603
      %v1701 = vpop.f32.mrf.mxu0
      %v1702 = vadd.f32 %v456, %v1701
      %v1703 = vpop.f32.mrf.mxu0
      %v1704 = vadd.f32 %v456, %v1703
      %v1705 = vpop.f32.mrf.mxu0
      %v1706 = vadd.f32 %v461, %v1705
      %v1707 = vpop.f32.mrf.mxu0
      %v1708 = vadd.f32 %v461, %v1707
      %1709 = vdwg.mxu0
      %1710 = vmatprep.subr.bf16.mxu0 0
      %1711 = vmatpush1.bf16.msra.mxu0 0
      %1712 = vmatprep.subr.bf16.mxu0 0
      %1713 = vmatpush1.bf16.msra.mxu0 0
      %1714 = vmatprep.subr.bf16.mxu0 0
      %1715 = vmatpush1.bf16.msra.mxu0 0
      %1716 = vmatprep.subr.bf16.mxu0 0
      %1717 = vmatpush1.bf16.msra.mxu0 0
      %1718 = vmatprep.subr.bf16.mxu0 0
      %1719 = vmatpush1.bf16.msra.mxu0 0
      %1720 = vmatprep.subr.bf16.mxu0 0
      %1721 = vmatpush1.bf16.msra.mxu0 0
      %1722 = vmatprep.subr.bf16.mxu0 0
      %1723 = vmatpush1.bf16.msra.mxu0 0
      %1724 = vmatprep.subr.bf16.mxu0 %v718
      %1725 = vmatpush1.bf16.msra.mxu0 %v715
      %1726 = vmatprep.subr.bf16.mxu0 0
      %1727 = vmatpush2.bf16.msra.mxu0 0
      %1728 = vmatprep.subr.bf16.mxu0 0
      %1729 = vmatpush2.bf16.msra.mxu0 0
      %1730 = vmatprep.subr.bf16.mxu0 0
      %1731 = vmatpush2.bf16.msra.mxu0 0
      %1732 = vmatprep.subr.bf16.mxu0 0
      %1733 = vmatpush2.bf16.msra.mxu0 0
      %1734 = vmatprep.subr.bf16.mxu0 0
      %1735 = vmatpush2.bf16.msra.mxu0 0
      %1736 = vmatprep.subr.bf16.mxu0 0
      %1737 = vmatpush2.bf16.msra.mxu0 0
      %1738 = vmatprep.subr.bf16.mxu0 0
      %1739 = vmatpush2.bf16.msra.mxu0 0
      %1740 = vmatprep.subr.bf16.mxu0 0
      %1741 = vmatpush2.bf16.msra.mxu0 0
      %1742 = vmatprep.mubr.bf16.mxu0 0
      %1743 = vmatmul.mubr.bf16.gmra.mxu0 %v600
      %v1744 = vpop.f32.mrf.mxu0
      %v1745 = vadd.f32 %v446, %v1744
      %v1746 = vpop.f32.mrf.mxu0
      %v1747 = vadd.f32 %v446, %v1746
      %v1748 = vpop.f32.mrf.mxu0
      %v1749 = vadd.f32 %v451, %v1748
      %v1750 = vpop.f32.mrf.mxu0
      %v1751 = vadd.f32 %v451, %v1750
      %1752 = vmatprep.mubr.bf16.mxu0 0
      %1753 = vmatmul.mubr.bf16.gmra.mxu0 %v603
      %v1754 = vpop.f32.mrf.mxu0
      %v1755 = vadd.f32 %v456, %v1754
      %v1756 = vpop.f32.mrf.mxu0
      %v1757 = vadd.f32 %v456, %v1756
      %v1758 = vpop.f32.mrf.mxu0
      %v1759 = vadd.f32 %v461, %v1758
      %v1760 = vpop.f32.mrf.mxu0
      %v1761 = vadd.f32 %v461, %v1760
      %1762 = vdwg.mxu0
      %1763 = vmatprep.subr.bf16.mxu0 0
      %1764 = vmatpush1.bf16.msra.mxu0 0
      %1765 = vmatprep.subr.bf16.mxu0 0
      %1766 = vmatpush1.bf16.msra.mxu0 0
      %1767 = vmatprep.subr.bf16.mxu0 0
      %1768 = vmatpush1.bf16.msra.mxu0 0
      %1769 = vmatprep.subr.bf16.mxu0 0
      %1770 = vmatpush1.bf16.msra.mxu0 0
      %1771 = vmatprep.subr.bf16.mxu0 0
      %1772 = vmatpush1.bf16.msra.mxu0 0
      %1773 = vmatprep.subr.bf16.mxu0 0
      %1774 = vmatpush1.bf16.msra.mxu0 0
      %1775 = vmatprep.subr.bf16.mxu0 0
      %1776 = vmatpush1.bf16.msra.mxu0 0
      %1777 = vmatprep.subr.bf16.mxu0 %v724
      %1778 = vmatpush1.bf16.msra.mxu0 %v721
      %1779 = vmatprep.subr.bf16.mxu0 0
      %1780 = vmatpush2.bf16.msra.mxu0 0
      %1781 = vmatprep.subr.bf16.mxu0 0
      %1782 = vmatpush2.bf16.msra.mxu0 0
      %1783 = vmatprep.subr.bf16.mxu0 0
      %1784 = vmatpush2.bf16.msra.mxu0 0
      %1785 = vmatprep.subr.bf16.mxu0 0
      %1786 = vmatpush2.bf16.msra.mxu0 0
      %1787 = vmatprep.subr.bf16.mxu0 0
      %1788 = vmatpush2.bf16.msra.mxu0 0
      %1789 = vmatprep.subr.bf16.mxu0 0
      %1790 = vmatpush2.bf16.msra.mxu0 0
      %1791 = vmatprep.subr.bf16.mxu0 0
      %1792 = vmatpush2.bf16.msra.mxu0 0
      %1793 = vmatprep.subr.bf16.mxu0 0
      %1794 = vmatpush2.bf16.msra.mxu0 0
      %1795 = vmatprep.mubr.bf16.mxu0 0
      %1796 = vmatmul.mubr.bf16.gmra.mxu0 %v600
      %v1797 = vpop.f32.mrf.mxu0
      %v1798 = vadd.f32 %v446, %v1797
      %v1799 = vpop.f32.mrf.mxu0
      %v1800 = vadd.f32 %v446, %v1799
      %v1801 = vpop.f32.mrf.mxu0
      %v1802 = vadd.f32 %v451, %v1801
      %v1803 = vpop.f32.mrf.mxu0
      %v1804 = vadd.f32 %v451, %v1803
      %1805 = vmatprep.mubr.bf16.mxu0 0
      %1806 = vmatmul.mubr.bf16.gmra.mxu0 %v603
      %v1807 = vpop.f32.mrf.mxu0
      %v1808 = vadd.f32 %v456, %v1807
      %v1809 = vpop.f32.mrf.mxu0
      %v1810 = vadd.f32 %v456, %v1809
      %v1811 = vpop.f32.mrf.mxu0
      %v1812 = vadd.f32 %v461, %v1811
      %v1813 = vpop.f32.mrf.mxu0
      %v1814 = vadd.f32 %v461, %v1813
      %1815 = vdwg.mxu0
      %1816 = vmatprep.subr.bf16.mxu0 0
      %1817 = vmatpush1.bf16.msra.mxu0 0
      %1818 = vmatprep.subr.bf16.mxu0 0
      %1819 = vmatpush1.bf16.msra.mxu0 0
      %1820 = vmatprep.subr.bf16.mxu0 0
      %1821 = vmatpush1.bf16.msra.mxu0 0
      %1822 = vmatprep.subr.bf16.mxu0 0
      %1823 = vmatpush1.bf16.msra.mxu0 0
      %1824 = vmatprep.subr.bf16.mxu0 0
      %1825 = vmatpush1.bf16.msra.mxu0 0
      %1826 = vmatprep.subr.bf16.mxu0 0
      %1827 = vmatpush1.bf16.msra.mxu0 0
      %1828 = vmatprep.subr.bf16.mxu0 0
      %1829 = vmatpush1.bf16.msra.mxu0 0
      %1830 = vmatprep.subr.bf16.mxu0 %v730
      %1831 = vmatpush1.bf16.msra.mxu0 %v727
      %1832 = vmatprep.subr.bf16.mxu0 0
      %1833 = vmatpush2.bf16.msra.mxu0 0
      %1834 = vmatprep.subr.bf16.mxu0 0
      %1835 = vmatpush2.bf16.msra.mxu0 0
      %1836 = vmatprep.subr.bf16.mxu0 0
      %1837 = vmatpush2.bf16.msra.mxu0 0
      %1838 = vmatprep.subr.bf16.mxu0 0
      %1839 = vmatpush2.bf16.msra.mxu0 0
      %1840 = vmatprep.subr.bf16.mxu0 0
      %1841 = vmatpush2.bf16.msra.mxu0 0
      %1842 = vmatprep.subr.bf16.mxu0 0
      %1843 = vmatpush2.bf16.msra.mxu0 0
      %1844 = vmatprep.subr.bf16.mxu0 0
      %1845 = vmatpush2.bf16.msra.mxu0 0
      %1846 = vmatprep.subr.bf16.mxu0 0
      %1847 = vmatpush2.bf16.msra.mxu0 0
      %1848 = vmatprep.mubr.bf16.mxu0 0
      %1849 = vmatmul.mubr.bf16.gmra.mxu0 %v600
      %v1850 = vpop.f32.mrf.mxu0
      %v1851 = vadd.f32 %v446, %v1850
      %v1852 = vpop.f32.mrf.mxu0
      %v1853 = vadd.f32 %v446, %v1852
      %v1854 = vpop.f32.mrf.mxu0
      %v1855 = vadd.f32 %v451, %v1854
      %v1856 = vpop.f32.mrf.mxu0
      %v1857 = vadd.f32 %v451, %v1856
      %1858 = vmatprep.mubr.bf16.mxu0 0
      %1859 = vmatmul.mubr.bf16.gmra.mxu0 %v603
      %v1860 = vpop.f32.mrf.mxu0
      %v1861 = vadd.f32 %v456, %v1860
      %v1862 = vpop.f32.mrf.mxu0
      %v1863 = vadd.f32 %v456, %v1862
      %v1864 = vpop.f32.mrf.mxu0
      %v1865 = vadd.f32 %v461, %v1864
      %v1866 = vpop.f32.mrf.mxu0
      %v1867 = vadd.f32 %v461, %v1866
      %1868 = vdwg.mxu0
      %1869 = vmatprep.subr.bf16.mxu0 0
      %1870 = vmatpush1.bf16.msra.mxu0 0
      %1871 = vmatprep.subr.bf16.mxu0 0
      %1872 = vmatpush1.bf16.msra.mxu0 0
      %1873 = vmatprep.subr.bf16.mxu0 0
      %1874 = vmatpush1.bf16.msra.mxu0 0
      %1875 = vmatprep.subr.bf16.mxu0 0
      %1876 = vmatpush1.bf16.msra.mxu0 0
      %1877 = vmatprep.subr.bf16.mxu0 0
      %1878 = vmatpush1.bf16.msra.mxu0 0
      %1879 = vmatprep.subr.bf16.mxu0 0
      %1880 = vmatpush1.bf16.msra.mxu0 0
      %1881 = vmatprep.subr.bf16.mxu0 0
      %1882 = vmatpush1.bf16.msra.mxu0 0
      %1883 = vmatprep.subr.bf16.mxu0 %v736
      %1884 = vmatpush1.bf16.msra.mxu0 %v733
      %1885 = vmatprep.subr.bf16.mxu0 0
      %1886 = vmatpush2.bf16.msra.mxu0 0
      %1887 = vmatprep.subr.bf16.mxu0 0
      %1888 = vmatpush2.bf16.msra.mxu0 0
      %1889 = vmatprep.subr.bf16.mxu0 0
      %1890 = vmatpush2.bf16.msra.mxu0 0
      %1891 = vmatprep.subr.bf16.mxu0 0
      %1892 = vmatpush2.bf16.msra.mxu0 0
      %1893 = vmatprep.subr.bf16.mxu0 0
      %1894 = vmatpush2.bf16.msra.mxu0 0
      %1895 = vmatprep.subr.bf16.mxu0 0
      %1896 = vmatpush2.bf16.msra.mxu0 0
      %1897 = vmatprep.subr.bf16.mxu0 0
      %1898 = vmatpush2.bf16.msra.mxu0 0
      %1899 = vmatprep.subr.bf16.mxu0 0
      %1900 = vmatpush2.bf16.msra.mxu0 0
      %1901 = vmatprep.mubr.bf16.mxu0 0
      %1902 = vmatmul.mubr.bf16.gmra.mxu0 %v600
      %v1903 = vpop.f32.mrf.mxu0
      %v1904 = vadd.f32 %v446, %v1903
      %v1905 = vpop.f32.mrf.mxu0
      %v1906 = vadd.f32 %v446, %v1905
      %v1907 = vpop.f32.mrf.mxu0
      %v1908 = vadd.f32 %v451, %v1907
      %v1909 = vpop.f32.mrf.mxu0
      %v1910 = vadd.f32 %v451, %v1909
      %1911 = vmatprep.mubr.bf16.mxu0 0
      %1912 = vmatmul.mubr.bf16.gmra.mxu0 %v603
      %v1913 = vpop.f32.mrf.mxu0
      %v1914 = vadd.f32 %v456, %v1913
      %v1915 = vpop.f32.mrf.mxu0
      %v1916 = vadd.f32 %v456, %v1915
      %v1917 = vpop.f32.mrf.mxu0
      %v1918 = vadd.f32 %v461, %v1917
      %v1919 = vpop.f32.mrf.mxu0
      %v1920 = vadd.f32 %v461, %v1919
      %1921 = vdwg.mxu0
      %1922 = vmatprep.subr.bf16.mxu0 0
      %1923 = vmatpush1.bf16.msra.mxu0 0
      %1924 = vmatprep.subr.bf16.mxu0 0
      %1925 = vmatpush1.bf16.msra.mxu0 0
      %1926 = vmatprep.subr.bf16.mxu0 0
      %1927 = vmatpush1.bf16.msra.mxu0 0
      %1928 = vmatprep.subr.bf16.mxu0 0
      %1929 = vmatpush1.bf16.msra.mxu0 0
      %1930 = vmatprep.subr.bf16.mxu0 0
      %1931 = vmatpush1.bf16.msra.mxu0 0
      %1932 = vmatprep.subr.bf16.mxu0 0
      %1933 = vmatpush1.bf16.msra.mxu0 0
      %1934 = vmatprep.subr.bf16.mxu0 0
      %1935 = vmatpush1.bf16.msra.mxu0 0
      %1936 = vmatprep.subr.bf16.mxu0 %v742
      %1937 = vmatpush1.bf16.msra.mxu0 %v739
      %1938 = vmatprep.subr.bf16.mxu0 0
      %1939 = vmatpush2.bf16.msra.mxu0 0
      %1940 = vmatprep.subr.bf16.mxu0 0
      %1941 = vmatpush2.bf16.msra.mxu0 0
      %1942 = vmatprep.subr.bf16.mxu0 0
      %1943 = vmatpush2.bf16.msra.mxu0 0
      %1944 = vmatprep.subr.bf16.mxu0 0
      %1945 = vmatpush2.bf16.msra.mxu0 0
      %1946 = vmatprep.subr.bf16.mxu0 0
      %1947 = vmatpush2.bf16.msra.mxu0 0
      %1948 = vmatprep.subr.bf16.mxu0 0
      %1949 = vmatpush2.bf16.msra.mxu0 0
      %1950 = vmatprep.subr.bf16.mxu0 0
      %1951 = vmatpush2.bf16.msra.mxu0 0
      %1952 = vmatprep.subr.bf16.mxu0 0
      %1953 = vmatpush2.bf16.msra.mxu0 0
      %1954 = vmatprep.mubr.bf16.mxu0 0
      %1955 = vmatmul.mubr.bf16.gmra.mxu0 %v600
      %v1956 = vpop.f32.mrf.mxu0
      %v1957 = vadd.f32 %v446, %v1956
      %v1958 = vpop.f32.mrf.mxu0
      %v1959 = vadd.f32 %v446, %v1958
      %v1960 = vpop.f32.mrf.mxu0
      %v1961 = vadd.f32 %v451, %v1960
      %v1962 = vpop.f32.mrf.mxu0
      %v1963 = vadd.f32 %v451, %v1962
      %1964 = vmatprep.mubr.bf16.mxu0 0
      %1965 = vmatmul.mubr.bf16.gmra.mxu0 %v603
      %v1966 = vpop.f32.mrf.mxu0
      %v1967 = vadd.f32 %v456, %v1966
      %v1968 = vpop.f32.mrf.mxu0
      %v1969 = vadd.f32 %v456, %v1968
      %v1970 = vpop.f32.mrf.mxu0
      %v1971 = vadd.f32 %v461, %v1970
      %v1972 = vpop.f32.mrf.mxu0
      %v1973 = vadd.f32 %v461, %v1972
      %1974 = vdwg.mxu0
      %1975 = vmatprep.subr.bf16.mxu0 0
      %1976 = vmatpush1.bf16.msra.mxu0 0
      %1977 = vmatprep.subr.bf16.mxu0 0
      %1978 = vmatpush1.bf16.msra.mxu0 0
      %1979 = vmatprep.subr.bf16.mxu0 0
      %1980 = vmatpush1.bf16.msra.mxu0 0
      %1981 = vmatprep.subr.bf16.mxu0 0
      %1982 = vmatpush1.bf16.msra.mxu0 0
      %1983 = vmatprep.subr.bf16.mxu0 0
      %1984 = vmatpush1.bf16.msra.mxu0 0
      %1985 = vmatprep.subr.bf16.mxu0 0
      %1986 = vmatpush1.bf16.msra.mxu0 0
      %1987 = vmatprep.subr.bf16.mxu0 0
      %1988 = vmatpush1.bf16.msra.mxu0 0
      %1989 = vmatprep.subr.bf16.mxu0 %v748
      %1990 = vmatpush1.bf16.msra.mxu0 %v745
      %1991 = vmatprep.subr.bf16.mxu0 0
      %1992 = vmatpush2.bf16.msra.mxu0 0
      %1993 = vmatprep.subr.bf16.mxu0 0
      %1994 = vmatpush2.bf16.msra.mxu0 0
      %1995 = vmatprep.subr.bf16.mxu0 0
      %1996 = vmatpush2.bf16.msra.mxu0 0
      %1997 = vmatprep.subr.bf16.mxu0 0
      %1998 = vmatpush2.bf16.msra.mxu0 0
      %1999 = vmatprep.subr.bf16.mxu0 0
      %2000 = vmatpush2.bf16.msra.mxu0 0
      %2001 = vmatprep.subr.bf16.mxu0 0
      %2002 = vmatpush2.bf16.msra.mxu0 0
      %2003 = vmatprep.subr.bf16.mxu0 0
      %2004 = vmatpush2.bf16.msra.mxu0 0
      %2005 = vmatprep.subr.bf16.mxu0 0
      %2006 = vmatpush2.bf16.msra.mxu0 0
      %2007 = vmatprep.mubr.bf16.mxu0 0
      %2008 = vmatmul.mubr.bf16.gmra.mxu0 %v600
      %v2009 = vpop.f32.mrf.mxu0
      %v2010 = vadd.f32 %v446, %v2009
      %v2011 = vpop.f32.mrf.mxu0
      %v2012 = vadd.f32 %v446, %v2011
      %v2013 = vpop.f32.mrf.mxu0
      %v2014 = vadd.f32 %v451, %v2013
      %v2015 = vpop.f32.mrf.mxu0
      %v2016 = vadd.f32 %v451, %v2015
      %2017 = vmatprep.mubr.bf16.mxu0 0
      %2018 = vmatmul.mubr.bf16.gmra.mxu0 %v603
      %v2019 = vpop.f32.mrf.mxu0
      %v2020 = vadd.f32 %v456, %v2019
      %v2021 = vpop.f32.mrf.mxu0
      %v2022 = vadd.f32 %v456, %v2021
      %v2023 = vpop.f32.mrf.mxu0
      %v2024 = vadd.f32 %v461, %v2023
      %v2025 = vpop.f32.mrf.mxu0
      %v2026 = vadd.f32 %v461, %v2025
      %2027 = vdwg.mxu0
      %2028 = vmatprep.subr.bf16.mxu0 0
      %2029 = vmatpush1.bf16.msra.mxu0 0
      %2030 = vmatprep.subr.bf16.mxu0 0
      %2031 = vmatpush1.bf16.msra.mxu0 0
      %2032 = vmatprep.subr.bf16.mxu0 0
      %2033 = vmatpush1.bf16.msra.mxu0 0
      %2034 = vmatprep.subr.bf16.mxu0 0
      %2035 = vmatpush1.bf16.msra.mxu0 0
      %2036 = vmatprep.subr.bf16.mxu0 0
      %2037 = vmatpush1.bf16.msra.mxu0 0
      %2038 = vmatprep.subr.bf16.mxu0 0
      %2039 = vmatpush1.bf16.msra.mxu0 0
      %2040 = vmatprep.subr.bf16.mxu0 0
      %2041 = vmatpush1.bf16.msra.mxu0 0
      %2042 = vmatprep.subr.bf16.mxu0 %v754
      %2043 = vmatpush1.bf16.msra.mxu0 %v751
      %2044 = vmatprep.subr.bf16.mxu0 0
      %2045 = vmatpush2.bf16.msra.mxu0 0
      %2046 = vmatprep.subr.bf16.mxu0 0
      %2047 = vmatpush2.bf16.msra.mxu0 0
      %2048 = vmatprep.subr.bf16.mxu0 0
      %2049 = vmatpush2.bf16.msra.mxu0 0
      %2050 = vmatprep.subr.bf16.mxu0 0
      %2051 = vmatpush2.bf16.msra.mxu0 0
      %2052 = vmatprep.subr.bf16.mxu0 0
      %2053 = vmatpush2.bf16.msra.mxu0 0
      %2054 = vmatprep.subr.bf16.mxu0 0
      %2055 = vmatpush2.bf16.msra.mxu0 0
      %2056 = vmatprep.subr.bf16.mxu0 0
      %2057 = vmatpush2.bf16.msra.mxu0 0
      %2058 = vmatprep.subr.bf16.mxu0 0
      %2059 = vmatpush2.bf16.msra.mxu0 0
      %2060 = vmatprep.mubr.bf16.mxu0 0
      %2061 = vmatmul.mubr.bf16.gmra.mxu0 %v600
      %v2062 = vpop.f32.mrf.mxu0
      %v2063 = vadd.f32 %v446, %v2062
      %v2064 = vpop.f32.mrf.mxu0
      %v2065 = vadd.f32 %v446, %v2064
      %v2066 = vpop.f32.mrf.mxu0
      %v2067 = vadd.f32 %v451, %v2066
      %v2068 = vpop.f32.mrf.mxu0
      %v2069 = vadd.f32 %v451, %v2068
      %2070 = vmatprep.mubr.bf16.mxu0 0
      %2071 = vmatmul.mubr.bf16.gmra.mxu0 %v603
      %v2072 = vpop.f32.mrf.mxu0
      %v2073 = vadd.f32 %v456, %v2072
      %v2074 = vpop.f32.mrf.mxu0
      %v2075 = vadd.f32 %v456, %v2074
      %v2076 = vpop.f32.mrf.mxu0
      %v2077 = vadd.f32 %v461, %v2076
      %v2078 = vpop.f32.mrf.mxu0
      %v2079 = vadd.f32 %v461, %v2078
      %2080 = vdwg.mxu0
      %v2081 = vmax.f32 %v791, 0.0
      %v2082 = vmax.f32 %v793, 0.0
      %v2083 = vmax.f32 %v844, 0.0
      %v2084 = vmax.f32 %v846, 0.0
      %v2085 = vmax.f32 %v897, 0.0
      %v2086 = vmax.f32 %v899, 0.0
      %v2087 = vmax.f32 %v950, 0.0
      %v2088 = vmax.f32 %v952, 0.0
      %v2089 = vmax.f32 %v1003, 0.0
      %v2090 = vmax.f32 %v1005, 0.0
      %v2091 = vmax.f32 %v1056, 0.0
      %v2092 = vmax.f32 %v1058, 0.0
      %v2093 = vmax.f32 %v1109, 0.0
      %v2094 = vmax.f32 %v1111, 0.0
      %v2095 = vmax.f32 %v1162, 0.0
      %v2096 = vmax.f32 %v1164, 0.0
      %v2097 = vmax.f32 %v1215, 0.0
      %v2098 = vmax.f32 %v1217, 0.0
      %v2099 = vmax.f32 %v1268, 0.0
      %v2100 = vmax.f32 %v1270, 0.0
      %v2101 = vmax.f32 %v1321, 0.0
      %v2102 = vmax.f32 %v1323, 0.0
      %v2103 = vmax.f32 %v1374, 0.0
      %v2104 = vmax.f32 %v1376, 0.0
      %v2105 = vmax.f32 %v1427, 0.0
      %v2106 = vmax.f32 %v1429, 0.0
      %v2107 = vmax.f32 %v1480, 0.0
      %v2108 = vmax.f32 %v1482, 0.0
      %v2109 = vmax.f32 %v1533, 0.0
      %v2110 = vmax.f32 %v1535, 0.0
      %v2111 = vmax.f32 %v1586, 0.0
      %v2112 = vmax.f32 %v1588, 0.0
      %v2113 = vmax.f32 %v1639, 0.0
      %v2114 = vmax.f32 %v1641, 0.0
      %v2115 = vmax.f32 %v1692, 0.0
      %v2116 = vmax.f32 %v1694, 0.0
      %v2117 = vmax.f32 %v1745, 0.0
      %v2118 = vmax.f32 %v1747, 0.0
      %v2119 = vmax.f32 %v1798, 0.0
      %v2120 = vmax.f32 %v1800, 0.0
      %v2121 = vmax.f32 %v1851, 0.0
      %v2122 = vmax.f32 %v1853, 0.0
      %v2123 = vmax.f32 %v1904, 0.0
      %v2124 = vmax.f32 %v1906, 0.0
      %v2125 = vmax.f32 %v1957, 0.0
      %v2126 = vmax.f32 %v1959, 0.0
      %v2127 = vmax.f32 %v2010, 0.0
      %v2128 = vmax.f32 %v2012, 0.0
      %v2129 = vmax.f32 %v2063, 0.0
      %v2130 = vmax.f32 %v2065, 0.0
      %v2131 = vmax.f32 %v795, 0.0
      %v2132 = vmax.f32 %v797, 0.0
      %v2133 = vmax.f32 %v848, 0.0
      %v2134 = vmax.f32 %v850, 0.0
      %v2135 = vmax.f32 %v901, 0.0
      %v2136 = vmax.f32 %v903, 0.0
      %v2137 = vmax.f32 %v954, 0.0
      %v2138 = vmax.f32 %v956, 0.0
      %v2139 = vmax.f32 %v1007, 0.0
      %v2140 = vmax.f32 %v1009, 0.0
      %v2141 = vmax.f32 %v1060, 0.0
      %v2142 = vmax.f32 %v1062, 0.0
      %v2143 = vmax.f32 %v1113, 0.0
      %v2144 = vmax.f32 %v1115, 0.0
      %v2145 = vmax.f32 %v1166, 0.0
      %v2146 = vmax.f32 %v1168, 0.0
      %v2147 = vmax.f32 %v1219, 0.0
      %v2148 = vmax.f32 %v1221, 0.0
      %v2149 = vmax.f32 %v1272, 0.0
      %v2150 = vmax.f32 %v1274, 0.0
      %v2151 = vmax.f32 %v1325, 0.0
      %v2152 = vmax.f32 %v1327, 0.0
      %v2153 = vmax.f32 %v1378, 0.0
      %v2154 = vmax.f32 %v1380, 0.0
      %v2155 = vmax.f32 %v1431, 0.0
      %v2156 = vmax.f32 %v1433, 0.0
      %v2157 = vmax.f32 %v1484, 0.0
      %v2158 = vmax.f32 %v1486, 0.0
      %v2159 = vmax.f32 %v1537, 0.0
      %v2160 = vmax.f32 %v1539, 0.0
      %v2161 = vmax.f32 %v1590, 0.0
      %v2162 = vmax.f32 %v1592, 0.0
      %v2163 = vmax.f32 %v1643, 0.0
      %v2164 = vmax.f32 %v1645, 0.0
      %v2165 = vmax.f32 %v1696, 0.0
      %v2166 = vmax.f32 %v1698, 0.0
      %v2167 = vmax.f32 %v1749, 0.0
      %v2168 = vmax.f32 %v1751, 0.0
      %v2169 = vmax.f32 %v1802, 0.0
      %v2170 = vmax.f32 %v1804, 0.0
      %v2171 = vmax.f32 %v1855, 0.0
      %v2172 = vmax.f32 %v1857, 0.0
      %v2173 = vmax.f32 %v1908, 0.0
      %v2174 = vmax.f32 %v1910, 0.0
      %v2175 = vmax.f32 %v1961, 0.0
      %v2176 = vmax.f32 %v1963, 0.0
      %v2177 = vmax.f32 %v2014, 0.0
      %v2178 = vmax.f32 %v2016, 0.0
      %v2179 = vmax.f32 %v2067, 0.0
      %v2180 = vmax.f32 %v2069, 0.0
      %v2181 = vmax.f32 %v801, 0.0
      %v2182 = vmax.f32 %v803, 0.0
      %v2183 = vmax.f32 %v854, 0.0
      %v2184 = vmax.f32 %v856, 0.0
      %v2185 = vmax.f32 %v907, 0.0
      %v2186 = vmax.f32 %v909, 0.0
      %v2187 = vmax.f32 %v960, 0.0
      %v2188 = vmax.f32 %v962, 0.0
      %v2189 = vmax.f32 %v1013, 0.0
      %v2190 = vmax.f32 %v1015, 0.0
      %v2191 = vmax.f32 %v1066, 0.0
      %v2192 = vmax.f32 %v1068, 0.0
      %v2193 = vmax.f32 %v1119, 0.0
      %v2194 = vmax.f32 %v1121, 0.0
      %v2195 = vmax.f32 %v1172, 0.0
      %v2196 = vmax.f32 %v1174, 0.0
      %v2197 = vmax.f32 %v1225, 0.0
      %v2198 = vmax.f32 %v1227, 0.0
      %v2199 = vmax.f32 %v1278, 0.0
      %v2200 = vmax.f32 %v1280, 0.0
      %v2201 = vmax.f32 %v1331, 0.0
      %v2202 = vmax.f32 %v1333, 0.0
      %v2203 = vmax.f32 %v1384, 0.0
      %v2204 = vmax.f32 %v1386, 0.0
      %v2205 = vmax.f32 %v1437, 0.0
      %v2206 = vmax.f32 %v1439, 0.0
      %v2207 = vmax.f32 %v1490, 0.0
      %v2208 = vmax.f32 %v1492, 0.0
      %v2209 = vmax.f32 %v1543, 0.0
      %v2210 = vmax.f32 %v1545, 0.0
      %v2211 = vmax.f32 %v1596, 0.0
      %v2212 = vmax.f32 %v1598, 0.0
      %v2213 = vmax.f32 %v1649, 0.0
      %v2214 = vmax.f32 %v1651, 0.0
      %v2215 = vmax.f32 %v1702, 0.0
      %v2216 = vmax.f32 %v1704, 0.0
      %v2217 = vmax.f32 %v1755, 0.0
      %v2218 = vmax.f32 %v1757, 0.0
      %v2219 = vmax.f32 %v1808, 0.0
      %v2220 = vmax.f32 %v1810, 0.0
      %v2221 = vmax.f32 %v1861, 0.0
      %v2222 = vmax.f32 %v1863, 0.0
      %v2223 = vmax.f32 %v1914, 0.0
      %v2224 = vmax.f32 %v1916, 0.0
      %v2225 = vmax.f32 %v1967, 0.0
      %v2226 = vmax.f32 %v1969, 0.0
      %v2227 = vmax.f32 %v2020, 0.0
      %v2228 = vmax.f32 %v2022, 0.0
      %v2229 = vmax.f32 %v2073, 0.0
      %v2230 = vmax.f32 %v2075, 0.0
      %v2231 = vmax.f32 %v805, 0.0
      %v2232 = vmax.f32 %v807, 0.0
      %v2233 = vmax.f32 %v858, 0.0
      %v2234 = vmax.f32 %v860, 0.0
      %v2235 = vmax.f32 %v911, 0.0
      %v2236 = vmax.f32 %v913, 0.0
      %v2237 = vmax.f32 %v964, 0.0
      %v2238 = vmax.f32 %v966, 0.0
      %v2239 = vmax.f32 %v1017, 0.0
      %v2240 = vmax.f32 %v1019, 0.0
      %v2241 = vmax.f32 %v1070, 0.0
      %v2242 = vmax.f32 %v1072, 0.0
      %v2243 = vmax.f32 %v1123, 0.0
      %v2244 = vmax.f32 %v1125, 0.0
      %v2245 = vmax.f32 %v1176, 0.0
      %v2246 = vmax.f32 %v1178, 0.0
      %v2247 = vmax.f32 %v1229, 0.0
      %v2248 = vmax.f32 %v1231, 0.0
      %v2249 = vmax.f32 %v1282, 0.0
      %v2250 = vmax.f32 %v1284, 0.0
      %v2251 = vmax.f32 %v1335, 0.0
      %v2252 = vmax.f32 %v1337, 0.0
      %v2253 = vmax.f32 %v1388, 0.0
      %v2254 = vmax.f32 %v1390, 0.0
      %v2255 = vmax.f32 %v1441, 0.0
      %v2256 = vmax.f32 %v1443, 0.0
      %v2257 = vmax.f32 %v1494, 0.0
      %v2258 = vmax.f32 %v1496, 0.0
      %v2259 = vmax.f32 %v1547, 0.0
      %v2260 = vmax.f32 %v1549, 0.0
      %v2261 = vmax.f32 %v1600, 0.0
      %v2262 = vmax.f32 %v1602, 0.0
      %v2263 = vmax.f32 %v1653, 0.0
      %v2264 = vmax.f32 %v1655, 0.0
      %v2265 = vmax.f32 %v1706, 0.0
      %v2266 = vmax.f32 %v1708, 0.0
      %v2267 = vmax.f32 %v1759, 0.0
      %v2268 = vmax.f32 %v1761, 0.0
      %v2269 = vmax.f32 %v1812, 0.0
      %v2270 = vmax.f32 %v1814, 0.0
      %v2271 = vmax.f32 %v1865, 0.0
      %v2272 = vmax.f32 %v1867, 0.0
      %v2273 = vmax.f32 %v1918, 0.0
      %v2274 = vmax.f32 %v1920, 0.0
      %v2275 = vmax.f32 %v1971, 0.0
      %v2276 = vmax.f32 %v1973, 0.0
      %v2277 = vmax.f32 %v2024, 0.0
      %v2278 = vmax.f32 %v2026, 0.0
      %v2279 = vmax.f32 %v2077, 0.0
      %v2280 = vmax.f32 %v2079, 0.0
      %v2281 = vpack.c.bf16 %v2131, %v2081
      %v2282 = vpack.c.bf16 %v2132, %v2082
      %v2283 = vpack.c.bf16 %v2133, %v2083
      %v2284 = vpack.c.bf16 %v2134, %v2084
      %v2285 = vpack.c.bf16 %v2135, %v2085
      %v2286 = vpack.c.bf16 %v2136, %v2086
      %v2287 = vpack.c.bf16 %v2137, %v2087
      %v2288 = vpack.c.bf16 %v2138, %v2088
      %v2289 = vpack.c.bf16 %v2139, %v2089
      %v2290 = vpack.c.bf16 %v2140, %v2090
      %v2291 = vpack.c.bf16 %v2141, %v2091
      %v2292 = vpack.c.bf16 %v2142, %v2092
      %v2293 = vpack.c.bf16 %v2143, %v2093
      %v2294 = vpack.c.bf16 %v2144, %v2094
      %v2295 = vpack.c.bf16 %v2145, %v2095
      %v2296 = vpack.c.bf16 %v2146, %v2096
      %v2297 = vpack.c.bf16 %v2147, %v2097
      %v2298 = vpack.c.bf16 %v2148, %v2098
      %v2299 = vpack.c.bf16 %v2149, %v2099
      %v2300 = vpack.c.bf16 %v2150, %v2100
      %v2301 = vpack.c.bf16 %v2151, %v2101
      %v2302 = vpack.c.bf16 %v2152, %v2102
      %v2303 = vpack.c.bf16 %v2153, %v2103
      %v2304 = vpack.c.bf16 %v2154, %v2104
      %v2305 = vpack.c.bf16 %v2155, %v2105
      %v2306 = vpack.c.bf16 %v2156, %v2106
      %v2307 = vpack.c.bf16 %v2157, %v2107
      %v2308 = vpack.c.bf16 %v2158, %v2108
      %v2309 = vpack.c.bf16 %v2159, %v2109
      %v2310 = vpack.c.bf16 %v2160, %v2110
      %v2311 = vpack.c.bf16 %v2161, %v2111
      %v2312 = vpack.c.bf16 %v2162, %v2112
      %v2313 = vpack.c.bf16 %v2163, %v2113
      %v2314 = vpack.c.bf16 %v2164, %v2114
      %v2315 = vpack.c.bf16 %v2165, %v2115
      %v2316 = vpack.c.bf16 %v2166, %v2116
      %v2317 = vpack.c.bf16 %v2167, %v2117
      %v2318 = vpack.c.bf16 %v2168, %v2118
      %v2319 = vpack.c.bf16 %v2169, %v2119
      %v2320 = vpack.c.bf16 %v2170, %v2120
      %v2321 = vpack.c.bf16 %v2171, %v2121
      %v2322 = vpack.c.bf16 %v2172, %v2122
      %v2323 = vpack.c.bf16 %v2173, %v2123
      %v2324 = vpack.c.bf16 %v2174, %v2124
      %v2325 = vpack.c.bf16 %v2175, %v2125
      %v2326 = vpack.c.bf16 %v2176, %v2126
      %v2327 = vpack.c.bf16 %v2177, %v2127
      %v2328 = vpack.c.bf16 %v2178, %v2128
      %v2329 = vpack.c.bf16 %v2179, %v2129
      %v2330 = vpack.c.bf16 %v2180, %v2130
      %v2331 = vpack.c.bf16 %v2231, %v2181
      %v2332 = vpack.c.bf16 %v2232, %v2182
      %v2333 = vpack.c.bf16 %v2233, %v2183
      %v2334 = vpack.c.bf16 %v2234, %v2184
      %v2335 = vpack.c.bf16 %v2235, %v2185
      %v2336 = vpack.c.bf16 %v2236, %v2186
      %v2337 = vpack.c.bf16 %v2237, %v2187
      %v2338 = vpack.c.bf16 %v2238, %v2188
      %v2339 = vpack.c.bf16 %v2239, %v2189
      %v2340 = vpack.c.bf16 %v2240, %v2190
      %v2341 = vpack.c.bf16 %v2241, %v2191
      %v2342 = vpack.c.bf16 %v2242, %v2192
      %v2343 = vpack.c.bf16 %v2243, %v2193
      %v2344 = vpack.c.bf16 %v2244, %v2194
      %v2345 = vpack.c.bf16 %v2245, %v2195
      %v2346 = vpack.c.bf16 %v2246, %v2196
      %v2347 = vpack.c.bf16 %v2247, %v2197
      %v2348 = vpack.c.bf16 %v2248, %v2198
      %v2349 = vpack.c.bf16 %v2249, %v2199
      %v2350 = vpack.c.bf16 %v2250, %v2200
      %v2351 = vpack.c.bf16 %v2251, %v2201
      %v2352 = vpack.c.bf16 %v2252, %v2202
      %v2353 = vpack.c.bf16 %v2253, %v2203
      %v2354 = vpack.c.bf16 %v2254, %v2204
      %v2355 = vpack.c.bf16 %v2255, %v2205
      %v2356 = vpack.c.bf16 %v2256, %v2206
      %v2357 = vpack.c.bf16 %v2257, %v2207
      %v2358 = vpack.c.bf16 %v2258, %v2208
      %v2359 = vpack.c.bf16 %v2259, %v2209
      %v2360 = vpack.c.bf16 %v2260, %v2210
      %v2361 = vpack.c.bf16 %v2261, %v2211
      %v2362 = vpack.c.bf16 %v2262, %v2212
      %v2363 = vpack.c.bf16 %v2263, %v2213
      %v2364 = vpack.c.bf16 %v2264, %v2214
      %v2365 = vpack.c.bf16 %v2265, %v2215
      %v2366 = vpack.c.bf16 %v2266, %v2216
      %v2367 = vpack.c.bf16 %v2267, %v2217
      %v2368 = vpack.c.bf16 %v2268, %v2218
      %v2369 = vpack.c.bf16 %v2269, %v2219
      %v2370 = vpack.c.bf16 %v2270, %v2220
      %v2371 = vpack.c.bf16 %v2271, %v2221
      %v2372 = vpack.c.bf16 %v2272, %v2222
      %v2373 = vpack.c.bf16 %v2273, %v2223
      %v2374 = vpack.c.bf16 %v2274, %v2224
      %v2375 = vpack.c.bf16 %v2275, %v2225
      %v2376 = vpack.c.bf16 %v2276, %v2226
      %v2377 = vpack.c.bf16 %v2277, %v2227
      %v2378 = vpack.c.bf16 %v2278, %v2228
      %v2379 = vpack.c.bf16 %v2279, %v2229
      %v2380 = vpack.c.bf16 %v2280, %v2230
      %v2381 = vld [vmem:[%s3] sm:$0xf]
      %v2382 = vld [vmem:[%s3 + $0x4] sm:$0xf]
      %v2383 = vld [vmem:[%s3 + $0x8] sm:$0xf]
      %v2384 = vld [vmem:[%s3 + $0xc] sm:$0xf]
      %v2385 = vld [vmem:[%s4] sm:$0xff]
      %v2386 = vld [vmem:[%s4 + $0x8] sm:$0xff]
      %v2387 = vld [vmem:[%s4 + $0x10] sm:$0xff]
      %v2388 = vld [vmem:[%s4 + $0x18] sm:$0xff]
      %2390 = vset.pattern.permute.xlu0 0
      %2391 = vperm.xlu0 %2390, %v2385
      %v2392 = vpop.permute.xlu0 %2391
      %2395 = vset.pattern.permute.xlu0 0
      %2396 = vperm.xlu0 %2395, %v2386
      %v2397 = vpop.permute.xlu0 %2396
      %2400 = vset.pattern.permute.xlu0 0
      %2401 = vperm.xlu0 %2400, %v2387
      %v2402 = vpop.permute.xlu0 %2401
      %2405 = vset.pattern.permute.xlu0 0
      %2406 = vperm.xlu0 %2405, %v2388
      %v2407 = vpop.permute.xlu0 %2406
      %v2413 = vunpack.c.l.b16 %v2381
      %v2414 = vunpack.c.l.b16 %v2382
      %v2415 = vunpack.c.l.b16 %v2383
      %v2416 = vunpack.c.l.b16 %v2384
      %v2417 = vpack.c.b16 %v2414, %v2413
      %v2418 = vpack.c.b16 %v2416, %v2415
      %vm2419 = vcmask 261120
      %v2421 = vsel %vm2419, %v2417, 0
      %v2424 = vsel %vm2419, %v2418, 0
      %2426 = vmatprep.subr.bf16.mxu0 0
      %2427 = vmatpush1.bf16.msra.mxu0 0
      %2428 = vmatprep.subr.bf16.mxu0 0
      %2429 = vmatpush1.bf16.msra.mxu0 0
      %2430 = vmatprep.subr.bf16.mxu0 0
      %2431 = vmatpush1.bf16.msra.mxu0 0
      %2432 = vmatprep.subr.bf16.mxu0 0
      %2433 = vmatpush1.bf16.msra.mxu0 0
      %2434 = vmatprep.subr.bf16.mxu0 0
      %2435 = vmatpush1.bf16.msra.mxu0 0
      %2436 = vmatprep.subr.bf16.mxu0 0
      %2437 = vmatpush1.bf16.msra.mxu0 0
      %2438 = vmatprep.subr.bf16.mxu0 %v2332
      %2439 = vmatpush1.bf16.msra.mxu0 %v2331
      %2440 = vmatprep.subr.bf16.mxu0 %v2282
      %2441 = vmatpush1.bf16.msra.mxu0 %v2281
      %2442 = vmatprep.subr.bf16.mxu0 0
      %2443 = vmatpush2.bf16.msra.mxu0 0
      %2444 = vmatprep.subr.bf16.mxu0 0
      %2445 = vmatpush2.bf16.msra.mxu0 0
      %2446 = vmatprep.subr.bf16.mxu0 0
      %2447 = vmatpush2.bf16.msra.mxu0 0
      %2448 = vmatprep.subr.bf16.mxu0 0
      %2449 = vmatpush2.bf16.msra.mxu0 0
      %2450 = vmatprep.subr.bf16.mxu0 0
      %2451 = vmatpush2.bf16.msra.mxu0 0
      %2452 = vmatprep.subr.bf16.mxu0 0
      %2453 = vmatpush2.bf16.msra.mxu0 0
      %2454 = vmatprep.subr.bf16.mxu0 0
      %2455 = vmatpush2.bf16.msra.mxu0 0
      %2456 = vmatprep.subr.bf16.mxu0 0
      %2457 = vmatpush2.bf16.msra.mxu0 0
      %2458 = vmatprep.mubr.bf16.mxu0 0
      %2459 = vmatmul.mubr.bf16.gmra.mxu0 %v2421
      %v2460 = vpop.f32.mrf.mxu0
      %v2461 = vadd.f32 %v2392, %v2460
      %v2462 = vpop.f32.mrf.mxu0
      %v2463 = vadd.f32 %v2392, %v2462
      %v2464 = vpop.f32.mrf.mxu0
      %v2465 = vadd.f32 %v2397, %v2464
      %v2466 = vpop.f32.mrf.mxu0
      %v2467 = vadd.f32 %v2397, %v2466
      %2468 = vmatprep.mubr.bf16.mxu0 0
      %2469 = vmatmul.mubr.bf16.gmra.mxu0 %v2424
      %v2470 = vpop.f32.mrf.mxu0
      %v2471 = vadd.f32 %v2402, %v2470
      %v2472 = vpop.f32.mrf.mxu0
      %v2473 = vadd.f32 %v2402, %v2472
      %v2474 = vpop.f32.mrf.mxu0
      %v2475 = vadd.f32 %v2407, %v2474
      %v2476 = vpop.f32.mrf.mxu0
      %v2477 = vadd.f32 %v2407, %v2476
      %2478 = vdwg.mxu0
      %2479 = vmatprep.subr.bf16.mxu0 0
      %2480 = vmatpush1.bf16.msra.mxu0 0
      %2481 = vmatprep.subr.bf16.mxu0 0
      %2482 = vmatpush1.bf16.msra.mxu0 0
      %2483 = vmatprep.subr.bf16.mxu0 0
      %2484 = vmatpush1.bf16.msra.mxu0 0
      %2485 = vmatprep.subr.bf16.mxu0 0
      %2486 = vmatpush1.bf16.msra.mxu0 0
      %2487 = vmatprep.subr.bf16.mxu0 0
      %2488 = vmatpush1.bf16.msra.mxu0 0
      %2489 = vmatprep.subr.bf16.mxu0 0
      %2490 = vmatpush1.bf16.msra.mxu0 0
      %2491 = vmatprep.subr.bf16.mxu0 %v2334
      %2492 = vmatpush1.bf16.msra.mxu0 %v2333
      %2493 = vmatprep.subr.bf16.mxu0 %v2284
      %2494 = vmatpush1.bf16.msra.mxu0 %v2283
      %2495 = vmatprep.subr.bf16.mxu0 0
      %2496 = vmatpush2.bf16.msra.mxu0 0
      %2497 = vmatprep.subr.bf16.mxu0 0
      %2498 = vmatpush2.bf16.msra.mxu0 0
      %2499 = vmatprep.subr.bf16.mxu0 0
      %2500 = vmatpush2.bf16.msra.mxu0 0
      %2501 = vmatprep.subr.bf16.mxu0 0
      %2502 = vmatpush2.bf16.msra.mxu0 0
      %2503 = vmatprep.subr.bf16.mxu0 0
      %2504 = vmatpush2.bf16.msra.mxu0 0
      %2505 = vmatprep.subr.bf16.mxu0 0
      %2506 = vmatpush2.bf16.msra.mxu0 0
      %2507 = vmatprep.subr.bf16.mxu0 0
      %2508 = vmatpush2.bf16.msra.mxu0 0
      %2509 = vmatprep.subr.bf16.mxu0 0
      %2510 = vmatpush2.bf16.msra.mxu0 0
      %2511 = vmatprep.mubr.bf16.mxu0 0
      %2512 = vmatmul.mubr.bf16.gmra.mxu0 %v2421
      %v2513 = vpop.f32.mrf.mxu0
      %v2514 = vadd.f32 %v2392, %v2513
      %v2515 = vpop.f32.mrf.mxu0
      %v2516 = vadd.f32 %v2392, %v2515
      %v2517 = vpop.f32.mrf.mxu0
      %v2518 = vadd.f32 %v2397, %v2517
      %v2519 = vpop.f32.mrf.mxu0
      %v2520 = vadd.f32 %v2397, %v2519
      %2521 = vmatprep.mubr.bf16.mxu0 0
      %2522 = vmatmul.mubr.bf16.gmra.mxu0 %v2424
      %v2523 = vpop.f32.mrf.mxu0
      %v2524 = vadd.f32 %v2402, %v2523
      %v2525 = vpop.f32.mrf.mxu0
      %v2526 = vadd.f32 %v2402, %v2525
      %v2527 = vpop.f32.mrf.mxu0
      %v2528 = vadd.f32 %v2407, %v2527
      %v2529 = vpop.f32.mrf.mxu0
      %v2530 = vadd.f32 %v2407, %v2529
      %2531 = vdwg.mxu0
      %2532 = vmatprep.subr.bf16.mxu0 0
      %2533 = vmatpush1.bf16.msra.mxu0 0
      %2534 = vmatprep.subr.bf16.mxu0 0
      %2535 = vmatpush1.bf16.msra.mxu0 0
      %2536 = vmatprep.subr.bf16.mxu0 0
      %2537 = vmatpush1.bf16.msra.mxu0 0
      %2538 = vmatprep.subr.bf16.mxu0 0
      %2539 = vmatpush1.bf16.msra.mxu0 0
      %2540 = vmatprep.subr.bf16.mxu0 0
      %2541 = vmatpush1.bf16.msra.mxu0 0
      %2542 = vmatprep.subr.bf16.mxu0 0
      %2543 = vmatpush1.bf16.msra.mxu0 0
      %2544 = vmatprep.subr.bf16.mxu0 %v2336
      %2545 = vmatpush1.bf16.msra.mxu0 %v2335
      %2546 = vmatprep.subr.bf16.mxu0 %v2286
      %2547 = vmatpush1.bf16.msra.mxu0 %v2285
      %2548 = vmatprep.subr.bf16.mxu0 0
      %2549 = vmatpush2.bf16.msra.mxu0 0
      %2550 = vmatprep.subr.bf16.mxu0 0
      %2551 = vmatpush2.bf16.msra.mxu0 0
      %2552 = vmatprep.subr.bf16.mxu0 0
      %2553 = vmatpush2.bf16.msra.mxu0 0
      %2554 = vmatprep.subr.bf16.mxu0 0
      %2555 = vmatpush2.bf16.msra.mxu0 0
      %2556 = vmatprep.subr.bf16.mxu0 0
      %2557 = vmatpush2.bf16.msra.mxu0 0
      %2558 = vmatprep.subr.bf16.mxu0 0
      %2559 = vmatpush2.bf16.msra.mxu0 0
      %2560 = vmatprep.subr.bf16.mxu0 0
      %2561 = vmatpush2.bf16.msra.mxu0 0
      %2562 = vmatprep.subr.bf16.mxu0 0
      %2563 = vmatpush2.bf16.msra.mxu0 0
      %2564 = vmatprep.mubr.bf16.mxu0 0
      %2565 = vmatmul.mubr.bf16.gmra.mxu0 %v2421
      %v2566 = vpop.f32.mrf.mxu0
      %v2567 = vadd.f32 %v2392, %v2566
      %v2568 = vpop.f32.mrf.mxu0
      %v2569 = vadd.f32 %v2392, %v2568
      %v2570 = vpop.f32.mrf.mxu0
      %v2571 = vadd.f32 %v2397, %v2570
      %v2572 = vpop.f32.mrf.mxu0
      %v2573 = vadd.f32 %v2397, %v2572
      %2574 = vmatprep.mubr.bf16.mxu0 0
      %2575 = vmatmul.mubr.bf16.gmra.mxu0 %v2424
      %v2576 = vpop.f32.mrf.mxu0
      %v2577 = vadd.f32 %v2402, %v2576
      %v2578 = vpop.f32.mrf.mxu0
      %v2579 = vadd.f32 %v2402, %v2578
      %v2580 = vpop.f32.mrf.mxu0
      %v2581 = vadd.f32 %v2407, %v2580
      %v2582 = vpop.f32.mrf.mxu0
      %v2583 = vadd.f32 %v2407, %v2582
      %2584 = vdwg.mxu0
      %2585 = vmatprep.subr.bf16.mxu0 0
      %2586 = vmatpush1.bf16.msra.mxu0 0
      %2587 = vmatprep.subr.bf16.mxu0 0
      %2588 = vmatpush1.bf16.msra.mxu0 0
      %2589 = vmatprep.subr.bf16.mxu0 0
      %2590 = vmatpush1.bf16.msra.mxu0 0
      %2591 = vmatprep.subr.bf16.mxu0 0
      %2592 = vmatpush1.bf16.msra.mxu0 0
      %2593 = vmatprep.subr.bf16.mxu0 0
      %2594 = vmatpush1.bf16.msra.mxu0 0
      %2595 = vmatprep.subr.bf16.mxu0 0
      %2596 = vmatpush1.bf16.msra.mxu0 0
      %2597 = vmatprep.subr.bf16.mxu0 %v2338
      %2598 = vmatpush1.bf16.msra.mxu0 %v2337
      %2599 = vmatprep.subr.bf16.mxu0 %v2288
      %2600 = vmatpush1.bf16.msra.mxu0 %v2287
      %2601 = vmatprep.subr.bf16.mxu0 0
      %2602 = vmatpush2.bf16.msra.mxu0 0
      %2603 = vmatprep.subr.bf16.mxu0 0
      %2604 = vmatpush2.bf16.msra.mxu0 0
      %2605 = vmatprep.subr.bf16.mxu0 0
      %2606 = vmatpush2.bf16.msra.mxu0 0
      %2607 = vmatprep.subr.bf16.mxu0 0
      %2608 = vmatpush2.bf16.msra.mxu0 0
      %2609 = vmatprep.subr.bf16.mxu0 0
      %2610 = vmatpush2.bf16.msra.mxu0 0
      %2611 = vmatprep.subr.bf16.mxu0 0
      %2612 = vmatpush2.bf16.msra.mxu0 0
      %2613 = vmatprep.subr.bf16.mxu0 0
      %2614 = vmatpush2.bf16.msra.mxu0 0
      %2615 = vmatprep.subr.bf16.mxu0 0
      %2616 = vmatpush2.bf16.msra.mxu0 0
      %2617 = vmatprep.mubr.bf16.mxu0 0
      %2618 = vmatmul.mubr.bf16.gmra.mxu0 %v2421
      %v2619 = vpop.f32.mrf.mxu0
      %v2620 = vadd.f32 %v2392, %v2619
      %v2621 = vpop.f32.mrf.mxu0
      %v2622 = vadd.f32 %v2392, %v2621
      %v2623 = vpop.f32.mrf.mxu0
      %v2624 = vadd.f32 %v2397, %v2623
      %v2625 = vpop.f32.mrf.mxu0
      %v2626 = vadd.f32 %v2397, %v2625
      %2627 = vmatprep.mubr.bf16.mxu0 0
      %2628 = vmatmul.mubr.bf16.gmra.mxu0 %v2424
      %v2629 = vpop.f32.mrf.mxu0
      %v2630 = vadd.f32 %v2402, %v2629
      %v2631 = vpop.f32.mrf.mxu0
      %v2632 = vadd.f32 %v2402, %v2631
      %v2633 = vpop.f32.mrf.mxu0
      %v2634 = vadd.f32 %v2407, %v2633
      %v2635 = vpop.f32.mrf.mxu0
      %v2636 = vadd.f32 %v2407, %v2635
      %2637 = vdwg.mxu0
      %2638 = vmatprep.subr.bf16.mxu0 0
      %2639 = vmatpush1.bf16.msra.mxu0 0
      %2640 = vmatprep.subr.bf16.mxu0 0
      %2641 = vmatpush1.bf16.msra.mxu0 0
      %2642 = vmatprep.subr.bf16.mxu0 0
      %2643 = vmatpush1.bf16.msra.mxu0 0
      %2644 = vmatprep.subr.bf16.mxu0 0
      %2645 = vmatpush1.bf16.msra.mxu0 0
      %2646 = vmatprep.subr.bf16.mxu0 0
      %2647 = vmatpush1.bf16.msra.mxu0 0
      %2648 = vmatprep.subr.bf16.mxu0 0
      %2649 = vmatpush1.bf16.msra.mxu0 0
      %2650 = vmatprep.subr.bf16.mxu0 %v2340
      %2651 = vmatpush1.bf16.msra.mxu0 %v2339
      %2652 = vmatprep.subr.bf16.mxu0 %v2290
      %2653 = vmatpush1.bf16.msra.mxu0 %v2289
      %2654 = vmatprep.subr.bf16.mxu0 0
      %2655 = vmatpush2.bf16.msra.mxu0 0
      %2656 = vmatprep.subr.bf16.mxu0 0
      %2657 = vmatpush2.bf16.msra.mxu0 0
      %2658 = vmatprep.subr.bf16.mxu0 0
      %2659 = vmatpush2.bf16.msra.mxu0 0
      %2660 = vmatprep.subr.bf16.mxu0 0
      %2661 = vmatpush2.bf16.msra.mxu0 0
      %2662 = vmatprep.subr.bf16.mxu0 0
      %2663 = vmatpush2.bf16.msra.mxu0 0
      %2664 = vmatprep.subr.bf16.mxu0 0
      %2665 = vmatpush2.bf16.msra.mxu0 0
      %2666 = vmatprep.subr.bf16.mxu0 0
      %2667 = vmatpush2.bf16.msra.mxu0 0
      %2668 = vmatprep.subr.bf16.mxu0 0
      %2669 = vmatpush2.bf16.msra.mxu0 0
      %2670 = vmatprep.mubr.bf16.mxu0 0
      %2671 = vmatmul.mubr.bf16.gmra.mxu0 %v2421
      %v2672 = vpop.f32.mrf.mxu0
      %v2673 = vadd.f32 %v2392, %v2672
      %v2674 = vpop.f32.mrf.mxu0
      %v2675 = vadd.f32 %v2392, %v2674
      %v2676 = vpop.f32.mrf.mxu0
      %v2677 = vadd.f32 %v2397, %v2676
      %v2678 = vpop.f32.mrf.mxu0
      %v2679 = vadd.f32 %v2397, %v2678
      %2680 = vmatprep.mubr.bf16.mxu0 0
      %2681 = vmatmul.mubr.bf16.gmra.mxu0 %v2424
      %v2682 = vpop.f32.mrf.mxu0
      %v2683 = vadd.f32 %v2402, %v2682
      %v2684 = vpop.f32.mrf.mxu0
      %v2685 = vadd.f32 %v2402, %v2684
      %v2686 = vpop.f32.mrf.mxu0
      %v2687 = vadd.f32 %v2407, %v2686
      %v2688 = vpop.f32.mrf.mxu0
      %v2689 = vadd.f32 %v2407, %v2688
      %2690 = vdwg.mxu0
      %2691 = vmatprep.subr.bf16.mxu0 0
      %2692 = vmatpush1.bf16.msra.mxu0 0
      %2693 = vmatprep.subr.bf16.mxu0 0
      %2694 = vmatpush1.bf16.msra.mxu0 0
      %2695 = vmatprep.subr.bf16.mxu0 0
      %2696 = vmatpush1.bf16.msra.mxu0 0
      %2697 = vmatprep.subr.bf16.mxu0 0
      %2698 = vmatpush1.bf16.msra.mxu0 0
      %2699 = vmatprep.subr.bf16.mxu0 0
      %2700 = vmatpush1.bf16.msra.mxu0 0
      %2701 = vmatprep.subr.bf16.mxu0 0
      %2702 = vmatpush1.bf16.msra.mxu0 0
      %2703 = vmatprep.subr.bf16.mxu0 %v2342
      %2704 = vmatpush1.bf16.msra.mxu0 %v2341
      %2705 = vmatprep.subr.bf16.mxu0 %v2292
      %2706 = vmatpush1.bf16.msra.mxu0 %v2291
      %2707 = vmatprep.subr.bf16.mxu0 0
      %2708 = vmatpush2.bf16.msra.mxu0 0
      %2709 = vmatprep.subr.bf16.mxu0 0
      %2710 = vmatpush2.bf16.msra.mxu0 0
      %2711 = vmatprep.subr.bf16.mxu0 0
      %2712 = vmatpush2.bf16.msra.mxu0 0
      %2713 = vmatprep.subr.bf16.mxu0 0
      %2714 = vmatpush2.bf16.msra.mxu0 0
      %2715 = vmatprep.subr.bf16.mxu0 0
      %2716 = vmatpush2.bf16.msra.mxu0 0
      %2717 = vmatprep.subr.bf16.mxu0 0
      %2718 = vmatpush2.bf16.msra.mxu0 0
      %2719 = vmatprep.subr.bf16.mxu0 0
      %2720 = vmatpush2.bf16.msra.mxu0 0
      %2721 = vmatprep.subr.bf16.mxu0 0
      %2722 = vmatpush2.bf16.msra.mxu0 0
      %2723 = vmatprep.mubr.bf16.mxu0 0
      %2724 = vmatmul.mubr.bf16.gmra.mxu0 %v2421
      %v2725 = vpop.f32.mrf.mxu0
      %v2726 = vadd.f32 %v2392, %v2725
      %v2727 = vpop.f32.mrf.mxu0
      %v2728 = vadd.f32 %v2392, %v2727
      %v2729 = vpop.f32.mrf.mxu0
      %v2730 = vadd.f32 %v2397, %v2729
      %v2731 = vpop.f32.mrf.mxu0
      %v2732 = vadd.f32 %v2397, %v2731
      %2733 = vmatprep.mubr.bf16.mxu0 0
      %2734 = vmatmul.mubr.bf16.gmra.mxu0 %v2424
      %v2735 = vpop.f32.mrf.mxu0
      %v2736 = vadd.f32 %v2402, %v2735
      %v2737 = vpop.f32.mrf.mxu0
      %v2738 = vadd.f32 %v2402, %v2737
      %v2739 = vpop.f32.mrf.mxu0
      %v2740 = vadd.f32 %v2407, %v2739
      %v2741 = vpop.f32.mrf.mxu0
      %v2742 = vadd.f32 %v2407, %v2741
      %2743 = vdwg.mxu0
      %2744 = vmatprep.subr.bf16.mxu0 0
      %2745 = vmatpush1.bf16.msra.mxu0 0
      %2746 = vmatprep.subr.bf16.mxu0 0
      %2747 = vmatpush1.bf16.msra.mxu0 0
      %2748 = vmatprep.subr.bf16.mxu0 0
      %2749 = vmatpush1.bf16.msra.mxu0 0
      %2750 = vmatprep.subr.bf16.mxu0 0
      %2751 = vmatpush1.bf16.msra.mxu0 0
      %2752 = vmatprep.subr.bf16.mxu0 0
      %2753 = vmatpush1.bf16.msra.mxu0 0
      %2754 = vmatprep.subr.bf16.mxu0 0
      %2755 = vmatpush1.bf16.msra.mxu0 0
      %2756 = vmatprep.subr.bf16.mxu0 %v2344
      %2757 = vmatpush1.bf16.msra.mxu0 %v2343
      %2758 = vmatprep.subr.bf16.mxu0 %v2294
      %2759 = vmatpush1.bf16.msra.mxu0 %v2293
      %2760 = vmatprep.subr.bf16.mxu0 0
      %2761 = vmatpush2.bf16.msra.mxu0 0
      %2762 = vmatprep.subr.bf16.mxu0 0
      %2763 = vmatpush2.bf16.msra.mxu0 0
      %2764 = vmatprep.subr.bf16.mxu0 0
      %2765 = vmatpush2.bf16.msra.mxu0 0
      %2766 = vmatprep.subr.bf16.mxu0 0
      %2767 = vmatpush2.bf16.msra.mxu0 0
      %2768 = vmatprep.subr.bf16.mxu0 0
      %2769 = vmatpush2.bf16.msra.mxu0 0
      %2770 = vmatprep.subr.bf16.mxu0 0
      %2771 = vmatpush2.bf16.msra.mxu0 0
      %2772 = vmatprep.subr.bf16.mxu0 0
      %2773 = vmatpush2.bf16.msra.mxu0 0
      %2774 = vmatprep.subr.bf16.mxu0 0
      %2775 = vmatpush2.bf16.msra.mxu0 0
      %2776 = vmatprep.mubr.bf16.mxu0 0
      %2777 = vmatmul.mubr.bf16.gmra.mxu0 %v2421
      %v2778 = vpop.f32.mrf.mxu0
      %v2779 = vadd.f32 %v2392, %v2778
      %v2780 = vpop.f32.mrf.mxu0
      %v2781 = vadd.f32 %v2392, %v2780
      %v2782 = vpop.f32.mrf.mxu0
      %v2783 = vadd.f32 %v2397, %v2782
      %v2784 = vpop.f32.mrf.mxu0
      %v2785 = vadd.f32 %v2397, %v2784
      %2786 = vmatprep.mubr.bf16.mxu0 0
      %2787 = vmatmul.mubr.bf16.gmra.mxu0 %v2424
      %v2788 = vpop.f32.mrf.mxu0
      %v2789 = vadd.f32 %v2402, %v2788
      %v2790 = vpop.f32.mrf.mxu0
      %v2791 = vadd.f32 %v2402, %v2790
      %v2792 = vpop.f32.mrf.mxu0
      %v2793 = vadd.f32 %v2407, %v2792
      %v2794 = vpop.f32.mrf.mxu0
      %v2795 = vadd.f32 %v2407, %v2794
      %2796 = vdwg.mxu0
      %2797 = vmatprep.subr.bf16.mxu0 0
      %2798 = vmatpush1.bf16.msra.mxu0 0
      %2799 = vmatprep.subr.bf16.mxu0 0
      %2800 = vmatpush1.bf16.msra.mxu0 0
      %2801 = vmatprep.subr.bf16.mxu0 0
      %2802 = vmatpush1.bf16.msra.mxu0 0
      %2803 = vmatprep.subr.bf16.mxu0 0
      %2804 = vmatpush1.bf16.msra.mxu0 0
      %2805 = vmatprep.subr.bf16.mxu0 0
      %2806 = vmatpush1.bf16.msra.mxu0 0
      %2807 = vmatprep.subr.bf16.mxu0 0
      %2808 = vmatpush1.bf16.msra.mxu0 0
      %2809 = vmatprep.subr.bf16.mxu0 %v2346
      %2810 = vmatpush1.bf16.msra.mxu0 %v2345
      %2811 = vmatprep.subr.bf16.mxu0 %v2296
      %2812 = vmatpush1.bf16.msra.mxu0 %v2295
      %2813 = vmatprep.subr.bf16.mxu0 0
      %2814 = vmatpush2.bf16.msra.mxu0 0
      %2815 = vmatprep.subr.bf16.mxu0 0
      %2816 = vmatpush2.bf16.msra.mxu0 0
      %2817 = vmatprep.subr.bf16.mxu0 0
      %2818 = vmatpush2.bf16.msra.mxu0 0
      %2819 = vmatprep.subr.bf16.mxu0 0
      %2820 = vmatpush2.bf16.msra.mxu0 0
      %2821 = vmatprep.subr.bf16.mxu0 0
      %2822 = vmatpush2.bf16.msra.mxu0 0
      %2823 = vmatprep.subr.bf16.mxu0 0
      %2824 = vmatpush2.bf16.msra.mxu0 0
      %2825 = vmatprep.subr.bf16.mxu0 0
      %2826 = vmatpush2.bf16.msra.mxu0 0
      %2827 = vmatprep.subr.bf16.mxu0 0
      %2828 = vmatpush2.bf16.msra.mxu0 0
      %2829 = vmatprep.mubr.bf16.mxu0 0
      %2830 = vmatmul.mubr.bf16.gmra.mxu0 %v2421
      %v2831 = vpop.f32.mrf.mxu0
      %v2832 = vadd.f32 %v2392, %v2831
      %v2833 = vpop.f32.mrf.mxu0
      %v2834 = vadd.f32 %v2392, %v2833
      %v2835 = vpop.f32.mrf.mxu0
      %v2836 = vadd.f32 %v2397, %v2835
      %v2837 = vpop.f32.mrf.mxu0
      %v2838 = vadd.f32 %v2397, %v2837
      %2839 = vmatprep.mubr.bf16.mxu0 0
      %2840 = vmatmul.mubr.bf16.gmra.mxu0 %v2424
      %v2841 = vpop.f32.mrf.mxu0
      %v2842 = vadd.f32 %v2402, %v2841
      %v2843 = vpop.f32.mrf.mxu0
      %v2844 = vadd.f32 %v2402, %v2843
      %v2845 = vpop.f32.mrf.mxu0
      %v2846 = vadd.f32 %v2407, %v2845
      %v2847 = vpop.f32.mrf.mxu0
      %v2848 = vadd.f32 %v2407, %v2847
      %2849 = vdwg.mxu0
      %2850 = vmatprep.subr.bf16.mxu0 0
      %2851 = vmatpush1.bf16.msra.mxu0 0
      %2852 = vmatprep.subr.bf16.mxu0 0
      %2853 = vmatpush1.bf16.msra.mxu0 0
      %2854 = vmatprep.subr.bf16.mxu0 0
      %2855 = vmatpush1.bf16.msra.mxu0 0
      %2856 = vmatprep.subr.bf16.mxu0 0
      %2857 = vmatpush1.bf16.msra.mxu0 0
      %2858 = vmatprep.subr.bf16.mxu0 0
      %2859 = vmatpush1.bf16.msra.mxu0 0
      %2860 = vmatprep.subr.bf16.mxu0 0
      %2861 = vmatpush1.bf16.msra.mxu0 0
      %2862 = vmatprep.subr.bf16.mxu0 %v2348
      %2863 = vmatpush1.bf16.msra.mxu0 %v2347
      %2864 = vmatprep.subr.bf16.mxu0 %v2298
      %2865 = vmatpush1.bf16.msra.mxu0 %v2297
      %2866 = vmatprep.subr.bf16.mxu0 0
      %2867 = vmatpush2.bf16.msra.mxu0 0
      %2868 = vmatprep.subr.bf16.mxu0 0
      %2869 = vmatpush2.bf16.msra.mxu0 0
      %2870 = vmatprep.subr.bf16.mxu0 0
      %2871 = vmatpush2.bf16.msra.mxu0 0
      %2872 = vmatprep.subr.bf16.mxu0 0
      %2873 = vmatpush2.bf16.msra.mxu0 0
      %2874 = vmatprep.subr.bf16.mxu0 0
      %2875 = vmatpush2.bf16.msra.mxu0 0
      %2876 = vmatprep.subr.bf16.mxu0 0
      %2877 = vmatpush2.bf16.msra.mxu0 0
      %2878 = vmatprep.subr.bf16.mxu0 0
      %2879 = vmatpush2.bf16.msra.mxu0 0
      %2880 = vmatprep.subr.bf16.mxu0 0
      %2881 = vmatpush2.bf16.msra.mxu0 0
      %2882 = vmatprep.mubr.bf16.mxu0 0
      %2883 = vmatmul.mubr.bf16.gmra.mxu0 %v2421
      %v2884 = vpop.f32.mrf.mxu0
      %v2885 = vadd.f32 %v2392, %v2884
      %v2886 = vpop.f32.mrf.mxu0
      %v2887 = vadd.f32 %v2392, %v2886
      %v2888 = vpop.f32.mrf.mxu0
      %v2889 = vadd.f32 %v2397, %v2888
      %v2890 = vpop.f32.mrf.mxu0
      %v2891 = vadd.f32 %v2397, %v2890
      %2892 = vmatprep.mubr.bf16.mxu0 0
      %2893 = vmatmul.mubr.bf16.gmra.mxu0 %v2424
      %v2894 = vpop.f32.mrf.mxu0
      %v2895 = vadd.f32 %v2402, %v2894
      %v2896 = vpop.f32.mrf.mxu0
      %v2897 = vadd.f32 %v2402, %v2896
      %v2898 = vpop.f32.mrf.mxu0
      %v2899 = vadd.f32 %v2407, %v2898
      %v2900 = vpop.f32.mrf.mxu0
      %v2901 = vadd.f32 %v2407, %v2900
      %2902 = vdwg.mxu0
      %2903 = vmatprep.subr.bf16.mxu0 0
      %2904 = vmatpush1.bf16.msra.mxu0 0
      %2905 = vmatprep.subr.bf16.mxu0 0
      %2906 = vmatpush1.bf16.msra.mxu0 0
      %2907 = vmatprep.subr.bf16.mxu0 0
      %2908 = vmatpush1.bf16.msra.mxu0 0
      %2909 = vmatprep.subr.bf16.mxu0 0
      %2910 = vmatpush1.bf16.msra.mxu0 0
      %2911 = vmatprep.subr.bf16.mxu0 0
      %2912 = vmatpush1.bf16.msra.mxu0 0
      %2913 = vmatprep.subr.bf16.mxu0 0
      %2914 = vmatpush1.bf16.msra.mxu0 0
      %2915 = vmatprep.subr.bf16.mxu0 %v2350
      %2916 = vmatpush1.bf16.msra.mxu0 %v2349
      %2917 = vmatprep.subr.bf16.mxu0 %v2300
      %2918 = vmatpush1.bf16.msra.mxu0 %v2299
      %2919 = vmatprep.subr.bf16.mxu0 0
      %2920 = vmatpush2.bf16.msra.mxu0 0
      %2921 = vmatprep.subr.bf16.mxu0 0
      %2922 = vmatpush2.bf16.msra.mxu0 0
      %2923 = vmatprep.subr.bf16.mxu0 0
      %2924 = vmatpush2.bf16.msra.mxu0 0
      %2925 = vmatprep.subr.bf16.mxu0 0
      %2926 = vmatpush2.bf16.msra.mxu0 0
      %2927 = vmatprep.subr.bf16.mxu0 0
      %2928 = vmatpush2.bf16.msra.mxu0 0
      %2929 = vmatprep.subr.bf16.mxu0 0
      %2930 = vmatpush2.bf16.msra.mxu0 0
      %2931 = vmatprep.subr.bf16.mxu0 0
      %2932 = vmatpush2.bf16.msra.mxu0 0
      %2933 = vmatprep.subr.bf16.mxu0 0
      %2934 = vmatpush2.bf16.msra.mxu0 0
      %2935 = vmatprep.mubr.bf16.mxu0 0
      %2936 = vmatmul.mubr.bf16.gmra.mxu0 %v2421
      %v2937 = vpop.f32.mrf.mxu0
      %v2938 = vadd.f32 %v2392, %v2937
      %v2939 = vpop.f32.mrf.mxu0
      %v2940 = vadd.f32 %v2392, %v2939
      %v2941 = vpop.f32.mrf.mxu0
      %v2942 = vadd.f32 %v2397, %v2941
      %v2943 = vpop.f32.mrf.mxu0
      %v2944 = vadd.f32 %v2397, %v2943
      %2945 = vmatprep.mubr.bf16.mxu0 0
      %2946 = vmatmul.mubr.bf16.gmra.mxu0 %v2424
      %v2947 = vpop.f32.mrf.mxu0
      %v2948 = vadd.f32 %v2402, %v2947
      %v2949 = vpop.f32.mrf.mxu0
      %v2950 = vadd.f32 %v2402, %v2949
      %v2951 = vpop.f32.mrf.mxu0
      %v2952 = vadd.f32 %v2407, %v2951
      %v2953 = vpop.f32.mrf.mxu0
      %v2954 = vadd.f32 %v2407, %v2953
      %2955 = vdwg.mxu0
      %2956 = vmatprep.subr.bf16.mxu0 0
      %2957 = vmatpush1.bf16.msra.mxu0 0
      %2958 = vmatprep.subr.bf16.mxu0 0
      %2959 = vmatpush1.bf16.msra.mxu0 0
      %2960 = vmatprep.subr.bf16.mxu0 0
      %2961 = vmatpush1.bf16.msra.mxu0 0
      %2962 = vmatprep.subr.bf16.mxu0 0
      %2963 = vmatpush1.bf16.msra.mxu0 0
      %2964 = vmatprep.subr.bf16.mxu0 0
      %2965 = vmatpush1.bf16.msra.mxu0 0
      %2966 = vmatprep.subr.bf16.mxu0 0
      %2967 = vmatpush1.bf16.msra.mxu0 0
      %2968 = vmatprep.subr.bf16.mxu0 %v2352
      %2969 = vmatpush1.bf16.msra.mxu0 %v2351
      %2970 = vmatprep.subr.bf16.mxu0 %v2302
      %2971 = vmatpush1.bf16.msra.mxu0 %v2301
      %2972 = vmatprep.subr.bf16.mxu0 0
      %2973 = vmatpush2.bf16.msra.mxu0 0
      %2974 = vmatprep.subr.bf16.mxu0 0
      %2975 = vmatpush2.bf16.msra.mxu0 0
      %2976 = vmatprep.subr.bf16.mxu0 0
      %2977 = vmatpush2.bf16.msra.mxu0 0
      %2978 = vmatprep.subr.bf16.mxu0 0
      %2979 = vmatpush2.bf16.msra.mxu0 0
      %2980 = vmatprep.subr.bf16.mxu0 0
      %2981 = vmatpush2.bf16.msra.mxu0 0
      %2982 = vmatprep.subr.bf16.mxu0 0
      %2983 = vmatpush2.bf16.msra.mxu0 0
      %2984 = vmatprep.subr.bf16.mxu0 0
      %2985 = vmatpush2.bf16.msra.mxu0 0
      %2986 = vmatprep.subr.bf16.mxu0 0
      %2987 = vmatpush2.bf16.msra.mxu0 0
      %2988 = vmatprep.mubr.bf16.mxu0 0
      %2989 = vmatmul.mubr.bf16.gmra.mxu0 %v2421
      %v2990 = vpop.f32.mrf.mxu0
      %v2991 = vadd.f32 %v2392, %v2990
      %v2992 = vpop.f32.mrf.mxu0
      %v2993 = vadd.f32 %v2392, %v2992
      %v2994 = vpop.f32.mrf.mxu0
      %v2995 = vadd.f32 %v2397, %v2994
      %v2996 = vpop.f32.mrf.mxu0
      %v2997 = vadd.f32 %v2397, %v2996
      %2998 = vmatprep.mubr.bf16.mxu0 0
      %2999 = vmatmul.mubr.bf16.gmra.mxu0 %v2424
      %v3000 = vpop.f32.mrf.mxu0
      %v3001 = vadd.f32 %v2402, %v3000
      %v3002 = vpop.f32.mrf.mxu0
      %v3003 = vadd.f32 %v2402, %v3002
      %v3004 = vpop.f32.mrf.mxu0
      %v3005 = vadd.f32 %v2407, %v3004
      %v3006 = vpop.f32.mrf.mxu0
      %v3007 = vadd.f32 %v2407, %v3006
      %3008 = vdwg.mxu0
      %3009 = vmatprep.subr.bf16.mxu0 0
      %3010 = vmatpush1.bf16.msra.mxu0 0
      %3011 = vmatprep.subr.bf16.mxu0 0
      %3012 = vmatpush1.bf16.msra.mxu0 0
      %3013 = vmatprep.subr.bf16.mxu0 0
      %3014 = vmatpush1.bf16.msra.mxu0 0
      %3015 = vmatprep.subr.bf16.mxu0 0
      %3016 = vmatpush1.bf16.msra.mxu0 0
      %3017 = vmatprep.subr.bf16.mxu0 0
      %3018 = vmatpush1.bf16.msra.mxu0 0
      %3019 = vmatprep.subr.bf16.mxu0 0
      %3020 = vmatpush1.bf16.msra.mxu0 0
      %3021 = vmatprep.subr.bf16.mxu0 %v2354
      %3022 = vmatpush1.bf16.msra.mxu0 %v2353
      %3023 = vmatprep.subr.bf16.mxu0 %v2304
      %3024 = vmatpush1.bf16.msra.mxu0 %v2303
      %3025 = vmatprep.subr.bf16.mxu0 0
      %3026 = vmatpush2.bf16.msra.mxu0 0
      %3027 = vmatprep.subr.bf16.mxu0 0
      %3028 = vmatpush2.bf16.msra.mxu0 0
      %3029 = vmatprep.subr.bf16.mxu0 0
      %3030 = vmatpush2.bf16.msra.mxu0 0
      %3031 = vmatprep.subr.bf16.mxu0 0
      %3032 = vmatpush2.bf16.msra.mxu0 0
      %3033 = vmatprep.subr.bf16.mxu0 0
      %3034 = vmatpush2.bf16.msra.mxu0 0
      %3035 = vmatprep.subr.bf16.mxu0 0
      %3036 = vmatpush2.bf16.msra.mxu0 0
      %3037 = vmatprep.subr.bf16.mxu0 0
      %3038 = vmatpush2.bf16.msra.mxu0 0
      %3039 = vmatprep.subr.bf16.mxu0 0
      %3040 = vmatpush2.bf16.msra.mxu0 0
      %3041 = vmatprep.mubr.bf16.mxu0 0
      %3042 = vmatmul.mubr.bf16.gmra.mxu0 %v2421
      %v3043 = vpop.f32.mrf.mxu0
      %v3044 = vadd.f32 %v2392, %v3043
      %v3045 = vpop.f32.mrf.mxu0
      %v3046 = vadd.f32 %v2392, %v3045
      %v3047 = vpop.f32.mrf.mxu0
      %v3048 = vadd.f32 %v2397, %v3047
      %v3049 = vpop.f32.mrf.mxu0
      %v3050 = vadd.f32 %v2397, %v3049
      %3051 = vmatprep.mubr.bf16.mxu0 0
      %3052 = vmatmul.mubr.bf16.gmra.mxu0 %v2424
      %v3053 = vpop.f32.mrf.mxu0
      %v3054 = vadd.f32 %v2402, %v3053
      %v3055 = vpop.f32.mrf.mxu0
      %v3056 = vadd.f32 %v2402, %v3055
      %v3057 = vpop.f32.mrf.mxu0
      %v3058 = vadd.f32 %v2407, %v3057
      %v3059 = vpop.f32.mrf.mxu0
      %v3060 = vadd.f32 %v2407, %v3059
      %3061 = vdwg.mxu0
      %3062 = vmatprep.subr.bf16.mxu0 0
      %3063 = vmatpush1.bf16.msra.mxu0 0
      %3064 = vmatprep.subr.bf16.mxu0 0
      %3065 = vmatpush1.bf16.msra.mxu0 0
      %3066 = vmatprep.subr.bf16.mxu0 0
      %3067 = vmatpush1.bf16.msra.mxu0 0
      %3068 = vmatprep.subr.bf16.mxu0 0
      %3069 = vmatpush1.bf16.msra.mxu0 0
      %3070 = vmatprep.subr.bf16.mxu0 0
      %3071 = vmatpush1.bf16.msra.mxu0 0
      %3072 = vmatprep.subr.bf16.mxu0 0
      %3073 = vmatpush1.bf16.msra.mxu0 0
      %3074 = vmatprep.subr.bf16.mxu0 %v2356
      %3075 = vmatpush1.bf16.msra.mxu0 %v2355
      %3076 = vmatprep.subr.bf16.mxu0 %v2306
      %3077 = vmatpush1.bf16.msra.mxu0 %v2305
      %3078 = vmatprep.subr.bf16.mxu0 0
      %3079 = vmatpush2.bf16.msra.mxu0 0
      %3080 = vmatprep.subr.bf16.mxu0 0
      %3081 = vmatpush2.bf16.msra.mxu0 0
      %3082 = vmatprep.subr.bf16.mxu0 0
      %3083 = vmatpush2.bf16.msra.mxu0 0
      %3084 = vmatprep.subr.bf16.mxu0 0
      %3085 = vmatpush2.bf16.msra.mxu0 0
      %3086 = vmatprep.subr.bf16.mxu0 0
      %3087 = vmatpush2.bf16.msra.mxu0 0
      %3088 = vmatprep.subr.bf16.mxu0 0
      %3089 = vmatpush2.bf16.msra.mxu0 0
      %3090 = vmatprep.subr.bf16.mxu0 0
      %3091 = vmatpush2.bf16.msra.mxu0 0
      %3092 = vmatprep.subr.bf16.mxu0 0
      %3093 = vmatpush2.bf16.msra.mxu0 0
      %3094 = vmatprep.mubr.bf16.mxu0 0
      %3095 = vmatmul.mubr.bf16.gmra.mxu0 %v2421
      %v3096 = vpop.f32.mrf.mxu0
      %v3097 = vadd.f32 %v2392, %v3096
      %v3098 = vpop.f32.mrf.mxu0
      %v3099 = vadd.f32 %v2392, %v3098
      %v3100 = vpop.f32.mrf.mxu0
      %v3101 = vadd.f32 %v2397, %v3100
      %v3102 = vpop.f32.mrf.mxu0
      %v3103 = vadd.f32 %v2397, %v3102
      %3104 = vmatprep.mubr.bf16.mxu0 0
      %3105 = vmatmul.mubr.bf16.gmra.mxu0 %v2424
      %v3106 = vpop.f32.mrf.mxu0
      %v3107 = vadd.f32 %v2402, %v3106
      %v3108 = vpop.f32.mrf.mxu0
      %v3109 = vadd.f32 %v2402, %v3108
      %v3110 = vpop.f32.mrf.mxu0
      %v3111 = vadd.f32 %v2407, %v3110
      %v3112 = vpop.f32.mrf.mxu0
      %v3113 = vadd.f32 %v2407, %v3112
      %3114 = vdwg.mxu0
      %3115 = vmatprep.subr.bf16.mxu0 0
      %3116 = vmatpush1.bf16.msra.mxu0 0
      %3117 = vmatprep.subr.bf16.mxu0 0
      %3118 = vmatpush1.bf16.msra.mxu0 0
      %3119 = vmatprep.subr.bf16.mxu0 0
      %3120 = vmatpush1.bf16.msra.mxu0 0
      %3121 = vmatprep.subr.bf16.mxu0 0
      %3122 = vmatpush1.bf16.msra.mxu0 0
      %3123 = vmatprep.subr.bf16.mxu0 0
      %3124 = vmatpush1.bf16.msra.mxu0 0
      %3125 = vmatprep.subr.bf16.mxu0 0
      %3126 = vmatpush1.bf16.msra.mxu0 0
      %3127 = vmatprep.subr.bf16.mxu0 %v2358
      %3128 = vmatpush1.bf16.msra.mxu0 %v2357
      %3129 = vmatprep.subr.bf16.mxu0 %v2308
      %3130 = vmatpush1.bf16.msra.mxu0 %v2307
      %3131 = vmatprep.subr.bf16.mxu0 0
      %3132 = vmatpush2.bf16.msra.mxu0 0
      %3133 = vmatprep.subr.bf16.mxu0 0
      %3134 = vmatpush2.bf16.msra.mxu0 0
      %3135 = vmatprep.subr.bf16.mxu0 0
      %3136 = vmatpush2.bf16.msra.mxu0 0
      %3137 = vmatprep.subr.bf16.mxu0 0
      %3138 = vmatpush2.bf16.msra.mxu0 0
      %3139 = vmatprep.subr.bf16.mxu0 0
      %3140 = vmatpush2.bf16.msra.mxu0 0
      %3141 = vmatprep.subr.bf16.mxu0 0
      %3142 = vmatpush2.bf16.msra.mxu0 0
      %3143 = vmatprep.subr.bf16.mxu0 0
      %3144 = vmatpush2.bf16.msra.mxu0 0
      %3145 = vmatprep.subr.bf16.mxu0 0
      %3146 = vmatpush2.bf16.msra.mxu0 0
      %3147 = vmatprep.mubr.bf16.mxu0 0
      %3148 = vmatmul.mubr.bf16.gmra.mxu0 %v2421
      %v3149 = vpop.f32.mrf.mxu0
      %v3150 = vadd.f32 %v2392, %v3149
      %v3151 = vpop.f32.mrf.mxu0
      %v3152 = vadd.f32 %v2392, %v3151
      %v3153 = vpop.f32.mrf.mxu0
      %v3154 = vadd.f32 %v2397, %v3153
      %v3155 = vpop.f32.mrf.mxu0
      %v3156 = vadd.f32 %v2397, %v3155
      %3157 = vmatprep.mubr.bf16.mxu0 0
      %3158 = vmatmul.mubr.bf16.gmra.mxu0 %v2424
      %v3159 = vpop.f32.mrf.mxu0
      %v3160 = vadd.f32 %v2402, %v3159
      %v3161 = vpop.f32.mrf.mxu0
      %v3162 = vadd.f32 %v2402, %v3161
      %v3163 = vpop.f32.mrf.mxu0
      %v3164 = vadd.f32 %v2407, %v3163
      %v3165 = vpop.f32.mrf.mxu0
      %v3166 = vadd.f32 %v2407, %v3165
      %3167 = vdwg.mxu0
      %3168 = vmatprep.subr.bf16.mxu0 0
      %3169 = vmatpush1.bf16.msra.mxu0 0
      %3170 = vmatprep.subr.bf16.mxu0 0
      %3171 = vmatpush1.bf16.msra.mxu0 0
      %3172 = vmatprep.subr.bf16.mxu0 0
      %3173 = vmatpush1.bf16.msra.mxu0 0
      %3174 = vmatprep.subr.bf16.mxu0 0
      %3175 = vmatpush1.bf16.msra.mxu0 0
      %3176 = vmatprep.subr.bf16.mxu0 0
      %3177 = vmatpush1.bf16.msra.mxu0 0
      %3178 = vmatprep.subr.bf16.mxu0 0
      %3179 = vmatpush1.bf16.msra.mxu0 0
      %3180 = vmatprep.subr.bf16.mxu0 %v2360
      %3181 = vmatpush1.bf16.msra.mxu0 %v2359
      %3182 = vmatprep.subr.bf16.mxu0 %v2310
      %3183 = vmatpush1.bf16.msra.mxu0 %v2309
      %3184 = vmatprep.subr.bf16.mxu0 0
      %3185 = vmatpush2.bf16.msra.mxu0 0
      %3186 = vmatprep.subr.bf16.mxu0 0
      %3187 = vmatpush2.bf16.msra.mxu0 0
      %3188 = vmatprep.subr.bf16.mxu0 0
      %3189 = vmatpush2.bf16.msra.mxu0 0
      %3190 = vmatprep.subr.bf16.mxu0 0
      %3191 = vmatpush2.bf16.msra.mxu0 0
      %3192 = vmatprep.subr.bf16.mxu0 0
      %3193 = vmatpush2.bf16.msra.mxu0 0
      %3194 = vmatprep.subr.bf16.mxu0 0
      %3195 = vmatpush2.bf16.msra.mxu0 0
      %3196 = vmatprep.subr.bf16.mxu0 0
      %3197 = vmatpush2.bf16.msra.mxu0 0
      %3198 = vmatprep.subr.bf16.mxu0 0
      %3199 = vmatpush2.bf16.msra.mxu0 0
      %3200 = vmatprep.mubr.bf16.mxu0 0
      %3201 = vmatmul.mubr.bf16.gmra.mxu0 %v2421
      %v3202 = vpop.f32.mrf.mxu0
      %v3203 = vadd.f32 %v2392, %v3202
      %v3204 = vpop.f32.mrf.mxu0
      %v3205 = vadd.f32 %v2392, %v3204
      %v3206 = vpop.f32.mrf.mxu0
      %v3207 = vadd.f32 %v2397, %v3206
      %v3208 = vpop.f32.mrf.mxu0
      %v3209 = vadd.f32 %v2397, %v3208
      %3210 = vmatprep.mubr.bf16.mxu0 0
      %3211 = vmatmul.mubr.bf16.gmra.mxu0 %v2424
      %v3212 = vpop.f32.mrf.mxu0
      %v3213 = vadd.f32 %v2402, %v3212
      %v3214 = vpop.f32.mrf.mxu0
      %v3215 = vadd.f32 %v2402, %v3214
      %v3216 = vpop.f32.mrf.mxu0
      %v3217 = vadd.f32 %v2407, %v3216
      %v3218 = vpop.f32.mrf.mxu0
      %v3219 = vadd.f32 %v2407, %v3218
      %3220 = vdwg.mxu0
      %3221 = vmatprep.subr.bf16.mxu0 0
      %3222 = vmatpush1.bf16.msra.mxu0 0
      %3223 = vmatprep.subr.bf16.mxu0 0
      %3224 = vmatpush1.bf16.msra.mxu0 0
      %3225 = vmatprep.subr.bf16.mxu0 0
      %3226 = vmatpush1.bf16.msra.mxu0 0
      %3227 = vmatprep.subr.bf16.mxu0 0
      %3228 = vmatpush1.bf16.msra.mxu0 0
      %3229 = vmatprep.subr.bf16.mxu0 0
      %3230 = vmatpush1.bf16.msra.mxu0 0
      %3231 = vmatprep.subr.bf16.mxu0 0
      %3232 = vmatpush1.bf16.msra.mxu0 0
      %3233 = vmatprep.subr.bf16.mxu0 %v2362
      %3234 = vmatpush1.bf16.msra.mxu0 %v2361
      %3235 = vmatprep.subr.bf16.mxu0 %v2312
      %3236 = vmatpush1.bf16.msra.mxu0 %v2311
      %3237 = vmatprep.subr.bf16.mxu0 0
      %3238 = vmatpush2.bf16.msra.mxu0 0
      %3239 = vmatprep.subr.bf16.mxu0 0
      %3240 = vmatpush2.bf16.msra.mxu0 0
      %3241 = vmatprep.subr.bf16.mxu0 0
      %3242 = vmatpush2.bf16.msra.mxu0 0
      %3243 = vmatprep.subr.bf16.mxu0 0
      %3244 = vmatpush2.bf16.msra.mxu0 0
      %3245 = vmatprep.subr.bf16.mxu0 0
      %3246 = vmatpush2.bf16.msra.mxu0 0
      %3247 = vmatprep.subr.bf16.mxu0 0
      %3248 = vmatpush2.bf16.msra.mxu0 0
      %3249 = vmatprep.subr.bf16.mxu0 0
      %3250 = vmatpush2.bf16.msra.mxu0 0
      %3251 = vmatprep.subr.bf16.mxu0 0
      %3252 = vmatpush2.bf16.msra.mxu0 0
      %3253 = vmatprep.mubr.bf16.mxu0 0
      %3254 = vmatmul.mubr.bf16.gmra.mxu0 %v2421
      %v3255 = vpop.f32.mrf.mxu0
      %v3256 = vadd.f32 %v2392, %v3255
      %v3257 = vpop.f32.mrf.mxu0
      %v3258 = vadd.f32 %v2392, %v3257
      %v3259 = vpop.f32.mrf.mxu0
      %v3260 = vadd.f32 %v2397, %v3259
      %v3261 = vpop.f32.mrf.mxu0
      %v3262 = vadd.f32 %v2397, %v3261
      %3263 = vmatprep.mubr.bf16.mxu0 0
      %3264 = vmatmul.mubr.bf16.gmra.mxu0 %v2424
      %v3265 = vpop.f32.mrf.mxu0
      %v3266 = vadd.f32 %v2402, %v3265
      %v3267 = vpop.f32.mrf.mxu0
      %v3268 = vadd.f32 %v2402, %v3267
      %v3269 = vpop.f32.mrf.mxu0
      %v3270 = vadd.f32 %v2407, %v3269
      %v3271 = vpop.f32.mrf.mxu0
      %v3272 = vadd.f32 %v2407, %v3271
      %3273 = vdwg.mxu0
      %3274 = vmatprep.subr.bf16.mxu0 0
      %3275 = vmatpush1.bf16.msra.mxu0 0
      %3276 = vmatprep.subr.bf16.mxu0 0
      %3277 = vmatpush1.bf16.msra.mxu0 0
      %3278 = vmatprep.subr.bf16.mxu0 0
      %3279 = vmatpush1.bf16.msra.mxu0 0
      %3280 = vmatprep.subr.bf16.mxu0 0
      %3281 = vmatpush1.bf16.msra.mxu0 0
      %3282 = vmatprep.subr.bf16.mxu0 0
      %3283 = vmatpush1.bf16.msra.mxu0 0
      %3284 = vmatprep.subr.bf16.mxu0 0
      %3285 = vmatpush1.bf16.msra.mxu0 0
      %3286 = vmatprep.subr.bf16.mxu0 %v2364
      %3287 = vmatpush1.bf16.msra.mxu0 %v2363
      %3288 = vmatprep.subr.bf16.mxu0 %v2314
      %3289 = vmatpush1.bf16.msra.mxu0 %v2313
      %3290 = vmatprep.subr.bf16.mxu0 0
      %3291 = vmatpush2.bf16.msra.mxu0 0
      %3292 = vmatprep.subr.bf16.mxu0 0
      %3293 = vmatpush2.bf16.msra.mxu0 0
      %3294 = vmatprep.subr.bf16.mxu0 0
      %3295 = vmatpush2.bf16.msra.mxu0 0
      %3296 = vmatprep.subr.bf16.mxu0 0
      %3297 = vmatpush2.bf16.msra.mxu0 0
      %3298 = vmatprep.subr.bf16.mxu0 0
      %3299 = vmatpush2.bf16.msra.mxu0 0
      %3300 = vmatprep.subr.bf16.mxu0 0
      %3301 = vmatpush2.bf16.msra.mxu0 0
      %3302 = vmatprep.subr.bf16.mxu0 0
      %3303 = vmatpush2.bf16.msra.mxu0 0
      %3304 = vmatprep.subr.bf16.mxu0 0
      %3305 = vmatpush2.bf16.msra.mxu0 0
      %3306 = vmatprep.mubr.bf16.mxu0 0
      %3307 = vmatmul.mubr.bf16.gmra.mxu0 %v2421
      %v3308 = vpop.f32.mrf.mxu0
      %v3309 = vadd.f32 %v2392, %v3308
      %v3310 = vpop.f32.mrf.mxu0
      %v3311 = vadd.f32 %v2392, %v3310
      %v3312 = vpop.f32.mrf.mxu0
      %v3313 = vadd.f32 %v2397, %v3312
      %v3314 = vpop.f32.mrf.mxu0
      %v3315 = vadd.f32 %v2397, %v3314
      %3316 = vmatprep.mubr.bf16.mxu0 0
      %3317 = vmatmul.mubr.bf16.gmra.mxu0 %v2424
      %v3318 = vpop.f32.mrf.mxu0
      %v3319 = vadd.f32 %v2402, %v3318
      %v3320 = vpop.f32.mrf.mxu0
      %v3321 = vadd.f32 %v2402, %v3320
      %v3322 = vpop.f32.mrf.mxu0
      %v3323 = vadd.f32 %v2407, %v3322
      %v3324 = vpop.f32.mrf.mxu0
      %v3325 = vadd.f32 %v2407, %v3324
      %3326 = vdwg.mxu0
      %3327 = vmatprep.subr.bf16.mxu0 0
      %3328 = vmatpush1.bf16.msra.mxu0 0
      %3329 = vmatprep.subr.bf16.mxu0 0
      %3330 = vmatpush1.bf16.msra.mxu0 0
      %3331 = vmatprep.subr.bf16.mxu0 0
      %3332 = vmatpush1.bf16.msra.mxu0 0
      %3333 = vmatprep.subr.bf16.mxu0 0
      %3334 = vmatpush1.bf16.msra.mxu0 0
      %3335 = vmatprep.subr.bf16.mxu0 0
      %3336 = vmatpush1.bf16.msra.mxu0 0
      %3337 = vmatprep.subr.bf16.mxu0 0
      %3338 = vmatpush1.bf16.msra.mxu0 0
      %3339 = vmatprep.subr.bf16.mxu0 %v2366
      %3340 = vmatpush1.bf16.msra.mxu0 %v2365
      %3341 = vmatprep.subr.bf16.mxu0 %v2316
      %3342 = vmatpush1.bf16.msra.mxu0 %v2315
      %3343 = vmatprep.subr.bf16.mxu0 0
      %3344 = vmatpush2.bf16.msra.mxu0 0
      %3345 = vmatprep.subr.bf16.mxu0 0
      %3346 = vmatpush2.bf16.msra.mxu0 0
      %3347 = vmatprep.subr.bf16.mxu0 0
      %3348 = vmatpush2.bf16.msra.mxu0 0
      %3349 = vmatprep.subr.bf16.mxu0 0
      %3350 = vmatpush2.bf16.msra.mxu0 0
      %3351 = vmatprep.subr.bf16.mxu0 0
      %3352 = vmatpush2.bf16.msra.mxu0 0
      %3353 = vmatprep.subr.bf16.mxu0 0
      %3354 = vmatpush2.bf16.msra.mxu0 0
      %3355 = vmatprep.subr.bf16.mxu0 0
      %3356 = vmatpush2.bf16.msra.mxu0 0
      %3357 = vmatprep.subr.bf16.mxu0 0
      %3358 = vmatpush2.bf16.msra.mxu0 0
      %3359 = vmatprep.mubr.bf16.mxu0 0
      %3360 = vmatmul.mubr.bf16.gmra.mxu0 %v2421
      %v3361 = vpop.f32.mrf.mxu0
      %v3362 = vadd.f32 %v2392, %v3361
      %v3363 = vpop.f32.mrf.mxu0
      %v3364 = vadd.f32 %v2392, %v3363
      %v3365 = vpop.f32.mrf.mxu0
      %v3366 = vadd.f32 %v2397, %v3365
      %v3367 = vpop.f32.mrf.mxu0
      %v3368 = vadd.f32 %v2397, %v3367
      %3369 = vmatprep.mubr.bf16.mxu0 0
      %3370 = vmatmul.mubr.bf16.gmra.mxu0 %v2424
      %v3371 = vpop.f32.mrf.mxu0
      %v3372 = vadd.f32 %v2402, %v3371
      %v3373 = vpop.f32.mrf.mxu0
      %v3374 = vadd.f32 %v2402, %v3373
      %v3375 = vpop.f32.mrf.mxu0
      %v3376 = vadd.f32 %v2407, %v3375
      %v3377 = vpop.f32.mrf.mxu0
      %v3378 = vadd.f32 %v2407, %v3377
      %3379 = vdwg.mxu0
      %3380 = vmatprep.subr.bf16.mxu0 0
      %3381 = vmatpush1.bf16.msra.mxu0 0
      %3382 = vmatprep.subr.bf16.mxu0 0
      %3383 = vmatpush1.bf16.msra.mxu0 0
      %3384 = vmatprep.subr.bf16.mxu0 0
      %3385 = vmatpush1.bf16.msra.mxu0 0
      %3386 = vmatprep.subr.bf16.mxu0 0
      %3387 = vmatpush1.bf16.msra.mxu0 0
      %3388 = vmatprep.subr.bf16.mxu0 0
      %3389 = vmatpush1.bf16.msra.mxu0 0
      %3390 = vmatprep.subr.bf16.mxu0 0
      %3391 = vmatpush1.bf16.msra.mxu0 0
      %3392 = vmatprep.subr.bf16.mxu0 %v2368
      %3393 = vmatpush1.bf16.msra.mxu0 %v2367
      %3394 = vmatprep.subr.bf16.mxu0 %v2318
      %3395 = vmatpush1.bf16.msra.mxu0 %v2317
      %3396 = vmatprep.subr.bf16.mxu0 0
      %3397 = vmatpush2.bf16.msra.mxu0 0
      %3398 = vmatprep.subr.bf16.mxu0 0
      %3399 = vmatpush2.bf16.msra.mxu0 0
      %3400 = vmatprep.subr.bf16.mxu0 0
      %3401 = vmatpush2.bf16.msra.mxu0 0
      %3402 = vmatprep.subr.bf16.mxu0 0
      %3403 = vmatpush2.bf16.msra.mxu0 0
      %3404 = vmatprep.subr.bf16.mxu0 0
      %3405 = vmatpush2.bf16.msra.mxu0 0
      %3406 = vmatprep.subr.bf16.mxu0 0
      %3407 = vmatpush2.bf16.msra.mxu0 0
      %3408 = vmatprep.subr.bf16.mxu0 0
      %3409 = vmatpush2.bf16.msra.mxu0 0
      %3410 = vmatprep.subr.bf16.mxu0 0
      %3411 = vmatpush2.bf16.msra.mxu0 0
      %3412 = vmatprep.mubr.bf16.mxu0 0
      %3413 = vmatmul.mubr.bf16.gmra.mxu0 %v2421
      %v3414 = vpop.f32.mrf.mxu0
      %v3415 = vadd.f32 %v2392, %v3414
      %v3416 = vpop.f32.mrf.mxu0
      %v3417 = vadd.f32 %v2392, %v3416
      %v3418 = vpop.f32.mrf.mxu0
      %v3419 = vadd.f32 %v2397, %v3418
      %v3420 = vpop.f32.mrf.mxu0
      %v3421 = vadd.f32 %v2397, %v3420
      %3422 = vmatprep.mubr.bf16.mxu0 0
      %3423 = vmatmul.mubr.bf16.gmra.mxu0 %v2424
      %v3424 = vpop.f32.mrf.mxu0
      %v3425 = vadd.f32 %v2402, %v3424
      %v3426 = vpop.f32.mrf.mxu0
      %v3427 = vadd.f32 %v2402, %v3426
      %v3428 = vpop.f32.mrf.mxu0
      %v3429 = vadd.f32 %v2407, %v3428
      %v3430 = vpop.f32.mrf.mxu0
      %v3431 = vadd.f32 %v2407, %v3430
      %3432 = vdwg.mxu0
      %3433 = vmatprep.subr.bf16.mxu0 0
      %3434 = vmatpush1.bf16.msra.mxu0 0
      %3435 = vmatprep.subr.bf16.mxu0 0
      %3436 = vmatpush1.bf16.msra.mxu0 0
      %3437 = vmatprep.subr.bf16.mxu0 0
      %3438 = vmatpush1.bf16.msra.mxu0 0
      %3439 = vmatprep.subr.bf16.mxu0 0
      %3440 = vmatpush1.bf16.msra.mxu0 0
      %3441 = vmatprep.subr.bf16.mxu0 0
      %3442 = vmatpush1.bf16.msra.mxu0 0
      %3443 = vmatprep.subr.bf16.mxu0 0
      %3444 = vmatpush1.bf16.msra.mxu0 0
      %3445 = vmatprep.subr.bf16.mxu0 %v2370
      %3446 = vmatpush1.bf16.msra.mxu0 %v2369
      %3447 = vmatprep.subr.bf16.mxu0 %v2320
      %3448 = vmatpush1.bf16.msra.mxu0 %v2319
      %3449 = vmatprep.subr.bf16.mxu0 0
      %3450 = vmatpush2.bf16.msra.mxu0 0
      %3451 = vmatprep.subr.bf16.mxu0 0
      %3452 = vmatpush2.bf16.msra.mxu0 0
      %3453 = vmatprep.subr.bf16.mxu0 0
      %3454 = vmatpush2.bf16.msra.mxu0 0
      %3455 = vmatprep.subr.bf16.mxu0 0
      %3456 = vmatpush2.bf16.msra.mxu0 0
      %3457 = vmatprep.subr.bf16.mxu0 0
      %3458 = vmatpush2.bf16.msra.mxu0 0
      %3459 = vmatprep.subr.bf16.mxu0 0
      %3460 = vmatpush2.bf16.msra.mxu0 0
      %3461 = vmatprep.subr.bf16.mxu0 0
      %3462 = vmatpush2.bf16.msra.mxu0 0
      %3463 = vmatprep.subr.bf16.mxu0 0
      %3464 = vmatpush2.bf16.msra.mxu0 0
      %3465 = vmatprep.mubr.bf16.mxu0 0
      %3466 = vmatmul.mubr.bf16.gmra.mxu0 %v2421
      %v3467 = vpop.f32.mrf.mxu0
      %v3468 = vadd.f32 %v2392, %v3467
      %v3469 = vpop.f32.mrf.mxu0
      %v3470 = vadd.f32 %v2392, %v3469
      %v3471 = vpop.f32.mrf.mxu0
      %v3472 = vadd.f32 %v2397, %v3471
      %v3473 = vpop.f32.mrf.mxu0
      %v3474 = vadd.f32 %v2397, %v3473
      %3475 = vmatprep.mubr.bf16.mxu0 0
      %3476 = vmatmul.mubr.bf16.gmra.mxu0 %v2424
      %v3477 = vpop.f32.mrf.mxu0
      %v3478 = vadd.f32 %v2402, %v3477
      %v3479 = vpop.f32.mrf.mxu0
      %v3480 = vadd.f32 %v2402, %v3479
      %v3481 = vpop.f32.mrf.mxu0
      %v3482 = vadd.f32 %v2407, %v3481
      %v3483 = vpop.f32.mrf.mxu0
      %v3484 = vadd.f32 %v2407, %v3483
      %3485 = vdwg.mxu0
      %3486 = vmatprep.subr.bf16.mxu0 0
      %3487 = vmatpush1.bf16.msra.mxu0 0
      %3488 = vmatprep.subr.bf16.mxu0 0
      %3489 = vmatpush1.bf16.msra.mxu0 0
      %3490 = vmatprep.subr.bf16.mxu0 0
      %3491 = vmatpush1.bf16.msra.mxu0 0
      %3492 = vmatprep.subr.bf16.mxu0 0
      %3493 = vmatpush1.bf16.msra.mxu0 0
      %3494 = vmatprep.subr.bf16.mxu0 0
      %3495 = vmatpush1.bf16.msra.mxu0 0
      %3496 = vmatprep.subr.bf16.mxu0 0
      %3497 = vmatpush1.bf16.msra.mxu0 0
      %3498 = vmatprep.subr.bf16.mxu0 %v2372
      %3499 = vmatpush1.bf16.msra.mxu0 %v2371
      %3500 = vmatprep.subr.bf16.mxu0 %v2322
      %3501 = vmatpush1.bf16.msra.mxu0 %v2321
      %3502 = vmatprep.subr.bf16.mxu0 0
      %3503 = vmatpush2.bf16.msra.mxu0 0
      %3504 = vmatprep.subr.bf16.mxu0 0
      %3505 = vmatpush2.bf16.msra.mxu0 0
      %3506 = vmatprep.subr.bf16.mxu0 0
      %3507 = vmatpush2.bf16.msra.mxu0 0
      %3508 = vmatprep.subr.bf16.mxu0 0
      %3509 = vmatpush2.bf16.msra.mxu0 0
      %3510 = vmatprep.subr.bf16.mxu0 0
      %3511 = vmatpush2.bf16.msra.mxu0 0
      %3512 = vmatprep.subr.bf16.mxu0 0
      %3513 = vmatpush2.bf16.msra.mxu0 0
      %3514 = vmatprep.subr.bf16.mxu0 0
      %3515 = vmatpush2.bf16.msra.mxu0 0
      %3516 = vmatprep.subr.bf16.mxu0 0
      %3517 = vmatpush2.bf16.msra.mxu0 0
      %3518 = vmatprep.mubr.bf16.mxu0 0
      %3519 = vmatmul.mubr.bf16.gmra.mxu0 %v2421
      %v3520 = vpop.f32.mrf.mxu0
      %v3521 = vadd.f32 %v2392, %v3520
      %v3522 = vpop.f32.mrf.mxu0
      %v3523 = vadd.f32 %v2392, %v3522
      %v3524 = vpop.f32.mrf.mxu0
      %v3525 = vadd.f32 %v2397, %v3524
      %v3526 = vpop.f32.mrf.mxu0
      %v3527 = vadd.f32 %v2397, %v3526
      %3528 = vmatprep.mubr.bf16.mxu0 0
      %3529 = vmatmul.mubr.bf16.gmra.mxu0 %v2424
      %v3530 = vpop.f32.mrf.mxu0
      %v3531 = vadd.f32 %v2402, %v3530
      %v3532 = vpop.f32.mrf.mxu0
      %v3533 = vadd.f32 %v2402, %v3532
      %v3534 = vpop.f32.mrf.mxu0
      %v3535 = vadd.f32 %v2407, %v3534
      %v3536 = vpop.f32.mrf.mxu0
      %v3537 = vadd.f32 %v2407, %v3536
      %3538 = vdwg.mxu0
      %3539 = vmatprep.subr.bf16.mxu0 0
      %3540 = vmatpush1.bf16.msra.mxu0 0
      %3541 = vmatprep.subr.bf16.mxu0 0
      %3542 = vmatpush1.bf16.msra.mxu0 0
      %3543 = vmatprep.subr.bf16.mxu0 0
      %3544 = vmatpush1.bf16.msra.mxu0 0
      %3545 = vmatprep.subr.bf16.mxu0 0
      %3546 = vmatpush1.bf16.msra.mxu0 0
      %3547 = vmatprep.subr.bf16.mxu0 0
      %3548 = vmatpush1.bf16.msra.mxu0 0
      %3549 = vmatprep.subr.bf16.mxu0 0
      %3550 = vmatpush1.bf16.msra.mxu0 0
      %3551 = vmatprep.subr.bf16.mxu0 %v2374
      %3552 = vmatpush1.bf16.msra.mxu0 %v2373
      %3553 = vmatprep.subr.bf16.mxu0 %v2324
      %3554 = vmatpush1.bf16.msra.mxu0 %v2323
      %3555 = vmatprep.subr.bf16.mxu0 0
      %3556 = vmatpush2.bf16.msra.mxu0 0
      %3557 = vmatprep.subr.bf16.mxu0 0
      %3558 = vmatpush2.bf16.msra.mxu0 0
      %3559 = vmatprep.subr.bf16.mxu0 0
      %3560 = vmatpush2.bf16.msra.mxu0 0
      %3561 = vmatprep.subr.bf16.mxu0 0
      %3562 = vmatpush2.bf16.msra.mxu0 0
      %3563 = vmatprep.subr.bf16.mxu0 0
      %3564 = vmatpush2.bf16.msra.mxu0 0
      %3565 = vmatprep.subr.bf16.mxu0 0
      %3566 = vmatpush2.bf16.msra.mxu0 0
      %3567 = vmatprep.subr.bf16.mxu0 0
      %3568 = vmatpush2.bf16.msra.mxu0 0
      %3569 = vmatprep.subr.bf16.mxu0 0
      %3570 = vmatpush2.bf16.msra.mxu0 0
      %3571 = vmatprep.mubr.bf16.mxu0 0
      %3572 = vmatmul.mubr.bf16.gmra.mxu0 %v2421
      %v3573 = vpop.f32.mrf.mxu0
      %v3574 = vadd.f32 %v2392, %v3573
      %v3575 = vpop.f32.mrf.mxu0
      %v3576 = vadd.f32 %v2392, %v3575
      %v3577 = vpop.f32.mrf.mxu0
      %v3578 = vadd.f32 %v2397, %v3577
      %v3579 = vpop.f32.mrf.mxu0
      %v3580 = vadd.f32 %v2397, %v3579
      %3581 = vmatprep.mubr.bf16.mxu0 0
      %3582 = vmatmul.mubr.bf16.gmra.mxu0 %v2424
      %v3583 = vpop.f32.mrf.mxu0
      %v3584 = vadd.f32 %v2402, %v3583
      %v3585 = vpop.f32.mrf.mxu0
      %v3586 = vadd.f32 %v2402, %v3585
      %v3587 = vpop.f32.mrf.mxu0
      %v3588 = vadd.f32 %v2407, %v3587
      %v3589 = vpop.f32.mrf.mxu0
      %v3590 = vadd.f32 %v2407, %v3589
      %3591 = vdwg.mxu0
      %3592 = vmatprep.subr.bf16.mxu0 0
      %3593 = vmatpush1.bf16.msra.mxu0 0
      %3594 = vmatprep.subr.bf16.mxu0 0
      %3595 = vmatpush1.bf16.msra.mxu0 0
      %3596 = vmatprep.subr.bf16.mxu0 0
      %3597 = vmatpush1.bf16.msra.mxu0 0
      %3598 = vmatprep.subr.bf16.mxu0 0
      %3599 = vmatpush1.bf16.msra.mxu0 0
      %3600 = vmatprep.subr.bf16.mxu0 0
      %3601 = vmatpush1.bf16.msra.mxu0 0
      %3602 = vmatprep.subr.bf16.mxu0 0
      %3603 = vmatpush1.bf16.msra.mxu0 0
      %3604 = vmatprep.subr.bf16.mxu0 %v2376
      %3605 = vmatpush1.bf16.msra.mxu0 %v2375
      %3606 = vmatprep.subr.bf16.mxu0 %v2326
      %3607 = vmatpush1.bf16.msra.mxu0 %v2325
      %3608 = vmatprep.subr.bf16.mxu0 0
      %3609 = vmatpush2.bf16.msra.mxu0 0
      %3610 = vmatprep.subr.bf16.mxu0 0
      %3611 = vmatpush2.bf16.msra.mxu0 0
      %3612 = vmatprep.subr.bf16.mxu0 0
      %3613 = vmatpush2.bf16.msra.mxu0 0
      %3614 = vmatprep.subr.bf16.mxu0 0
      %3615 = vmatpush2.bf16.msra.mxu0 0
      %3616 = vmatprep.subr.bf16.mxu0 0
      %3617 = vmatpush2.bf16.msra.mxu0 0
      %3618 = vmatprep.subr.bf16.mxu0 0
      %3619 = vmatpush2.bf16.msra.mxu0 0
      %3620 = vmatprep.subr.bf16.mxu0 0
      %3621 = vmatpush2.bf16.msra.mxu0 0
      %3622 = vmatprep.subr.bf16.mxu0 0
      %3623 = vmatpush2.bf16.msra.mxu0 0
      %3624 = vmatprep.mubr.bf16.mxu0 0
      %3625 = vmatmul.mubr.bf16.gmra.mxu0 %v2421
      %v3626 = vpop.f32.mrf.mxu0
      %v3627 = vadd.f32 %v2392, %v3626
      %v3628 = vpop.f32.mrf.mxu0
      %v3629 = vadd.f32 %v2392, %v3628
      %v3630 = vpop.f32.mrf.mxu0
      %v3631 = vadd.f32 %v2397, %v3630
      %v3632 = vpop.f32.mrf.mxu0
      %v3633 = vadd.f32 %v2397, %v3632
      %3634 = vmatprep.mubr.bf16.mxu0 0
      %3635 = vmatmul.mubr.bf16.gmra.mxu0 %v2424
      %v3636 = vpop.f32.mrf.mxu0
      %v3637 = vadd.f32 %v2402, %v3636
      %v3638 = vpop.f32.mrf.mxu0
      %v3639 = vadd.f32 %v2402, %v3638
      %v3640 = vpop.f32.mrf.mxu0
      %v3641 = vadd.f32 %v2407, %v3640
      %v3642 = vpop.f32.mrf.mxu0
      %v3643 = vadd.f32 %v2407, %v3642
      %3644 = vdwg.mxu0
      %3645 = vmatprep.subr.bf16.mxu0 0
      %3646 = vmatpush1.bf16.msra.mxu0 0
      %3647 = vmatprep.subr.bf16.mxu0 0
      %3648 = vmatpush1.bf16.msra.mxu0 0
      %3649 = vmatprep.subr.bf16.mxu0 0
      %3650 = vmatpush1.bf16.msra.mxu0 0
      %3651 = vmatprep.subr.bf16.mxu0 0
      %3652 = vmatpush1.bf16.msra.mxu0 0
      %3653 = vmatprep.subr.bf16.mxu0 0
      %3654 = vmatpush1.bf16.msra.mxu0 0
      %3655 = vmatprep.subr.bf16.mxu0 0
      %3656 = vmatpush1.bf16.msra.mxu0 0
      %3657 = vmatprep.subr.bf16.mxu0 %v2378
      %3658 = vmatpush1.bf16.msra.mxu0 %v2377
      %3659 = vmatprep.subr.bf16.mxu0 %v2328
      %3660 = vmatpush1.bf16.msra.mxu0 %v2327
      %3661 = vmatprep.subr.bf16.mxu0 0
      %3662 = vmatpush2.bf16.msra.mxu0 0
      %3663 = vmatprep.subr.bf16.mxu0 0
      %3664 = vmatpush2.bf16.msra.mxu0 0
      %3665 = vmatprep.subr.bf16.mxu0 0
      %3666 = vmatpush2.bf16.msra.mxu0 0
      %3667 = vmatprep.subr.bf16.mxu0 0
      %3668 = vmatpush2.bf16.msra.mxu0 0
      %3669 = vmatprep.subr.bf16.mxu0 0
      %3670 = vmatpush2.bf16.msra.mxu0 0
      %3671 = vmatprep.subr.bf16.mxu0 0
      %3672 = vmatpush2.bf16.msra.mxu0 0
      %3673 = vmatprep.subr.bf16.mxu0 0
      %3674 = vmatpush2.bf16.msra.mxu0 0
      %3675 = vmatprep.subr.bf16.mxu0 0
      %3676 = vmatpush2.bf16.msra.mxu0 0
      %3677 = vmatprep.mubr.bf16.mxu0 0
      %3678 = vmatmul.mubr.bf16.gmra.mxu0 %v2421
      %v3679 = vpop.f32.mrf.mxu0
      %v3680 = vadd.f32 %v2392, %v3679
      %v3681 = vpop.f32.mrf.mxu0
      %v3682 = vadd.f32 %v2392, %v3681
      %v3683 = vpop.f32.mrf.mxu0
      %v3684 = vadd.f32 %v2397, %v3683
      %v3685 = vpop.f32.mrf.mxu0
      %v3686 = vadd.f32 %v2397, %v3685
      %3687 = vmatprep.mubr.bf16.mxu0 0
      %3688 = vmatmul.mubr.bf16.gmra.mxu0 %v2424
      %v3689 = vpop.f32.mrf.mxu0
      %v3690 = vadd.f32 %v2402, %v3689
      %v3691 = vpop.f32.mrf.mxu0
      %v3692 = vadd.f32 %v2402, %v3691
      %v3693 = vpop.f32.mrf.mxu0
      %v3694 = vadd.f32 %v2407, %v3693
      %v3695 = vpop.f32.mrf.mxu0
      %v3696 = vadd.f32 %v2407, %v3695
      %3697 = vdwg.mxu0
      %3698 = vmatprep.subr.bf16.mxu0 0
      %3699 = vmatpush1.bf16.msra.mxu0 0
      %3700 = vmatprep.subr.bf16.mxu0 0
      %3701 = vmatpush1.bf16.msra.mxu0 0
      %3702 = vmatprep.subr.bf16.mxu0 0
      %3703 = vmatpush1.bf16.msra.mxu0 0
      %3704 = vmatprep.subr.bf16.mxu0 0
      %3705 = vmatpush1.bf16.msra.mxu0 0
      %3706 = vmatprep.subr.bf16.mxu0 0
      %3707 = vmatpush1.bf16.msra.mxu0 0
      %3708 = vmatprep.subr.bf16.mxu0 0
      %3709 = vmatpush1.bf16.msra.mxu0 0
      %3710 = vmatprep.subr.bf16.mxu0 %v2380
      %3711 = vmatpush1.bf16.msra.mxu0 %v2379
      %3712 = vmatprep.subr.bf16.mxu0 %v2330
      %3713 = vmatpush1.bf16.msra.mxu0 %v2329
      %3714 = vmatprep.subr.bf16.mxu0 0
      %3715 = vmatpush2.bf16.msra.mxu0 0
      %3716 = vmatprep.subr.bf16.mxu0 0
      %3717 = vmatpush2.bf16.msra.mxu0 0
      %3718 = vmatprep.subr.bf16.mxu0 0
      %3719 = vmatpush2.bf16.msra.mxu0 0
      %3720 = vmatprep.subr.bf16.mxu0 0
      %3721 = vmatpush2.bf16.msra.mxu0 0
      %3722 = vmatprep.subr.bf16.mxu0 0
      %3723 = vmatpush2.bf16.msra.mxu0 0
      %3724 = vmatprep.subr.bf16.mxu0 0
      %3725 = vmatpush2.bf16.msra.mxu0 0
      %3726 = vmatprep.subr.bf16.mxu0 0
      %3727 = vmatpush2.bf16.msra.mxu0 0
      %3728 = vmatprep.subr.bf16.mxu0 0
      %3729 = vmatpush2.bf16.msra.mxu0 0
      %3730 = vmatprep.mubr.bf16.mxu0 0
      %3731 = vmatmul.mubr.bf16.gmra.mxu0 %v2421
      %v3732 = vpop.f32.mrf.mxu0
      %v3733 = vadd.f32 %v2392, %v3732
      %v3734 = vpop.f32.mrf.mxu0
      %v3735 = vadd.f32 %v2392, %v3734
      %v3736 = vpop.f32.mrf.mxu0
      %v3737 = vadd.f32 %v2397, %v3736
      %v3738 = vpop.f32.mrf.mxu0
      %v3739 = vadd.f32 %v2397, %v3738
      %3740 = vmatprep.mubr.bf16.mxu0 0
      %3741 = vmatmul.mubr.bf16.gmra.mxu0 %v2424
      %v3742 = vpop.f32.mrf.mxu0
      %v3743 = vadd.f32 %v2402, %v3742
      %v3744 = vpop.f32.mrf.mxu0
      %v3745 = vadd.f32 %v2402, %v3744
      %v3746 = vpop.f32.mrf.mxu0
      %v3747 = vadd.f32 %v2407, %v3746
      %v3748 = vpop.f32.mrf.mxu0
      %v3749 = vadd.f32 %v2407, %v3748
      %3750 = vdwg.mxu0
      %v3751 = vmax.f32 %v2461, 0.0
      %v3752 = vmax.f32 %v2463, 0.0
      %v3753 = vmax.f32 %v2514, 0.0
      %v3754 = vmax.f32 %v2516, 0.0
      %v3755 = vmax.f32 %v2567, 0.0
      %v3756 = vmax.f32 %v2569, 0.0
      %v3757 = vmax.f32 %v2620, 0.0
      %v3758 = vmax.f32 %v2622, 0.0
      %v3759 = vmax.f32 %v2673, 0.0
      %v3760 = vmax.f32 %v2675, 0.0
      %v3761 = vmax.f32 %v2726, 0.0
      %v3762 = vmax.f32 %v2728, 0.0
      %v3763 = vmax.f32 %v2779, 0.0
      %v3764 = vmax.f32 %v2781, 0.0
      %v3765 = vmax.f32 %v2832, 0.0
      %v3766 = vmax.f32 %v2834, 0.0
      %v3767 = vmax.f32 %v2885, 0.0
      %v3768 = vmax.f32 %v2887, 0.0
      %v3769 = vmax.f32 %v2938, 0.0
      %v3770 = vmax.f32 %v2940, 0.0
      %v3771 = vmax.f32 %v2991, 0.0
      %v3772 = vmax.f32 %v2993, 0.0
      %v3773 = vmax.f32 %v3044, 0.0
      %v3774 = vmax.f32 %v3046, 0.0
      %v3775 = vmax.f32 %v3097, 0.0
      %v3776 = vmax.f32 %v3099, 0.0
      %v3777 = vmax.f32 %v3150, 0.0
      %v3778 = vmax.f32 %v3152, 0.0
      %v3779 = vmax.f32 %v3203, 0.0
      %v3780 = vmax.f32 %v3205, 0.0
      %v3781 = vmax.f32 %v3256, 0.0
      %v3782 = vmax.f32 %v3258, 0.0
      %v3783 = vmax.f32 %v3309, 0.0
      %v3784 = vmax.f32 %v3311, 0.0
      %v3785 = vmax.f32 %v3362, 0.0
      %v3786 = vmax.f32 %v3364, 0.0
      %v3787 = vmax.f32 %v3415, 0.0
      %v3788 = vmax.f32 %v3417, 0.0
      %v3789 = vmax.f32 %v3468, 0.0
      %v3790 = vmax.f32 %v3470, 0.0
      %v3791 = vmax.f32 %v3521, 0.0
      %v3792 = vmax.f32 %v3523, 0.0
      %v3793 = vmax.f32 %v3574, 0.0
      %v3794 = vmax.f32 %v3576, 0.0
      %v3795 = vmax.f32 %v3627, 0.0
      %v3796 = vmax.f32 %v3629, 0.0
      %v3797 = vmax.f32 %v3680, 0.0
      %v3798 = vmax.f32 %v3682, 0.0
      %v3799 = vmax.f32 %v3733, 0.0
      %v3800 = vmax.f32 %v3735, 0.0
      %v3801 = vmax.f32 %v2465, 0.0
      %v3802 = vmax.f32 %v2467, 0.0
      %v3803 = vmax.f32 %v2518, 0.0
      %v3804 = vmax.f32 %v2520, 0.0
      %v3805 = vmax.f32 %v2571, 0.0
      %v3806 = vmax.f32 %v2573, 0.0
      %v3807 = vmax.f32 %v2624, 0.0
      %v3808 = vmax.f32 %v2626, 0.0
      %v3809 = vmax.f32 %v2677, 0.0
      %v3810 = vmax.f32 %v2679, 0.0
      %v3811 = vmax.f32 %v2730, 0.0
      %v3812 = vmax.f32 %v2732, 0.0
      %v3813 = vmax.f32 %v2783, 0.0
      %v3814 = vmax.f32 %v2785, 0.0
      %v3815 = vmax.f32 %v2836, 0.0
      %v3816 = vmax.f32 %v2838, 0.0
      %v3817 = vmax.f32 %v2889, 0.0
      %v3818 = vmax.f32 %v2891, 0.0
      %v3819 = vmax.f32 %v2942, 0.0
      %v3820 = vmax.f32 %v2944, 0.0
      %v3821 = vmax.f32 %v2995, 0.0
      %v3822 = vmax.f32 %v2997, 0.0
      %v3823 = vmax.f32 %v3048, 0.0
      %v3824 = vmax.f32 %v3050, 0.0
      %v3825 = vmax.f32 %v3101, 0.0
      %v3826 = vmax.f32 %v3103, 0.0
      %v3827 = vmax.f32 %v3154, 0.0
      %v3828 = vmax.f32 %v3156, 0.0
      %v3829 = vmax.f32 %v3207, 0.0
      %v3830 = vmax.f32 %v3209, 0.0
      %v3831 = vmax.f32 %v3260, 0.0
      %v3832 = vmax.f32 %v3262, 0.0
      %v3833 = vmax.f32 %v3313, 0.0
      %v3834 = vmax.f32 %v3315, 0.0
      %v3835 = vmax.f32 %v3366, 0.0
      %v3836 = vmax.f32 %v3368, 0.0
      %v3837 = vmax.f32 %v3419, 0.0
      %v3838 = vmax.f32 %v3421, 0.0
      %v3839 = vmax.f32 %v3472, 0.0
      %v3840 = vmax.f32 %v3474, 0.0
      %v3841 = vmax.f32 %v3525, 0.0
      %v3842 = vmax.f32 %v3527, 0.0
      %v3843 = vmax.f32 %v3578, 0.0
      %v3844 = vmax.f32 %v3580, 0.0
      %v3845 = vmax.f32 %v3631, 0.0
      %v3846 = vmax.f32 %v3633, 0.0
      %v3847 = vmax.f32 %v3684, 0.0
      %v3848 = vmax.f32 %v3686, 0.0
      %v3849 = vmax.f32 %v3737, 0.0
      %v3850 = vmax.f32 %v3739, 0.0
      %v3851 = vmax.f32 %v2471, 0.0
      %v3852 = vmax.f32 %v2473, 0.0
      %v3853 = vmax.f32 %v2524, 0.0
      %v3854 = vmax.f32 %v2526, 0.0
      %v3855 = vmax.f32 %v2577, 0.0
      %v3856 = vmax.f32 %v2579, 0.0
      %v3857 = vmax.f32 %v2630, 0.0
      %v3858 = vmax.f32 %v2632, 0.0
      %v3859 = vmax.f32 %v2683, 0.0
      %v3860 = vmax.f32 %v2685, 0.0
      %v3861 = vmax.f32 %v2736, 0.0
      %v3862 = vmax.f32 %v2738, 0.0
      %v3863 = vmax.f32 %v2789, 0.0
      %v3864 = vmax.f32 %v2791, 0.0
      %v3865 = vmax.f32 %v2842, 0.0
      %v3866 = vmax.f32 %v2844, 0.0
      %v3867 = vmax.f32 %v2895, 0.0
      %v3868 = vmax.f32 %v2897, 0.0
      %v3869 = vmax.f32 %v2948, 0.0
      %v3870 = vmax.f32 %v2950, 0.0
      %v3871 = vmax.f32 %v3001, 0.0
      %v3872 = vmax.f32 %v3003, 0.0
      %v3873 = vmax.f32 %v3054, 0.0
      %v3874 = vmax.f32 %v3056, 0.0
      %v3875 = vmax.f32 %v3107, 0.0
      %v3876 = vmax.f32 %v3109, 0.0
      %v3877 = vmax.f32 %v3160, 0.0
      %v3878 = vmax.f32 %v3162, 0.0
      %v3879 = vmax.f32 %v3213, 0.0
      %v3880 = vmax.f32 %v3215, 0.0
      %v3881 = vmax.f32 %v3266, 0.0
      %v3882 = vmax.f32 %v3268, 0.0
      %v3883 = vmax.f32 %v3319, 0.0
      %v3884 = vmax.f32 %v3321, 0.0
      %v3885 = vmax.f32 %v3372, 0.0
      %v3886 = vmax.f32 %v3374, 0.0
      %v3887 = vmax.f32 %v3425, 0.0
      %v3888 = vmax.f32 %v3427, 0.0
      %v3889 = vmax.f32 %v3478, 0.0
      %v3890 = vmax.f32 %v3480, 0.0
      %v3891 = vmax.f32 %v3531, 0.0
      %v3892 = vmax.f32 %v3533, 0.0
      %v3893 = vmax.f32 %v3584, 0.0
      %v3894 = vmax.f32 %v3586, 0.0
      %v3895 = vmax.f32 %v3637, 0.0
      %v3896 = vmax.f32 %v3639, 0.0
      %v3897 = vmax.f32 %v3690, 0.0
      %v3898 = vmax.f32 %v3692, 0.0
      %v3899 = vmax.f32 %v3743, 0.0
      %v3900 = vmax.f32 %v3745, 0.0
      %v3901 = vmax.f32 %v2475, 0.0
      %v3902 = vmax.f32 %v2477, 0.0
      %v3903 = vmax.f32 %v2528, 0.0
      %v3904 = vmax.f32 %v2530, 0.0
      %v3905 = vmax.f32 %v2581, 0.0
      %v3906 = vmax.f32 %v2583, 0.0
      %v3907 = vmax.f32 %v2634, 0.0
      %v3908 = vmax.f32 %v2636, 0.0
      %v3909 = vmax.f32 %v2687, 0.0
      %v3910 = vmax.f32 %v2689, 0.0
      %v3911 = vmax.f32 %v2740, 0.0
      %v3912 = vmax.f32 %v2742, 0.0
      %v3913 = vmax.f32 %v2793, 0.0
      %v3914 = vmax.f32 %v2795, 0.0
      %v3915 = vmax.f32 %v2846, 0.0
      %v3916 = vmax.f32 %v2848, 0.0
      %v3917 = vmax.f32 %v2899, 0.0
      %v3918 = vmax.f32 %v2901, 0.0
      %v3919 = vmax.f32 %v2952, 0.0
      %v3920 = vmax.f32 %v2954, 0.0
      %v3921 = vmax.f32 %v3005, 0.0
      %v3922 = vmax.f32 %v3007, 0.0
      %v3923 = vmax.f32 %v3058, 0.0
      %v3924 = vmax.f32 %v3060, 0.0
      %v3925 = vmax.f32 %v3111, 0.0
      %v3926 = vmax.f32 %v3113, 0.0
      %v3927 = vmax.f32 %v3164, 0.0
      %v3928 = vmax.f32 %v3166, 0.0
      %v3929 = vmax.f32 %v3217, 0.0
      %v3930 = vmax.f32 %v3219, 0.0
      %v3931 = vmax.f32 %v3270, 0.0
      %v3932 = vmax.f32 %v3272, 0.0
      %v3933 = vmax.f32 %v3323, 0.0
      %v3934 = vmax.f32 %v3325, 0.0
      %v3935 = vmax.f32 %v3376, 0.0
      %v3936 = vmax.f32 %v3378, 0.0
      %v3937 = vmax.f32 %v3429, 0.0
      %v3938 = vmax.f32 %v3431, 0.0
      %v3939 = vmax.f32 %v3482, 0.0
      %v3940 = vmax.f32 %v3484, 0.0
      %v3941 = vmax.f32 %v3535, 0.0
      %v3942 = vmax.f32 %v3537, 0.0
      %v3943 = vmax.f32 %v3588, 0.0
      %v3944 = vmax.f32 %v3590, 0.0
      %v3945 = vmax.f32 %v3641, 0.0
      %v3946 = vmax.f32 %v3643, 0.0
      %v3947 = vmax.f32 %v3694, 0.0
      %v3948 = vmax.f32 %v3696, 0.0
      %v3949 = vmax.f32 %v3747, 0.0
      %v3950 = vmax.f32 %v3749, 0.0
      %v3951 = vpack.c.bf16 %v3801, %v3751
      %v3952 = vpack.c.bf16 %v3802, %v3752
      %v3953 = vpack.c.bf16 %v3803, %v3753
      %v3954 = vpack.c.bf16 %v3804, %v3754
      %v3955 = vpack.c.bf16 %v3805, %v3755
      %v3956 = vpack.c.bf16 %v3806, %v3756
      %v3957 = vpack.c.bf16 %v3807, %v3757
      %v3958 = vpack.c.bf16 %v3808, %v3758
      %v3959 = vpack.c.bf16 %v3809, %v3759
      %v3960 = vpack.c.bf16 %v3810, %v3760
      %v3961 = vpack.c.bf16 %v3811, %v3761
      %v3962 = vpack.c.bf16 %v3812, %v3762
      %v3963 = vpack.c.bf16 %v3813, %v3763
      %v3964 = vpack.c.bf16 %v3814, %v3764
      %v3965 = vpack.c.bf16 %v3815, %v3765
      %v3966 = vpack.c.bf16 %v3816, %v3766
      %v3967 = vpack.c.bf16 %v3817, %v3767
      %v3968 = vpack.c.bf16 %v3818, %v3768
      %v3969 = vpack.c.bf16 %v3819, %v3769
      %v3970 = vpack.c.bf16 %v3820, %v3770
      %v3971 = vpack.c.bf16 %v3821, %v3771
      %v3972 = vpack.c.bf16 %v3822, %v3772
      %v3973 = vpack.c.bf16 %v3823, %v3773
      %v3974 = vpack.c.bf16 %v3824, %v3774
      %v3975 = vpack.c.bf16 %v3825, %v3775
      %v3976 = vpack.c.bf16 %v3826, %v3776
      %v3977 = vpack.c.bf16 %v3827, %v3777
      %v3978 = vpack.c.bf16 %v3828, %v3778
      %v3979 = vpack.c.bf16 %v3829, %v3779
      %v3980 = vpack.c.bf16 %v3830, %v3780
      %v3981 = vpack.c.bf16 %v3831, %v3781
      %v3982 = vpack.c.bf16 %v3832, %v3782
      %v3983 = vpack.c.bf16 %v3833, %v3783
      %v3984 = vpack.c.bf16 %v3834, %v3784
      %v3985 = vpack.c.bf16 %v3835, %v3785
      %v3986 = vpack.c.bf16 %v3836, %v3786
      %v3987 = vpack.c.bf16 %v3837, %v3787
      %v3988 = vpack.c.bf16 %v3838, %v3788
      %v3989 = vpack.c.bf16 %v3839, %v3789
      %v3990 = vpack.c.bf16 %v3840, %v3790
      %v3991 = vpack.c.bf16 %v3841, %v3791
      %v3992 = vpack.c.bf16 %v3842, %v3792
      %v3993 = vpack.c.bf16 %v3843, %v3793
      %v3994 = vpack.c.bf16 %v3844, %v3794
      %v3995 = vpack.c.bf16 %v3845, %v3795
      %v3996 = vpack.c.bf16 %v3846, %v3796
      %v3997 = vpack.c.bf16 %v3847, %v3797
      %v3998 = vpack.c.bf16 %v3848, %v3798
      %v3999 = vpack.c.bf16 %v3849, %v3799
      %v4000 = vpack.c.bf16 %v3850, %v3800
      %v4001 = vpack.c.bf16 %v3901, %v3851
      %v4002 = vpack.c.bf16 %v3902, %v3852
      %v4003 = vpack.c.bf16 %v3903, %v3853
      %v4004 = vpack.c.bf16 %v3904, %v3854
      %v4005 = vpack.c.bf16 %v3905, %v3855
      %v4006 = vpack.c.bf16 %v3906, %v3856
      %v4007 = vpack.c.bf16 %v3907, %v3857
      %v4008 = vpack.c.bf16 %v3908, %v3858
      %v4009 = vpack.c.bf16 %v3909, %v3859
      %v4010 = vpack.c.bf16 %v3910, %v3860
      %v4011 = vpack.c.bf16 %v3911, %v3861
      %v4012 = vpack.c.bf16 %v3912, %v3862
      %v4013 = vpack.c.bf16 %v3913, %v3863
      %v4014 = vpack.c.bf16 %v3914, %v3864
      %v4015 = vpack.c.bf16 %v3915, %v3865
      %v4016 = vpack.c.bf16 %v3916, %v3866
      %v4017 = vpack.c.bf16 %v3917, %v3867
      %v4018 = vpack.c.bf16 %v3918, %v3868
      %v4019 = vpack.c.bf16 %v3919, %v3869
      %v4020 = vpack.c.bf16 %v3920, %v3870
      %v4021 = vpack.c.bf16 %v3921, %v3871
      %v4022 = vpack.c.bf16 %v3922, %v3872
      %v4023 = vpack.c.bf16 %v3923, %v3873
      %v4024 = vpack.c.bf16 %v3924, %v3874
      %v4025 = vpack.c.bf16 %v3925, %v3875
      %v4026 = vpack.c.bf16 %v3926, %v3876
      %v4027 = vpack.c.bf16 %v3927, %v3877
      %v4028 = vpack.c.bf16 %v3928, %v3878
      %v4029 = vpack.c.bf16 %v3929, %v3879
      %v4030 = vpack.c.bf16 %v3930, %v3880
      %v4031 = vpack.c.bf16 %v3931, %v3881
      %v4032 = vpack.c.bf16 %v3932, %v3882
      %v4033 = vpack.c.bf16 %v3933, %v3883
      %v4034 = vpack.c.bf16 %v3934, %v3884
      %v4035 = vpack.c.bf16 %v3935, %v3885
      %v4036 = vpack.c.bf16 %v3936, %v3886
      %v4037 = vpack.c.bf16 %v3937, %v3887
      %v4038 = vpack.c.bf16 %v3938, %v3888
      %v4039 = vpack.c.bf16 %v3939, %v3889
      %v4040 = vpack.c.bf16 %v3940, %v3890
      %v4041 = vpack.c.bf16 %v3941, %v3891
      %v4042 = vpack.c.bf16 %v3942, %v3892
      %v4043 = vpack.c.bf16 %v3943, %v3893
      %v4044 = vpack.c.bf16 %v3944, %v3894
      %v4045 = vpack.c.bf16 %v3945, %v3895
      %v4046 = vpack.c.bf16 %v3946, %v3896
      %v4047 = vpack.c.bf16 %v3947, %v3897
      %v4048 = vpack.c.bf16 %v3948, %v3898
      %v4049 = vpack.c.bf16 %v3949, %v3899
      %v4050 = vpack.c.bf16 %v3950, %v3900
      %v4151 = vunpack.c.l.b16 %v3951
      %v4152 = vunpack.c.l.b16 %v3952
      %v4153 = vunpack.c.l.b16 %v3953
      %v4154 = vunpack.c.l.b16 %v3954
      %v4155 = vunpack.c.l.b16 %v3955
      %v4156 = vunpack.c.l.b16 %v3956
      %v4157 = vunpack.c.l.b16 %v3957
      %v4158 = vunpack.c.l.b16 %v3958
      %v4159 = vunpack.c.l.b16 %v3959
      %v4160 = vunpack.c.l.b16 %v3960
      %v4161 = vunpack.c.l.b16 %v3961
      %v4162 = vunpack.c.l.b16 %v3962
      %v4163 = vunpack.c.l.b16 %v3963
      %v4164 = vunpack.c.l.b16 %v3964
      %v4165 = vunpack.c.l.b16 %v3965
      %v4166 = vunpack.c.l.b16 %v3966
      %v4167 = vunpack.c.l.b16 %v3967
      %v4168 = vunpack.c.l.b16 %v3968
      %v4169 = vunpack.c.l.b16 %v3969
      %v4170 = vunpack.c.l.b16 %v3970
      %v4171 = vunpack.c.l.b16 %v3971
      %v4172 = vunpack.c.l.b16 %v3972
      %v4173 = vunpack.c.l.b16 %v3973
      %v4174 = vunpack.c.l.b16 %v3974
      %v4175 = vunpack.c.l.b16 %v3975
      %v4176 = vunpack.c.l.b16 %v3976
      %v4177 = vunpack.c.l.b16 %v3977
      %v4178 = vunpack.c.l.b16 %v3978
      %v4179 = vunpack.c.l.b16 %v3979
      %v4180 = vunpack.c.l.b16 %v3980
      %v4181 = vunpack.c.l.b16 %v3981
      %v4182 = vunpack.c.l.b16 %v3982
      %v4183 = vunpack.c.l.b16 %v3983
      %v4184 = vunpack.c.l.b16 %v3984
      %v4185 = vunpack.c.l.b16 %v3985
      %v4186 = vunpack.c.l.b16 %v3986
      %v4187 = vunpack.c.l.b16 %v3987
      %v4188 = vunpack.c.l.b16 %v3988
      %v4189 = vunpack.c.l.b16 %v3989
      %v4190 = vunpack.c.l.b16 %v3990
      %v4191 = vunpack.c.l.b16 %v3991
      %v4192 = vunpack.c.l.b16 %v3992
      %v4193 = vunpack.c.l.b16 %v3993
      %v4194 = vunpack.c.l.b16 %v3994
      %v4195 = vunpack.c.l.b16 %v3995
      %v4196 = vunpack.c.l.b16 %v3996
      %v4197 = vunpack.c.l.b16 %v3997
      %v4198 = vunpack.c.l.b16 %v3998
      %v4199 = vunpack.c.l.b16 %v3999
      %v4200 = vunpack.c.l.b16 %v4000
      %v4201 = vunpack.c.h.b16 %v3951
      %v4202 = vunpack.c.h.b16 %v3952
      %v4203 = vunpack.c.h.b16 %v3953
      %v4204 = vunpack.c.h.b16 %v3954
      %v4205 = vunpack.c.h.b16 %v3955
      %v4206 = vunpack.c.h.b16 %v3956
      %v4207 = vunpack.c.h.b16 %v3957
      %v4208 = vunpack.c.h.b16 %v3958
      %v4209 = vunpack.c.h.b16 %v3959
      %v4210 = vunpack.c.h.b16 %v3960
      %v4211 = vunpack.c.h.b16 %v3961
      %v4212 = vunpack.c.h.b16 %v3962
      %v4213 = vunpack.c.h.b16 %v3963
      %v4214 = vunpack.c.h.b16 %v3964
      %v4215 = vunpack.c.h.b16 %v3965
      %v4216 = vunpack.c.h.b16 %v3966
      %v4217 = vunpack.c.h.b16 %v3967
      %v4218 = vunpack.c.h.b16 %v3968
      %v4219 = vunpack.c.h.b16 %v3969
      %v4220 = vunpack.c.h.b16 %v3970
      %v4221 = vunpack.c.h.b16 %v3971
      %v4222 = vunpack.c.h.b16 %v3972
      %v4223 = vunpack.c.h.b16 %v3973
      %v4224 = vunpack.c.h.b16 %v3974
      %v4225 = vunpack.c.h.b16 %v3975
      %v4226 = vunpack.c.h.b16 %v3976
      %v4227 = vunpack.c.h.b16 %v3977
      %v4228 = vunpack.c.h.b16 %v3978
      %v4229 = vunpack.c.h.b16 %v3979
      %v4230 = vunpack.c.h.b16 %v3980
      %v4231 = vunpack.c.h.b16 %v3981
      %v4232 = vunpack.c.h.b16 %v3982
      %v4233 = vunpack.c.h.b16 %v3983
      %v4234 = vunpack.c.h.b16 %v3984
      %v4235 = vunpack.c.h.b16 %v3985
      %v4236 = vunpack.c.h.b16 %v3986
      %v4237 = vunpack.c.h.b16 %v3987
      %v4238 = vunpack.c.h.b16 %v3988
      %v4239 = vunpack.c.h.b16 %v3989
      %v4240 = vunpack.c.h.b16 %v3990
      %v4241 = vunpack.c.h.b16 %v3991
      %v4242 = vunpack.c.h.b16 %v3992
      %v4243 = vunpack.c.h.b16 %v3993
      %v4244 = vunpack.c.h.b16 %v3994
      %v4245 = vunpack.c.h.b16 %v3995
      %v4246 = vunpack.c.h.b16 %v3996
      %v4247 = vunpack.c.h.b16 %v3997
      %v4248 = vunpack.c.h.b16 %v3998
      %v4249 = vunpack.c.h.b16 %v3999
      %v4250 = vunpack.c.h.b16 %v4000
      %v4251 = vunpack.c.l.b16 %v4001
      %v4252 = vunpack.c.l.b16 %v4002
      %v4253 = vunpack.c.l.b16 %v4003
      %v4254 = vunpack.c.l.b16 %v4004
      %v4255 = vunpack.c.l.b16 %v4005
      %v4256 = vunpack.c.l.b16 %v4006
      %v4257 = vunpack.c.l.b16 %v4007
      %v4258 = vunpack.c.l.b16 %v4008
      %v4259 = vunpack.c.l.b16 %v4009
      %v4260 = vunpack.c.l.b16 %v4010
      %v4261 = vunpack.c.l.b16 %v4011
      %v4262 = vunpack.c.l.b16 %v4012
      %v4263 = vunpack.c.l.b16 %v4013
      %v4264 = vunpack.c.l.b16 %v4014
      %v4265 = vunpack.c.l.b16 %v4015
      %v4266 = vunpack.c.l.b16 %v4016
      %v4267 = vunpack.c.l.b16 %v4017
      %v4268 = vunpack.c.l.b16 %v4018
      %v4269 = vunpack.c.l.b16 %v4019
      %v4270 = vunpack.c.l.b16 %v4020
      %v4271 = vunpack.c.l.b16 %v4021
      %v4272 = vunpack.c.l.b16 %v4022
      %v4273 = vunpack.c.l.b16 %v4023
      %v4274 = vunpack.c.l.b16 %v4024
      %v4275 = vunpack.c.l.b16 %v4025
      %v4276 = vunpack.c.l.b16 %v4026
      %v4277 = vunpack.c.l.b16 %v4027
      %v4278 = vunpack.c.l.b16 %v4028
      %v4279 = vunpack.c.l.b16 %v4029
      %v4280 = vunpack.c.l.b16 %v4030
      %v4281 = vunpack.c.l.b16 %v4031
      %v4282 = vunpack.c.l.b16 %v4032
      %v4283 = vunpack.c.l.b16 %v4033
      %v4284 = vunpack.c.l.b16 %v4034
      %v4285 = vunpack.c.l.b16 %v4035
      %v4286 = vunpack.c.l.b16 %v4036
      %v4287 = vunpack.c.l.b16 %v4037
      %v4288 = vunpack.c.l.b16 %v4038
      %v4289 = vunpack.c.l.b16 %v4039
      %v4290 = vunpack.c.l.b16 %v4040
      %v4291 = vunpack.c.l.b16 %v4041
      %v4292 = vunpack.c.l.b16 %v4042
      %v4293 = vunpack.c.l.b16 %v4043
      %v4294 = vunpack.c.l.b16 %v4044
      %v4295 = vunpack.c.l.b16 %v4045
      %v4296 = vunpack.c.l.b16 %v4046
      %v4297 = vunpack.c.l.b16 %v4047
      %v4298 = vunpack.c.l.b16 %v4048
      %v4299 = vunpack.c.l.b16 %v4049
      %v4300 = vunpack.c.l.b16 %v4050
      %v4301 = vunpack.c.h.b16 %v4001
      %v4302 = vunpack.c.h.b16 %v4002
      %v4303 = vunpack.c.h.b16 %v4003
      %v4304 = vunpack.c.h.b16 %v4004
      %v4305 = vunpack.c.h.b16 %v4005
      %v4306 = vunpack.c.h.b16 %v4006
      %v4307 = vunpack.c.h.b16 %v4007
      %v4308 = vunpack.c.h.b16 %v4008
      %v4309 = vunpack.c.h.b16 %v4009
      %v4310 = vunpack.c.h.b16 %v4010
      %v4311 = vunpack.c.h.b16 %v4011
      %v4312 = vunpack.c.h.b16 %v4012
      %v4313 = vunpack.c.h.b16 %v4013
      %v4314 = vunpack.c.h.b16 %v4014
      %v4315 = vunpack.c.h.b16 %v4015
      %v4316 = vunpack.c.h.b16 %v4016
      %v4317 = vunpack.c.h.b16 %v4017
      %v4318 = vunpack.c.h.b16 %v4018
      %v4319 = vunpack.c.h.b16 %v4019
      %v4320 = vunpack.c.h.b16 %v4020
      %v4321 = vunpack.c.h.b16 %v4021
      %v4322 = vunpack.c.h.b16 %v4022
      %v4323 = vunpack.c.h.b16 %v4023
      %v4324 = vunpack.c.h.b16 %v4024
      %v4325 = vunpack.c.h.b16 %v4025
      %v4326 = vunpack.c.h.b16 %v4026
      %v4327 = vunpack.c.h.b16 %v4027
      %v4328 = vunpack.c.h.b16 %v4028
      %v4329 = vunpack.c.h.b16 %v4029
      %v4330 = vunpack.c.h.b16 %v4030
      %v4331 = vunpack.c.h.b16 %v4031
      %v4332 = vunpack.c.h.b16 %v4032
      %v4333 = vunpack.c.h.b16 %v4033
      %v4334 = vunpack.c.h.b16 %v4034
      %v4335 = vunpack.c.h.b16 %v4035
      %v4336 = vunpack.c.h.b16 %v4036
      %v4337 = vunpack.c.h.b16 %v4037
      %v4338 = vunpack.c.h.b16 %v4038
      %v4339 = vunpack.c.h.b16 %v4039
      %v4340 = vunpack.c.h.b16 %v4040
      %v4341 = vunpack.c.h.b16 %v4041
      %v4342 = vunpack.c.h.b16 %v4042
      %v4343 = vunpack.c.h.b16 %v4043
      %v4344 = vunpack.c.h.b16 %v4044
      %v4345 = vunpack.c.h.b16 %v4045
      %v4346 = vunpack.c.h.b16 %v4046
      %v4347 = vunpack.c.h.b16 %v4047
      %v4348 = vunpack.c.h.b16 %v4048
      %v4349 = vunpack.c.h.b16 %v4049
      %v4350 = vunpack.c.h.b16 %v4050
      %v4351 = vpack.c.b16 %v4152, %v4151
      %v4352 = vpack.c.b16 %v4154, %v4153
      %v4353 = vpack.c.b16 %v4156, %v4155
      %v4354 = vpack.c.b16 %v4158, %v4157
      %v4355 = vpack.c.b16 %v4160, %v4159
      %v4356 = vpack.c.b16 %v4162, %v4161
      %v4357 = vpack.c.b16 %v4164, %v4163
      %v4358 = vpack.c.b16 %v4166, %v4165
      %v4359 = vpack.c.b16 %v4168, %v4167
      %v4360 = vpack.c.b16 %v4170, %v4169
      %v4361 = vpack.c.b16 %v4172, %v4171
      %v4362 = vpack.c.b16 %v4174, %v4173
      %v4363 = vpack.c.b16 %v4176, %v4175
      %v4364 = vpack.c.b16 %v4178, %v4177
      %v4365 = vpack.c.b16 %v4180, %v4179
      %v4366 = vpack.c.b16 %v4182, %v4181
      %v4367 = vpack.c.b16 %v4184, %v4183
      %v4368 = vpack.c.b16 %v4186, %v4185
      %v4369 = vpack.c.b16 %v4188, %v4187
      %v4370 = vpack.c.b16 %v4190, %v4189
      %v4371 = vpack.c.b16 %v4192, %v4191
      %v4372 = vpack.c.b16 %v4194, %v4193
      %v4373 = vpack.c.b16 %v4196, %v4195
      %v4374 = vpack.c.b16 %v4198, %v4197
      %v4375 = vpack.c.b16 %v4200, %v4199
      %v4376 = vpack.c.b16 %v4202, %v4201
      %v4377 = vpack.c.b16 %v4204, %v4203
      %v4378 = vpack.c.b16 %v4206, %v4205
      %v4379 = vpack.c.b16 %v4208, %v4207
      %v4380 = vpack.c.b16 %v4210, %v4209
      %v4381 = vpack.c.b16 %v4212, %v4211
      %v4382 = vpack.c.b16 %v4214, %v4213
      %v4383 = vpack.c.b16 %v4216, %v4215
      %v4384 = vpack.c.b16 %v4218, %v4217
      %v4385 = vpack.c.b16 %v4220, %v4219
      %v4386 = vpack.c.b16 %v4222, %v4221
      %v4387 = vpack.c.b16 %v4224, %v4223
      %v4388 = vpack.c.b16 %v4226, %v4225
      %v4389 = vpack.c.b16 %v4228, %v4227
      %v4390 = vpack.c.b16 %v4230, %v4229
      %v4391 = vpack.c.b16 %v4232, %v4231
      %v4392 = vpack.c.b16 %v4234, %v4233
      %v4393 = vpack.c.b16 %v4236, %v4235
      %v4394 = vpack.c.b16 %v4238, %v4237
      %v4395 = vpack.c.b16 %v4240, %v4239
      %v4396 = vpack.c.b16 %v4242, %v4241
      %v4397 = vpack.c.b16 %v4244, %v4243
      %v4398 = vpack.c.b16 %v4246, %v4245
      %v4399 = vpack.c.b16 %v4248, %v4247
      %v4400 = vpack.c.b16 %v4250, %v4249
      %v4401 = vpack.c.b16 %v4252, %v4251
      %v4402 = vpack.c.b16 %v4254, %v4253
      %v4403 = vpack.c.b16 %v4256, %v4255
      %v4404 = vpack.c.b16 %v4258, %v4257
      %v4405 = vpack.c.b16 %v4260, %v4259
      %v4406 = vpack.c.b16 %v4262, %v4261
      %v4407 = vpack.c.b16 %v4264, %v4263
      %v4408 = vpack.c.b16 %v4266, %v4265
      %v4409 = vpack.c.b16 %v4268, %v4267
      %v4410 = vpack.c.b16 %v4270, %v4269
      %v4411 = vpack.c.b16 %v4272, %v4271
      %v4412 = vpack.c.b16 %v4274, %v4273
      %v4413 = vpack.c.b16 %v4276, %v4275
      %v4414 = vpack.c.b16 %v4278, %v4277
      %v4415 = vpack.c.b16 %v4280, %v4279
      %v4416 = vpack.c.b16 %v4282, %v4281
      %v4417 = vpack.c.b16 %v4284, %v4283
      %v4418 = vpack.c.b16 %v4286, %v4285
      %v4419 = vpack.c.b16 %v4288, %v4287
      %v4420 = vpack.c.b16 %v4290, %v4289
      %v4421 = vpack.c.b16 %v4292, %v4291
      %v4422 = vpack.c.b16 %v4294, %v4293
      %v4423 = vpack.c.b16 %v4296, %v4295
      %v4424 = vpack.c.b16 %v4298, %v4297
      %v4425 = vpack.c.b16 %v4300, %v4299
      %v4426 = vpack.c.b16 %v4302, %v4301
      %v4427 = vpack.c.b16 %v4304, %v4303
      %v4428 = vpack.c.b16 %v4306, %v4305
      %v4429 = vpack.c.b16 %v4308, %v4307
      %v4430 = vpack.c.b16 %v4310, %v4309
      %v4431 = vpack.c.b16 %v4312, %v4311
      %v4432 = vpack.c.b16 %v4314, %v4313
      %v4433 = vpack.c.b16 %v4316, %v4315
      %v4434 = vpack.c.b16 %v4318, %v4317
      %v4435 = vpack.c.b16 %v4320, %v4319
      %v4436 = vpack.c.b16 %v4322, %v4321
      %v4437 = vpack.c.b16 %v4324, %v4323
      %v4438 = vpack.c.b16 %v4326, %v4325
      %v4439 = vpack.c.b16 %v4328, %v4327
      %v4440 = vpack.c.b16 %v4330, %v4329
      %v4441 = vpack.c.b16 %v4332, %v4331
      %v4442 = vpack.c.b16 %v4334, %v4333
      %v4443 = vpack.c.b16 %v4336, %v4335
      %v4444 = vpack.c.b16 %v4338, %v4337
      %v4445 = vpack.c.b16 %v4340, %v4339
      %v4446 = vpack.c.b16 %v4342, %v4341
      %v4447 = vpack.c.b16 %v4344, %v4343
      %v4448 = vpack.c.b16 %v4346, %v4345
      %v4449 = vpack.c.b16 %v4348, %v4347
      %v4450 = vpack.c.b16 %v4350, %v4349
      %4551 = vst [vmem:[%s397] sm:$0xff] %v4351
      %4552 = vst [vmem:[%s397 + $0x8] sm:$0xff] %v4352
      %4553 = vst [vmem:[%s397 + $0x10] sm:$0xff] %v4353
      %4554 = vst [vmem:[%s397 + $0x18] sm:$0xff] %v4354
      %4555 = vst [vmem:[%s397 + $0x20] sm:$0xff] %v4355
      %4556 = vst [vmem:[%s397 + $0x28] sm:$0xff] %v4356
      %4557 = vst [vmem:[%s397 + $0x30] sm:$0xff] %v4357
      %4558 = vst [vmem:[%s397 + $0x38] sm:$0xff] %v4358
      %4559 = vst [vmem:[%s397 + $0x40] sm:$0xff] %v4359
      %4560 = vst [vmem:[%s397 + $0x48] sm:$0xff] %v4360
      %4561 = vst [vmem:[%s397 + $0x50] sm:$0xff] %v4361
      %4562 = vst [vmem:[%s397 + $0x58] sm:$0xff] %v4362
      %4563 = vst [vmem:[%s397 + $0x60] sm:$0xff] %v4363
      %4564 = vst [vmem:[%s397 + $0x68] sm:$0xff] %v4364
      %4565 = vst [vmem:[%s397 + $0x70] sm:$0xff] %v4365
      %4566 = vst [vmem:[%s397 + $0x78] sm:$0xff] %v4366
      %4567 = vst [vmem:[%s397 + $0x80] sm:$0xff] %v4367
      %4568 = vst [vmem:[%s397 + $0x88] sm:$0xff] %v4368
      %4569 = vst [vmem:[%s397 + $0x90] sm:$0xff] %v4369
      %4570 = vst [vmem:[%s397 + $0x98] sm:$0xff] %v4370
      %4571 = vst [vmem:[%s397 + $0xa0] sm:$0xff] %v4371
      %4572 = vst [vmem:[%s397 + $0xa8] sm:$0xff] %v4372
      %4573 = vst [vmem:[%s397 + $0xb0] sm:$0xff] %v4373
      %4574 = vst [vmem:[%s397 + $0xb8] sm:$0xff] %v4374
      %4575 = vst [vmem:[%s397 + $0xc0] sm:$0xff] %v4375
      %4576 = vst [vmem:[%s397 + $0xc8] sm:$0xff] %v4376
      %4577 = vst [vmem:[%s397 + $0xd0] sm:$0xff] %v4377
      %4578 = vst [vmem:[%s397 + $0xd8] sm:$0xff] %v4378
      %4579 = vst [vmem:[%s397 + $0xe0] sm:$0xff] %v4379
      %4580 = vst [vmem:[%s397 + $0xe8] sm:$0xff] %v4380
      %4581 = vst [vmem:[%s397 + $0xf0] sm:$0xff] %v4381
      %4582 = vst [vmem:[%s397 + $0xf8] sm:$0xff] %v4382
      %4583 = vst [vmem:[%s397 + $0x100] sm:$0xff] %v4383
      %4584 = vst [vmem:[%s397 + $0x108] sm:$0xff] %v4384
      %4585 = vst [vmem:[%s397 + $0x110] sm:$0xff] %v4385
      %4586 = vst [vmem:[%s397 + $0x118] sm:$0xff] %v4386
      %4587 = vst [vmem:[%s397 + $0x120] sm:$0xff] %v4387
      %4588 = vst [vmem:[%s397 + $0x128] sm:$0xff] %v4388
      %4589 = vst [vmem:[%s397 + $0x130] sm:$0xff] %v4389
      %4590 = vst [vmem:[%s397 + $0x138] sm:$0xff] %v4390
      %4591 = vst [vmem:[%s397 + $0x140] sm:$0xff] %v4391
      %4592 = vst [vmem:[%s397 + $0x148] sm:$0xff] %v4392
      %4593 = vst [vmem:[%s397 + $0x150] sm:$0xff] %v4393
      %4594 = vst [vmem:[%s397 + $0x158] sm:$0xff] %v4394
      %4595 = vst [vmem:[%s397 + $0x160] sm:$0xff] %v4395
      %4596 = vst [vmem:[%s397 + $0x168] sm:$0xff] %v4396
      %4597 = vst [vmem:[%s397 + $0x170] sm:$0xff] %v4397
      %4598 = vst [vmem:[%s397 + $0x178] sm:$0xff] %v4398
      %4599 = vst [vmem:[%s397 + $0x180] sm:$0xff] %v4399
      %4600 = vst [vmem:[%s397 + $0x188] sm:$0xff] %v4400
      %4601 = vst [vmem:[%s397 + $0x190] sm:$0xff] %v4401
      %4602 = vst [vmem:[%s397 + $0x198] sm:$0xff] %v4402
      %4603 = vst [vmem:[%s397 + $0x1a0] sm:$0xff] %v4403
      %4604 = vst [vmem:[%s397 + $0x1a8] sm:$0xff] %v4404
      %4605 = vst [vmem:[%s397 + $0x1b0] sm:$0xff] %v4405
      %4606 = vst [vmem:[%s397 + $0x1b8] sm:$0xff] %v4406
      %4607 = vst [vmem:[%s397 + $0x1c0] sm:$0xff] %v4407
      %4608 = vst [vmem:[%s397 + $0x1c8] sm:$0xff] %v4408
      %4609 = vst [vmem:[%s397 + $0x1d0] sm:$0xff] %v4409
      %4610 = vst [vmem:[%s397 + $0x1d8] sm:$0xff] %v4410
      %4611 = vst [vmem:[%s397 + $0x1e0] sm:$0xff] %v4411
      %4612 = vst [vmem:[%s397 + $0x1e8] sm:$0xff] %v4412
      %4613 = vst [vmem:[%s397 + $0x1f0] sm:$0xff] %v4413
      %4614 = vst [vmem:[%s397 + $0x1f8] sm:$0xff] %v4414
      %4615 = vst [vmem:[%s397 + $0x200] sm:$0xff] %v4415
      %4616 = vst [vmem:[%s397 + $0x208] sm:$0xff] %v4416
      %4617 = vst [vmem:[%s397 + $0x210] sm:$0xff] %v4417
      %4618 = vst [vmem:[%s397 + $0x218] sm:$0xff] %v4418
      %4619 = vst [vmem:[%s397 + $0x220] sm:$0xff] %v4419
      %4620 = vst [vmem:[%s397 + $0x228] sm:$0xff] %v4420
      %4621 = vst [vmem:[%s397 + $0x230] sm:$0xff] %v4421
      %4622 = vst [vmem:[%s397 + $0x238] sm:$0xff] %v4422
      %4623 = vst [vmem:[%s397 + $0x240] sm:$0xff] %v4423
      %4624 = vst [vmem:[%s397 + $0x248] sm:$0xff] %v4424
      %4625 = vst [vmem:[%s397 + $0x250] sm:$0xff] %v4425
      %4626 = vst [vmem:[%s397 + $0x258] sm:$0xff] %v4426
      %4627 = vst [vmem:[%s397 + $0x260] sm:$0xff] %v4427
      %4628 = vst [vmem:[%s397 + $0x268] sm:$0xff] %v4428
      %4629 = vst [vmem:[%s397 + $0x270] sm:$0xff] %v4429
      %4630 = vst [vmem:[%s397 + $0x278] sm:$0xff] %v4430
      %4631 = vst [vmem:[%s397 + $0x280] sm:$0xff] %v4431
      %4632 = vst [vmem:[%s397 + $0x288] sm:$0xff] %v4432
      %4633 = vst [vmem:[%s397 + $0x290] sm:$0xff] %v4433
      %4634 = vst [vmem:[%s397 + $0x298] sm:$0xff] %v4434
      %4635 = vst [vmem:[%s397 + $0x2a0] sm:$0xff] %v4435
      %4636 = vst [vmem:[%s397 + $0x2a8] sm:$0xff] %v4436
      %4637 = vst [vmem:[%s397 + $0x2b0] sm:$0xff] %v4437
      %4638 = vst [vmem:[%s397 + $0x2b8] sm:$0xff] %v4438
      %4639 = vst [vmem:[%s397 + $0x2c0] sm:$0xff] %v4439
      %4640 = vst [vmem:[%s397 + $0x2c8] sm:$0xff] %v4440
      %4641 = vst [vmem:[%s397 + $0x2d0] sm:$0xff] %v4441
      %4642 = vst [vmem:[%s397 + $0x2d8] sm:$0xff] %v4442
      %4643 = vst [vmem:[%s397 + $0x2e0] sm:$0xff] %v4443
      %4644 = vst [vmem:[%s397 + $0x2e8] sm:$0xff] %v4444
      %4645 = vst [vmem:[%s397 + $0x2f0] sm:$0xff] %v4445
      %4646 = vst [vmem:[%s397 + $0x2f8] sm:$0xff] %v4446
      %4647 = vst [vmem:[%s397 + $0x300] sm:$0xff] %v4447
      %4648 = vst [vmem:[%s397 + $0x308] sm:$0xff] %v4448
      %4649 = vst [vmem:[%s397 + $0x310] sm:$0xff] %v4449
      %4650 = vst [vmem:[%s397 + $0x318] sm:$0xff] %v4450
      %v4651 = vld [vmem:[%s5] sm:$0x3]
      %v4652 = vld [vmem:[%s6] sm:$0x7]
      %4654 = vset.pattern.permute.xlu0 0
      %4655 = vperm.xlu0 %4654, %v4652
      %v4656 = vpop.permute.xlu0 %4655
      %v4659 = vsel %vm2419, %v4651, 0
      %4661 = vmatprep.subr.bf16.mxu0 0
      %4662 = vmatpush1.bf16.msra.mxu0 0
      %4663 = vmatprep.subr.bf16.mxu0 0
      %4664 = vmatpush1.bf16.msra.mxu0 0
      %4665 = vmatprep.subr.bf16.mxu0 0
      %4666 = vmatpush1.bf16.msra.mxu0 0
      %4667 = vmatprep.subr.bf16.mxu0 0
      %4668 = vmatpush1.bf16.msra.mxu0 0
      %4669 = vmatprep.subr.bf16.mxu0 0
      %4670 = vmatpush1.bf16.msra.mxu0 0
      %4671 = vmatprep.subr.bf16.mxu0 0
      %4672 = vmatpush1.bf16.msra.mxu0 0
      %4673 = vmatprep.subr.bf16.mxu0 %v4002
      %4674 = vmatpush1.bf16.msra.mxu0 %v4001
      %4675 = vmatprep.subr.bf16.mxu0 %v3952
      %4676 = vmatpush1.bf16.msra.mxu0 %v3951
      %4677 = vmatprep.subr.bf16.mxu0 0
      %4678 = vmatpush2.bf16.msra.mxu0 0
      %4679 = vmatprep.subr.bf16.mxu0 0
      %4680 = vmatpush2.bf16.msra.mxu0 0
      %4681 = vmatprep.subr.bf16.mxu0 0
      %4682 = vmatpush2.bf16.msra.mxu0 0
      %4683 = vmatprep.subr.bf16.mxu0 0
      %4684 = vmatpush2.bf16.msra.mxu0 0
      %4685 = vmatprep.subr.bf16.mxu0 0
      %4686 = vmatpush2.bf16.msra.mxu0 0
      %4687 = vmatprep.subr.bf16.mxu0 0
      %4688 = vmatpush2.bf16.msra.mxu0 0
      %4689 = vmatprep.subr.bf16.mxu0 0
      %4690 = vmatpush2.bf16.msra.mxu0 0
      %4691 = vmatprep.subr.bf16.mxu0 0
      %4692 = vmatpush2.bf16.msra.mxu0 0
      %4693 = vmatprep.mubr.bf16.mxu0 0
      %4694 = vmatmul.mubr.bf16.gmra.mxu0 %v4659
      %v4695 = vpop.f32.mrf.mxu0
      %v4696 = vadd.f32 %v4656, %v4695
      %v4697 = vpop.f32.mrf.mxu0
      %v4698 = vadd.f32 %v4656, %v4697
      %v4699 = vpop.f32.mrf.mxu0
      %v4700 = vpop.f32.mrf.mxu0
      %4701 = vdwg.mxu0
      %4702 = vmatprep.subr.bf16.mxu0 0
      %4703 = vmatpush1.bf16.msra.mxu0 0
      %4704 = vmatprep.subr.bf16.mxu0 0
      %4705 = vmatpush1.bf16.msra.mxu0 0
      %4706 = vmatprep.subr.bf16.mxu0 0
      %4707 = vmatpush1.bf16.msra.mxu0 0
      %4708 = vmatprep.subr.bf16.mxu0 0
      %4709 = vmatpush1.bf16.msra.mxu0 0
      %4710 = vmatprep.subr.bf16.mxu0 0
      %4711 = vmatpush1.bf16.msra.mxu0 0
      %4712 = vmatprep.subr.bf16.mxu0 0
      %4713 = vmatpush1.bf16.msra.mxu0 0
      %4714 = vmatprep.subr.bf16.mxu0 %v4004
      %4715 = vmatpush1.bf16.msra.mxu0 %v4003
      %4716 = vmatprep.subr.bf16.mxu0 %v3954
      %4717 = vmatpush1.bf16.msra.mxu0 %v3953
      %4718 = vmatprep.subr.bf16.mxu0 0
      %4719 = vmatpush2.bf16.msra.mxu0 0
      %4720 = vmatprep.subr.bf16.mxu0 0
      %4721 = vmatpush2.bf16.msra.mxu0 0
      %4722 = vmatprep.subr.bf16.mxu0 0
      %4723 = vmatpush2.bf16.msra.mxu0 0
      %4724 = vmatprep.subr.bf16.mxu0 0
      %4725 = vmatpush2.bf16.msra.mxu0 0
      %4726 = vmatprep.subr.bf16.mxu0 0
      %4727 = vmatpush2.bf16.msra.mxu0 0
      %4728 = vmatprep.subr.bf16.mxu0 0
      %4729 = vmatpush2.bf16.msra.mxu0 0
      %4730 = vmatprep.subr.bf16.mxu0 0
      %4731 = vmatpush2.bf16.msra.mxu0 0
      %4732 = vmatprep.subr.bf16.mxu0 0
      %4733 = vmatpush2.bf16.msra.mxu0 0
      %4734 = vmatprep.mubr.bf16.mxu0 0
      %4735 = vmatmul.mubr.bf16.gmra.mxu0 %v4659
      %v4736 = vpop.f32.mrf.mxu0
      %v4737 = vadd.f32 %v4656, %v4736
      %v4738 = vpop.f32.mrf.mxu0
      %v4739 = vadd.f32 %v4656, %v4738
      %v4740 = vpop.f32.mrf.mxu0
      %v4741 = vpop.f32.mrf.mxu0
      %4742 = vdwg.mxu0
      %4743 = vmatprep.subr.bf16.mxu0 0
      %4744 = vmatpush1.bf16.msra.mxu0 0
      %4745 = vmatprep.subr.bf16.mxu0 0
      %4746 = vmatpush1.bf16.msra.mxu0 0
      %4747 = vmatprep.subr.bf16.mxu0 0
      %4748 = vmatpush1.bf16.msra.mxu0 0
      %4749 = vmatprep.subr.bf16.mxu0 0
      %4750 = vmatpush1.bf16.msra.mxu0 0
      %4751 = vmatprep.subr.bf16.mxu0 0
      %4752 = vmatpush1.bf16.msra.mxu0 0
      %4753 = vmatprep.subr.bf16.mxu0 0
      %4754 = vmatpush1.bf16.msra.mxu0 0
      %4755 = vmatprep.subr.bf16.mxu0 %v4006
      %4756 = vmatpush1.bf16.msra.mxu0 %v4005
      %4757 = vmatprep.subr.bf16.mxu0 %v3956
      %4758 = vmatpush1.bf16.msra.mxu0 %v3955
      %4759 = vmatprep.subr.bf16.mxu0 0
      %4760 = vmatpush2.bf16.msra.mxu0 0
      %4761 = vmatprep.subr.bf16.mxu0 0
      %4762 = vmatpush2.bf16.msra.mxu0 0
      %4763 = vmatprep.subr.bf16.mxu0 0
      %4764 = vmatpush2.bf16.msra.mxu0 0
      %4765 = vmatprep.subr.bf16.mxu0 0
      %4766 = vmatpush2.bf16.msra.mxu0 0
      %4767 = vmatprep.subr.bf16.mxu0 0
      %4768 = vmatpush2.bf16.msra.mxu0 0
      %4769 = vmatprep.subr.bf16.mxu0 0
      %4770 = vmatpush2.bf16.msra.mxu0 0
      %4771 = vmatprep.subr.bf16.mxu0 0
      %4772 = vmatpush2.bf16.msra.mxu0 0
      %4773 = vmatprep.subr.bf16.mxu0 0
      %4774 = vmatpush2.bf16.msra.mxu0 0
      %4775 = vmatprep.mubr.bf16.mxu0 0
      %4776 = vmatmul.mubr.bf16.gmra.mxu0 %v4659
      %v4777 = vpop.f32.mrf.mxu0
      %v4778 = vadd.f32 %v4656, %v4777
      %v4779 = vpop.f32.mrf.mxu0
      %v4780 = vadd.f32 %v4656, %v4779
      %v4781 = vpop.f32.mrf.mxu0
      %v4782 = vpop.f32.mrf.mxu0
      %4783 = vdwg.mxu0
      %4784 = vmatprep.subr.bf16.mxu0 0
      %4785 = vmatpush1.bf16.msra.mxu0 0
      %4786 = vmatprep.subr.bf16.mxu0 0
      %4787 = vmatpush1.bf16.msra.mxu0 0
      %4788 = vmatprep.subr.bf16.mxu0 0
      %4789 = vmatpush1.bf16.msra.mxu0 0
      %4790 = vmatprep.subr.bf16.mxu0 0
      %4791 = vmatpush1.bf16.msra.mxu0 0
      %4792 = vmatprep.subr.bf16.mxu0 0
      %4793 = vmatpush1.bf16.msra.mxu0 0
      %4794 = vmatprep.subr.bf16.mxu0 0
      %4795 = vmatpush1.bf16.msra.mxu0 0
      %4796 = vmatprep.subr.bf16.mxu0 %v4008
      %4797 = vmatpush1.bf16.msra.mxu0 %v4007
      %4798 = vmatprep.subr.bf16.mxu0 %v3958
      %4799 = vmatpush1.bf16.msra.mxu0 %v3957
      %4800 = vmatprep.subr.bf16.mxu0 0
      %4801 = vmatpush2.bf16.msra.mxu0 0
      %4802 = vmatprep.subr.bf16.mxu0 0
      %4803 = vmatpush2.bf16.msra.mxu0 0
      %4804 = vmatprep.subr.bf16.mxu0 0
      %4805 = vmatpush2.bf16.msra.mxu0 0
      %4806 = vmatprep.subr.bf16.mxu0 0
      %4807 = vmatpush2.bf16.msra.mxu0 0
      %4808 = vmatprep.subr.bf16.mxu0 0
      %4809 = vmatpush2.bf16.msra.mxu0 0
      %4810 = vmatprep.subr.bf16.mxu0 0
      %4811 = vmatpush2.bf16.msra.mxu0 0
      %4812 = vmatprep.subr.bf16.mxu0 0
      %4813 = vmatpush2.bf16.msra.mxu0 0
      %4814 = vmatprep.subr.bf16.mxu0 0
      %4815 = vmatpush2.bf16.msra.mxu0 0
      %4816 = vmatprep.mubr.bf16.mxu0 0
      %4817 = vmatmul.mubr.bf16.gmra.mxu0 %v4659
      %v4818 = vpop.f32.mrf.mxu0
      %v4819 = vadd.f32 %v4656, %v4818
      %v4820 = vpop.f32.mrf.mxu0
      %v4821 = vadd.f32 %v4656, %v4820
      %v4822 = vpop.f32.mrf.mxu0
      %v4823 = vpop.f32.mrf.mxu0
      %4824 = vdwg.mxu0
      %4825 = vmatprep.subr.bf16.mxu0 0
      %4826 = vmatpush1.bf16.msra.mxu0 0
      %4827 = vmatprep.subr.bf16.mxu0 0
      %4828 = vmatpush1.bf16.msra.mxu0 0
      %4829 = vmatprep.subr.bf16.mxu0 0
      %4830 = vmatpush1.bf16.msra.mxu0 0
      %4831 = vmatprep.subr.bf16.mxu0 0
      %4832 = vmatpush1.bf16.msra.mxu0 0
      %4833 = vmatprep.subr.bf16.mxu0 0
      %4834 = vmatpush1.bf16.msra.mxu0 0
      %4835 = vmatprep.subr.bf16.mxu0 0
      %4836 = vmatpush1.bf16.msra.mxu0 0
      %4837 = vmatprep.subr.bf16.mxu0 %v4010
      %4838 = vmatpush1.bf16.msra.mxu0 %v4009
      %4839 = vmatprep.subr.bf16.mxu0 %v3960
      %4840 = vmatpush1.bf16.msra.mxu0 %v3959
      %4841 = vmatprep.subr.bf16.mxu0 0
      %4842 = vmatpush2.bf16.msra.mxu0 0
      %4843 = vmatprep.subr.bf16.mxu0 0
      %4844 = vmatpush2.bf16.msra.mxu0 0
      %4845 = vmatprep.subr.bf16.mxu0 0
      %4846 = vmatpush2.bf16.msra.mxu0 0
      %4847 = vmatprep.subr.bf16.mxu0 0
      %4848 = vmatpush2.bf16.msra.mxu0 0
      %4849 = vmatprep.subr.bf16.mxu0 0
      %4850 = vmatpush2.bf16.msra.mxu0 0
      %4851 = vmatprep.subr.bf16.mxu0 0
      %4852 = vmatpush2.bf16.msra.mxu0 0
      %4853 = vmatprep.subr.bf16.mxu0 0
      %4854 = vmatpush2.bf16.msra.mxu0 0
      %4855 = vmatprep.subr.bf16.mxu0 0
      %4856 = vmatpush2.bf16.msra.mxu0 0
      %4857 = vmatprep.mubr.bf16.mxu0 0
      %4858 = vmatmul.mubr.bf16.gmra.mxu0 %v4659
      %v4859 = vpop.f32.mrf.mxu0
      %v4860 = vadd.f32 %v4656, %v4859
      %v4861 = vpop.f32.mrf.mxu0
      %v4862 = vadd.f32 %v4656, %v4861
      %v4863 = vpop.f32.mrf.mxu0
      %v4864 = vpop.f32.mrf.mxu0
      %4865 = vdwg.mxu0
      %4866 = vmatprep.subr.bf16.mxu0 0
      %4867 = vmatpush1.bf16.msra.mxu0 0
      %4868 = vmatprep.subr.bf16.mxu0 0
      %4869 = vmatpush1.bf16.msra.mxu0 0
      %4870 = vmatprep.subr.bf16.mxu0 0
      %4871 = vmatpush1.bf16.msra.mxu0 0
      %4872 = vmatprep.subr.bf16.mxu0 0
      %4873 = vmatpush1.bf16.msra.mxu0 0
      %4874 = vmatprep.subr.bf16.mxu0 0
      %4875 = vmatpush1.bf16.msra.mxu0 0
      %4876 = vmatprep.subr.bf16.mxu0 0
      %4877 = vmatpush1.bf16.msra.mxu0 0
      %4878 = vmatprep.subr.bf16.mxu0 %v4012
      %4879 = vmatpush1.bf16.msra.mxu0 %v4011
      %4880 = vmatprep.subr.bf16.mxu0 %v3962
      %4881 = vmatpush1.bf16.msra.mxu0 %v3961
      %4882 = vmatprep.subr.bf16.mxu0 0
      %4883 = vmatpush2.bf16.msra.mxu0 0
      %4884 = vmatprep.subr.bf16.mxu0 0
      %4885 = vmatpush2.bf16.msra.mxu0 0
      %4886 = vmatprep.subr.bf16.mxu0 0
      %4887 = vmatpush2.bf16.msra.mxu0 0
      %4888 = vmatprep.subr.bf16.mxu0 0
      %4889 = vmatpush2.bf16.msra.mxu0 0
      %4890 = vmatprep.subr.bf16.mxu0 0
      %4891 = vmatpush2.bf16.msra.mxu0 0
      %4892 = vmatprep.subr.bf16.mxu0 0
      %4893 = vmatpush2.bf16.msra.mxu0 0
      %4894 = vmatprep.subr.bf16.mxu0 0
      %4895 = vmatpush2.bf16.msra.mxu0 0
      %4896 = vmatprep.subr.bf16.mxu0 0
      %4897 = vmatpush2.bf16.msra.mxu0 0
      %4898 = vmatprep.mubr.bf16.mxu0 0
      %4899 = vmatmul.mubr.bf16.gmra.mxu0 %v4659
      %v4900 = vpop.f32.mrf.mxu0
      %v4901 = vadd.f32 %v4656, %v4900
      %v4902 = vpop.f32.mrf.mxu0
      %v4903 = vadd.f32 %v4656, %v4902
      %v4904 = vpop.f32.mrf.mxu0
      %v4905 = vpop.f32.mrf.mxu0
      %4906 = vdwg.mxu0
      %4907 = vmatprep.subr.bf16.mxu0 0
      %4908 = vmatpush1.bf16.msra.mxu0 0
      %4909 = vmatprep.subr.bf16.mxu0 0
      %4910 = vmatpush1.bf16.msra.mxu0 0
      %4911 = vmatprep.subr.bf16.mxu0 0
      %4912 = vmatpush1.bf16.msra.mxu0 0
      %4913 = vmatprep.subr.bf16.mxu0 0
      %4914 = vmatpush1.bf16.msra.mxu0 0
      %4915 = vmatprep.subr.bf16.mxu0 0
      %4916 = vmatpush1.bf16.msra.mxu0 0
      %4917 = vmatprep.subr.bf16.mxu0 0
      %4918 = vmatpush1.bf16.msra.mxu0 0
      %4919 = vmatprep.subr.bf16.mxu0 %v4014
      %4920 = vmatpush1.bf16.msra.mxu0 %v4013
      %4921 = vmatprep.subr.bf16.mxu0 %v3964
      %4922 = vmatpush1.bf16.msra.mxu0 %v3963
      %4923 = vmatprep.subr.bf16.mxu0 0
      %4924 = vmatpush2.bf16.msra.mxu0 0
      %4925 = vmatprep.subr.bf16.mxu0 0
      %4926 = vmatpush2.bf16.msra.mxu0 0
      %4927 = vmatprep.subr.bf16.mxu0 0
      %4928 = vmatpush2.bf16.msra.mxu0 0
      %4929 = vmatprep.subr.bf16.mxu0 0
      %4930 = vmatpush2.bf16.msra.mxu0 0
      %4931 = vmatprep.subr.bf16.mxu0 0
      %4932 = vmatpush2.bf16.msra.mxu0 0
      %4933 = vmatprep.subr.bf16.mxu0 0
      %4934 = vmatpush2.bf16.msra.mxu0 0
      %4935 = vmatprep.subr.bf16.mxu0 0
      %4936 = vmatpush2.bf16.msra.mxu0 0
      %4937 = vmatprep.subr.bf16.mxu0 0
      %4938 = vmatpush2.bf16.msra.mxu0 0
      %4939 = vmatprep.mubr.bf16.mxu0 0
      %4940 = vmatmul.mubr.bf16.gmra.mxu0 %v4659
      %v4941 = vpop.f32.mrf.mxu0
      %v4942 = vadd.f32 %v4656, %v4941
      %v4943 = vpop.f32.mrf.mxu0
      %v4944 = vadd.f32 %v4656, %v4943
      %v4945 = vpop.f32.mrf.mxu0
      %v4946 = vpop.f32.mrf.mxu0
      %4947 = vdwg.mxu0
      %4948 = vmatprep.subr.bf16.mxu0 0
      %4949 = vmatpush1.bf16.msra.mxu0 0
      %4950 = vmatprep.subr.bf16.mxu0 0
      %4951 = vmatpush1.bf16.msra.mxu0 0
      %4952 = vmatprep.subr.bf16.mxu0 0
      %4953 = vmatpush1.bf16.msra.mxu0 0
      %4954 = vmatprep.subr.bf16.mxu0 0
      %4955 = vmatpush1.bf16.msra.mxu0 0
      %4956 = vmatprep.subr.bf16.mxu0 0
      %4957 = vmatpush1.bf16.msra.mxu0 0
      %4958 = vmatprep.subr.bf16.mxu0 0
      %4959 = vmatpush1.bf16.msra.mxu0 0
      %4960 = vmatprep.subr.bf16.mxu0 %v4016
      %4961 = vmatpush1.bf16.msra.mxu0 %v4015
      %4962 = vmatprep.subr.bf16.mxu0 %v3966
      %4963 = vmatpush1.bf16.msra.mxu0 %v3965
      %4964 = vmatprep.subr.bf16.mxu0 0
      %4965 = vmatpush2.bf16.msra.mxu0 0
      %4966 = vmatprep.subr.bf16.mxu0 0
      %4967 = vmatpush2.bf16.msra.mxu0 0
      %4968 = vmatprep.subr.bf16.mxu0 0
      %4969 = vmatpush2.bf16.msra.mxu0 0
      %4970 = vmatprep.subr.bf16.mxu0 0
      %4971 = vmatpush2.bf16.msra.mxu0 0
      %4972 = vmatprep.subr.bf16.mxu0 0
      %4973 = vmatpush2.bf16.msra.mxu0 0
      %4974 = vmatprep.subr.bf16.mxu0 0
      %4975 = vmatpush2.bf16.msra.mxu0 0
      %4976 = vmatprep.subr.bf16.mxu0 0
      %4977 = vmatpush2.bf16.msra.mxu0 0
      %4978 = vmatprep.subr.bf16.mxu0 0
      %4979 = vmatpush2.bf16.msra.mxu0 0
      %4980 = vmatprep.mubr.bf16.mxu0 0
      %4981 = vmatmul.mubr.bf16.gmra.mxu0 %v4659
      %v4982 = vpop.f32.mrf.mxu0
      %v4983 = vadd.f32 %v4656, %v4982
      %v4984 = vpop.f32.mrf.mxu0
      %v4985 = vadd.f32 %v4656, %v4984
      %v4986 = vpop.f32.mrf.mxu0
      %v4987 = vpop.f32.mrf.mxu0
      %4988 = vdwg.mxu0
      %4989 = vmatprep.subr.bf16.mxu0 0
      %4990 = vmatpush1.bf16.msra.mxu0 0
      %4991 = vmatprep.subr.bf16.mxu0 0
      %4992 = vmatpush1.bf16.msra.mxu0 0
      %4993 = vmatprep.subr.bf16.mxu0 0
      %4994 = vmatpush1.bf16.msra.mxu0 0
      %4995 = vmatprep.subr.bf16.mxu0 0
      %4996 = vmatpush1.bf16.msra.mxu0 0
      %4997 = vmatprep.subr.bf16.mxu0 0
      %4998 = vmatpush1.bf16.msra.mxu0 0
      %4999 = vmatprep.subr.bf16.mxu0 0
      %5000 = vmatpush1.bf16.msra.mxu0 0
      %5001 = vmatprep.subr.bf16.mxu0 %v4018
      %5002 = vmatpush1.bf16.msra.mxu0 %v4017
      %5003 = vmatprep.subr.bf16.mxu0 %v3968
      %5004 = vmatpush1.bf16.msra.mxu0 %v3967
      %5005 = vmatprep.subr.bf16.mxu0 0
      %5006 = vmatpush2.bf16.msra.mxu0 0
      %5007 = vmatprep.subr.bf16.mxu0 0
      %5008 = vmatpush2.bf16.msra.mxu0 0
      %5009 = vmatprep.subr.bf16.mxu0 0
      %5010 = vmatpush2.bf16.msra.mxu0 0
      %5011 = vmatprep.subr.bf16.mxu0 0
      %5012 = vmatpush2.bf16.msra.mxu0 0
      %5013 = vmatprep.subr.bf16.mxu0 0
      %5014 = vmatpush2.bf16.msra.mxu0 0
      %5015 = vmatprep.subr.bf16.mxu0 0
      %5016 = vmatpush2.bf16.msra.mxu0 0
      %5017 = vmatprep.subr.bf16.mxu0 0
      %5018 = vmatpush2.bf16.msra.mxu0 0
      %5019 = vmatprep.subr.bf16.mxu0 0
      %5020 = vmatpush2.bf16.msra.mxu0 0
      %5021 = vmatprep.mubr.bf16.mxu0 0
      %5022 = vmatmul.mubr.bf16.gmra.mxu0 %v4659
      %v5023 = vpop.f32.mrf.mxu0
      %v5024 = vadd.f32 %v4656, %v5023
      %v5025 = vpop.f32.mrf.mxu0
      %v5026 = vadd.f32 %v4656, %v5025
      %v5027 = vpop.f32.mrf.mxu0
      %v5028 = vpop.f32.mrf.mxu0
      %5029 = vdwg.mxu0
      %5030 = vmatprep.subr.bf16.mxu0 0
      %5031 = vmatpush1.bf16.msra.mxu0 0
      %5032 = vmatprep.subr.bf16.mxu0 0
      %5033 = vmatpush1.bf16.msra.mxu0 0
      %5034 = vmatprep.subr.bf16.mxu0 0
      %5035 = vmatpush1.bf16.msra.mxu0 0
      %5036 = vmatprep.subr.bf16.mxu0 0
      %5037 = vmatpush1.bf16.msra.mxu0 0
      %5038 = vmatprep.subr.bf16.mxu0 0
      %5039 = vmatpush1.bf16.msra.mxu0 0
      %5040 = vmatprep.subr.bf16.mxu0 0
      %5041 = vmatpush1.bf16.msra.mxu0 0
      %5042 = vmatprep.subr.bf16.mxu0 %v4020
      %5043 = vmatpush1.bf16.msra.mxu0 %v4019
      %5044 = vmatprep.subr.bf16.mxu0 %v3970
      %5045 = vmatpush1.bf16.msra.mxu0 %v3969
      %5046 = vmatprep.subr.bf16.mxu0 0
      %5047 = vmatpush2.bf16.msra.mxu0 0
      %5048 = vmatprep.subr.bf16.mxu0 0
      %5049 = vmatpush2.bf16.msra.mxu0 0
      %5050 = vmatprep.subr.bf16.mxu0 0
      %5051 = vmatpush2.bf16.msra.mxu0 0
      %5052 = vmatprep.subr.bf16.mxu0 0
      %5053 = vmatpush2.bf16.msra.mxu0 0
      %5054 = vmatprep.subr.bf16.mxu0 0
      %5055 = vmatpush2.bf16.msra.mxu0 0
      %5056 = vmatprep.subr.bf16.mxu0 0
      %5057 = vmatpush2.bf16.msra.mxu0 0
      %5058 = vmatprep.subr.bf16.mxu0 0
      %5059 = vmatpush2.bf16.msra.mxu0 0
      %5060 = vmatprep.subr.bf16.mxu0 0
      %5061 = vmatpush2.bf16.msra.mxu0 0
      %5062 = vmatprep.mubr.bf16.mxu0 0
      %5063 = vmatmul.mubr.bf16.gmra.mxu0 %v4659
      %v5064 = vpop.f32.mrf.mxu0
      %v5065 = vadd.f32 %v4656, %v5064
      %v5066 = vpop.f32.mrf.mxu0
      %v5067 = vadd.f32 %v4656, %v5066
      %v5068 = vpop.f32.mrf.mxu0
      %v5069 = vpop.f32.mrf.mxu0
      %5070 = vdwg.mxu0
      %5071 = vmatprep.subr.bf16.mxu0 0
      %5072 = vmatpush1.bf16.msra.mxu0 0
      %5073 = vmatprep.subr.bf16.mxu0 0
      %5074 = vmatpush1.bf16.msra.mxu0 0
      %5075 = vmatprep.subr.bf16.mxu0 0
      %5076 = vmatpush1.bf16.msra.mxu0 0
      %5077 = vmatprep.subr.bf16.mxu0 0
      %5078 = vmatpush1.bf16.msra.mxu0 0
      %5079 = vmatprep.subr.bf16.mxu0 0
      %5080 = vmatpush1.bf16.msra.mxu0 0
      %5081 = vmatprep.subr.bf16.mxu0 0
      %5082 = vmatpush1.bf16.msra.mxu0 0
      %5083 = vmatprep.subr.bf16.mxu0 %v4022
      %5084 = vmatpush1.bf16.msra.mxu0 %v4021
      %5085 = vmatprep.subr.bf16.mxu0 %v3972
      %5086 = vmatpush1.bf16.msra.mxu0 %v3971
      %5087 = vmatprep.subr.bf16.mxu0 0
      %5088 = vmatpush2.bf16.msra.mxu0 0
      %5089 = vmatprep.subr.bf16.mxu0 0
      %5090 = vmatpush2.bf16.msra.mxu0 0
      %5091 = vmatprep.subr.bf16.mxu0 0
      %5092 = vmatpush2.bf16.msra.mxu0 0
      %5093 = vmatprep.subr.bf16.mxu0 0
      %5094 = vmatpush2.bf16.msra.mxu0 0
      %5095 = vmatprep.subr.bf16.mxu0 0
      %5096 = vmatpush2.bf16.msra.mxu0 0
      %5097 = vmatprep.subr.bf16.mxu0 0
      %5098 = vmatpush2.bf16.msra.mxu0 0
      %5099 = vmatprep.subr.bf16.mxu0 0
      %5100 = vmatpush2.bf16.msra.mxu0 0
      %5101 = vmatprep.subr.bf16.mxu0 0
      %5102 = vmatpush2.bf16.msra.mxu0 0
      %5103 = vmatprep.mubr.bf16.mxu0 0
      %5104 = vmatmul.mubr.bf16.gmra.mxu0 %v4659
      %v5105 = vpop.f32.mrf.mxu0
      %v5106 = vadd.f32 %v4656, %v5105
      %v5107 = vpop.f32.mrf.mxu0
      %v5108 = vadd.f32 %v4656, %v5107
      %v5109 = vpop.f32.mrf.mxu0
      %v5110 = vpop.f32.mrf.mxu0
      %5111 = vdwg.mxu0
      %5112 = vmatprep.subr.bf16.mxu0 0
      %5113 = vmatpush1.bf16.msra.mxu0 0
      %5114 = vmatprep.subr.bf16.mxu0 0
      %5115 = vmatpush1.bf16.msra.mxu0 0
      %5116 = vmatprep.subr.bf16.mxu0 0
      %5117 = vmatpush1.bf16.msra.mxu0 0
      %5118 = vmatprep.subr.bf16.mxu0 0
      %5119 = vmatpush1.bf16.msra.mxu0 0
      %5120 = vmatprep.subr.bf16.mxu0 0
      %5121 = vmatpush1.bf16.msra.mxu0 0
      %5122 = vmatprep.subr.bf16.mxu0 0
      %5123 = vmatpush1.bf16.msra.mxu0 0
      %5124 = vmatprep.subr.bf16.mxu0 %v4024
      %5125 = vmatpush1.bf16.msra.mxu0 %v4023
      %5126 = vmatprep.subr.bf16.mxu0 %v3974
      %5127 = vmatpush1.bf16.msra.mxu0 %v3973
      %5128 = vmatprep.subr.bf16.mxu0 0
      %5129 = vmatpush2.bf16.msra.mxu0 0
      %5130 = vmatprep.subr.bf16.mxu0 0
      %5131 = vmatpush2.bf16.msra.mxu0 0
      %5132 = vmatprep.subr.bf16.mxu0 0
      %5133 = vmatpush2.bf16.msra.mxu0 0
      %5134 = vmatprep.subr.bf16.mxu0 0
      %5135 = vmatpush2.bf16.msra.mxu0 0
      %5136 = vmatprep.subr.bf16.mxu0 0
      %5137 = vmatpush2.bf16.msra.mxu0 0
      %5138 = vmatprep.subr.bf16.mxu0 0
      %5139 = vmatpush2.bf16.msra.mxu0 0
      %5140 = vmatprep.subr.bf16.mxu0 0
      %5141 = vmatpush2.bf16.msra.mxu0 0
      %5142 = vmatprep.subr.bf16.mxu0 0
      %5143 = vmatpush2.bf16.msra.mxu0 0
      %5144 = vmatprep.mubr.bf16.mxu0 0
      %5145 = vmatmul.mubr.bf16.gmra.mxu0 %v4659
      %v5146 = vpop.f32.mrf.mxu0
      %v5147 = vadd.f32 %v4656, %v5146
      %v5148 = vpop.f32.mrf.mxu0
      %v5149 = vadd.f32 %v4656, %v5148
      %v5150 = vpop.f32.mrf.mxu0
      %v5151 = vpop.f32.mrf.mxu0
      %5152 = vdwg.mxu0
      %5153 = vmatprep.subr.bf16.mxu0 0
      %5154 = vmatpush1.bf16.msra.mxu0 0
      %5155 = vmatprep.subr.bf16.mxu0 0
      %5156 = vmatpush1.bf16.msra.mxu0 0
      %5157 = vmatprep.subr.bf16.mxu0 0
      %5158 = vmatpush1.bf16.msra.mxu0 0
      %5159 = vmatprep.subr.bf16.mxu0 0
      %5160 = vmatpush1.bf16.msra.mxu0 0
      %5161 = vmatprep.subr.bf16.mxu0 0
      %5162 = vmatpush1.bf16.msra.mxu0 0
      %5163 = vmatprep.subr.bf16.mxu0 0
      %5164 = vmatpush1.bf16.msra.mxu0 0
      %5165 = vmatprep.subr.bf16.mxu0 %v4026
      %5166 = vmatpush1.bf16.msra.mxu0 %v4025
      %5167 = vmatprep.subr.bf16.mxu0 %v3976
      %5168 = vmatpush1.bf16.msra.mxu0 %v3975
      %5169 = vmatprep.subr.bf16.mxu0 0
      %5170 = vmatpush2.bf16.msra.mxu0 0
      %5171 = vmatprep.subr.bf16.mxu0 0
      %5172 = vmatpush2.bf16.msra.mxu0 0
      %5173 = vmatprep.subr.bf16.mxu0 0
      %5174 = vmatpush2.bf16.msra.mxu0 0
      %5175 = vmatprep.subr.bf16.mxu0 0
      %5176 = vmatpush2.bf16.msra.mxu0 0
      %5177 = vmatprep.subr.bf16.mxu0 0
      %5178 = vmatpush2.bf16.msra.mxu0 0
      %5179 = vmatprep.subr.bf16.mxu0 0
      %5180 = vmatpush2.bf16.msra.mxu0 0
      %5181 = vmatprep.subr.bf16.mxu0 0
      %5182 = vmatpush2.bf16.msra.mxu0 0
      %5183 = vmatprep.subr.bf16.mxu0 0
      %5184 = vmatpush2.bf16.msra.mxu0 0
      %5185 = vmatprep.mubr.bf16.mxu0 0
      %5186 = vmatmul.mubr.bf16.gmra.mxu0 %v4659
      %v5187 = vpop.f32.mrf.mxu0
      %v5188 = vadd.f32 %v4656, %v5187
      %v5189 = vpop.f32.mrf.mxu0
      %v5190 = vadd.f32 %v4656, %v5189
      %v5191 = vpop.f32.mrf.mxu0
      %v5192 = vpop.f32.mrf.mxu0
      %5193 = vdwg.mxu0
      %5194 = vmatprep.subr.bf16.mxu0 0
      %5195 = vmatpush1.bf16.msra.mxu0 0
      %5196 = vmatprep.subr.bf16.mxu0 0
      %5197 = vmatpush1.bf16.msra.mxu0 0
      %5198 = vmatprep.subr.bf16.mxu0 0
      %5199 = vmatpush1.bf16.msra.mxu0 0
      %5200 = vmatprep.subr.bf16.mxu0 0
      %5201 = vmatpush1.bf16.msra.mxu0 0
      %5202 = vmatprep.subr.bf16.mxu0 0
      %5203 = vmatpush1.bf16.msra.mxu0 0
      %5204 = vmatprep.subr.bf16.mxu0 0
      %5205 = vmatpush1.bf16.msra.mxu0 0
      %5206 = vmatprep.subr.bf16.mxu0 %v4028
      %5207 = vmatpush1.bf16.msra.mxu0 %v4027
      %5208 = vmatprep.subr.bf16.mxu0 %v3978
      %5209 = vmatpush1.bf16.msra.mxu0 %v3977
      %5210 = vmatprep.subr.bf16.mxu0 0
      %5211 = vmatpush2.bf16.msra.mxu0 0
      %5212 = vmatprep.subr.bf16.mxu0 0
      %5213 = vmatpush2.bf16.msra.mxu0 0
      %5214 = vmatprep.subr.bf16.mxu0 0
      %5215 = vmatpush2.bf16.msra.mxu0 0
      %5216 = vmatprep.subr.bf16.mxu0 0
      %5217 = vmatpush2.bf16.msra.mxu0 0
      %5218 = vmatprep.subr.bf16.mxu0 0
      %5219 = vmatpush2.bf16.msra.mxu0 0
      %5220 = vmatprep.subr.bf16.mxu0 0
      %5221 = vmatpush2.bf16.msra.mxu0 0
      %5222 = vmatprep.subr.bf16.mxu0 0
      %5223 = vmatpush2.bf16.msra.mxu0 0
      %5224 = vmatprep.subr.bf16.mxu0 0
      %5225 = vmatpush2.bf16.msra.mxu0 0
      %5226 = vmatprep.mubr.bf16.mxu0 0
      %5227 = vmatmul.mubr.bf16.gmra.mxu0 %v4659
      %v5228 = vpop.f32.mrf.mxu0
      %v5229 = vadd.f32 %v4656, %v5228
      %v5230 = vpop.f32.mrf.mxu0
      %v5231 = vadd.f32 %v4656, %v5230
      %v5232 = vpop.f32.mrf.mxu0
      %v5233 = vpop.f32.mrf.mxu0
      %5234 = vdwg.mxu0
      %5235 = vmatprep.subr.bf16.mxu0 0
      %5236 = vmatpush1.bf16.msra.mxu0 0
      %5237 = vmatprep.subr.bf16.mxu0 0
      %5238 = vmatpush1.bf16.msra.mxu0 0
      %5239 = vmatprep.subr.bf16.mxu0 0
      %5240 = vmatpush1.bf16.msra.mxu0 0
      %5241 = vmatprep.subr.bf16.mxu0 0
      %5242 = vmatpush1.bf16.msra.mxu0 0
      %5243 = vmatprep.subr.bf16.mxu0 0
      %5244 = vmatpush1.bf16.msra.mxu0 0
      %5245 = vmatprep.subr.bf16.mxu0 0
      %5246 = vmatpush1.bf16.msra.mxu0 0
      %5247 = vmatprep.subr.bf16.mxu0 %v4030
      %5248 = vmatpush1.bf16.msra.mxu0 %v4029
      %5249 = vmatprep.subr.bf16.mxu0 %v3980
      %5250 = vmatpush1.bf16.msra.mxu0 %v3979
      %5251 = vmatprep.subr.bf16.mxu0 0
      %5252 = vmatpush2.bf16.msra.mxu0 0
      %5253 = vmatprep.subr.bf16.mxu0 0
      %5254 = vmatpush2.bf16.msra.mxu0 0
      %5255 = vmatprep.subr.bf16.mxu0 0
      %5256 = vmatpush2.bf16.msra.mxu0 0
      %5257 = vmatprep.subr.bf16.mxu0 0
      %5258 = vmatpush2.bf16.msra.mxu0 0
      %5259 = vmatprep.subr.bf16.mxu0 0
      %5260 = vmatpush2.bf16.msra.mxu0 0
      %5261 = vmatprep.subr.bf16.mxu0 0
      %5262 = vmatpush2.bf16.msra.mxu0 0
      %5263 = vmatprep.subr.bf16.mxu0 0
      %5264 = vmatpush2.bf16.msra.mxu0 0
      %5265 = vmatprep.subr.bf16.mxu0 0
      %5266 = vmatpush2.bf16.msra.mxu0 0
      %5267 = vmatprep.mubr.bf16.mxu0 0
      %5268 = vmatmul.mubr.bf16.gmra.mxu0 %v4659
      %v5269 = vpop.f32.mrf.mxu0
      %v5270 = vadd.f32 %v4656, %v5269
      %v5271 = vpop.f32.mrf.mxu0
      %v5272 = vadd.f32 %v4656, %v5271
      %v5273 = vpop.f32.mrf.mxu0
      %v5274 = vpop.f32.mrf.mxu0
      %5275 = vdwg.mxu0
      %5276 = vmatprep.subr.bf16.mxu0 0
      %5277 = vmatpush1.bf16.msra.mxu0 0
      %5278 = vmatprep.subr.bf16.mxu0 0
      %5279 = vmatpush1.bf16.msra.mxu0 0
      %5280 = vmatprep.subr.bf16.mxu0 0
      %5281 = vmatpush1.bf16.msra.mxu0 0
      %5282 = vmatprep.subr.bf16.mxu0 0
      %5283 = vmatpush1.bf16.msra.mxu0 0
      %5284 = vmatprep.subr.bf16.mxu0 0
      %5285 = vmatpush1.bf16.msra.mxu0 0
      %5286 = vmatprep.subr.bf16.mxu0 0
      %5287 = vmatpush1.bf16.msra.mxu0 0
      %5288 = vmatprep.subr.bf16.mxu0 %v4032
      %5289 = vmatpush1.bf16.msra.mxu0 %v4031
      %5290 = vmatprep.subr.bf16.mxu0 %v3982
      %5291 = vmatpush1.bf16.msra.mxu0 %v3981
      %5292 = vmatprep.subr.bf16.mxu0 0
      %5293 = vmatpush2.bf16.msra.mxu0 0
      %5294 = vmatprep.subr.bf16.mxu0 0
      %5295 = vmatpush2.bf16.msra.mxu0 0
      %5296 = vmatprep.subr.bf16.mxu0 0
      %5297 = vmatpush2.bf16.msra.mxu0 0
      %5298 = vmatprep.subr.bf16.mxu0 0
      %5299 = vmatpush2.bf16.msra.mxu0 0
      %5300 = vmatprep.subr.bf16.mxu0 0
      %5301 = vmatpush2.bf16.msra.mxu0 0
      %5302 = vmatprep.subr.bf16.mxu0 0
      %5303 = vmatpush2.bf16.msra.mxu0 0
      %5304 = vmatprep.subr.bf16.mxu0 0
      %5305 = vmatpush2.bf16.msra.mxu0 0
      %5306 = vmatprep.subr.bf16.mxu0 0
      %5307 = vmatpush2.bf16.msra.mxu0 0
      %5308 = vmatprep.mubr.bf16.mxu0 0
      %5309 = vmatmul.mubr.bf16.gmra.mxu0 %v4659
      %v5310 = vpop.f32.mrf.mxu0
      %v5311 = vadd.f32 %v4656, %v5310
      %v5312 = vpop.f32.mrf.mxu0
      %v5313 = vadd.f32 %v4656, %v5312
      %v5314 = vpop.f32.mrf.mxu0
      %v5315 = vpop.f32.mrf.mxu0
      %5316 = vdwg.mxu0
      %5317 = vmatprep.subr.bf16.mxu0 0
      %5318 = vmatpush1.bf16.msra.mxu0 0
      %5319 = vmatprep.subr.bf16.mxu0 0
      %5320 = vmatpush1.bf16.msra.mxu0 0
      %5321 = vmatprep.subr.bf16.mxu0 0
      %5322 = vmatpush1.bf16.msra.mxu0 0
      %5323 = vmatprep.subr.bf16.mxu0 0
      %5324 = vmatpush1.bf16.msra.mxu0 0
      %5325 = vmatprep.subr.bf16.mxu0 0
      %5326 = vmatpush1.bf16.msra.mxu0 0
      %5327 = vmatprep.subr.bf16.mxu0 0
      %5328 = vmatpush1.bf16.msra.mxu0 0
      %5329 = vmatprep.subr.bf16.mxu0 %v4034
      %5330 = vmatpush1.bf16.msra.mxu0 %v4033
      %5331 = vmatprep.subr.bf16.mxu0 %v3984
      %5332 = vmatpush1.bf16.msra.mxu0 %v3983
      %5333 = vmatprep.subr.bf16.mxu0 0
      %5334 = vmatpush2.bf16.msra.mxu0 0
      %5335 = vmatprep.subr.bf16.mxu0 0
      %5336 = vmatpush2.bf16.msra.mxu0 0
      %5337 = vmatprep.subr.bf16.mxu0 0
      %5338 = vmatpush2.bf16.msra.mxu0 0
      %5339 = vmatprep.subr.bf16.mxu0 0
      %5340 = vmatpush2.bf16.msra.mxu0 0
      %5341 = vmatprep.subr.bf16.mxu0 0
      %5342 = vmatpush2.bf16.msra.mxu0 0
      %5343 = vmatprep.subr.bf16.mxu0 0
      %5344 = vmatpush2.bf16.msra.mxu0 0
      %5345 = vmatprep.subr.bf16.mxu0 0
      %5346 = vmatpush2.bf16.msra.mxu0 0
      %5347 = vmatprep.subr.bf16.mxu0 0
      %5348 = vmatpush2.bf16.msra.mxu0 0
      %5349 = vmatprep.mubr.bf16.mxu0 0
      %5350 = vmatmul.mubr.bf16.gmra.mxu0 %v4659
      %v5351 = vpop.f32.mrf.mxu0
      %v5352 = vadd.f32 %v4656, %v5351
      %v5353 = vpop.f32.mrf.mxu0
      %v5354 = vadd.f32 %v4656, %v5353
      %v5355 = vpop.f32.mrf.mxu0
      %v5356 = vpop.f32.mrf.mxu0
      %5357 = vdwg.mxu0
      %5358 = vmatprep.subr.bf16.mxu0 0
      %5359 = vmatpush1.bf16.msra.mxu0 0
      %5360 = vmatprep.subr.bf16.mxu0 0
      %5361 = vmatpush1.bf16.msra.mxu0 0
      %5362 = vmatprep.subr.bf16.mxu0 0
      %5363 = vmatpush1.bf16.msra.mxu0 0
      %5364 = vmatprep.subr.bf16.mxu0 0
      %5365 = vmatpush1.bf16.msra.mxu0 0
      %5366 = vmatprep.subr.bf16.mxu0 0
      %5367 = vmatpush1.bf16.msra.mxu0 0
      %5368 = vmatprep.subr.bf16.mxu0 0
      %5369 = vmatpush1.bf16.msra.mxu0 0
      %5370 = vmatprep.subr.bf16.mxu0 %v4036
      %5371 = vmatpush1.bf16.msra.mxu0 %v4035
      %5372 = vmatprep.subr.bf16.mxu0 %v3986
      %5373 = vmatpush1.bf16.msra.mxu0 %v3985
      %5374 = vmatprep.subr.bf16.mxu0 0
      %5375 = vmatpush2.bf16.msra.mxu0 0
      %5376 = vmatprep.subr.bf16.mxu0 0
      %5377 = vmatpush2.bf16.msra.mxu0 0
      %5378 = vmatprep.subr.bf16.mxu0 0
      %5379 = vmatpush2.bf16.msra.mxu0 0
      %5380 = vmatprep.subr.bf16.mxu0 0
      %5381 = vmatpush2.bf16.msra.mxu0 0
      %5382 = vmatprep.subr.bf16.mxu0 0
      %5383 = vmatpush2.bf16.msra.mxu0 0
      %5384 = vmatprep.subr.bf16.mxu0 0
      %5385 = vmatpush2.bf16.msra.mxu0 0
      %5386 = vmatprep.subr.bf16.mxu0 0
      %5387 = vmatpush2.bf16.msra.mxu0 0
      %5388 = vmatprep.subr.bf16.mxu0 0
      %5389 = vmatpush2.bf16.msra.mxu0 0
      %5390 = vmatprep.mubr.bf16.mxu0 0
      %5391 = vmatmul.mubr.bf16.gmra.mxu0 %v4659
      %v5392 = vpop.f32.mrf.mxu0
      %v5393 = vadd.f32 %v4656, %v5392
      %v5394 = vpop.f32.mrf.mxu0
      %v5395 = vadd.f32 %v4656, %v5394
      %v5396 = vpop.f32.mrf.mxu0
      %v5397 = vpop.f32.mrf.mxu0
      %5398 = vdwg.mxu0
      %5399 = vmatprep.subr.bf16.mxu0 0
      %5400 = vmatpush1.bf16.msra.mxu0 0
      %5401 = vmatprep.subr.bf16.mxu0 0
      %5402 = vmatpush1.bf16.msra.mxu0 0
      %5403 = vmatprep.subr.bf16.mxu0 0
      %5404 = vmatpush1.bf16.msra.mxu0 0
      %5405 = vmatprep.subr.bf16.mxu0 0
      %5406 = vmatpush1.bf16.msra.mxu0 0
      %5407 = vmatprep.subr.bf16.mxu0 0
      %5408 = vmatpush1.bf16.msra.mxu0 0
      %5409 = vmatprep.subr.bf16.mxu0 0
      %5410 = vmatpush1.bf16.msra.mxu0 0
      %5411 = vmatprep.subr.bf16.mxu0 %v4038
      %5412 = vmatpush1.bf16.msra.mxu0 %v4037
      %5413 = vmatprep.subr.bf16.mxu0 %v3988
      %5414 = vmatpush1.bf16.msra.mxu0 %v3987
      %5415 = vmatprep.subr.bf16.mxu0 0
      %5416 = vmatpush2.bf16.msra.mxu0 0
      %5417 = vmatprep.subr.bf16.mxu0 0
      %5418 = vmatpush2.bf16.msra.mxu0 0
      %5419 = vmatprep.subr.bf16.mxu0 0
      %5420 = vmatpush2.bf16.msra.mxu0 0
      %5421 = vmatprep.subr.bf16.mxu0 0
      %5422 = vmatpush2.bf16.msra.mxu0 0
      %5423 = vmatprep.subr.bf16.mxu0 0
      %5424 = vmatpush2.bf16.msra.mxu0 0
      %5425 = vmatprep.subr.bf16.mxu0 0
      %5426 = vmatpush2.bf16.msra.mxu0 0
      %5427 = vmatprep.subr.bf16.mxu0 0
      %5428 = vmatpush2.bf16.msra.mxu0 0
      %5429 = vmatprep.subr.bf16.mxu0 0
      %5430 = vmatpush2.bf16.msra.mxu0 0
      %5431 = vmatprep.mubr.bf16.mxu0 0
      %5432 = vmatmul.mubr.bf16.gmra.mxu0 %v4659
      %v5433 = vpop.f32.mrf.mxu0
      %v5434 = vadd.f32 %v4656, %v5433
      %v5435 = vpop.f32.mrf.mxu0
      %v5436 = vadd.f32 %v4656, %v5435
      %v5437 = vpop.f32.mrf.mxu0
      %v5438 = vpop.f32.mrf.mxu0
      %5439 = vdwg.mxu0
      %5440 = vmatprep.subr.bf16.mxu0 0
      %5441 = vmatpush1.bf16.msra.mxu0 0
      %5442 = vmatprep.subr.bf16.mxu0 0
      %5443 = vmatpush1.bf16.msra.mxu0 0
      %5444 = vmatprep.subr.bf16.mxu0 0
      %5445 = vmatpush1.bf16.msra.mxu0 0
      %5446 = vmatprep.subr.bf16.mxu0 0
      %5447 = vmatpush1.bf16.msra.mxu0 0
      %5448 = vmatprep.subr.bf16.mxu0 0
      %5449 = vmatpush1.bf16.msra.mxu0 0
      %5450 = vmatprep.subr.bf16.mxu0 0
      %5451 = vmatpush1.bf16.msra.mxu0 0
      %5452 = vmatprep.subr.bf16.mxu0 %v4040
      %5453 = vmatpush1.bf16.msra.mxu0 %v4039
      %5454 = vmatprep.subr.bf16.mxu0 %v3990
      %5455 = vmatpush1.bf16.msra.mxu0 %v3989
      %5456 = vmatprep.subr.bf16.mxu0 0
      %5457 = vmatpush2.bf16.msra.mxu0 0
      %5458 = vmatprep.subr.bf16.mxu0 0
      %5459 = vmatpush2.bf16.msra.mxu0 0
      %5460 = vmatprep.subr.bf16.mxu0 0
      %5461 = vmatpush2.bf16.msra.mxu0 0
      %5462 = vmatprep.subr.bf16.mxu0 0
      %5463 = vmatpush2.bf16.msra.mxu0 0
      %5464 = vmatprep.subr.bf16.mxu0 0
      %5465 = vmatpush2.bf16.msra.mxu0 0
      %5466 = vmatprep.subr.bf16.mxu0 0
      %5467 = vmatpush2.bf16.msra.mxu0 0
      %5468 = vmatprep.subr.bf16.mxu0 0
      %5469 = vmatpush2.bf16.msra.mxu0 0
      %5470 = vmatprep.subr.bf16.mxu0 0
      %5471 = vmatpush2.bf16.msra.mxu0 0
      %5472 = vmatprep.mubr.bf16.mxu0 0
      %5473 = vmatmul.mubr.bf16.gmra.mxu0 %v4659
      %v5474 = vpop.f32.mrf.mxu0
      %v5475 = vadd.f32 %v4656, %v5474
      %v5476 = vpop.f32.mrf.mxu0
      %v5477 = vadd.f32 %v4656, %v5476
      %v5478 = vpop.f32.mrf.mxu0
      %v5479 = vpop.f32.mrf.mxu0
      %5480 = vdwg.mxu0
      %5481 = vmatprep.subr.bf16.mxu0 0
      %5482 = vmatpush1.bf16.msra.mxu0 0
      %5483 = vmatprep.subr.bf16.mxu0 0
      %5484 = vmatpush1.bf16.msra.mxu0 0
      %5485 = vmatprep.subr.bf16.mxu0 0
      %5486 = vmatpush1.bf16.msra.mxu0 0
      %5487 = vmatprep.subr.bf16.mxu0 0
      %5488 = vmatpush1.bf16.msra.mxu0 0
      %5489 = vmatprep.subr.bf16.mxu0 0
      %5490 = vmatpush1.bf16.msra.mxu0 0
      %5491 = vmatprep.subr.bf16.mxu0 0
      %5492 = vmatpush1.bf16.msra.mxu0 0
      %5493 = vmatprep.subr.bf16.mxu0 %v4042
      %5494 = vmatpush1.bf16.msra.mxu0 %v4041
      %5495 = vmatprep.subr.bf16.mxu0 %v3992
      %5496 = vmatpush1.bf16.msra.mxu0 %v3991
      %5497 = vmatprep.subr.bf16.mxu0 0
      %5498 = vmatpush2.bf16.msra.mxu0 0
      %5499 = vmatprep.subr.bf16.mxu0 0
      %5500 = vmatpush2.bf16.msra.mxu0 0
      %5501 = vmatprep.subr.bf16.mxu0 0
      %5502 = vmatpush2.bf16.msra.mxu0 0
      %5503 = vmatprep.subr.bf16.mxu0 0
      %5504 = vmatpush2.bf16.msra.mxu0 0
      %5505 = vmatprep.subr.bf16.mxu0 0
      %5506 = vmatpush2.bf16.msra.mxu0 0
      %5507 = vmatprep.subr.bf16.mxu0 0
      %5508 = vmatpush2.bf16.msra.mxu0 0
      %5509 = vmatprep.subr.bf16.mxu0 0
      %5510 = vmatpush2.bf16.msra.mxu0 0
      %5511 = vmatprep.subr.bf16.mxu0 0
      %5512 = vmatpush2.bf16.msra.mxu0 0
      %5513 = vmatprep.mubr.bf16.mxu0 0
      %5514 = vmatmul.mubr.bf16.gmra.mxu0 %v4659
      %v5515 = vpop.f32.mrf.mxu0
      %v5516 = vadd.f32 %v4656, %v5515
      %v5517 = vpop.f32.mrf.mxu0
      %v5518 = vadd.f32 %v4656, %v5517
      %v5519 = vpop.f32.mrf.mxu0
      %v5520 = vpop.f32.mrf.mxu0
      %5521 = vdwg.mxu0
      %5522 = vmatprep.subr.bf16.mxu0 0
      %5523 = vmatpush1.bf16.msra.mxu0 0
      %5524 = vmatprep.subr.bf16.mxu0 0
      %5525 = vmatpush1.bf16.msra.mxu0 0
      %5526 = vmatprep.subr.bf16.mxu0 0
      %5527 = vmatpush1.bf16.msra.mxu0 0
      %5528 = vmatprep.subr.bf16.mxu0 0
      %5529 = vmatpush1.bf16.msra.mxu0 0
      %5530 = vmatprep.subr.bf16.mxu0 0
      %5531 = vmatpush1.bf16.msra.mxu0 0
      %5532 = vmatprep.subr.bf16.mxu0 0
      %5533 = vmatpush1.bf16.msra.mxu0 0
      %5534 = vmatprep.subr.bf16.mxu0 %v4044
      %5535 = vmatpush1.bf16.msra.mxu0 %v4043
      %5536 = vmatprep.subr.bf16.mxu0 %v3994
      %5537 = vmatpush1.bf16.msra.mxu0 %v3993
      %5538 = vmatprep.subr.bf16.mxu0 0
      %5539 = vmatpush2.bf16.msra.mxu0 0
      %5540 = vmatprep.subr.bf16.mxu0 0
      %5541 = vmatpush2.bf16.msra.mxu0 0
      %5542 = vmatprep.subr.bf16.mxu0 0
      %5543 = vmatpush2.bf16.msra.mxu0 0
      %5544 = vmatprep.subr.bf16.mxu0 0
      %5545 = vmatpush2.bf16.msra.mxu0 0
      %5546 = vmatprep.subr.bf16.mxu0 0
      %5547 = vmatpush2.bf16.msra.mxu0 0
      %5548 = vmatprep.subr.bf16.mxu0 0
      %5549 = vmatpush2.bf16.msra.mxu0 0
      %5550 = vmatprep.subr.bf16.mxu0 0
      %5551 = vmatpush2.bf16.msra.mxu0 0
      %5552 = vmatprep.subr.bf16.mxu0 0
      %5553 = vmatpush2.bf16.msra.mxu0 0
      %5554 = vmatprep.mubr.bf16.mxu0 0
      %5555 = vmatmul.mubr.bf16.gmra.mxu0 %v4659
      %v5556 = vpop.f32.mrf.mxu0
      %v5557 = vadd.f32 %v4656, %v5556
      %v5558 = vpop.f32.mrf.mxu0
      %v5559 = vadd.f32 %v4656, %v5558
      %v5560 = vpop.f32.mrf.mxu0
      %v5561 = vpop.f32.mrf.mxu0
      %5562 = vdwg.mxu0
      %5563 = vmatprep.subr.bf16.mxu0 0
      %5564 = vmatpush1.bf16.msra.mxu0 0
      %5565 = vmatprep.subr.bf16.mxu0 0
      %5566 = vmatpush1.bf16.msra.mxu0 0
      %5567 = vmatprep.subr.bf16.mxu0 0
      %5568 = vmatpush1.bf16.msra.mxu0 0
      %5569 = vmatprep.subr.bf16.mxu0 0
      %5570 = vmatpush1.bf16.msra.mxu0 0
      %5571 = vmatprep.subr.bf16.mxu0 0
      %5572 = vmatpush1.bf16.msra.mxu0 0
      %5573 = vmatprep.subr.bf16.mxu0 0
      %5574 = vmatpush1.bf16.msra.mxu0 0
      %5575 = vmatprep.subr.bf16.mxu0 %v4046
      %5576 = vmatpush1.bf16.msra.mxu0 %v4045
      %5577 = vmatprep.subr.bf16.mxu0 %v3996
      %5578 = vmatpush1.bf16.msra.mxu0 %v3995
      %5579 = vmatprep.subr.bf16.mxu0 0
      %5580 = vmatpush2.bf16.msra.mxu0 0
      %5581 = vmatprep.subr.bf16.mxu0 0
      %5582 = vmatpush2.bf16.msra.mxu0 0
      %5583 = vmatprep.subr.bf16.mxu0 0
      %5584 = vmatpush2.bf16.msra.mxu0 0
      %5585 = vmatprep.subr.bf16.mxu0 0
      %5586 = vmatpush2.bf16.msra.mxu0 0
      %5587 = vmatprep.subr.bf16.mxu0 0
      %5588 = vmatpush2.bf16.msra.mxu0 0
      %5589 = vmatprep.subr.bf16.mxu0 0
      %5590 = vmatpush2.bf16.msra.mxu0 0
      %5591 = vmatprep.subr.bf16.mxu0 0
      %5592 = vmatpush2.bf16.msra.mxu0 0
      %5593 = vmatprep.subr.bf16.mxu0 0
      %5594 = vmatpush2.bf16.msra.mxu0 0
      %5595 = vmatprep.mubr.bf16.mxu0 0
      %5596 = vmatmul.mubr.bf16.gmra.mxu0 %v4659
      %v5597 = vpop.f32.mrf.mxu0
      %v5598 = vadd.f32 %v4656, %v5597
      %v5599 = vpop.f32.mrf.mxu0
      %v5600 = vadd.f32 %v4656, %v5599
      %v5601 = vpop.f32.mrf.mxu0
      %v5602 = vpop.f32.mrf.mxu0
      %5603 = vdwg.mxu0
      %5604 = vmatprep.subr.bf16.mxu0 0
      %5605 = vmatpush1.bf16.msra.mxu0 0
      %5606 = vmatprep.subr.bf16.mxu0 0
      %5607 = vmatpush1.bf16.msra.mxu0 0
      %5608 = vmatprep.subr.bf16.mxu0 0
      %5609 = vmatpush1.bf16.msra.mxu0 0
      %5610 = vmatprep.subr.bf16.mxu0 0
      %5611 = vmatpush1.bf16.msra.mxu0 0
      %5612 = vmatprep.subr.bf16.mxu0 0
      %5613 = vmatpush1.bf16.msra.mxu0 0
      %5614 = vmatprep.subr.bf16.mxu0 0
      %5615 = vmatpush1.bf16.msra.mxu0 0
      %5616 = vmatprep.subr.bf16.mxu0 %v4048
      %5617 = vmatpush1.bf16.msra.mxu0 %v4047
      %5618 = vmatprep.subr.bf16.mxu0 %v3998
      %5619 = vmatpush1.bf16.msra.mxu0 %v3997
      %5620 = vmatprep.subr.bf16.mxu0 0
      %5621 = vmatpush2.bf16.msra.mxu0 0
      %5622 = vmatprep.subr.bf16.mxu0 0
      %5623 = vmatpush2.bf16.msra.mxu0 0
      %5624 = vmatprep.subr.bf16.mxu0 0
      %5625 = vmatpush2.bf16.msra.mxu0 0
      %5626 = vmatprep.subr.bf16.mxu0 0
      %5627 = vmatpush2.bf16.msra.mxu0 0
      %5628 = vmatprep.subr.bf16.mxu0 0
      %5629 = vmatpush2.bf16.msra.mxu0 0
      %5630 = vmatprep.subr.bf16.mxu0 0
      %5631 = vmatpush2.bf16.msra.mxu0 0
      %5632 = vmatprep.subr.bf16.mxu0 0
      %5633 = vmatpush2.bf16.msra.mxu0 0
      %5634 = vmatprep.subr.bf16.mxu0 0
      %5635 = vmatpush2.bf16.msra.mxu0 0
      %5636 = vmatprep.mubr.bf16.mxu0 0
      %5637 = vmatmul.mubr.bf16.gmra.mxu0 %v4659
      %v5638 = vpop.f32.mrf.mxu0
      %v5639 = vadd.f32 %v4656, %v5638
      %v5640 = vpop.f32.mrf.mxu0
      %v5641 = vadd.f32 %v4656, %v5640
      %v5642 = vpop.f32.mrf.mxu0
      %v5643 = vpop.f32.mrf.mxu0
      %5644 = vdwg.mxu0
      %5645 = vmatprep.subr.bf16.mxu0 0
      %5646 = vmatpush1.bf16.msra.mxu0 0
      %5647 = vmatprep.subr.bf16.mxu0 0
      %5648 = vmatpush1.bf16.msra.mxu0 0
      %5649 = vmatprep.subr.bf16.mxu0 0
      %5650 = vmatpush1.bf16.msra.mxu0 0
      %5651 = vmatprep.subr.bf16.mxu0 0
      %5652 = vmatpush1.bf16.msra.mxu0 0
      %5653 = vmatprep.subr.bf16.mxu0 0
      %5654 = vmatpush1.bf16.msra.mxu0 0
      %5655 = vmatprep.subr.bf16.mxu0 0
      %5656 = vmatpush1.bf16.msra.mxu0 0
      %5657 = vmatprep.subr.bf16.mxu0 %v4050
      %5658 = vmatpush1.bf16.msra.mxu0 %v4049
      %5659 = vmatprep.subr.bf16.mxu0 %v4000
      %5660 = vmatpush1.bf16.msra.mxu0 %v3999
      %5661 = vmatprep.subr.bf16.mxu0 0
      %5662 = vmatpush2.bf16.msra.mxu0 0
      %5663 = vmatprep.subr.bf16.mxu0 0
      %5664 = vmatpush2.bf16.msra.mxu0 0
      %5665 = vmatprep.subr.bf16.mxu0 0
      %5666 = vmatpush2.bf16.msra.mxu0 0
      %5667 = vmatprep.subr.bf16.mxu0 0
      %5668 = vmatpush2.bf16.msra.mxu0 0
      %5669 = vmatprep.subr.bf16.mxu0 0
      %5670 = vmatpush2.bf16.msra.mxu0 0
      %5671 = vmatprep.subr.bf16.mxu0 0
      %5672 = vmatpush2.bf16.msra.mxu0 0
      %5673 = vmatprep.subr.bf16.mxu0 0
      %5674 = vmatpush2.bf16.msra.mxu0 0
      %5675 = vmatprep.subr.bf16.mxu0 0
      %5676 = vmatpush2.bf16.msra.mxu0 0
      %5677 = vmatprep.mubr.bf16.mxu0 0
      %5678 = vmatmul.mubr.bf16.gmra.mxu0 %v4659
      %v5679 = vpop.f32.mrf.mxu0
      %v5680 = vadd.f32 %v4656, %v5679
      %v5681 = vpop.f32.mrf.mxu0
      %v5682 = vadd.f32 %v4656, %v5681
      %v5683 = vpop.f32.mrf.mxu0
      %v5684 = vpop.f32.mrf.mxu0
      %5685 = vdwg.mxu0
      %v5686 = vtanh.pop %v4696
      %v5687 = vtanh.pop %v4698
      %v5688 = vtanh.pop %v4737
      %v5689 = vtanh.pop %v4739
      %v5690 = vtanh.pop %v4778
      %v5691 = vtanh.pop %v4780
      %v5692 = vtanh.pop %v4819
      %v5693 = vtanh.pop %v4821
      %v5694 = vtanh.pop %v4860
      %v5695 = vtanh.pop %v4862
      %v5696 = vtanh.pop %v4901
      %v5697 = vtanh.pop %v4903
      %v5698 = vtanh.pop %v4942
      %v5699 = vtanh.pop %v4944
      %v5700 = vtanh.pop %v4983
      %v5701 = vtanh.pop %v4985
      %v5702 = vtanh.pop %v5024
      %v5703 = vtanh.pop %v5026
      %v5704 = vtanh.pop %v5065
      %v5705 = vtanh.pop %v5067
      %v5706 = vtanh.pop %v5106
      %v5707 = vtanh.pop %v5108
      %v5708 = vtanh.pop %v5147
      %v5709 = vtanh.pop %v5149
      %v5710 = vtanh.pop %v5188
      %v5711 = vtanh.pop %v5190
      %v5712 = vtanh.pop %v5229
      %v5713 = vtanh.pop %v5231
      %v5714 = vtanh.pop %v5270
      %v5715 = vtanh.pop %v5272
      %v5716 = vtanh.pop %v5311
      %v5717 = vtanh.pop %v5313
      %v5718 = vtanh.pop %v5352
      %v5719 = vtanh.pop %v5354
      %v5720 = vtanh.pop %v5393
      %v5721 = vtanh.pop %v5395
      %v5722 = vtanh.pop %v5434
      %v5723 = vtanh.pop %v5436
      %v5724 = vtanh.pop %v5475
      %v5725 = vtanh.pop %v5477
      %v5726 = vtanh.pop %v5516
      %v5727 = vtanh.pop %v5518
      %v5728 = vtanh.pop %v5557
      %v5729 = vtanh.pop %v5559
      %v5730 = vtanh.pop %v5598
      %v5731 = vtanh.pop %v5600
      %v5732 = vtanh.pop %v5639
      %v5733 = vtanh.pop %v5641
      %v5734 = vtanh.pop %v5680
      %v5735 = vtanh.pop %v5682
      %v5786 = vcombine.low %v5686, %v5687
      %v5787 = vcombine.low %v5688, %v5689
      %v5788 = vcombine.low %v5690, %v5691
      %v5789 = vcombine.low %v5692, %v5693
      %v5790 = vcombine.low %v5694, %v5695
      %v5791 = vcombine.low %v5696, %v5697
      %v5792 = vcombine.low %v5698, %v5699
      %v5793 = vcombine.low %v5700, %v5701
      %v5794 = vcombine.low %v5702, %v5703
      %v5795 = vcombine.low %v5704, %v5705
      %v5796 = vcombine.low %v5706, %v5707
      %v5797 = vcombine.low %v5708, %v5709
      %v5798 = vcombine.low %v5710, %v5711
      %v5799 = vcombine.low %v5712, %v5713
      %v5800 = vcombine.low %v5714, %v5715
      %v5801 = vcombine.low %v5716, %v5717
      %v5802 = vcombine.low %v5718, %v5719
      %v5803 = vcombine.low %v5720, %v5721
      %v5804 = vcombine.low %v5722, %v5723
      %v5805 = vcombine.low %v5724, %v5725
      %v5806 = vcombine.low %v5726, %v5727
      %v5807 = vcombine.low %v5728, %v5729
      %v5808 = vcombine.low %v5730, %v5731
      %v5809 = vcombine.low %v5732, %v5733
      %v5810 = vcombine.low %v5734, %v5735
      %5836 = vst [vmem:[%s407] sm:$0x77] %v5786
      %5837 = vst [vmem:[%s407 + $0x8] sm:$0x77] %v5787
      %5838 = vst [vmem:[%s407 + $0x10] sm:$0x77] %v5788
      %5839 = vst [vmem:[%s407 + $0x18] sm:$0x77] %v5789
      %5840 = vst [vmem:[%s407 + $0x20] sm:$0x77] %v5790
      %5841 = vst [vmem:[%s407 + $0x28] sm:$0x77] %v5791
      %5842 = vst [vmem:[%s407 + $0x30] sm:$0x77] %v5792
      %5843 = vst [vmem:[%s407 + $0x38] sm:$0x77] %v5793
      %5844 = vst [vmem:[%s407 + $0x40] sm:$0x77] %v5794
      %5845 = vst [vmem:[%s407 + $0x48] sm:$0x77] %v5795
      %5846 = vst [vmem:[%s407 + $0x50] sm:$0x77] %v5796
      %5847 = vst [vmem:[%s407 + $0x58] sm:$0x77] %v5797
      %5848 = vst [vmem:[%s407 + $0x60] sm:$0x77] %v5798
      %5849 = vst [vmem:[%s407 + $0x68] sm:$0x77] %v5799
      %5850 = vst [vmem:[%s407 + $0x70] sm:$0x77] %v5800
      %5851 = vst [vmem:[%s407 + $0x78] sm:$0x77] %v5801
      %5852 = vst [vmem:[%s407 + $0x80] sm:$0x77] %v5802
      %5853 = vst [vmem:[%s407 + $0x88] sm:$0x77] %v5803
      %5854 = vst [vmem:[%s407 + $0x90] sm:$0x77] %v5804
      %5855 = vst [vmem:[%s407 + $0x98] sm:$0x77] %v5805
      %5856 = vst [vmem:[%s407 + $0xa0] sm:$0x77] %v5806
      %5857 = vst [vmem:[%s407 + $0xa8] sm:$0x77] %v5807
      %5858 = vst [vmem:[%s407 + $0xb0] sm:$0x77] %v5808
      %5859 = vst [vmem:[%s407 + $0xb8] sm:$0x77] %v5809
      %5860 = vst [vmem:[%s407 + $0xc0] sm:$0x77] %v5810
      %s5861 = smul.u32 50, %s25
      %p5862 = scmp.lt.s32.totalorder %s24, 1
      %s5863 = scalar_select %p5862, %s24, 1
      %p5864 = scmp.lt.s32.totalorder %s5861, 49
      %s5865 = scalar_select %p5864, %s5861, 49
      %s5866 = smul.addr %s5863, 200
      %s5867 = sadd.s32 %s5865, %s5866
      %s5868 = smul.addr %s5867, 4
      %s5869 = scalar_lea.vmem %s7, %s5868
      %s5870 = smul.u32 50, %s25
      %p5871 = scmp.lt.s32.totalorder %s24, 1
      %s5872 = scalar_select %p5871, %s24, 1
      %p5873 = scmp.lt.s32.totalorder %s5870, 49
      %s5874 = scalar_select %p5873, %s5870, 49
      %s5875 = smul.addr %s5872, 50
      %s5876 = sadd.s32 %s5874, %s5875
      %s5877 = smul.addr %s5876, 4
      %s5878 = scalar_lea.vmem %s8, %s5877
      // Predicated region
      $region49: #{deep_color_transfer_forward.3} parent=47 // pred_check
        %p5879 = pneg %p216
      $region50: #{deep_color_transfer_forward.3} parent=47 // pred_check_branch
        %5881 = sbr.rel (%p5879) target = $region52
      $region51: #{deep_color_transfer_forward.3} parent=47 // pred_region
        %s5882 = smul.u32 50, %s25
      $region52: #{deep_color_transfer_forward.3} parent=47 // pred_fallthru
        _
      // Predicated region
      $region53: #{deep_color_transfer_forward.3} parent=47 // pred_check
        %p5883 = pneg %p244
      $region54: #{deep_color_transfer_forward.3} parent=47 // pred_check_branch
        %5885 = sbr.rel (%p5883) target = $region56
      $region55: #{deep_color_transfer_forward.3} parent=47 // pred_region
        %s5886 = smul.u32 50, %s25
      $region56: #{deep_color_transfer_forward.3} parent=47 // pred_fallthru
        _
    $region48: #{deep_color_transfer_forward.3} parent=5 // pred_fallthru
      _
    %p5887 = scmp.le.s32.totalorder 2, %s15
    // Predicated region
    $region57: #{deep_color_transfer_forward.3} parent=5 // pred_check
      %p5888 = pneg %p5887
    $region58: #{deep_color_transfer_forward.3} parent=5 // pred_check_branch
      %5890 = sbr.rel (%p5888) target = $region60
    $region59: #{deep_color_transfer_forward.3} parent=5 // pred_region
      %s5891 = ssub.s32 %s15, 2
      // Predicated region
      $region61: #{deep_color_transfer_forward.3} parent=59 // pred_check
        %p5892 = pneg %p222
      $region62: #{deep_color_transfer_forward.3} parent=59 // pred_check_branch
        %5894 = sbr.rel (%p5892) target = $region64
      $region63: #{deep_color_transfer_forward.3} parent=59 // pred_region
        %s5895 = smul.u32 50, %s27
        %p5896 = scmp.lt.s32.totalorder %s26, 1
        %s5897 = scalar_select %p5896, %s26, 1
        %p5898 = scmp.lt.s32.totalorder %s5895, 49
        %s5899 = scalar_select %p5898, %s5895, 49
        %s5900 = smul.addr %s5897, 200
        %s5901 = sadd.s32 %s5899, %s5900
        %s5902 = smul.addr %s5901, 4
        %s5903 = scalar_lea.vmem %s7, %s5902
      $region64: #{deep_color_transfer_forward.3} parent=59 // pred_fallthru
        _
      // Predicated region
      $region65: #{deep_color_transfer_forward.3} parent=59 // pred_check
        %p5904 = pneg %p250
      $region66: #{deep_color_transfer_forward.3} parent=59 // pred_check_branch
        %5906 = sbr.rel (%p5904) target = $region68
      $region67: #{deep_color_transfer_forward.3} parent=59 // pred_region
        %s5907 = smul.u32 50, %s27
        %p5908 = scmp.lt.s32.totalorder %s26, 1
        %s5909 = scalar_select %p5908, %s26, 1
        %p5910 = scmp.lt.s32.totalorder %s5907, 49
        %s5911 = scalar_select %p5910, %s5907, 49
        %s5912 = smul.addr %s5909, 50
        %s5913 = sadd.s32 %s5911, %s5912
        %s5914 = smul.addr %s5913, 4
        %s5915 = scalar_lea.vmem %s8, %s5914
      $region68: #{deep_color_transfer_forward.3} parent=59 // pred_fallthru
        _
    $region60: #{deep_color_transfer_forward.3} parent=5 // pred_fallthru
      _
  $region6: #{deep_color_transfer_forward.3} parent=0 // loop_footer
    %s19 = sadd.s32 1, %s15
  $region7: #{deep_color_transfer_forward.3} parent=0 // loop_footer_branch
    %14 = sbr.rel target = $region3
  $region8: #{deep_color_transfer_forward.3} parent=0 // loop_exit
    _

</llo_original>
